<compile_context>
chip_gen: v7x
topology: tpu7x:2x2x1
jax: 0.10.0
libtpu: 0.0.40
codegen_flags: <defaults>
</compile_context>

<pallas_src>
import functools
import math

import numpy as np
import jax
import jax.numpy as jnp
from jax.experimental import pallas as pl
from jax.experimental.pallas import tpu as pltpu


# ----------------------------------------------------------------------------
# Host-side glue: build the (rotated) anisotropic Gaussian kernel, matching the
# PyTorch module's __init__ (get_gaussian_kernel1d/2d + torchvision.rotate).
# ----------------------------------------------------------------------------
def get_gaussian_kernel1d(kernel_size: int, sigma: float) -> np.ndarray:
    ksize_half = (kernel_size - 1) * 0.5
    x = np.linspace(-ksize_half, ksize_half, kernel_size)
    pdf = np.exp(-0.5 * (x / sigma) ** 2)
    return pdf / pdf.sum()


def get_gaussian_kernel2d(kernel_size, sigmas) -> np.ndarray:
    kernel1d_x = get_gaussian_kernel1d(kernel_size[0], sigmas[0])
    kernel1d_y = get_gaussian_kernel1d(kernel_size[1], sigmas[1])
    return np.outer(kernel1d_y, kernel1d_x)  # (kH, kW)


def rotate_nearest(k2d: np.ndarray, angle_deg: float) -> np.ndarray:
    """Counter-clockwise rotation about the image center, nearest-neighbor,
    no expand, fill=0 (host-side replication of torchvision rotate defaults)."""
    kh, kw = k2d.shape
    a = math.radians(angle_deg)
    ca, sa = math.cos(a), math.sin(a)
    cy, cx = (kh - 1) * 0.5, (kw - 1) * 0.5
    yy, xx = np.meshgrid(np.arange(kh), np.arange(kw), indexing="ij")
    xo = xx - cx
    yo = yy - cy
    xi = ca * xo - sa * yo + cx
    yi = sa * xo + ca * yo + cy
    xi_n = np.floor(xi + 0.5).astype(np.int64)
    yi_n = np.floor(yi + 0.5).astype(np.int64)
    valid = (xi_n >= 0) & (xi_n < kw) & (yi_n >= 0) & (yi_n < kh)
    out = np.zeros_like(k2d)
    out[valid] = k2d[yi_n[valid], xi_n[valid]]
    return out


def build_blur_kernel(kernel_size=(9, 9), sigmas=(6.0, 1.5), theta=0.0) -> np.ndarray:
    k2d = get_gaussian_kernel2d(kernel_size, sigmas)
    k2d = rotate_nearest(k2d, theta)
    return k2d.astype(np.float32)


# ----------------------------------------------------------------------------
# Pallas kernel: one (H, W, CB) channel block per grid step, channels in lanes.
# ----------------------------------------------------------------------------
def _blur_kernel(x_ref, o_ref, pad_ref, *, taps):
    # x_ref:   (H, W, CB)  unpadded input block (channels in the lane dim), VMEM
    # o_ref:   (H, W, CB)  output block, VMEM
    # pad_ref: (H+kh-1, W+kw-1, CB) f32 scratch holding the zero-padded block
    kh, kw = len(taps), len(taps[0])
    H, W, CB = o_ref.shape
    ph, pw = (kh - 1) // 2, (kw - 1) // 2

    # Fused 'same' padding: zero the scratch (costs ~half a tap worth of
    # stores) and write the block into its interior. Redone every grid step so
    # correctness never depends on grid order or multi-TensorCore sharding.
    pad_ref[...] = jnp.zeros(pad_ref.shape, pad_ref.dtype)
    pad_ref[pl.ds(ph, H), pl.ds(pw, W), :] = x_ref[...].astype(jnp.float32)

    # Unrolled shift-and-accumulate. Every tap is a direct ref slice: dy is a
    # plain address offset, dx a sublane offset -- no lane rotates and no
    # value-slice temporaries. Taps are compile-time constants; exact-zero taps
    # (rotated-kernel fill=0 corners) are skipped. Four partial accumulators
    # break the serial add chain and are tree-summed at the end.
    NACC = 4
    accs = [jnp.zeros((H, W, CB), jnp.float32) for _ in range(NACC)]
    t = 0
    for dy in range(kh):
        for dx in range(kw):
            w = taps[dy][dx]
            if w == 0.0:
                continue
            accs[t % NACC] = accs[t % NACC] + w * pad_ref[pl.ds(dy, H), pl.ds(dx, W), :]
            t += 1
    acc = (accs[0] + accs[1]) + (accs[2] + accs[3])
    o_ref[...] = acc.astype(o_ref.dtype)


def _round_up(x: int, m: int) -> int:
    return ((x + m - 1) // m) * m


def gaussian_anisotropic_blur(img: jax.Array, kernel2d: np.ndarray) -> jax.Array:
    """Pallas implementation of GaussianAnysotropicBlur.forward for NCHW tensors."""
    N, C, H, W = img.shape
    kh, kw = kernel2d.shape
    Hp, Wp = H + kh - 1, W + kw - 1
    NC = N * C
    isz = jnp.dtype(img.dtype).itemsize
    LANES = 128
    NACC = 4

    # VMEM footprint of one channel block, including lane (128) and sublane (8)
    # padding of the physical layout so the estimate is honest.
    w_v, wp_v = _round_up(W, 8), _round_up(Wp, 8)

    def block_vmem_bytes(cb: int) -> int:
        cb_v = _round_up(cb, LANES)
        return cb_v * (2 * H * w_v * isz          # double-buffered input block
                       + 2 * H * w_v * isz        # double-buffered output block
                       + Hp * wp_v * 4            # padded f32 scratch
                       + NACC * H * w_v * 4)      # live f32 partial accumulators

    # Channel-block size: a multiple of 128 lanes (lane-dense stores), grown
    # toward <=~8 MiB blocks while keeping >=4 grid steps; NC<=128 uses the
    # full channel extent as a single (legal full-dim) block.
    if NC > LANES:
        CB = LANES
        while (CB * 2 <= _round_up(NC, LANES)
               and pl.cdiv(NC, CB * 2) >= 4
               and block_vmem_bytes(CB * 2) <= 8 * 1024 * 1024):
            CB *= 2
        NCp = _round_up(NC, CB)
    else:
        CB, NCp = NC, NC
    n_blocks = NCp // CB

    # Channels-last (lane-dense) layout; only the channel axis is ever padded
    # (spatial 'same' padding happens inside the kernel).
    x = jnp.transpose(img.reshape(NC, H, W), (1, 2, 0))        # (H, W, NC)
    if NCp != NC:
        x = jnp.pad(x, ((0, 0), (0, 0), (0, NCp - NC)))

    # VMEM limit: 2x the honest estimate, never below the default 32 MiB and
    # capped at 48 MiB so it is always legal on v7x's 64 MiB physical VMEM.
    needed = block_vmem_bytes(CB)
    vmem_limit = int(min(48 * 1024 * 1024, max(32 * 1024 * 1024, 2 * needed)))

    taps = tuple(tuple(float(v) for v in row) for row in np.asarray(kernel2d))
    kernel = functools.partial(_blur_kernel, taps=taps)

    out = pl.pallas_call(
        kernel,
        out_shape=jax.ShapeDtypeStruct((H, W, NCp), img.dtype),
        grid_spec=pltpu.PrefetchScalarGridSpec(
            num_scalar_prefetch=0,
            grid=(n_blocks,),
            in_specs=[pl.BlockSpec((H, W, CB), lambda c: (0, 0, c))],
            out_specs=pl.BlockSpec((H, W, CB), lambda c: (0, 0, c)),
            scratch_shapes=[pltpu.VMEM((Hp, Wp, CB), jnp.float32)],
        ),
        compiler_params=pltpu.CompilerParams(
            dimension_semantics=("parallel",),
            vmem_limit_bytes=vmem_limit,
        ),
    )(x)

    out = out[:, :, :NC]                                        # drop channel pad
    return jnp.transpose(out, (2, 0, 1)).reshape(N, C, H, W)


# ----------------------------------------------------------------------------
# Demo + self-check (NumPy reference of the depthwise 'same' cross-correlation).
# ----------------------------------------------------------------------------
if __name__ == "__main__":
    key = jax.random.PRNGKey(0)
    N, C, H, W = 2, 4, 16, 16
    img = jax.random.uniform(key, (N, C, H, W), dtype=jnp.float32)

    kernel_size = (9, 9)
    sigmas = (6.0, 1.5)   # note: the module's default sigma_y=0 is degenerate (div by 0)
    theta = 30.0
    k2d = build_blur_kernel(kernel_size, sigmas, theta)

    out = gaussian_anisotropic_blur(img, k2d)
    out = jax.block_until_ready(out)

    kh, kw = k2d.shape
    ph, pw = (kh - 1) // 2, (kw - 1) // 2
    xnp = np.asarray(img)
    xp = np.pad(xnp, ((0, 0), (0, 0), (ph, kh - 1 - ph), (pw, kw - 1 - pw)))
    ref = np.zeros((N, C, H, W), np.float32)
    for dy in range(kh):
        for dx in range(kw):
            ref += k2d[dy, dx] * xp[:, :, dy:dy + H, dx:dx + W]

    assert out.shape == img.shape and out.dtype == img.dtype
    np.testing.assert_allclose(np.asarray(out), ref, rtol=1e-5, atol=1e-5)
    print("KERNEL_OK")
</pallas_src>

<mosaic_0001>
module attributes {stable_mosaic.version = 11 : i64} {
  func.func @_blur_kernel(%arg0: i32, %arg1: memref<16x16x8xf32, #tpu.memory_space<vmem>>, %arg2: memref<16x16x8xf32, #tpu.memory_space<vmem>>, %arg3: memref<24x24x8xf32, #tpu.memory_space<vmem>>) attributes {dimension_semantics = [#tpu.dimension_semantics<parallel>], iteration_bounds = array<i64: 1>, scalar_prefetch = 0 : i64, scratch_operands = 1 : i64, tpu.core_type = #tpu.core_type<tc>, window_params = [{transform_indices = @transform_0, window_bounds = array<i64: 16, 16, 8>}, {transform_indices = @transform_1, window_bounds = array<i64: 16, 16, 8>}]} {
    %cst = arith.constant 0.000000e+00 : f32
    %0 = vector.broadcast %cst : f32 to vector<24x24x8xf32>
    %c0 = arith.constant 0 : index
    %c0_0 = arith.constant 0 : index
    %c0_1 = arith.constant 0 : index
    %1 = vector.load %arg3[%c0, %c0_0, %c0_1] : memref<24x24x8xf32, #tpu.memory_space<vmem>>, vector<24x24x8xf32>
    tpu.vector_store %arg3[%c0, %c0_0, %c0_1], %0 {strides = array<i32>} : memref<24x24x8xf32, #tpu.memory_space<vmem>>, vector<24x24x8xf32>,
    %c0_2 = arith.constant 0 : index
    %c0_3 = arith.constant 0 : index
    %c0_4 = arith.constant 0 : index
    %2 = vector.load %arg1[%c0_2, %c0_3, %c0_4] : memref<16x16x8xf32, #tpu.memory_space<vmem>>, vector<16x16x8xf32>
    %c4 = arith.constant 4 : index
    %c4_5 = arith.constant 4 : index
    %c0_6 = arith.constant 0 : index
    %3 = vector.load %arg3[%c4, %c4_5, %c0_6] : memref<24x24x8xf32, #tpu.memory_space<vmem>>, vector<16x16x8xf32>
    tpu.vector_store %arg3[%c4, %c4_5, %c0_6], %2 {strides = array<i32>} : memref<24x24x8xf32, #tpu.memory_space<vmem>>, vector<16x16x8xf32>,
    %cst_7 = arith.constant 0.000000e+00 : f32
    %4 = vector.broadcast %cst_7 : f32 to vector<16x16x8xf32>
    %cst_8 = arith.constant 0.000000e+00 : f32
    %5 = vector.broadcast %cst_8 : f32 to vector<16x16x8xf32>
    %cst_9 = arith.constant 0.000000e+00 : f32
    %6 = vector.broadcast %cst_9 : f32 to vector<16x16x8xf32>
    %cst_10 = arith.constant 0.000000e+00 : f32
    %7 = vector.broadcast %cst_10 : f32 to vector<16x16x8xf32>
    %c0_11 = arith.constant 0 : index
    %c2 = arith.constant 2 : index
    %c0_12 = arith.constant 0 : index
    %8 = vector.load %arg3[%c0_11, %c2, %c0_12] : memref<24x24x8xf32, #tpu.memory_space<vmem>>, vector<16x16x8xf32>
    %cst_13 = arith.constant 9.2511269E-4 : f32
    %9 = vector.broadcast %cst_13 : f32 to vector<16x16x8xf32>
    %10 = arith.mulf %9, %8 : vector<16x16x8xf32>
    %11 = arith.addf %4, %10 : vector<16x16x8xf32>
    %c0_14 = arith.constant 0 : index
    %c3 = arith.constant 3 : index
    %c0_15 = arith.constant 0 : index
    %12 = vector.load %arg3[%c0_14, %c3, %c0_15] : memref<24x24x8xf32, #tpu.memory_space<vmem>>, vector<16x16x8xf32>
    %cst_16 = arith.constant 9.12352697E-4 : f32
    %13 = vector.broadcast %cst_16 : f32 to vector<16x16x8xf32>
    %14 = arith.mulf %13, %12 : vector<16x16x8xf32>
    %15 = arith.addf %5, %14 : vector<16x16x8xf32>
    %c0_17 = arith.constant 0 : index
    %c4_18 = arith.constant 4 : index
    %c0_19 = arith.constant 0 : index
    %16 = vector.load %arg3[%c0_17, %c4_18, %c0_19] : memref<24x24x8xf32, #tpu.memory_space<vmem>>, vector<16x16x8xf32>
    %cst_20 = arith.constant 0.00414606743 : f32
    %17 = vector.broadcast %cst_20 : f32 to vector<16x16x8xf32>
    %18 = arith.mulf %17, %16 : vector<16x16x8xf32>
    %19 = arith.addf %6, %18 : vector<16x16x8xf32>
    %c0_21 = arith.constant 0 : index
    %c5 = arith.constant 5 : index
    %c0_22 = arith.constant 0 : index
    %20 = vector.load %arg3[%c0_21, %c5, %c0_22] : memref<24x24x8xf32, #tpu.memory_space<vmem>>, vector<16x16x8xf32>
    %cst_23 = arith.constant 0.00386791583 : f32
    %21 = vector.broadcast %cst_23 : f32 to vector<16x16x8xf32>
    %22 = arith.mulf %21, %20 : vector<16x16x8xf32>
    %23 = arith.addf %7, %22 : vector<16x16x8xf32>
    %c0_24 = arith.constant 0 : index
    %c6 = arith.constant 6 : index
    %c0_25 = arith.constant 0 : index
    %24 = vector.load %arg3[%c0_24, %c6, %c0_25] : memref<24x24x8xf32, #tpu.memory_space<vmem>>, vector<16x16x8xf32>
    %cst_26 = arith.constant 0.0106611336 : f32
    %25 = vector.broadcast %cst_26 : f32 to vector<16x16x8xf32>
    %26 = arith.mulf %25, %24 : vector<16x16x8xf32>
    %27 = arith.addf %11, %26 : vector<16x16x8xf32>
    %c1 = arith.constant 1 : index
    %c1_27 = arith.constant 1 : index
    %c0_28 = arith.constant 0 : index
    %28 = vector.load %arg3[%c1, %c1_27, %c0_28] : memref<24x24x8xf32, #tpu.memory_space<vmem>>, vector<16x16x8xf32>
    %cst_29 = arith.constant 9.12352697E-4 : f32
    %29 = vector.broadcast %cst_29 : f32 to vector<16x16x8xf32>
    %30 = arith.mulf %29, %28 : vector<16x16x8xf32>
    %31 = arith.addf %15, %30 : vector<16x16x8xf32>
    %c1_30 = arith.constant 1 : index
    %c2_31 = arith.constant 2 : index
    %c0_32 = arith.constant 0 : index
    %32 = vector.load %arg3[%c1_30, %c2_31, %c0_32] : memref<24x24x8xf32, #tpu.memory_space<vmem>>, vector<16x16x8xf32>
    %cst_33 = arith.constant 9.2511269E-4 : f32
    %33 = vector.broadcast %cst_33 : f32 to vector<16x16x8xf32>
    %34 = arith.mulf %33, %32 : vector<16x16x8xf32>
    %35 = arith.addf %19, %34 : vector<16x16x8xf32>
    %c1_34 = arith.constant 1 : index
    %c3_35 = arith.constant 3 : index
    %c0_36 = arith.constant 0 : index
    %36 = vector.load %arg3[%c1_34, %c3_35, %c0_36] : memref<24x24x8xf32, #tpu.memory_space<vmem>>, vector<16x16x8xf32>
    %cst_37 = arith.constant 0.0043224697 : f32
    %37 = vector.broadcast %cst_37 : f32 to vector<16x16x8xf32>
    %38 = arith.mulf %37, %36 : vector<16x16x8xf32>
    %39 = arith.addf %23, %38 : vector<16x16x8xf32>
    %c1_38 = arith.constant 1 : index
    %c4_39 = arith.constant 4 : index
    %c0_40 = arith.constant 0 : index
    %40 = vector.load %arg3[%c1_38, %c4_39, %c0_40] : memref<24x24x8xf32, #tpu.memory_space<vmem>>, vector<16x16x8xf32>
    %cst_41 = arith.constant 0.00414606743 : f32
    %41 = vector.broadcast %cst_41 : f32 to vector<16x16x8xf32>
    %42 = arith.mulf %41, %40 : vector<16x16x8xf32>
    %43 = arith.addf %27, %42 : vector<16x16x8xf32>
    %c1_42 = arith.constant 1 : index
    %c5_43 = arith.constant 5 : index
    %c0_44 = arith.constant 0 : index
    %44 = vector.load %arg3[%c1_42, %c5_43, %c0_44] : memref<24x24x8xf32, #tpu.memory_space<vmem>>, vector<16x16x8xf32>
    %cst_45 = arith.constant 0.0125946412 : f32
    %45 = vector.broadcast %cst_45 : f32 to vector<16x16x8xf32>
    %46 = arith.mulf %45, %44 : vector<16x16x8xf32>
    %47 = arith.addf %31, %46 : vector<16x16x8xf32>
    %c1_46 = arith.constant 1 : index
    %c6_47 = arith.constant 6 : index
    %c0_48 = arith.constant 0 : index
    %48 = vector.load %arg3[%c1_46, %c6_47, %c0_48] : memref<24x24x8xf32, #tpu.memory_space<vmem>>, vector<16x16x8xf32>
    %cst_49 = arith.constant 0.0117496913 : f32
    %49 = vector.broadcast %cst_49 : f32 to vector<16x16x8xf32>
    %50 = arith.mulf %49, %48 : vector<16x16x8xf32>
    %51 = arith.addf %35, %50 : vector<16x16x8xf32>
    %c1_50 = arith.constant 1 : index
    %c7 = arith.constant 7 : index
    %c0_51 = arith.constant 0 : index
    %52 = vector.load %arg3[%c1_50, %c7, %c0_51] : memref<24x24x8xf32, #tpu.memory_space<vmem>>, vector<16x16x8xf32>
    %cst_52 = arith.constant 0.0207650512 : f32
    %53 = vector.broadcast %cst_52 : f32 to vector<16x16x8xf32>
    %54 = arith.mulf %53, %52 : vector<16x16x8xf32>
    %55 = arith.addf %39, %54 : vector<16x16x8xf32>
    %c2_53 = arith.constant 2 : index
    %c0_54 = arith.constant 0 : index
    %c0_55 = arith.constant 0 : index
    %56 = vector.load %arg3[%c2_53, %c0_54, %c0_55] : memref<24x24x8xf32, #tpu.memory_space<vmem>>, vector<16x16x8xf32>
    %cst_56 = arith.constant 8.7511912E-4 : f32
    %57 = vector.broadcast %cst_56 : f32 to vector<16x16x8xf32>
    %58 = arith.mulf %57, %56 : vector<16x16x8xf32>
    %59 = arith.addf %43, %58 : vector<16x16x8xf32>
    %c2_57 = arith.constant 2 : index
    %c1_58 = arith.constant 1 : index
    %c0_59 = arith.constant 0 : index
    %60 = vector.load %arg3[%c2_57, %c1_58, %c0_59] : memref<24x24x8xf32, #tpu.memory_space<vmem>>, vector<16x16x8xf32>
    %cst_60 = arith.constant 0.00414606743 : f32
    %61 = vector.broadcast %cst_60 : f32 to vector<16x16x8xf32>
    %62 = arith.mulf %61, %60 : vector<16x16x8xf32>
    %63 = arith.addf %47, %62 : vector<16x16x8xf32>
    %c2_61 = arith.constant 2 : index
    %c2_62 = arith.constant 2 : index
    %c0_63 = arith.constant 0 : index
    %64 = vector.load %arg3[%c2_61, %c2_62, %c0_63] : memref<24x24x8xf32, #tpu.memory_space<vmem>>, vector<16x16x8xf32>
    %cst_64 = arith.constant 0.0043224697 : f32
    %65 = vector.broadcast %cst_64 : f32 to vector<16x16x8xf32>
    %66 = arith.mulf %65, %64 : vector<16x16x8xf32>
    %67 = arith.addf %51, %66 : vector<16x16x8xf32>
    %c2_65 = arith.constant 2 : index
    %c3_66 = arith.constant 3 : index
    %c0_67 = arith.constant 0 : index
    %68 = vector.load %arg3[%c2_65, %c3_66, %c0_67] : memref<24x24x8xf32, #tpu.memory_space<vmem>>, vector<16x16x8xf32>
    %cst_68 = arith.constant 0.0133141438 : f32
    %69 = vector.broadcast %cst_68 : f32 to vector<16x16x8xf32>
    %70 = arith.mulf %69, %68 : vector<16x16x8xf32>
    %71 = arith.addf %55, %70 : vector<16x16x8xf32>
    %c2_69 = arith.constant 2 : index
    %c4_70 = arith.constant 4 : index
    %c0_71 = arith.constant 0 : index
    %72 = vector.load %arg3[%c2_69, %c4_70, %c0_71] : memref<24x24x8xf32, #tpu.memory_space<vmem>>, vector<16x16x8xf32>
    %cst_72 = arith.constant 0.0131305037 : f32
    %73 = vector.broadcast %cst_72 : f32 to vector<16x16x8xf32>
    %74 = arith.mulf %73, %72 : vector<16x16x8xf32>
    %75 = arith.addf %59, %74 : vector<16x16x8xf32>
    %c2_73 = arith.constant 2 : index
    %c5_74 = arith.constant 5 : index
    %c0_75 = arith.constant 0 : index
    %76 = vector.load %arg3[%c2_73, %c5_74, %c0_75] : memref<24x24x8xf32, #tpu.memory_space<vmem>>, vector<16x16x8xf32>
    %cst_76 = arith.constant 0.0245310105 : f32
    %77 = vector.broadcast %cst_76 : f32 to vector<16x16x8xf32>
    %78 = arith.mulf %77, %76 : vector<16x16x8xf32>
    %79 = arith.addf %63, %78 : vector<16x16x8xf32>
    %c2_77 = arith.constant 2 : index
    %c6_78 = arith.constant 6 : index
    %c0_79 = arith.constant 0 : index
    %80 = vector.load %arg3[%c2_77, %c6_78, %c0_79] : memref<24x24x8xf32, #tpu.memory_space<vmem>>, vector<16x16x8xf32>
    %cst_80 = arith.constant 0.0228852723 : f32
    %81 = vector.broadcast %cst_80 : f32 to vector<16x16x8xf32>
    %82 = arith.mulf %81, %80 : vector<16x16x8xf32>
    %83 = arith.addf %67, %82 : vector<16x16x8xf32>
    %c2_81 = arith.constant 2 : index
    %c7_82 = arith.constant 7 : index
    %c0_83 = arith.constant 0 : index
    %84 = vector.load %arg3[%c2_81, %c7_82, %c0_83] : memref<24x24x8xf32, #tpu.memory_space<vmem>>, vector<16x16x8xf32>
    %cst_84 = arith.constant 0.0259324126 : f32
    %85 = vector.broadcast %cst_84 : f32 to vector<16x16x8xf32>
    %86 = arith.mulf %85, %84 : vector<16x16x8xf32>
    %87 = arith.addf %71, %86 : vector<16x16x8xf32>
    %c2_85 = arith.constant 2 : index
    %c8 = arith.constant 8 : index
    %c0_86 = arith.constant 0 : index
    %88 = vector.load %arg3[%c2_85, %c8, %c0_86] : memref<24x24x8xf32, #tpu.memory_space<vmem>>, vector<16x16x8xf32>
    %cst_87 = arith.constant 0.0259324126 : f32
    %89 = vector.broadcast %cst_87 : f32 to vector<16x16x8xf32>
    %90 = arith.mulf %89, %88 : vector<16x16x8xf32>
    %91 = arith.addf %75, %90 : vector<16x16x8xf32>
    %c3_88 = arith.constant 3 : index
    %c0_89 = arith.constant 0 : index
    %c0_90 = arith.constant 0 : index
    %92 = vector.load %arg3[%c3_88, %c0_89, %c0_90] : memref<24x24x8xf32, #tpu.memory_space<vmem>>, vector<16x16x8xf32>
    %cst_91 = arith.constant 0.00386791583 : f32
    %93 = vector.broadcast %cst_91 : f32 to vector<16x16x8xf32>
    %94 = arith.mulf %93, %92 : vector<16x16x8xf32>
    %95 = arith.addf %79, %94 : vector<16x16x8xf32>
    %c3_92 = arith.constant 3 : index
    %c1_93 = arith.constant 1 : index
    %c0_94 = arith.constant 0 : index
    %96 = vector.load %arg3[%c3_92, %c1_93, %c0_94] : memref<24x24x8xf32, #tpu.memory_space<vmem>>, vector<16x16x8xf32>
    %cst_95 = arith.constant 0.0125946412 : f32
    %97 = vector.broadcast %cst_95 : f32 to vector<16x16x8xf32>
    %98 = arith.mulf %97, %96 : vector<16x16x8xf32>
    %99 = arith.addf %83, %98 : vector<16x16x8xf32>
    %c3_96 = arith.constant 3 : index
    %c2_97 = arith.constant 2 : index
    %c0_98 = arith.constant 0 : index
    %100 = vector.load %arg3[%c3_96, %c2_97, %c0_98] : memref<24x24x8xf32, #tpu.memory_space<vmem>>, vector<16x16x8xf32>
    %cst_99 = arith.constant 0.0131305037 : f32
    %101 = vector.broadcast %cst_99 : f32 to vector<16x16x8xf32>
    %102 = arith.mulf %101, %100 : vector<16x16x8xf32>
    %103 = arith.addf %87, %102 : vector<16x16x8xf32>
    %c3_100 = arith.constant 3 : index
    %c3_101 = arith.constant 3 : index
    %c0_102 = arith.constant 0 : index
    %104 = vector.load %arg3[%c3_100, %c3_101, %c0_102] : memref<24x24x8xf32, #tpu.memory_space<vmem>>, vector<16x16x8xf32>
    %cst_103 = arith.constant 0.0259324126 : f32
    %105 = vector.broadcast %cst_103 : f32 to vector<16x16x8xf32>
    %106 = arith.mulf %105, %104 : vector<16x16x8xf32>
    %107 = arith.addf %91, %106 : vector<16x16x8xf32>
    %c3_104 = arith.constant 3 : index
    %c4_105 = arith.constant 4 : index
    %c0_106 = arith.constant 0 : index
    %108 = vector.load %arg3[%c3_104, %c4_105, %c0_106] : memref<24x24x8xf32, #tpu.memory_space<vmem>>, vector<16x16x8xf32>
    %cst_107 = arith.constant 0.0255747288 : f32
    %109 = vector.broadcast %cst_107 : f32 to vector<16x16x8xf32>
    %110 = arith.mulf %109, %108 : vector<16x16x8xf32>
    %111 = arith.addf %95, %110 : vector<16x16x8xf32>
    %c3_108 = arith.constant 3 : index
    %c5_109 = arith.constant 5 : index
    %c0_110 = arith.constant 0 : index
    %112 = vector.load %arg3[%c3_108, %c5_109, %c0_110] : memref<24x24x8xf32, #tpu.memory_space<vmem>>, vector<16x16x8xf32>
    %cst_111 = arith.constant 0.0319389701 : f32
    %113 = vector.broadcast %cst_111 : f32 to vector<16x16x8xf32>
    %114 = arith.mulf %113, %112 : vector<16x16x8xf32>
    %115 = arith.addf %99, %114 : vector<16x16x8xf32>
    %c3_112 = arith.constant 3 : index
    %c6_113 = arith.constant 6 : index
    %c0_114 = arith.constant 0 : index
    %116 = vector.load %arg3[%c3_112, %c6_113, %c0_114] : memref<24x24x8xf32, #tpu.memory_space<vmem>>, vector<16x16x8xf32>
    %cst_115 = arith.constant 0.0306355245 : f32
    %117 = vector.broadcast %cst_115 : f32 to vector<16x16x8xf32>
    %118 = arith.mulf %117, %116 : vector<16x16x8xf32>
    %119 = arith.addf %103, %118 : vector<16x16x8xf32>
    %c3_116 = arith.constant 3 : index
    %c7_117 = arith.constant 7 : index
    %c0_118 = arith.constant 0 : index
    %120 = vector.load %arg3[%c3_116, %c7_117, %c0_118] : memref<24x24x8xf32, #tpu.memory_space<vmem>>, vector<16x16x8xf32>
    %cst_119 = arith.constant 0.0228852723 : f32
    %121 = vector.broadcast %cst_119 : f32 to vector<16x16x8xf32>
    %122 = arith.mulf %121, %120 : vector<16x16x8xf32>
    %123 = arith.addf %107, %122 : vector<16x16x8xf32>
    %c3_120 = arith.constant 3 : index
    %c8_121 = arith.constant 8 : index
    %c0_122 = arith.constant 0 : index
    %124 = vector.load %arg3[%c3_120, %c8_121, %c0_122] : memref<24x24x8xf32, #tpu.memory_space<vmem>>, vector<16x16x8xf32>
    %cst_123 = arith.constant 0.0207650512 : f32
    %125 = vector.broadcast %cst_123 : f32 to vector<16x16x8xf32>
    %126 = arith.mulf %125, %124 : vector<16x16x8xf32>
    %127 = arith.addf %111, %126 : vector<16x16x8xf32>
    %c4_124 = arith.constant 4 : index
    %c0_125 = arith.constant 0 : index
    %c0_126 = arith.constant 0 : index
    %128 = vector.load %arg3[%c4_124, %c0_125, %c0_126] : memref<24x24x8xf32, #tpu.memory_space<vmem>>, vector<16x16x8xf32>
    %cst_127 = arith.constant 0.0117496913 : f32
    %129 = vector.broadcast %cst_127 : f32 to vector<16x16x8xf32>
    %130 = arith.mulf %129, %128 : vector<16x16x8xf32>
    %131 = arith.addf %115, %130 : vector<16x16x8xf32>
    %c4_128 = arith.constant 4 : index
    %c1_129 = arith.constant 1 : index
    %c0_130 = arith.constant 0 : index
    %132 = vector.load %arg3[%c4_128, %c1_129, %c0_130] : memref<24x24x8xf32, #tpu.memory_space<vmem>>, vector<16x16x8xf32>
    %cst_131 = arith.constant 0.0228852723 : f32
    %133 = vector.broadcast %cst_131 : f32 to vector<16x16x8xf32>
    %134 = arith.mulf %133, %132 : vector<16x16x8xf32>
    %135 = arith.addf %119, %134 : vector<16x16x8xf32>
    %c4_132 = arith.constant 4 : index
    %c2_133 = arith.constant 2 : index
    %c0_134 = arith.constant 0 : index
    %136 = vector.load %arg3[%c4_132, %c2_133, %c0_134] : memref<24x24x8xf32, #tpu.memory_space<vmem>>, vector<16x16x8xf32>
    %cst_135 = arith.constant 0.0245310105 : f32
    %137 = vector.broadcast %cst_135 : f32 to vector<16x16x8xf32>
    %138 = arith.mulf %137, %136 : vector<16x16x8xf32>
    %139 = arith.addf %123, %138 : vector<16x16x8xf32>
    %c4_136 = arith.constant 4 : index
    %c3_137 = arith.constant 3 : index
    %c0_138 = arith.constant 0 : index
    %140 = vector.load %arg3[%c4_136, %c3_137, %c0_138] : memref<24x24x8xf32, #tpu.memory_space<vmem>>, vector<16x16x8xf32>
    %cst_139 = arith.constant 0.0319389701 : f32
    %141 = vector.broadcast %cst_139 : f32 to vector<16x16x8xf32>
    %142 = arith.mulf %141, %140 : vector<16x16x8xf32>
    %143 = arith.addf %127, %142 : vector<16x16x8xf32>
    %c4_140 = arith.constant 4 : index
    %c4_141 = arith.constant 4 : index
    %c0_142 = arith.constant 0 : index
    %144 = vector.load %arg3[%c4_140, %c4_141, %c0_142] : memref<24x24x8xf32, #tpu.memory_space<vmem>>, vector<16x16x8xf32>
    %cst_143 = arith.constant 0.0323856622 : f32
    %145 = vector.broadcast %cst_143 : f32 to vector<16x16x8xf32>
    %146 = arith.mulf %145, %144 : vector<16x16x8xf32>
    %147 = arith.addf %131, %146 : vector<16x16x8xf32>
    %c4_144 = arith.constant 4 : index
    %c5_145 = arith.constant 5 : index
    %c0_146 = arith.constant 0 : index
    %148 = vector.load %arg3[%c4_144, %c5_145, %c0_146] : memref<24x24x8xf32, #tpu.memory_space<vmem>>, vector<16x16x8xf32>
    %cst_147 = arith.constant 0.0255747288 : f32
    %149 = vector.broadcast %cst_147 : f32 to vector<16x16x8xf32>
    %150 = arith.mulf %149, %148 : vector<16x16x8xf32>
    %151 = arith.addf %135, %150 : vector<16x16x8xf32>
    %c4_148 = arith.constant 4 : index
    %c6_149 = arith.constant 6 : index
    %c0_150 = arith.constant 0 : index
    %152 = vector.load %arg3[%c4_148, %c6_149, %c0_150] : memref<24x24x8xf32, #tpu.memory_space<vmem>>, vector<16x16x8xf32>
    %cst_151 = arith.constant 0.0245310105 : f32
    %153 = vector.broadcast %cst_151 : f32 to vector<16x16x8xf32>
    %154 = arith.mulf %153, %152 : vector<16x16x8xf32>
    %155 = arith.addf %139, %154 : vector<16x16x8xf32>
    %c4_152 = arith.constant 4 : index
    %c7_153 = arith.constant 7 : index
    %c0_154 = arith.constant 0 : index
    %156 = vector.load %arg3[%c4_152, %c7_153, %c0_154] : memref<24x24x8xf32, #tpu.memory_space<vmem>>, vector<16x16x8xf32>
    %cst_155 = arith.constant 0.0117496913 : f32
    %157 = vector.broadcast %cst_155 : f32 to vector<16x16x8xf32>
    %158 = arith.mulf %157, %156 : vector<16x16x8xf32>
    %159 = arith.addf %143, %158 : vector<16x16x8xf32>
    %c4_156 = arith.constant 4 : index
    %c8_157 = arith.constant 8 : index
    %c0_158 = arith.constant 0 : index
    %160 = vector.load %arg3[%c4_156, %c8_157, %c0_158] : memref<24x24x8xf32, #tpu.memory_space<vmem>>, vector<16x16x8xf32>
    %cst_159 = arith.constant 0.0117496913 : f32
    %161 = vector.broadcast %cst_159 : f32 to vector<16x16x8xf32>
    %162 = arith.mulf %161, %160 : vector<16x16x8xf32>
    %163 = arith.addf %147, %162 : vector<16x16x8xf32>
    %c5_160 = arith.constant 5 : index
    %c0_161 = arith.constant 0 : index
    %c0_162 = arith.constant 0 : index
    %164 = vector.load %arg3[%c5_160, %c0_161, %c0_162] : memref<24x24x8xf32, #tpu.memory_space<vmem>>, vector<16x16x8xf32>
    %cst_163 = arith.constant 0.0207650512 : f32
    %165 = vector.broadcast %cst_163 : f32 to vector<16x16x8xf32>
    %166 = arith.mulf %165, %164 : vector<16x16x8xf32>
    %167 = arith.addf %151, %166 : vector<16x16x8xf32>
    %c5_164 = arith.constant 5 : index
    %c1_165 = arith.constant 1 : index
    %c0_166 = arith.constant 0 : index
    %168 = vector.load %arg3[%c5_164, %c1_165, %c0_166] : memref<24x24x8xf32, #tpu.memory_space<vmem>>, vector<16x16x8xf32>
    %cst_167 = arith.constant 0.0228852723 : f32
    %169 = vector.broadcast %cst_167 : f32 to vector<16x16x8xf32>
    %170 = arith.mulf %169, %168 : vector<16x16x8xf32>
    %171 = arith.addf %155, %170 : vector<16x16x8xf32>
    %c5_168 = arith.constant 5 : index
    %c2_169 = arith.constant 2 : index
    %c0_170 = arith.constant 0 : index
    %172 = vector.load %arg3[%c5_168, %c2_169, %c0_170] : memref<24x24x8xf32, #tpu.memory_space<vmem>>, vector<16x16x8xf32>
    %cst_171 = arith.constant 0.0306355245 : f32
    %173 = vector.broadcast %cst_171 : f32 to vector<16x16x8xf32>
    %174 = arith.mulf %173, %172 : vector<16x16x8xf32>
    %175 = arith.addf %159, %174 : vector<16x16x8xf32>
    %c5_172 = arith.constant 5 : index
    %c3_173 = arith.constant 3 : index
    %c0_174 = arith.constant 0 : index
    %176 = vector.load %arg3[%c5_172, %c3_173, %c0_174] : memref<24x24x8xf32, #tpu.memory_space<vmem>>, vector<16x16x8xf32>
    %cst_175 = arith.constant 0.0319389701 : f32
    %177 = vector.broadcast %cst_175 : f32 to vector<16x16x8xf32>
    %178 = arith.mulf %177, %176 : vector<16x16x8xf32>
    %179 = arith.addf %163, %178 : vector<16x16x8xf32>
    %c5_176 = arith.constant 5 : index
    %c4_177 = arith.constant 4 : index
    %c0_178 = arith.constant 0 : index
    %180 = vector.load %arg3[%c5_176, %c4_177, %c0_178] : memref<24x24x8xf32, #tpu.memory_space<vmem>>, vector<16x16x8xf32>
    %cst_179 = arith.constant 0.0259324126 : f32
    %181 = vector.broadcast %cst_179 : f32 to vector<16x16x8xf32>
    %182 = arith.mulf %181, %180 : vector<16x16x8xf32>
    %183 = arith.addf %167, %182 : vector<16x16x8xf32>
    %c5_180 = arith.constant 5 : index
    %c5_181 = arith.constant 5 : index
    %c0_182 = arith.constant 0 : index
    %184 = vector.load %arg3[%c5_180, %c5_181, %c0_182] : memref<24x24x8xf32, #tpu.memory_space<vmem>>, vector<16x16x8xf32>
    %cst_183 = arith.constant 0.0259324126 : f32
    %185 = vector.broadcast %cst_183 : f32 to vector<16x16x8xf32>
    %186 = arith.mulf %185, %184 : vector<16x16x8xf32>
    %187 = arith.addf %171, %186 : vector<16x16x8xf32>
    %c5_184 = arith.constant 5 : index
    %c6_185 = arith.constant 6 : index
    %c0_186 = arith.constant 0 : index
    %188 = vector.load %arg3[%c5_184, %c6_185, %c0_186] : memref<24x24x8xf32, #tpu.memory_space<vmem>>, vector<16x16x8xf32>
    %cst_187 = arith.constant 0.0131305037 : f32
    %189 = vector.broadcast %cst_187 : f32 to vector<16x16x8xf32>
    %190 = arith.mulf %189, %188 : vector<16x16x8xf32>
    %191 = arith.addf %175, %190 : vector<16x16x8xf32>
    %c5_188 = arith.constant 5 : index
    %c7_189 = arith.constant 7 : index
    %c0_190 = arith.constant 0 : index
    %192 = vector.load %arg3[%c5_188, %c7_189, %c0_190] : memref<24x24x8xf32, #tpu.memory_space<vmem>>, vector<16x16x8xf32>
    %cst_191 = arith.constant 0.0125946412 : f32
    %193 = vector.broadcast %cst_191 : f32 to vector<16x16x8xf32>
    %194 = arith.mulf %193, %192 : vector<16x16x8xf32>
    %195 = arith.addf %179, %194 : vector<16x16x8xf32>
    %c5_192 = arith.constant 5 : index
    %c8_193 = arith.constant 8 : index
    %c0_194 = arith.constant 0 : index
    %196 = vector.load %arg3[%c5_192, %c8_193, %c0_194] : memref<24x24x8xf32, #tpu.memory_space<vmem>>, vector<16x16x8xf32>
    %cst_195 = arith.constant 0.00386791583 : f32
    %197 = vector.broadcast %cst_195 : f32 to vector<16x16x8xf32>
    %198 = arith.mulf %197, %196 : vector<16x16x8xf32>
    %199 = arith.addf %183, %198 : vector<16x16x8xf32>
    %c6_196 = arith.constant 6 : index
    %c0_197 = arith.constant 0 : index
    %c0_198 = arith.constant 0 : index
    %200 = vector.load %arg3[%c6_196, %c0_197, %c0_198] : memref<24x24x8xf32, #tpu.memory_space<vmem>>, vector<16x16x8xf32>
    %cst_199 = arith.constant 0.0259324126 : f32
    %201 = vector.broadcast %cst_199 : f32 to vector<16x16x8xf32>
    %202 = arith.mulf %201, %200 : vector<16x16x8xf32>
    %203 = arith.addf %187, %202 : vector<16x16x8xf32>
    %c6_200 = arith.constant 6 : index
    %c1_201 = arith.constant 1 : index
    %c0_202 = arith.constant 0 : index
    %204 = vector.load %arg3[%c6_200, %c1_201, %c0_202] : memref<24x24x8xf32, #tpu.memory_space<vmem>>, vector<16x16x8xf32>
    %cst_203 = arith.constant 0.0259324126 : f32
    %205 = vector.broadcast %cst_203 : f32 to vector<16x16x8xf32>
    %206 = arith.mulf %205, %204 : vector<16x16x8xf32>
    %207 = arith.addf %191, %206 : vector<16x16x8xf32>
    %c6_204 = arith.constant 6 : index
    %c2_205 = arith.constant 2 : index
    %c0_206 = arith.constant 0 : index
    %208 = vector.load %arg3[%c6_204, %c2_205, %c0_206] : memref<24x24x8xf32, #tpu.memory_space<vmem>>, vector<16x16x8xf32>
    %cst_207 = arith.constant 0.0228852723 : f32
    %209 = vector.broadcast %cst_207 : f32 to vector<16x16x8xf32>
    %210 = arith.mulf %209, %208 : vector<16x16x8xf32>
    %211 = arith.addf %195, %210 : vector<16x16x8xf32>
    %c6_208 = arith.constant 6 : index
    %c3_209 = arith.constant 3 : index
    %c0_210 = arith.constant 0 : index
    %212 = vector.load %arg3[%c6_208, %c3_209, %c0_210] : memref<24x24x8xf32, #tpu.memory_space<vmem>>, vector<16x16x8xf32>
    %cst_211 = arith.constant 0.0245310105 : f32
    %213 = vector.broadcast %cst_211 : f32 to vector<16x16x8xf32>
    %214 = arith.mulf %213, %212 : vector<16x16x8xf32>
    %215 = arith.addf %199, %214 : vector<16x16x8xf32>
    %c6_212 = arith.constant 6 : index
    %c4_213 = arith.constant 4 : index
    %c0_214 = arith.constant 0 : index
    %216 = vector.load %arg3[%c6_212, %c4_213, %c0_214] : memref<24x24x8xf32, #tpu.memory_space<vmem>>, vector<16x16x8xf32>
    %cst_215 = arith.constant 0.0131305037 : f32
    %217 = vector.broadcast %cst_215 : f32 to vector<16x16x8xf32>
    %218 = arith.mulf %217, %216 : vector<16x16x8xf32>
    %219 = arith.addf %203, %218 : vector<16x16x8xf32>
    %c6_216 = arith.constant 6 : index
    %c5_217 = arith.constant 5 : index
    %c0_218 = arith.constant 0 : index
    %220 = vector.load %arg3[%c6_216, %c5_217, %c0_218] : memref<24x24x8xf32, #tpu.memory_space<vmem>>, vector<16x16x8xf32>
    %cst_219 = arith.constant 0.0133141438 : f32
    %221 = vector.broadcast %cst_219 : f32 to vector<16x16x8xf32>
    %222 = arith.mulf %221, %220 : vector<16x16x8xf32>
    %223 = arith.addf %207, %222 : vector<16x16x8xf32>
    %c6_220 = arith.constant 6 : index
    %c6_221 = arith.constant 6 : index
    %c0_222 = arith.constant 0 : index
    %224 = vector.load %arg3[%c6_220, %c6_221, %c0_222] : memref<24x24x8xf32, #tpu.memory_space<vmem>>, vector<16x16x8xf32>
    %cst_223 = arith.constant 0.0043224697 : f32
    %225 = vector.broadcast %cst_223 : f32 to vector<16x16x8xf32>
    %226 = arith.mulf %225, %224 : vector<16x16x8xf32>
    %227 = arith.addf %211, %226 : vector<16x16x8xf32>
    %c6_224 = arith.constant 6 : index
    %c7_225 = arith.constant 7 : index
    %c0_226 = arith.constant 0 : index
    %228 = vector.load %arg3[%c6_224, %c7_225, %c0_226] : memref<24x24x8xf32, #tpu.memory_space<vmem>>, vector<16x16x8xf32>
    %cst_227 = arith.constant 0.00414606743 : f32
    %229 = vector.broadcast %cst_227 : f32 to vector<16x16x8xf32>
    %230 = arith.mulf %229, %228 : vector<16x16x8xf32>
    %231 = arith.addf %215, %230 : vector<16x16x8xf32>
    %c6_228 = arith.constant 6 : index
    %c8_229 = arith.constant 8 : index
    %c0_230 = arith.constant 0 : index
    %232 = vector.load %arg3[%c6_228, %c8_229, %c0_230] : memref<24x24x8xf32, #tpu.memory_space<vmem>>, vector<16x16x8xf32>
    %cst_231 = arith.constant 8.7511912E-4 : f32
    %233 = vector.broadcast %cst_231 : f32 to vector<16x16x8xf32>
    %234 = arith.mulf %233, %232 : vector<16x16x8xf32>
    %235 = arith.addf %219, %234 : vector<16x16x8xf32>
    %c7_232 = arith.constant 7 : index
    %c1_233 = arith.constant 1 : index
    %c0_234 = arith.constant 0 : index
    %236 = vector.load %arg3[%c7_232, %c1_233, %c0_234] : memref<24x24x8xf32, #tpu.memory_space<vmem>>, vector<16x16x8xf32>
    %cst_235 = arith.constant 0.0207650512 : f32
    %237 = vector.broadcast %cst_235 : f32 to vector<16x16x8xf32>
    %238 = arith.mulf %237, %236 : vector<16x16x8xf32>
    %239 = arith.addf %223, %238 : vector<16x16x8xf32>
    %c7_236 = arith.constant 7 : index
    %c2_237 = arith.constant 2 : index
    %c0_238 = arith.constant 0 : index
    %240 = vector.load %arg3[%c7_236, %c2_237, %c0_238] : memref<24x24x8xf32, #tpu.memory_space<vmem>>, vector<16x16x8xf32>
    %cst_239 = arith.constant 0.0117496913 : f32
    %241 = vector.broadcast %cst_239 : f32 to vector<16x16x8xf32>
    %242 = arith.mulf %241, %240 : vector<16x16x8xf32>
    %243 = arith.addf %227, %242 : vector<16x16x8xf32>
    %c7_240 = arith.constant 7 : index
    %c3_241 = arith.constant 3 : index
    %c0_242 = arith.constant 0 : index
    %244 = vector.load %arg3[%c7_240, %c3_241, %c0_242] : memref<24x24x8xf32, #tpu.memory_space<vmem>>, vector<16x16x8xf32>
    %cst_243 = arith.constant 0.0125946412 : f32
    %245 = vector.broadcast %cst_243 : f32 to vector<16x16x8xf32>
    %246 = arith.mulf %245, %244 : vector<16x16x8xf32>
    %247 = arith.addf %231, %246 : vector<16x16x8xf32>
    %c7_244 = arith.constant 7 : index
    %c4_245 = arith.constant 4 : index
    %c0_246 = arith.constant 0 : index
    %248 = vector.load %arg3[%c7_244, %c4_245, %c0_246] : memref<24x24x8xf32, #tpu.memory_space<vmem>>, vector<16x16x8xf32>
    %cst_247 = arith.constant 0.0043224697 : f32
    %249 = vector.broadcast %cst_247 : f32 to vector<16x16x8xf32>
    %250 = arith.mulf %249, %248 : vector<16x16x8xf32>
    %251 = arith.addf %235, %250 : vector<16x16x8xf32>
    %c7_248 = arith.constant 7 : index
    %c5_249 = arith.constant 5 : index
    %c0_250 = arith.constant 0 : index
    %252 = vector.load %arg3[%c7_248, %c5_249, %c0_250] : memref<24x24x8xf32, #tpu.memory_space<vmem>>, vector<16x16x8xf32>
    %cst_251 = arith.constant 0.0043224697 : f32
    %253 = vector.broadcast %cst_251 : f32 to vector<16x16x8xf32>
    %254 = arith.mulf %253, %252 : vector<16x16x8xf32>
    %255 = arith.addf %239, %254 : vector<16x16x8xf32>
    %c7_252 = arith.constant 7 : index
    %c6_253 = arith.constant 6 : index
    %c0_254 = arith.constant 0 : index
    %256 = vector.load %arg3[%c7_252, %c6_253, %c0_254] : memref<24x24x8xf32, #tpu.memory_space<vmem>>, vector<16x16x8xf32>
    %cst_255 = arith.constant 9.2511269E-4 : f32
    %257 = vector.broadcast %cst_255 : f32 to vector<16x16x8xf32>
    %258 = arith.mulf %257, %256 : vector<16x16x8xf32>
    %259 = arith.addf %243, %258 : vector<16x16x8xf32>
    %c7_256 = arith.constant 7 : index
    %c7_257 = arith.constant 7 : index
    %c0_258 = arith.constant 0 : index
    %260 = vector.load %arg3[%c7_256, %c7_257, %c0_258] : memref<24x24x8xf32, #tpu.memory_space<vmem>>, vector<16x16x8xf32>
    %cst_259 = arith.constant 9.12352697E-4 : f32
    %261 = vector.broadcast %cst_259 : f32 to vector<16x16x8xf32>
    %262 = arith.mulf %261, %260 : vector<16x16x8xf32>
    %263 = arith.addf %247, %262 : vector<16x16x8xf32>
    %c8_260 = arith.constant 8 : index
    %c2_261 = arith.constant 2 : index
    %c0_262 = arith.constant 0 : index
    %264 = vector.load %arg3[%c8_260, %c2_261, %c0_262] : memref<24x24x8xf32, #tpu.memory_space<vmem>>, vector<16x16x8xf32>
    %cst_263 = arith.constant 0.0106611336 : f32
    %265 = vector.broadcast %cst_263 : f32 to vector<16x16x8xf32>
    %266 = arith.mulf %265, %264 : vector<16x16x8xf32>
    %267 = arith.addf %251, %266 : vector<16x16x8xf32>
    %c8_264 = arith.constant 8 : index
    %c3_265 = arith.constant 3 : index
    %c0_266 = arith.constant 0 : index
    %268 = vector.load %arg3[%c8_264, %c3_265, %c0_266] : memref<24x24x8xf32, #tpu.memory_space<vmem>>, vector<16x16x8xf32>
    %cst_267 = arith.constant 0.00386791583 : f32
    %269 = vector.broadcast %cst_267 : f32 to vector<16x16x8xf32>
    %270 = arith.mulf %269, %268 : vector<16x16x8xf32>
    %271 = arith.addf %255, %270 : vector<16x16x8xf32>
    %c8_268 = arith.constant 8 : index
    %c4_269 = arith.constant 4 : index
    %c0_270 = arith.constant 0 : index
    %272 = vector.load %arg3[%c8_268, %c4_269, %c0_270] : memref<24x24x8xf32, #tpu.memory_space<vmem>>, vector<16x16x8xf32>
    %cst_271 = arith.constant 0.00414606743 : f32
    %273 = vector.broadcast %cst_271 : f32 to vector<16x16x8xf32>
    %274 = arith.mulf %273, %272 : vector<16x16x8xf32>
    %275 = arith.addf %259, %274 : vector<16x16x8xf32>
    %c8_272 = arith.constant 8 : index
    %c5_273 = arith.constant 5 : index
    %c0_274 = arith.constant 0 : index
    %276 = vector.load %arg3[%c8_272, %c5_273, %c0_274] : memref<24x24x8xf32, #tpu.memory_space<vmem>>, vector<16x16x8xf32>
    %cst_275 = arith.constant 9.12352697E-4 : f32
    %277 = vector.broadcast %cst_275 : f32 to vector<16x16x8xf32>
    %278 = arith.mulf %277, %276 : vector<16x16x8xf32>
    %279 = arith.addf %263, %278 : vector<16x16x8xf32>
    %c8_276 = arith.constant 8 : index
    %c6_277 = arith.constant 6 : index
    %c0_278 = arith.constant 0 : index
    %280 = vector.load %arg3[%c8_276, %c6_277, %c0_278] : memref<24x24x8xf32, #tpu.memory_space<vmem>>, vector<16x16x8xf32>
    %cst_279 = arith.constant 9.2511269E-4 : f32
    %281 = vector.broadcast %cst_279 : f32 to vector<16x16x8xf32>
    %282 = arith.mulf %281, %280 : vector<16x16x8xf32>
    %283 = arith.addf %267, %282 : vector<16x16x8xf32>
    %284 = arith.addf %283, %271 : vector<16x16x8xf32>
    %285 = arith.addf %275, %279 : vector<16x16x8xf32>
    %286 = arith.addf %284, %285 : vector<16x16x8xf32>
    %c0_280 = arith.constant 0 : index
    %c0_281 = arith.constant 0 : index
    %c0_282 = arith.constant 0 : index
    %287 = vector.load %arg2[%c0_280, %c0_281, %c0_282] : memref<16x16x8xf32, #tpu.memory_space<vmem>>, vector<16x16x8xf32>
    tpu.vector_store %arg2[%c0_280, %c0_281, %c0_282], %286 {strides = array<i32>} : memref<16x16x8xf32, #tpu.memory_space<vmem>>, vector<16x16x8xf32>,
    return
  }
  func.func @transform_0(%arg0: i32) -> (i32, i32, i32) {
    %c0_i32 = arith.constant 0 : i32
    %c0_i32_0 = arith.constant 0 : i32
    %c0_i32_1 = arith.constant 0 : i32
    return %c0_i32, %c0_i32_0, %arg0 : i32, i32, i32
  }
  func.func @transform_1(%arg0: i32) -> (i32, i32, i32) {
    %c0_i32 = arith.constant 0 : i32
    %c0_i32_0 = arith.constant 0 : i32
    %c0_i32_1 = arith.constant 0 : i32
    return %c0_i32, %c0_i32_0, %arg0 : i32, i32, i32
  }
}

</mosaic_0001>

<llo_original>
// kernel: tpu_custom_call.1
$region0: #{tpu_custom_call.1}
  #allocation0 [shape = 'u32[]', space=smem, size = 0x4, offset = 0x4, fixed_abs, tag = 'smem constant byte address 0x4 - core index']
  #allocation1 [shape = 'u32[144,128]{1,0:T(1,128)}', space=vmem, size = 0x12000, scoped, tag = 'internal scratch']
  #allocation2 [shape = 'f32[24,24,8]{2,1,0:T(8,128)}', space=vmem, size = 0x48000, scoped, tag = 'scratch operand']
  %s0 = inlined_call_operand.vmem [shape: f32[16,16,8], index: 0, kind: input, shape index: {}]
  %s1 = inlined_call_operand.vmem [shape: f32[16,16,8], index: 1, kind: output, shape index: {}]
  %s2 = sld [smem:[#allocation0]]
  $region14: #{tpu_custom_call.1} parent=0
    _
  %s4 = ssub.s32 1, %s2
  %s5 = scalar_select 0, %s4, %s2
  // Predicated region
  $region2: #{tpu_custom_call.1} parent=0 // pred_check
    _
  $region3: #{tpu_custom_call.1} parent=0 // pred_check_branch
    %7 = sbr.rel (0) target = $region5
  $region4: #{tpu_custom_call.1} parent=0 // pred_region
    _
  $region5: #{tpu_custom_call.1} parent=0 // pred_fallthru
    _
  %vm8 = vcmask 64512
  %9 = vst.msk [vmem:[#allocation2] sm:$0xff] %vm8, 0.0
  %10 = vst.msk [vmem:[#allocation2 + $0x8] sm:$0xff] %vm8, 0.0
  %11 = vst.msk [vmem:[#allocation2 + $0x10] sm:$0xff] %vm8, 0.0
  %12 = vst.msk [vmem:[#allocation2 + $0x18] sm:$0xff] %vm8, 0.0
  %13 = vst.msk [vmem:[#allocation2 + $0x20] sm:$0xff] %vm8, 0.0
  %14 = vst.msk [vmem:[#allocation2 + $0x28] sm:$0xff] %vm8, 0.0
  %15 = vst.msk [vmem:[#allocation2 + $0x30] sm:$0xff] %vm8, 0.0
  %16 = vst.msk [vmem:[#allocation2 + $0x38] sm:$0xff] %vm8, 0.0
  %17 = vst.msk [vmem:[#allocation2 + $0x40] sm:$0xff] %vm8, 0.0
  %18 = vst.msk [vmem:[#allocation2 + $0x48] sm:$0xff] %vm8, 0.0
  %19 = vst.msk [vmem:[#allocation2 + $0x50] sm:$0xff] %vm8, 0.0
  %20 = vst.msk [vmem:[#allocation2 + $0x58] sm:$0xff] %vm8, 0.0
  %21 = vst.msk [vmem:[#allocation2 + $0x60] sm:$0xff] %vm8, 0.0
  %22 = vst.msk [vmem:[#allocation2 + $0x68] sm:$0xff] %vm8, 0.0
  %23 = vst.msk [vmem:[#allocation2 + $0x70] sm:$0xff] %vm8, 0.0
  %24 = vst.msk [vmem:[#allocation2 + $0x78] sm:$0xff] %vm8, 0.0
  %25 = vst.msk [vmem:[#allocation2 + $0x80] sm:$0xff] %vm8, 0.0
  %26 = vst.msk [vmem:[#allocation2 + $0x88] sm:$0xff] %vm8, 0.0
  %27 = vst.msk [vmem:[#allocation2 + $0x90] sm:$0xff] %vm8, 0.0
  %28 = vst.msk [vmem:[#allocation2 + $0x98] sm:$0xff] %vm8, 0.0
  %29 = vst.msk [vmem:[#allocation2 + $0xa0] sm:$0xff] %vm8, 0.0
  %30 = vst.msk [vmem:[#allocation2 + $0xa8] sm:$0xff] %vm8, 0.0
  %31 = vst.msk [vmem:[#allocation2 + $0xb0] sm:$0xff] %vm8, 0.0
  %32 = vst.msk [vmem:[#allocation2 + $0xb8] sm:$0xff] %vm8, 0.0
  %33 = vst.msk [vmem:[#allocation2 + $0xc0] sm:$0xff] %vm8, 0.0
  %34 = vst.msk [vmem:[#allocation2 + $0xc8] sm:$0xff] %vm8, 0.0
  %35 = vst.msk [vmem:[#allocation2 + $0xd0] sm:$0xff] %vm8, 0.0
  %36 = vst.msk [vmem:[#allocation2 + $0xd8] sm:$0xff] %vm8, 0.0
  %37 = vst.msk [vmem:[#allocation2 + $0xe0] sm:$0xff] %vm8, 0.0
  %38 = vst.msk [vmem:[#allocation2 + $0xe8] sm:$0xff] %vm8, 0.0
  %39 = vst.msk [vmem:[#allocation2 + $0xf0] sm:$0xff] %vm8, 0.0
  %40 = vst.msk [vmem:[#allocation2 + $0xf8] sm:$0xff] %vm8, 0.0
  %41 = vst.msk [vmem:[#allocation2 + $0x100] sm:$0xff] %vm8, 0.0
  %42 = vst.msk [vmem:[#allocation2 + $0x108] sm:$0xff] %vm8, 0.0
  %43 = vst.msk [vmem:[#allocation2 + $0x110] sm:$0xff] %vm8, 0.0
  %44 = vst.msk [vmem:[#allocation2 + $0x118] sm:$0xff] %vm8, 0.0
  %45 = vst.msk [vmem:[#allocation2 + $0x120] sm:$0xff] %vm8, 0.0
  %46 = vst.msk [vmem:[#allocation2 + $0x128] sm:$0xff] %vm8, 0.0
  %47 = vst.msk [vmem:[#allocation2 + $0x130] sm:$0xff] %vm8, 0.0
  %48 = vst.msk [vmem:[#allocation2 + $0x138] sm:$0xff] %vm8, 0.0
  %49 = vst.msk [vmem:[#allocation2 + $0x140] sm:$0xff] %vm8, 0.0
  %50 = vst.msk [vmem:[#allocation2 + $0x148] sm:$0xff] %vm8, 0.0
  %51 = vst.msk [vmem:[#allocation2 + $0x150] sm:$0xff] %vm8, 0.0
  %52 = vst.msk [vmem:[#allocation2 + $0x158] sm:$0xff] %vm8, 0.0
  %53 = vst.msk [vmem:[#allocation2 + $0x160] sm:$0xff] %vm8, 0.0
  %54 = vst.msk [vmem:[#allocation2 + $0x168] sm:$0xff] %vm8, 0.0
  %55 = vst.msk [vmem:[#allocation2 + $0x170] sm:$0xff] %vm8, 0.0
  %56 = vst.msk [vmem:[#allocation2 + $0x178] sm:$0xff] %vm8, 0.0
  %57 = vst.msk [vmem:[#allocation2 + $0x180] sm:$0xff] %vm8, 0.0
  %58 = vst.msk [vmem:[#allocation2 + $0x188] sm:$0xff] %vm8, 0.0
  %59 = vst.msk [vmem:[#allocation2 + $0x190] sm:$0xff] %vm8, 0.0
  %60 = vst.msk [vmem:[#allocation2 + $0x198] sm:$0xff] %vm8, 0.0
  %61 = vst.msk [vmem:[#allocation2 + $0x1a0] sm:$0xff] %vm8, 0.0
  %62 = vst.msk [vmem:[#allocation2 + $0x1a8] sm:$0xff] %vm8, 0.0
  %63 = vst.msk [vmem:[#allocation2 + $0x1b0] sm:$0xff] %vm8, 0.0
  %64 = vst.msk [vmem:[#allocation2 + $0x1b8] sm:$0xff] %vm8, 0.0
  %65 = vst.msk [vmem:[#allocation2 + $0x1c0] sm:$0xff] %vm8, 0.0
  %66 = vst.msk [vmem:[#allocation2 + $0x1c8] sm:$0xff] %vm8, 0.0
  %67 = vst.msk [vmem:[#allocation2 + $0x1d0] sm:$0xff] %vm8, 0.0
  %68 = vst.msk [vmem:[#allocation2 + $0x1d8] sm:$0xff] %vm8, 0.0
  %69 = vst.msk [vmem:[#allocation2 + $0x1e0] sm:$0xff] %vm8, 0.0
  %70 = vst.msk [vmem:[#allocation2 + $0x1e8] sm:$0xff] %vm8, 0.0
  %71 = vst.msk [vmem:[#allocation2 + $0x1f0] sm:$0xff] %vm8, 0.0
  %72 = vst.msk [vmem:[#allocation2 + $0x1f8] sm:$0xff] %vm8, 0.0
  %73 = vst.msk [vmem:[#allocation2 + $0x200] sm:$0xff] %vm8, 0.0
  %74 = vst.msk [vmem:[#allocation2 + $0x208] sm:$0xff] %vm8, 0.0
  %75 = vst.msk [vmem:[#allocation2 + $0x210] sm:$0xff] %vm8, 0.0
  %76 = vst.msk [vmem:[#allocation2 + $0x218] sm:$0xff] %vm8, 0.0
  %77 = vst.msk [vmem:[#allocation2 + $0x220] sm:$0xff] %vm8, 0.0
  %78 = vst.msk [vmem:[#allocation2 + $0x228] sm:$0xff] %vm8, 0.0
  %79 = vst.msk [vmem:[#allocation2 + $0x230] sm:$0xff] %vm8, 0.0
  %80 = vst.msk [vmem:[#allocation2 + $0x238] sm:$0xff] %vm8, 0.0
  %v81 = vld [vmem:[%s0] sm:$0xff]
  %v82 = vld [vmem:[%s0 + $0x8] sm:$0xff]
  %v83 = vld [vmem:[%s0 + $0x10] sm:$0xff]
  %v84 = vld [vmem:[%s0 + $0x18] sm:$0xff]
  %v85 = vld [vmem:[%s0 + $0x20] sm:$0xff]
  %v86 = vld [vmem:[%s0 + $0x28] sm:$0xff]
  %v87 = vld [vmem:[%s0 + $0x30] sm:$0xff]
  %v88 = vld [vmem:[%s0 + $0x38] sm:$0xff]
  %v89 = vld [vmem:[%s0 + $0x40] sm:$0xff]
  %v90 = vld [vmem:[%s0 + $0x48] sm:$0xff]
  %v91 = vld [vmem:[%s0 + $0x50] sm:$0xff]
  %v92 = vld [vmem:[%s0 + $0x58] sm:$0xff]
  %v93 = vld [vmem:[%s0 + $0x60] sm:$0xff]
  %v94 = vld [vmem:[%s0 + $0x68] sm:$0xff]
  %v95 = vld [vmem:[%s0 + $0x70] sm:$0xff]
  %v96 = vld [vmem:[%s0 + $0x78] sm:$0xff]
  %v97 = vld [vmem:[%s0 + $0x80] sm:$0xff]
  %v98 = vld [vmem:[%s0 + $0x88] sm:$0xff]
  %v99 = vld [vmem:[%s0 + $0x90] sm:$0xff]
  %v100 = vld [vmem:[%s0 + $0x98] sm:$0xff]
  %v101 = vld [vmem:[%s0 + $0xa0] sm:$0xff]
  %v102 = vld [vmem:[%s0 + $0xa8] sm:$0xff]
  %v103 = vld [vmem:[%s0 + $0xb0] sm:$0xff]
  %v104 = vld [vmem:[%s0 + $0xb8] sm:$0xff]
  %v105 = vld [vmem:[%s0 + $0xc0] sm:$0xff]
  %v106 = vld [vmem:[%s0 + $0xc8] sm:$0xff]
  %v107 = vld [vmem:[%s0 + $0xd0] sm:$0xff]
  %v108 = vld [vmem:[%s0 + $0xd8] sm:$0xff]
  %v109 = vld [vmem:[%s0 + $0xe0] sm:$0xff]
  %v110 = vld [vmem:[%s0 + $0xe8] sm:$0xff]
  %v111 = vld [vmem:[%s0 + $0xf0] sm:$0xff]
  %v112 = vld [vmem:[%s0 + $0xf8] sm:$0xff]
  %s113 = scalar_lea.vmem [#allocation2], 96
  %114 = vst.msk [vmem:[%s113 + $0x4] sm:$0xff] %vm8, %v81
  %115 = vst.msk [vmem:[%s113 + $0xc] sm:$0xff] %vm8, %v82
  %116 = vst.msk [vmem:[%s113 + $0x1c] sm:$0xff] %vm8, %v83
  %117 = vst.msk [vmem:[%s113 + $0x24] sm:$0xff] %vm8, %v84
  %118 = vst.msk [vmem:[%s113 + $0x34] sm:$0xff] %vm8, %v85
  %119 = vst.msk [vmem:[%s113 + $0x3c] sm:$0xff] %vm8, %v86
  %120 = vst.msk [vmem:[%s113 + $0x4c] sm:$0xff] %vm8, %v87
  %121 = vst.msk [vmem:[%s113 + $0x54] sm:$0xff] %vm8, %v88
  %122 = vst.msk [vmem:[%s113 + $0x64] sm:$0xff] %vm8, %v89
  %123 = vst.msk [vmem:[%s113 + $0x6c] sm:$0xff] %vm8, %v90
  %124 = vst.msk [vmem:[%s113 + $0x7c] sm:$0xff] %vm8, %v91
  %125 = vst.msk [vmem:[%s113 + $0x84] sm:$0xff] %vm8, %v92
  %126 = vst.msk [vmem:[%s113 + $0x94] sm:$0xff] %vm8, %v93
  %127 = vst.msk [vmem:[%s113 + $0x9c] sm:$0xff] %vm8, %v94
  %128 = vst.msk [vmem:[%s113 + $0xac] sm:$0xff] %vm8, %v95
  %129 = vst.msk [vmem:[%s113 + $0xb4] sm:$0xff] %vm8, %v96
  %130 = vst.msk [vmem:[%s113 + $0xc4] sm:$0xff] %vm8, %v97
  %131 = vst.msk [vmem:[%s113 + $0xcc] sm:$0xff] %vm8, %v98
  %132 = vst.msk [vmem:[%s113 + $0xdc] sm:$0xff] %vm8, %v99
  %133 = vst.msk [vmem:[%s113 + $0xe4] sm:$0xff] %vm8, %v100
  %134 = vst.msk [vmem:[%s113 + $0xf4] sm:$0xff] %vm8, %v101
  %135 = vst.msk [vmem:[%s113 + $0xfc] sm:$0xff] %vm8, %v102
  %136 = vst.msk [vmem:[%s113 + $0x10c] sm:$0xff] %vm8, %v103
  %137 = vst.msk [vmem:[%s113 + $0x114] sm:$0xff] %vm8, %v104
  %138 = vst.msk [vmem:[%s113 + $0x124] sm:$0xff] %vm8, %v105
  %139 = vst.msk [vmem:[%s113 + $0x12c] sm:$0xff] %vm8, %v106
  %140 = vst.msk [vmem:[%s113 + $0x13c] sm:$0xff] %vm8, %v107
  %141 = vst.msk [vmem:[%s113 + $0x144] sm:$0xff] %vm8, %v108
  %142 = vst.msk [vmem:[%s113 + $0x154] sm:$0xff] %vm8, %v109
  %143 = vst.msk [vmem:[%s113 + $0x15c] sm:$0xff] %vm8, %v110
  %144 = vst.msk [vmem:[%s113 + $0x16c] sm:$0xff] %vm8, %v111
  %145 = vst.msk [vmem:[%s113 + $0x174] sm:$0xff] %vm8, %v112
  %v146 = vld [vmem:[#allocation2 + $0x2] sm:$0xff]
  %v147 = vld [vmem:[#allocation2 + $0xa] sm:$0xff]
  %v148 = vld [vmem:[#allocation2 + $0x1a] sm:$0xff]
  %v149 = vld [vmem:[#allocation2 + $0x22] sm:$0xff]
  %v150 = vld [vmem:[#allocation2 + $0x32] sm:$0xff]
  %v151 = vld [vmem:[#allocation2 + $0x3a] sm:$0xff]
  %v152 = vld [vmem:[#allocation2 + $0x4a] sm:$0xff]
  %v153 = vld [vmem:[#allocation2 + $0x52] sm:$0xff]
  %v154 = vld [vmem:[#allocation2 + $0x62] sm:$0xff]
  %v155 = vld [vmem:[#allocation2 + $0x6a] sm:$0xff]
  %v156 = vld [vmem:[#allocation2 + $0x7a] sm:$0xff]
  %v157 = vld [vmem:[#allocation2 + $0x82] sm:$0xff]
  %v158 = vld [vmem:[#allocation2 + $0x92] sm:$0xff]
  %v159 = vld [vmem:[#allocation2 + $0x9a] sm:$0xff]
  %v160 = vld [vmem:[#allocation2 + $0xaa] sm:$0xff]
  %v161 = vld [vmem:[#allocation2 + $0xb2] sm:$0xff]
  %v162 = vld [vmem:[#allocation2 + $0xc2] sm:$0xff]
  %v163 = vld [vmem:[#allocation2 + $0xca] sm:$0xff]
  %v164 = vld [vmem:[#allocation2 + $0xda] sm:$0xff]
  %v165 = vld [vmem:[#allocation2 + $0xe2] sm:$0xff]
  %v166 = vld [vmem:[#allocation2 + $0xf2] sm:$0xff]
  %v167 = vld [vmem:[#allocation2 + $0xfa] sm:$0xff]
  %v168 = vld [vmem:[#allocation2 + $0x10a] sm:$0xff]
  %v169 = vld [vmem:[#allocation2 + $0x112] sm:$0xff]
  %v170 = vld [vmem:[#allocation2 + $0x122] sm:$0xff]
  %v171 = vld [vmem:[#allocation2 + $0x12a] sm:$0xff]
  %v172 = vld [vmem:[#allocation2 + $0x13a] sm:$0xff]
  %v173 = vld [vmem:[#allocation2 + $0x142] sm:$0xff]
  %v174 = vld [vmem:[#allocation2 + $0x152] sm:$0xff]
  %v175 = vld [vmem:[#allocation2 + $0x15a] sm:$0xff]
  %v176 = vld [vmem:[#allocation2 + $0x16a] sm:$0xff]
  %v177 = vld [vmem:[#allocation2 + $0x172] sm:$0xff]
  %v178 = vmul.f32 %v146, 0.0009251127
  %v179 = vmul.f32 %v147, 0.0009251127
  %v180 = vmul.f32 %v148, 0.0009251127
  %v181 = vmul.f32 %v149, 0.0009251127
  %v182 = vmul.f32 %v150, 0.0009251127
  %v183 = vmul.f32 %v151, 0.0009251127
  %v184 = vmul.f32 %v152, 0.0009251127
  %v185 = vmul.f32 %v153, 0.0009251127
  %v186 = vmul.f32 %v154, 0.0009251127
  %v187 = vmul.f32 %v155, 0.0009251127
  %v188 = vmul.f32 %v156, 0.0009251127
  %v189 = vmul.f32 %v157, 0.0009251127
  %v190 = vmul.f32 %v158, 0.0009251127
  %v191 = vmul.f32 %v159, 0.0009251127
  %v192 = vmul.f32 %v160, 0.0009251127
  %v193 = vmul.f32 %v161, 0.0009251127
  %v194 = vmul.f32 %v162, 0.0009251127
  %v195 = vmul.f32 %v163, 0.0009251127
  %v196 = vmul.f32 %v164, 0.0009251127
  %v197 = vmul.f32 %v165, 0.0009251127
  %v198 = vmul.f32 %v166, 0.0009251127
  %v199 = vmul.f32 %v167, 0.0009251127
  %v200 = vmul.f32 %v168, 0.0009251127
  %v201 = vmul.f32 %v169, 0.0009251127
  %v202 = vmul.f32 %v170, 0.0009251127
  %v203 = vmul.f32 %v171, 0.0009251127
  %v204 = vmul.f32 %v172, 0.0009251127
  %v205 = vmul.f32 %v173, 0.0009251127
  %v206 = vmul.f32 %v174, 0.0009251127
  %v207 = vmul.f32 %v175, 0.0009251127
  %v208 = vmul.f32 %v176, 0.0009251127
  %v209 = vmul.f32 %v177, 0.0009251127
  %v210 = vadd.f32 %v178, 0.0
  %v211 = vadd.f32 %v179, 0.0
  %v212 = vadd.f32 %v180, 0.0
  %v213 = vadd.f32 %v181, 0.0
  %v214 = vadd.f32 %v182, 0.0
  %v215 = vadd.f32 %v183, 0.0
  %v216 = vadd.f32 %v184, 0.0
  %v217 = vadd.f32 %v185, 0.0
  %v218 = vadd.f32 %v186, 0.0
  %v219 = vadd.f32 %v187, 0.0
  %v220 = vadd.f32 %v188, 0.0
  %v221 = vadd.f32 %v189, 0.0
  %v222 = vadd.f32 %v190, 0.0
  %v223 = vadd.f32 %v191, 0.0
  %v224 = vadd.f32 %v192, 0.0
  %v225 = vadd.f32 %v193, 0.0
  %v226 = vadd.f32 %v194, 0.0
  %v227 = vadd.f32 %v195, 0.0
  %v228 = vadd.f32 %v196, 0.0
  %v229 = vadd.f32 %v197, 0.0
  %v230 = vadd.f32 %v198, 0.0
  %v231 = vadd.f32 %v199, 0.0
  %v232 = vadd.f32 %v200, 0.0
  %v233 = vadd.f32 %v201, 0.0
  %v234 = vadd.f32 %v202, 0.0
  %v235 = vadd.f32 %v203, 0.0
  %v236 = vadd.f32 %v204, 0.0
  %v237 = vadd.f32 %v205, 0.0
  %v238 = vadd.f32 %v206, 0.0
  %v239 = vadd.f32 %v207, 0.0
  %v240 = vadd.f32 %v208, 0.0
  %v241 = vadd.f32 %v209, 0.0
  %v242 = vld [vmem:[#allocation2 + $0x3] sm:$0xff]
  %v243 = vld [vmem:[#allocation2 + $0xb] sm:$0xff]
  %v244 = vld [vmem:[#allocation2 + $0x1b] sm:$0xff]
  %v245 = vld [vmem:[#allocation2 + $0x23] sm:$0xff]
  %v246 = vld [vmem:[#allocation2 + $0x33] sm:$0xff]
  %v247 = vld [vmem:[#allocation2 + $0x3b] sm:$0xff]
  %v248 = vld [vmem:[#allocation2 + $0x4b] sm:$0xff]
  %v249 = vld [vmem:[#allocation2 + $0x53] sm:$0xff]
  %v250 = vld [vmem:[#allocation2 + $0x63] sm:$0xff]
  %v251 = vld [vmem:[#allocation2 + $0x6b] sm:$0xff]
  %v252 = vld [vmem:[#allocation2 + $0x7b] sm:$0xff]
  %v253 = vld [vmem:[#allocation2 + $0x83] sm:$0xff]
  %v254 = vld [vmem:[#allocation2 + $0x93] sm:$0xff]
  %v255 = vld [vmem:[#allocation2 + $0x9b] sm:$0xff]
  %v256 = vld [vmem:[#allocation2 + $0xab] sm:$0xff]
  %v257 = vld [vmem:[#allocation2 + $0xb3] sm:$0xff]
  %v258 = vld [vmem:[#allocation2 + $0xc3] sm:$0xff]
  %v259 = vld [vmem:[#allocation2 + $0xcb] sm:$0xff]
  %v260 = vld [vmem:[#allocation2 + $0xdb] sm:$0xff]
  %v261 = vld [vmem:[#allocation2 + $0xe3] sm:$0xff]
  %v262 = vld [vmem:[#allocation2 + $0xf3] sm:$0xff]
  %v263 = vld [vmem:[#allocation2 + $0xfb] sm:$0xff]
  %v264 = vld [vmem:[#allocation2 + $0x10b] sm:$0xff]
  %v265 = vld [vmem:[#allocation2 + $0x113] sm:$0xff]
  %v266 = vld [vmem:[#allocation2 + $0x123] sm:$0xff]
  %v267 = vld [vmem:[#allocation2 + $0x12b] sm:$0xff]
  %v268 = vld [vmem:[#allocation2 + $0x13b] sm:$0xff]
  %v269 = vld [vmem:[#allocation2 + $0x143] sm:$0xff]
  %v270 = vld [vmem:[#allocation2 + $0x153] sm:$0xff]
  %v271 = vld [vmem:[#allocation2 + $0x15b] sm:$0xff]
  %v272 = vld [vmem:[#allocation2 + $0x16b] sm:$0xff]
  %v273 = vld [vmem:[#allocation2 + $0x173] sm:$0xff]
  %v274 = vmul.f32 %v242, 0.0009123527
  %v275 = vmul.f32 %v243, 0.0009123527
  %v276 = vmul.f32 %v244, 0.0009123527
  %v277 = vmul.f32 %v245, 0.0009123527
  %v278 = vmul.f32 %v246, 0.0009123527
  %v279 = vmul.f32 %v247, 0.0009123527
  %v280 = vmul.f32 %v248, 0.0009123527
  %v281 = vmul.f32 %v249, 0.0009123527
  %v282 = vmul.f32 %v250, 0.0009123527
  %v283 = vmul.f32 %v251, 0.0009123527
  %v284 = vmul.f32 %v252, 0.0009123527
  %v285 = vmul.f32 %v253, 0.0009123527
  %v286 = vmul.f32 %v254, 0.0009123527
  %v287 = vmul.f32 %v255, 0.0009123527
  %v288 = vmul.f32 %v256, 0.0009123527
  %v289 = vmul.f32 %v257, 0.0009123527
  %v290 = vmul.f32 %v258, 0.0009123527
  %v291 = vmul.f32 %v259, 0.0009123527
  %v292 = vmul.f32 %v260, 0.0009123527
  %v293 = vmul.f32 %v261, 0.0009123527
  %v294 = vmul.f32 %v262, 0.0009123527
  %v295 = vmul.f32 %v263, 0.0009123527
  %v296 = vmul.f32 %v264, 0.0009123527
  %v297 = vmul.f32 %v265, 0.0009123527
  %v298 = vmul.f32 %v266, 0.0009123527
  %v299 = vmul.f32 %v267, 0.0009123527
  %v300 = vmul.f32 %v268, 0.0009123527
  %v301 = vmul.f32 %v269, 0.0009123527
  %v302 = vmul.f32 %v270, 0.0009123527
  %v303 = vmul.f32 %v271, 0.0009123527
  %v304 = vmul.f32 %v272, 0.0009123527
  %v305 = vmul.f32 %v273, 0.0009123527
  %v306 = vadd.f32 %v274, 0.0
  %v307 = vadd.f32 %v275, 0.0
  %v308 = vadd.f32 %v276, 0.0
  %v309 = vadd.f32 %v277, 0.0
  %v310 = vadd.f32 %v278, 0.0
  %v311 = vadd.f32 %v279, 0.0
  %v312 = vadd.f32 %v280, 0.0
  %v313 = vadd.f32 %v281, 0.0
  %v314 = vadd.f32 %v282, 0.0
  %v315 = vadd.f32 %v283, 0.0
  %v316 = vadd.f32 %v284, 0.0
  %v317 = vadd.f32 %v285, 0.0
  %v318 = vadd.f32 %v286, 0.0
  %v319 = vadd.f32 %v287, 0.0
  %v320 = vadd.f32 %v288, 0.0
  %v321 = vadd.f32 %v289, 0.0
  %v322 = vadd.f32 %v290, 0.0
  %v323 = vadd.f32 %v291, 0.0
  %v324 = vadd.f32 %v292, 0.0
  %v325 = vadd.f32 %v293, 0.0
  %v326 = vadd.f32 %v294, 0.0
  %v327 = vadd.f32 %v295, 0.0
  %v328 = vadd.f32 %v296, 0.0
  %v329 = vadd.f32 %v297, 0.0
  %v330 = vadd.f32 %v298, 0.0
  %v331 = vadd.f32 %v299, 0.0
  %v332 = vadd.f32 %v300, 0.0
  %v333 = vadd.f32 %v301, 0.0
  %v334 = vadd.f32 %v302, 0.0
  %v335 = vadd.f32 %v303, 0.0
  %v336 = vadd.f32 %v304, 0.0
  %v337 = vadd.f32 %v305, 0.0
  %v338 = vld [vmem:[#allocation2 + $0x4] sm:$0xff]
  %v339 = vld [vmem:[#allocation2 + $0xc] sm:$0xff]
  %v340 = vld [vmem:[#allocation2 + $0x1c] sm:$0xff]
  %v341 = vld [vmem:[#allocation2 + $0x24] sm:$0xff]
  %v342 = vld [vmem:[#allocation2 + $0x34] sm:$0xff]
  %v343 = vld [vmem:[#allocation2 + $0x3c] sm:$0xff]
  %v344 = vld [vmem:[#allocation2 + $0x4c] sm:$0xff]
  %v345 = vld [vmem:[#allocation2 + $0x54] sm:$0xff]
  %v346 = vld [vmem:[#allocation2 + $0x64] sm:$0xff]
  %v347 = vld [vmem:[#allocation2 + $0x6c] sm:$0xff]
  %v348 = vld [vmem:[#allocation2 + $0x7c] sm:$0xff]
  %v349 = vld [vmem:[#allocation2 + $0x84] sm:$0xff]
  %v350 = vld [vmem:[#allocation2 + $0x94] sm:$0xff]
  %v351 = vld [vmem:[#allocation2 + $0x9c] sm:$0xff]
  %v352 = vld [vmem:[#allocation2 + $0xac] sm:$0xff]
  %v353 = vld [vmem:[#allocation2 + $0xb4] sm:$0xff]
  %v354 = vld [vmem:[#allocation2 + $0xc4] sm:$0xff]
  %v355 = vld [vmem:[#allocation2 + $0xcc] sm:$0xff]
  %v356 = vld [vmem:[#allocation2 + $0xdc] sm:$0xff]
  %v357 = vld [vmem:[#allocation2 + $0xe4] sm:$0xff]
  %v358 = vld [vmem:[#allocation2 + $0xf4] sm:$0xff]
  %v359 = vld [vmem:[#allocation2 + $0xfc] sm:$0xff]
  %v360 = vld [vmem:[#allocation2 + $0x10c] sm:$0xff]
  %v361 = vld [vmem:[#allocation2 + $0x114] sm:$0xff]
  %v362 = vld [vmem:[#allocation2 + $0x124] sm:$0xff]
  %v363 = vld [vmem:[#allocation2 + $0x12c] sm:$0xff]
  %v364 = vld [vmem:[#allocation2 + $0x13c] sm:$0xff]
  %v365 = vld [vmem:[#allocation2 + $0x144] sm:$0xff]
  %v366 = vld [vmem:[#allocation2 + $0x154] sm:$0xff]
  %v367 = vld [vmem:[#allocation2 + $0x15c] sm:$0xff]
  %v368 = vld [vmem:[#allocation2 + $0x16c] sm:$0xff]
  %v369 = vld [vmem:[#allocation2 + $0x174] sm:$0xff]
  %v370 = vmul.f32 %v338, 0.0041460674
  %v371 = vmul.f32 %v339, 0.0041460674
  %v372 = vmul.f32 %v340, 0.0041460674
  %v373 = vmul.f32 %v341, 0.0041460674
  %v374 = vmul.f32 %v342, 0.0041460674
  %v375 = vmul.f32 %v343, 0.0041460674
  %v376 = vmul.f32 %v344, 0.0041460674
  %v377 = vmul.f32 %v345, 0.0041460674
  %v378 = vmul.f32 %v346, 0.0041460674
  %v379 = vmul.f32 %v347, 0.0041460674
  %v380 = vmul.f32 %v348, 0.0041460674
  %v381 = vmul.f32 %v349, 0.0041460674
  %v382 = vmul.f32 %v350, 0.0041460674
  %v383 = vmul.f32 %v351, 0.0041460674
  %v384 = vmul.f32 %v352, 0.0041460674
  %v385 = vmul.f32 %v353, 0.0041460674
  %v386 = vmul.f32 %v354, 0.0041460674
  %v387 = vmul.f32 %v355, 0.0041460674
  %v388 = vmul.f32 %v356, 0.0041460674
  %v389 = vmul.f32 %v357, 0.0041460674
  %v390 = vmul.f32 %v358, 0.0041460674
  %v391 = vmul.f32 %v359, 0.0041460674
  %v392 = vmul.f32 %v360, 0.0041460674
  %v393 = vmul.f32 %v361, 0.0041460674
  %v394 = vmul.f32 %v362, 0.0041460674
  %v395 = vmul.f32 %v363, 0.0041460674
  %v396 = vmul.f32 %v364, 0.0041460674
  %v397 = vmul.f32 %v365, 0.0041460674
  %v398 = vmul.f32 %v366, 0.0041460674
  %v399 = vmul.f32 %v367, 0.0041460674
  %v400 = vmul.f32 %v368, 0.0041460674
  %v401 = vmul.f32 %v369, 0.0041460674
  %v402 = vadd.f32 %v370, 0.0
  %v403 = vadd.f32 %v371, 0.0
  %v404 = vadd.f32 %v372, 0.0
  %v405 = vadd.f32 %v373, 0.0
  %v406 = vadd.f32 %v374, 0.0
  %v407 = vadd.f32 %v375, 0.0
  %v408 = vadd.f32 %v376, 0.0
  %v409 = vadd.f32 %v377, 0.0
  %v410 = vadd.f32 %v378, 0.0
  %v411 = vadd.f32 %v379, 0.0
  %v412 = vadd.f32 %v380, 0.0
  %v413 = vadd.f32 %v381, 0.0
  %v414 = vadd.f32 %v382, 0.0
  %v415 = vadd.f32 %v383, 0.0
  %v416 = vadd.f32 %v384, 0.0
  %v417 = vadd.f32 %v385, 0.0
  %v418 = vadd.f32 %v386, 0.0
  %v419 = vadd.f32 %v387, 0.0
  %v420 = vadd.f32 %v388, 0.0
  %v421 = vadd.f32 %v389, 0.0
  %v422 = vadd.f32 %v390, 0.0
  %v423 = vadd.f32 %v391, 0.0
  %v424 = vadd.f32 %v392, 0.0
  %v425 = vadd.f32 %v393, 0.0
  %v426 = vadd.f32 %v394, 0.0
  %v427 = vadd.f32 %v395, 0.0
  %v428 = vadd.f32 %v396, 0.0
  %v429 = vadd.f32 %v397, 0.0
  %v430 = vadd.f32 %v398, 0.0
  %v431 = vadd.f32 %v399, 0.0
  %v432 = vadd.f32 %v400, 0.0
  %v433 = vadd.f32 %v401, 0.0
  %v434 = vld [vmem:[#allocation2 + $0x5] sm:$0xff]
  %v435 = vld [vmem:[#allocation2 + $0xd] sm:$0xff]
  %v436 = vld [vmem:[#allocation2 + $0x1d] sm:$0xff]
  %v437 = vld [vmem:[#allocation2 + $0x25] sm:$0xff]
  %v438 = vld [vmem:[#allocation2 + $0x35] sm:$0xff]
  %v439 = vld [vmem:[#allocation2 + $0x3d] sm:$0xff]
  %v440 = vld [vmem:[#allocation2 + $0x4d] sm:$0xff]
  %v441 = vld [vmem:[#allocation2 + $0x55] sm:$0xff]
  %v442 = vld [vmem:[#allocation2 + $0x65] sm:$0xff]
  %v443 = vld [vmem:[#allocation2 + $0x6d] sm:$0xff]
  %v444 = vld [vmem:[#allocation2 + $0x7d] sm:$0xff]
  %v445 = vld [vmem:[#allocation2 + $0x85] sm:$0xff]
  %v446 = vld [vmem:[#allocation2 + $0x95] sm:$0xff]
  %v447 = vld [vmem:[#allocation2 + $0x9d] sm:$0xff]
  %v448 = vld [vmem:[#allocation2 + $0xad] sm:$0xff]
  %v449 = vld [vmem:[#allocation2 + $0xb5] sm:$0xff]
  %v450 = vld [vmem:[#allocation2 + $0xc5] sm:$0xff]
  %v451 = vld [vmem:[#allocation2 + $0xcd] sm:$0xff]
  %v452 = vld [vmem:[#allocation2 + $0xdd] sm:$0xff]
  %v453 = vld [vmem:[#allocation2 + $0xe5] sm:$0xff]
  %v454 = vld [vmem:[#allocation2 + $0xf5] sm:$0xff]
  %v455 = vld [vmem:[#allocation2 + $0xfd] sm:$0xff]
  %v456 = vld [vmem:[#allocation2 + $0x10d] sm:$0xff]
  %v457 = vld [vmem:[#allocation2 + $0x115] sm:$0xff]
  %v458 = vld [vmem:[#allocation2 + $0x125] sm:$0xff]
  %v459 = vld [vmem:[#allocation2 + $0x12d] sm:$0xff]
  %v460 = vld [vmem:[#allocation2 + $0x13d] sm:$0xff]
  %v461 = vld [vmem:[#allocation2 + $0x145] sm:$0xff]
  %v462 = vld [vmem:[#allocation2 + $0x155] sm:$0xff]
  %v463 = vld [vmem:[#allocation2 + $0x15d] sm:$0xff]
  %v464 = vld [vmem:[#allocation2 + $0x16d] sm:$0xff]
  %v465 = vld [vmem:[#allocation2 + $0x175] sm:$0xff]
  %v466 = vmul.f32 %v434, 0.0038679158
  %v467 = vmul.f32 %v435, 0.0038679158
  %v468 = vmul.f32 %v436, 0.0038679158
  %v469 = vmul.f32 %v437, 0.0038679158
  %v470 = vmul.f32 %v438, 0.0038679158
  %v471 = vmul.f32 %v439, 0.0038679158
  %v472 = vmul.f32 %v440, 0.0038679158
  %v473 = vmul.f32 %v441, 0.0038679158
  %v474 = vmul.f32 %v442, 0.0038679158
  %v475 = vmul.f32 %v443, 0.0038679158
  %v476 = vmul.f32 %v444, 0.0038679158
  %v477 = vmul.f32 %v445, 0.0038679158
  %v478 = vmul.f32 %v446, 0.0038679158
  %v479 = vmul.f32 %v447, 0.0038679158
  %v480 = vmul.f32 %v448, 0.0038679158
  %v481 = vmul.f32 %v449, 0.0038679158
  %v482 = vmul.f32 %v450, 0.0038679158
  %v483 = vmul.f32 %v451, 0.0038679158
  %v484 = vmul.f32 %v452, 0.0038679158
  %v485 = vmul.f32 %v453, 0.0038679158
  %v486 = vmul.f32 %v454, 0.0038679158
  %v487 = vmul.f32 %v455, 0.0038679158
  %v488 = vmul.f32 %v456, 0.0038679158
  %v489 = vmul.f32 %v457, 0.0038679158
  %v490 = vmul.f32 %v458, 0.0038679158
  %v491 = vmul.f32 %v459, 0.0038679158
  %v492 = vmul.f32 %v460, 0.0038679158
  %v493 = vmul.f32 %v461, 0.0038679158
  %v494 = vmul.f32 %v462, 0.0038679158
  %v495 = vmul.f32 %v463, 0.0038679158
  %v496 = vmul.f32 %v464, 0.0038679158
  %v497 = vmul.f32 %v465, 0.0038679158
  %v498 = vadd.f32 %v466, 0.0
  %v499 = vadd.f32 %v467, 0.0
  %v500 = vadd.f32 %v468, 0.0
  %v501 = vadd.f32 %v469, 0.0
  %v502 = vadd.f32 %v470, 0.0
  %v503 = vadd.f32 %v471, 0.0
  %v504 = vadd.f32 %v472, 0.0
  %v505 = vadd.f32 %v473, 0.0
  %v506 = vadd.f32 %v474, 0.0
  %v507 = vadd.f32 %v475, 0.0
  %v508 = vadd.f32 %v476, 0.0
  %v509 = vadd.f32 %v477, 0.0
  %v510 = vadd.f32 %v478, 0.0
  %v511 = vadd.f32 %v479, 0.0
  %v512 = vadd.f32 %v480, 0.0
  %v513 = vadd.f32 %v481, 0.0
  %v514 = vadd.f32 %v482, 0.0
  %v515 = vadd.f32 %v483, 0.0
  %v516 = vadd.f32 %v484, 0.0
  %v517 = vadd.f32 %v485, 0.0
  %v518 = vadd.f32 %v486, 0.0
  %v519 = vadd.f32 %v487, 0.0
  %v520 = vadd.f32 %v488, 0.0
  %v521 = vadd.f32 %v489, 0.0
  %v522 = vadd.f32 %v490, 0.0
  %v523 = vadd.f32 %v491, 0.0
  %v524 = vadd.f32 %v492, 0.0
  %v525 = vadd.f32 %v493, 0.0
  %v526 = vadd.f32 %v494, 0.0
  %v527 = vadd.f32 %v495, 0.0
  %v528 = vadd.f32 %v496, 0.0
  %v529 = vadd.f32 %v497, 0.0
  %v530 = vld [vmem:[#allocation2 + $0x6] sm:$0xff]
  %v531 = vld [vmem:[#allocation2 + $0xe] sm:$0xff]
  %v532 = vld [vmem:[#allocation2 + $0x1e] sm:$0xff]
  %v533 = vld [vmem:[#allocation2 + $0x26] sm:$0xff]
  %v534 = vld [vmem:[#allocation2 + $0x36] sm:$0xff]
  %v535 = vld [vmem:[#allocation2 + $0x3e] sm:$0xff]
  %v536 = vld [vmem:[#allocation2 + $0x4e] sm:$0xff]
  %v537 = vld [vmem:[#allocation2 + $0x56] sm:$0xff]
  %v538 = vld [vmem:[#allocation2 + $0x66] sm:$0xff]
  %v539 = vld [vmem:[#allocation2 + $0x6e] sm:$0xff]
  %v540 = vld [vmem:[#allocation2 + $0x7e] sm:$0xff]
  %v541 = vld [vmem:[#allocation2 + $0x86] sm:$0xff]
  %v542 = vld [vmem:[#allocation2 + $0x96] sm:$0xff]
  %v543 = vld [vmem:[#allocation2 + $0x9e] sm:$0xff]
  %v544 = vld [vmem:[#allocation2 + $0xae] sm:$0xff]
  %v545 = vld [vmem:[#allocation2 + $0xb6] sm:$0xff]
  %v546 = vld [vmem:[#allocation2 + $0xc6] sm:$0xff]
  %v547 = vld [vmem:[#allocation2 + $0xce] sm:$0xff]
  %v548 = vld [vmem:[#allocation2 + $0xde] sm:$0xff]
  %v549 = vld [vmem:[#allocation2 + $0xe6] sm:$0xff]
  %v550 = vld [vmem:[#allocation2 + $0xf6] sm:$0xff]
  %v551 = vld [vmem:[#allocation2 + $0xfe] sm:$0xff]
  %v552 = vld [vmem:[#allocation2 + $0x10e] sm:$0xff]
  %v553 = vld [vmem:[#allocation2 + $0x116] sm:$0xff]
  %v554 = vld [vmem:[#allocation2 + $0x126] sm:$0xff]
  %v555 = vld [vmem:[#allocation2 + $0x12e] sm:$0xff]
  %v556 = vld [vmem:[#allocation2 + $0x13e] sm:$0xff]
  %v557 = vld [vmem:[#allocation2 + $0x146] sm:$0xff]
  %v558 = vld [vmem:[#allocation2 + $0x156] sm:$0xff]
  %v559 = vld [vmem:[#allocation2 + $0x15e] sm:$0xff]
  %v560 = vld [vmem:[#allocation2 + $0x16e] sm:$0xff]
  %v561 = vld [vmem:[#allocation2 + $0x176] sm:$0xff]
  %v562 = vmul.f32 %v530, 0.010661134
  %v563 = vmul.f32 %v531, 0.010661134
  %v564 = vmul.f32 %v532, 0.010661134
  %v565 = vmul.f32 %v533, 0.010661134
  %v566 = vmul.f32 %v534, 0.010661134
  %v567 = vmul.f32 %v535, 0.010661134
  %v568 = vmul.f32 %v536, 0.010661134
  %v569 = vmul.f32 %v537, 0.010661134
  %v570 = vmul.f32 %v538, 0.010661134
  %v571 = vmul.f32 %v539, 0.010661134
  %v572 = vmul.f32 %v540, 0.010661134
  %v573 = vmul.f32 %v541, 0.010661134
  %v574 = vmul.f32 %v542, 0.010661134
  %v575 = vmul.f32 %v543, 0.010661134
  %v576 = vmul.f32 %v544, 0.010661134
  %v577 = vmul.f32 %v545, 0.010661134
  %v578 = vmul.f32 %v546, 0.010661134
  %v579 = vmul.f32 %v547, 0.010661134
  %v580 = vmul.f32 %v548, 0.010661134
  %v581 = vmul.f32 %v549, 0.010661134
  %v582 = vmul.f32 %v550, 0.010661134
  %v583 = vmul.f32 %v551, 0.010661134
  %v584 = vmul.f32 %v552, 0.010661134
  %v585 = vmul.f32 %v553, 0.010661134
  %v586 = vmul.f32 %v554, 0.010661134
  %v587 = vmul.f32 %v555, 0.010661134
  %v588 = vmul.f32 %v556, 0.010661134
  %v589 = vmul.f32 %v557, 0.010661134
  %v590 = vmul.f32 %v558, 0.010661134
  %v591 = vmul.f32 %v559, 0.010661134
  %v592 = vmul.f32 %v560, 0.010661134
  %v593 = vmul.f32 %v561, 0.010661134
  %v594 = vadd.f32 %v210, %v562
  %v595 = vadd.f32 %v211, %v563
  %v596 = vadd.f32 %v212, %v564
  %v597 = vadd.f32 %v213, %v565
  %v598 = vadd.f32 %v214, %v566
  %v599 = vadd.f32 %v215, %v567
  %v600 = vadd.f32 %v216, %v568
  %v601 = vadd.f32 %v217, %v569
  %v602 = vadd.f32 %v218, %v570
  %v603 = vadd.f32 %v219, %v571
  %v604 = vadd.f32 %v220, %v572
  %v605 = vadd.f32 %v221, %v573
  %v606 = vadd.f32 %v222, %v574
  %v607 = vadd.f32 %v223, %v575
  %v608 = vadd.f32 %v224, %v576
  %v609 = vadd.f32 %v225, %v577
  %v610 = vadd.f32 %v226, %v578
  %v611 = vadd.f32 %v227, %v579
  %v612 = vadd.f32 %v228, %v580
  %v613 = vadd.f32 %v229, %v581
  %v614 = vadd.f32 %v230, %v582
  %v615 = vadd.f32 %v231, %v583
  %v616 = vadd.f32 %v232, %v584
  %v617 = vadd.f32 %v233, %v585
  %v618 = vadd.f32 %v234, %v586
  %v619 = vadd.f32 %v235, %v587
  %v620 = vadd.f32 %v236, %v588
  %v621 = vadd.f32 %v237, %v589
  %v622 = vadd.f32 %v238, %v590
  %v623 = vadd.f32 %v239, %v591
  %v624 = vadd.f32 %v240, %v592
  %v625 = vadd.f32 %v241, %v593
  %s626 = scalar_lea.vmem [#allocation2], 24
  %v627 = vld [vmem:[%s626 + $0x1] sm:$0xff]
  %v628 = vld [vmem:[%s626 + $0x9] sm:$0xff]
  %v629 = vld [vmem:[%s626 + $0x19] sm:$0xff]
  %v630 = vld [vmem:[%s626 + $0x21] sm:$0xff]
  %v631 = vld [vmem:[%s626 + $0x31] sm:$0xff]
  %v632 = vld [vmem:[%s626 + $0x39] sm:$0xff]
  %v633 = vld [vmem:[%s626 + $0x49] sm:$0xff]
  %v634 = vld [vmem:[%s626 + $0x51] sm:$0xff]
  %v635 = vld [vmem:[%s626 + $0x61] sm:$0xff]
  %v636 = vld [vmem:[%s626 + $0x69] sm:$0xff]
  %v637 = vld [vmem:[%s626 + $0x79] sm:$0xff]
  %v638 = vld [vmem:[%s626 + $0x81] sm:$0xff]
  %v639 = vld [vmem:[%s626 + $0x91] sm:$0xff]
  %v640 = vld [vmem:[%s626 + $0x99] sm:$0xff]
  %v641 = vld [vmem:[%s626 + $0xa9] sm:$0xff]
  %v642 = vld [vmem:[%s626 + $0xb1] sm:$0xff]
  %v643 = vld [vmem:[%s626 + $0xc1] sm:$0xff]
  %v644 = vld [vmem:[%s626 + $0xc9] sm:$0xff]
  %v645 = vld [vmem:[%s626 + $0xd9] sm:$0xff]
  %v646 = vld [vmem:[%s626 + $0xe1] sm:$0xff]
  %v647 = vld [vmem:[%s626 + $0xf1] sm:$0xff]
  %v648 = vld [vmem:[%s626 + $0xf9] sm:$0xff]
  %v649 = vld [vmem:[%s626 + $0x109] sm:$0xff]
  %v650 = vld [vmem:[%s626 + $0x111] sm:$0xff]
  %v651 = vld [vmem:[%s626 + $0x121] sm:$0xff]
  %v652 = vld [vmem:[%s626 + $0x129] sm:$0xff]
  %v653 = vld [vmem:[%s626 + $0x139] sm:$0xff]
  %v654 = vld [vmem:[%s626 + $0x141] sm:$0xff]
  %v655 = vld [vmem:[%s626 + $0x151] sm:$0xff]
  %v656 = vld [vmem:[%s626 + $0x159] sm:$0xff]
  %v657 = vld [vmem:[%s626 + $0x169] sm:$0xff]
  %v658 = vld [vmem:[%s626 + $0x171] sm:$0xff]
  %v659 = vmul.f32 %v627, 0.0009123527
  %v660 = vmul.f32 %v628, 0.0009123527
  %v661 = vmul.f32 %v629, 0.0009123527
  %v662 = vmul.f32 %v630, 0.0009123527
  %v663 = vmul.f32 %v631, 0.0009123527
  %v664 = vmul.f32 %v632, 0.0009123527
  %v665 = vmul.f32 %v633, 0.0009123527
  %v666 = vmul.f32 %v634, 0.0009123527
  %v667 = vmul.f32 %v635, 0.0009123527
  %v668 = vmul.f32 %v636, 0.0009123527
  %v669 = vmul.f32 %v637, 0.0009123527
  %v670 = vmul.f32 %v638, 0.0009123527
  %v671 = vmul.f32 %v639, 0.0009123527
  %v672 = vmul.f32 %v640, 0.0009123527
  %v673 = vmul.f32 %v641, 0.0009123527
  %v674 = vmul.f32 %v642, 0.0009123527
  %v675 = vmul.f32 %v643, 0.0009123527
  %v676 = vmul.f32 %v644, 0.0009123527
  %v677 = vmul.f32 %v645, 0.0009123527
  %v678 = vmul.f32 %v646, 0.0009123527
  %v679 = vmul.f32 %v647, 0.0009123527
  %v680 = vmul.f32 %v648, 0.0009123527
  %v681 = vmul.f32 %v649, 0.0009123527
  %v682 = vmul.f32 %v650, 0.0009123527
  %v683 = vmul.f32 %v651, 0.0009123527
  %v684 = vmul.f32 %v652, 0.0009123527
  %v685 = vmul.f32 %v653, 0.0009123527
  %v686 = vmul.f32 %v654, 0.0009123527
  %v687 = vmul.f32 %v655, 0.0009123527
  %v688 = vmul.f32 %v656, 0.0009123527
  %v689 = vmul.f32 %v657, 0.0009123527
  %v690 = vmul.f32 %v658, 0.0009123527
  %v691 = vadd.f32 %v306, %v659
  %v692 = vadd.f32 %v307, %v660
  %v693 = vadd.f32 %v308, %v661
  %v694 = vadd.f32 %v309, %v662
  %v695 = vadd.f32 %v310, %v663
  %v696 = vadd.f32 %v311, %v664
  %v697 = vadd.f32 %v312, %v665
  %v698 = vadd.f32 %v313, %v666
  %v699 = vadd.f32 %v314, %v667
  %v700 = vadd.f32 %v315, %v668
  %v701 = vadd.f32 %v316, %v669
  %v702 = vadd.f32 %v317, %v670
  %v703 = vadd.f32 %v318, %v671
  %v704 = vadd.f32 %v319, %v672
  %v705 = vadd.f32 %v320, %v673
  %v706 = vadd.f32 %v321, %v674
  %v707 = vadd.f32 %v322, %v675
  %v708 = vadd.f32 %v323, %v676
  %v709 = vadd.f32 %v324, %v677
  %v710 = vadd.f32 %v325, %v678
  %v711 = vadd.f32 %v326, %v679
  %v712 = vadd.f32 %v327, %v680
  %v713 = vadd.f32 %v328, %v681
  %v714 = vadd.f32 %v329, %v682
  %v715 = vadd.f32 %v330, %v683
  %v716 = vadd.f32 %v331, %v684
  %v717 = vadd.f32 %v332, %v685
  %v718 = vadd.f32 %v333, %v686
  %v719 = vadd.f32 %v334, %v687
  %v720 = vadd.f32 %v335, %v688
  %v721 = vadd.f32 %v336, %v689
  %v722 = vadd.f32 %v337, %v690
  %v723 = vld [vmem:[%s626 + $0x2] sm:$0xff]
  %v724 = vld [vmem:[%s626 + $0xa] sm:$0xff]
  %v725 = vld [vmem:[%s626 + $0x1a] sm:$0xff]
  %v726 = vld [vmem:[%s626 + $0x22] sm:$0xff]
  %v727 = vld [vmem:[%s626 + $0x32] sm:$0xff]
  %v728 = vld [vmem:[%s626 + $0x3a] sm:$0xff]
  %v729 = vld [vmem:[%s626 + $0x4a] sm:$0xff]
  %v730 = vld [vmem:[%s626 + $0x52] sm:$0xff]
  %v731 = vld [vmem:[%s626 + $0x62] sm:$0xff]
  %v732 = vld [vmem:[%s626 + $0x6a] sm:$0xff]
  %v733 = vld [vmem:[%s626 + $0x7a] sm:$0xff]
  %v734 = vld [vmem:[%s626 + $0x82] sm:$0xff]
  %v735 = vld [vmem:[%s626 + $0x92] sm:$0xff]
  %v736 = vld [vmem:[%s626 + $0x9a] sm:$0xff]
  %v737 = vld [vmem:[%s626 + $0xaa] sm:$0xff]
  %v738 = vld [vmem:[%s626 + $0xb2] sm:$0xff]
  %v739 = vld [vmem:[%s626 + $0xc2] sm:$0xff]
  %v740 = vld [vmem:[%s626 + $0xca] sm:$0xff]
  %v741 = vld [vmem:[%s626 + $0xda] sm:$0xff]
  %v742 = vld [vmem:[%s626 + $0xe2] sm:$0xff]
  %v743 = vld [vmem:[%s626 + $0xf2] sm:$0xff]
  %v744 = vld [vmem:[%s626 + $0xfa] sm:$0xff]
  %v745 = vld [vmem:[%s626 + $0x10a] sm:$0xff]
  %v746 = vld [vmem:[%s626 + $0x112] sm:$0xff]
  %v747 = vld [vmem:[%s626 + $0x122] sm:$0xff]
  %v748 = vld [vmem:[%s626 + $0x12a] sm:$0xff]
  %v749 = vld [vmem:[%s626 + $0x13a] sm:$0xff]
  %v750 = vld [vmem:[%s626 + $0x142] sm:$0xff]
  %v751 = vld [vmem:[%s626 + $0x152] sm:$0xff]
  %v752 = vld [vmem:[%s626 + $0x15a] sm:$0xff]
  %v753 = vld [vmem:[%s626 + $0x16a] sm:$0xff]
  %v754 = vld [vmem:[%s626 + $0x172] sm:$0xff]
  %v755 = vmul.f32 %v723, 0.0009251127
  %v756 = vmul.f32 %v724, 0.0009251127
  %v757 = vmul.f32 %v725, 0.0009251127
  %v758 = vmul.f32 %v726, 0.0009251127
  %v759 = vmul.f32 %v727, 0.0009251127
  %v760 = vmul.f32 %v728, 0.0009251127
  %v761 = vmul.f32 %v729, 0.0009251127
  %v762 = vmul.f32 %v730, 0.0009251127
  %v763 = vmul.f32 %v731, 0.0009251127
  %v764 = vmul.f32 %v732, 0.0009251127
  %v765 = vmul.f32 %v733, 0.0009251127
  %v766 = vmul.f32 %v734, 0.0009251127
  %v767 = vmul.f32 %v735, 0.0009251127
  %v768 = vmul.f32 %v736, 0.0009251127
  %v769 = vmul.f32 %v737, 0.0009251127
  %v770 = vmul.f32 %v738, 0.0009251127
  %v771 = vmul.f32 %v739, 0.0009251127
  %v772 = vmul.f32 %v740, 0.0009251127
  %v773 = vmul.f32 %v741, 0.0009251127
  %v774 = vmul.f32 %v742, 0.0009251127
  %v775 = vmul.f32 %v743, 0.0009251127
  %v776 = vmul.f32 %v744, 0.0009251127
  %v777 = vmul.f32 %v745, 0.0009251127
  %v778 = vmul.f32 %v746, 0.0009251127
  %v779 = vmul.f32 %v747, 0.0009251127
  %v780 = vmul.f32 %v748, 0.0009251127
  %v781 = vmul.f32 %v749, 0.0009251127
  %v782 = vmul.f32 %v750, 0.0009251127
  %v783 = vmul.f32 %v751, 0.0009251127
  %v784 = vmul.f32 %v752, 0.0009251127
  %v785 = vmul.f32 %v753, 0.0009251127
  %v786 = vmul.f32 %v754, 0.0009251127
  %v787 = vadd.f32 %v402, %v755
  %v788 = vadd.f32 %v403, %v756
  %v789 = vadd.f32 %v404, %v757
  %v790 = vadd.f32 %v405, %v758
  %v791 = vadd.f32 %v406, %v759
  %v792 = vadd.f32 %v407, %v760
  %v793 = vadd.f32 %v408, %v761
  %v794 = vadd.f32 %v409, %v762
  %v795 = vadd.f32 %v410, %v763
  %v796 = vadd.f32 %v411, %v764
  %v797 = vadd.f32 %v412, %v765
  %v798 = vadd.f32 %v413, %v766
  %v799 = vadd.f32 %v414, %v767
  %v800 = vadd.f32 %v415, %v768
  %v801 = vadd.f32 %v416, %v769
  %v802 = vadd.f32 %v417, %v770
  %v803 = vadd.f32 %v418, %v771
  %v804 = vadd.f32 %v419, %v772
  %v805 = vadd.f32 %v420, %v773
  %v806 = vadd.f32 %v421, %v774
  %v807 = vadd.f32 %v422, %v775
  %v808 = vadd.f32 %v423, %v776
  %v809 = vadd.f32 %v424, %v777
  %v810 = vadd.f32 %v425, %v778
  %v811 = vadd.f32 %v426, %v779
  %v812 = vadd.f32 %v427, %v780
  %v813 = vadd.f32 %v428, %v781
  %v814 = vadd.f32 %v429, %v782
  %v815 = vadd.f32 %v430, %v783
  %v816 = vadd.f32 %v431, %v784
  %v817 = vadd.f32 %v432, %v785
  %v818 = vadd.f32 %v433, %v786
  %v819 = vld [vmem:[%s626 + $0x3] sm:$0xff]
  %v820 = vld [vmem:[%s626 + $0xb] sm:$0xff]
  %v821 = vld [vmem:[%s626 + $0x1b] sm:$0xff]
  %v822 = vld [vmem:[%s626 + $0x23] sm:$0xff]
  %v823 = vld [vmem:[%s626 + $0x33] sm:$0xff]
  %v824 = vld [vmem:[%s626 + $0x3b] sm:$0xff]
  %v825 = vld [vmem:[%s626 + $0x4b] sm:$0xff]
  %v826 = vld [vmem:[%s626 + $0x53] sm:$0xff]
  %v827 = vld [vmem:[%s626 + $0x63] sm:$0xff]
  %v828 = vld [vmem:[%s626 + $0x6b] sm:$0xff]
  %v829 = vld [vmem:[%s626 + $0x7b] sm:$0xff]
  %v830 = vld [vmem:[%s626 + $0x83] sm:$0xff]
  %v831 = vld [vmem:[%s626 + $0x93] sm:$0xff]
  %v832 = vld [vmem:[%s626 + $0x9b] sm:$0xff]
  %v833 = vld [vmem:[%s626 + $0xab] sm:$0xff]
  %v834 = vld [vmem:[%s626 + $0xb3] sm:$0xff]
  %v835 = vld [vmem:[%s626 + $0xc3] sm:$0xff]
  %v836 = vld [vmem:[%s626 + $0xcb] sm:$0xff]
  %v837 = vld [vmem:[%s626 + $0xdb] sm:$0xff]
  %v838 = vld [vmem:[%s626 + $0xe3] sm:$0xff]
  %v839 = vld [vmem:[%s626 + $0xf3] sm:$0xff]
  %v840 = vld [vmem:[%s626 + $0xfb] sm:$0xff]
  %v841 = vld [vmem:[%s626 + $0x10b] sm:$0xff]
  %v842 = vld [vmem:[%s626 + $0x113] sm:$0xff]
  %v843 = vld [vmem:[%s626 + $0x123] sm:$0xff]
  %v844 = vld [vmem:[%s626 + $0x12b] sm:$0xff]
  %v845 = vld [vmem:[%s626 + $0x13b] sm:$0xff]
  %v846 = vld [vmem:[%s626 + $0x143] sm:$0xff]
  %v847 = vld [vmem:[%s626 + $0x153] sm:$0xff]
  %v848 = vld [vmem:[%s626 + $0x15b] sm:$0xff]
  %v849 = vld [vmem:[%s626 + $0x16b] sm:$0xff]
  %v850 = vld [vmem:[%s626 + $0x173] sm:$0xff]
  %v851 = vmul.f32 %v819, 0.0043224697
  %v852 = vmul.f32 %v820, 0.0043224697
  %v853 = vmul.f32 %v821, 0.0043224697
  %v854 = vmul.f32 %v822, 0.0043224697
  %v855 = vmul.f32 %v823, 0.0043224697
  %v856 = vmul.f32 %v824, 0.0043224697
  %v857 = vmul.f32 %v825, 0.0043224697
  %v858 = vmul.f32 %v826, 0.0043224697
  %v859 = vmul.f32 %v827, 0.0043224697
  %v860 = vmul.f32 %v828, 0.0043224697
  %v861 = vmul.f32 %v829, 0.0043224697
  %v862 = vmul.f32 %v830, 0.0043224697
  %v863 = vmul.f32 %v831, 0.0043224697
  %v864 = vmul.f32 %v832, 0.0043224697
  %v865 = vmul.f32 %v833, 0.0043224697
  %v866 = vmul.f32 %v834, 0.0043224697
  %v867 = vmul.f32 %v835, 0.0043224697
  %v868 = vmul.f32 %v836, 0.0043224697
  %v869 = vmul.f32 %v837, 0.0043224697
  %v870 = vmul.f32 %v838, 0.0043224697
  %v871 = vmul.f32 %v839, 0.0043224697
  %v872 = vmul.f32 %v840, 0.0043224697
  %v873 = vmul.f32 %v841, 0.0043224697
  %v874 = vmul.f32 %v842, 0.0043224697
  %v875 = vmul.f32 %v843, 0.0043224697
  %v876 = vmul.f32 %v844, 0.0043224697
  %v877 = vmul.f32 %v845, 0.0043224697
  %v878 = vmul.f32 %v846, 0.0043224697
  %v879 = vmul.f32 %v847, 0.0043224697
  %v880 = vmul.f32 %v848, 0.0043224697
  %v881 = vmul.f32 %v849, 0.0043224697
  %v882 = vmul.f32 %v850, 0.0043224697
  %v883 = vadd.f32 %v498, %v851
  %v884 = vadd.f32 %v499, %v852
  %v885 = vadd.f32 %v500, %v853
  %v886 = vadd.f32 %v501, %v854
  %v887 = vadd.f32 %v502, %v855
  %v888 = vadd.f32 %v503, %v856
  %v889 = vadd.f32 %v504, %v857
  %v890 = vadd.f32 %v505, %v858
  %v891 = vadd.f32 %v506, %v859
  %v892 = vadd.f32 %v507, %v860
  %v893 = vadd.f32 %v508, %v861
  %v894 = vadd.f32 %v509, %v862
  %v895 = vadd.f32 %v510, %v863
  %v896 = vadd.f32 %v511, %v864
  %v897 = vadd.f32 %v512, %v865
  %v898 = vadd.f32 %v513, %v866
  %v899 = vadd.f32 %v514, %v867
  %v900 = vadd.f32 %v515, %v868
  %v901 = vadd.f32 %v516, %v869
  %v902 = vadd.f32 %v517, %v870
  %v903 = vadd.f32 %v518, %v871
  %v904 = vadd.f32 %v519, %v872
  %v905 = vadd.f32 %v520, %v873
  %v906 = vadd.f32 %v521, %v874
  %v907 = vadd.f32 %v522, %v875
  %v908 = vadd.f32 %v523, %v876
  %v909 = vadd.f32 %v524, %v877
  %v910 = vadd.f32 %v525, %v878
  %v911 = vadd.f32 %v526, %v879
  %v912 = vadd.f32 %v527, %v880
  %v913 = vadd.f32 %v528, %v881
  %v914 = vadd.f32 %v529, %v882
  %v915 = vld [vmem:[%s626 + $0x4] sm:$0xff]
  %v916 = vld [vmem:[%s626 + $0xc] sm:$0xff]
  %v917 = vld [vmem:[%s626 + $0x1c] sm:$0xff]
  %v918 = vld [vmem:[%s626 + $0x24] sm:$0xff]
  %v919 = vld [vmem:[%s626 + $0x34] sm:$0xff]
  %v920 = vld [vmem:[%s626 + $0x3c] sm:$0xff]
  %v921 = vld [vmem:[%s626 + $0x4c] sm:$0xff]
  %v922 = vld [vmem:[%s626 + $0x54] sm:$0xff]
  %v923 = vld [vmem:[%s626 + $0x64] sm:$0xff]
  %v924 = vld [vmem:[%s626 + $0x6c] sm:$0xff]
  %v925 = vld [vmem:[%s626 + $0x7c] sm:$0xff]
  %v926 = vld [vmem:[%s626 + $0x84] sm:$0xff]
  %v927 = vld [vmem:[%s626 + $0x94] sm:$0xff]
  %v928 = vld [vmem:[%s626 + $0x9c] sm:$0xff]
  %v929 = vld [vmem:[%s626 + $0xac] sm:$0xff]
  %v930 = vld [vmem:[%s626 + $0xb4] sm:$0xff]
  %v931 = vld [vmem:[%s626 + $0xc4] sm:$0xff]
  %v932 = vld [vmem:[%s626 + $0xcc] sm:$0xff]
  %v933 = vld [vmem:[%s626 + $0xdc] sm:$0xff]
  %v934 = vld [vmem:[%s626 + $0xe4] sm:$0xff]
  %v935 = vld [vmem:[%s626 + $0xf4] sm:$0xff]
  %v936 = vld [vmem:[%s626 + $0xfc] sm:$0xff]
  %v937 = vld [vmem:[%s626 + $0x10c] sm:$0xff]
  %v938 = vld [vmem:[%s626 + $0x114] sm:$0xff]
  %v939 = vld [vmem:[%s626 + $0x124] sm:$0xff]
  %v940 = vld [vmem:[%s626 + $0x12c] sm:$0xff]
  %v941 = vld [vmem:[%s626 + $0x13c] sm:$0xff]
  %v942 = vld [vmem:[%s626 + $0x144] sm:$0xff]
  %v943 = vld [vmem:[%s626 + $0x154] sm:$0xff]
  %v944 = vld [vmem:[%s626 + $0x15c] sm:$0xff]
  %v945 = vld [vmem:[%s626 + $0x16c] sm:$0xff]
  %v946 = vld [vmem:[%s626 + $0x174] sm:$0xff]
  %v947 = vmul.f32 %v915, 0.0041460674
  %v948 = vmul.f32 %v916, 0.0041460674
  %v949 = vmul.f32 %v917, 0.0041460674
  %v950 = vmul.f32 %v918, 0.0041460674
  %v951 = vmul.f32 %v919, 0.0041460674
  %v952 = vmul.f32 %v920, 0.0041460674
  %v953 = vmul.f32 %v921, 0.0041460674
  %v954 = vmul.f32 %v922, 0.0041460674
  %v955 = vmul.f32 %v923, 0.0041460674
  %v956 = vmul.f32 %v924, 0.0041460674
  %v957 = vmul.f32 %v925, 0.0041460674
  %v958 = vmul.f32 %v926, 0.0041460674
  %v959 = vmul.f32 %v927, 0.0041460674
  %v960 = vmul.f32 %v928, 0.0041460674
  %v961 = vmul.f32 %v929, 0.0041460674
  %v962 = vmul.f32 %v930, 0.0041460674
  %v963 = vmul.f32 %v931, 0.0041460674
  %v964 = vmul.f32 %v932, 0.0041460674
  %v965 = vmul.f32 %v933, 0.0041460674
  %v966 = vmul.f32 %v934, 0.0041460674
  %v967 = vmul.f32 %v935, 0.0041460674
  %v968 = vmul.f32 %v936, 0.0041460674
  %v969 = vmul.f32 %v937, 0.0041460674
  %v970 = vmul.f32 %v938, 0.0041460674
  %v971 = vmul.f32 %v939, 0.0041460674
  %v972 = vmul.f32 %v940, 0.0041460674
  %v973 = vmul.f32 %v941, 0.0041460674
  %v974 = vmul.f32 %v942, 0.0041460674
  %v975 = vmul.f32 %v943, 0.0041460674
  %v976 = vmul.f32 %v944, 0.0041460674
  %v977 = vmul.f32 %v945, 0.0041460674
  %v978 = vmul.f32 %v946, 0.0041460674
  %v979 = vadd.f32 %v594, %v947
  %v980 = vadd.f32 %v595, %v948
  %v981 = vadd.f32 %v596, %v949
  %v982 = vadd.f32 %v597, %v950
  %v983 = vadd.f32 %v598, %v951
  %v984 = vadd.f32 %v599, %v952
  %v985 = vadd.f32 %v600, %v953
  %v986 = vadd.f32 %v601, %v954
  %v987 = vadd.f32 %v602, %v955
  %v988 = vadd.f32 %v603, %v956
  %v989 = vadd.f32 %v604, %v957
  %v990 = vadd.f32 %v605, %v958
  %v991 = vadd.f32 %v606, %v959
  %v992 = vadd.f32 %v607, %v960
  %v993 = vadd.f32 %v608, %v961
  %v994 = vadd.f32 %v609, %v962
  %v995 = vadd.f32 %v610, %v963
  %v996 = vadd.f32 %v611, %v964
  %v997 = vadd.f32 %v612, %v965
  %v998 = vadd.f32 %v613, %v966
  %v999 = vadd.f32 %v614, %v967
  %v1000 = vadd.f32 %v615, %v968
  %v1001 = vadd.f32 %v616, %v969
  %v1002 = vadd.f32 %v617, %v970
  %v1003 = vadd.f32 %v618, %v971
  %v1004 = vadd.f32 %v619, %v972
  %v1005 = vadd.f32 %v620, %v973
  %v1006 = vadd.f32 %v621, %v974
  %v1007 = vadd.f32 %v622, %v975
  %v1008 = vadd.f32 %v623, %v976
  %v1009 = vadd.f32 %v624, %v977
  %v1010 = vadd.f32 %v625, %v978
  %v1011 = vld [vmem:[%s626 + $0x5] sm:$0xff]
  %v1012 = vld [vmem:[%s626 + $0xd] sm:$0xff]
  %v1013 = vld [vmem:[%s626 + $0x1d] sm:$0xff]
  %v1014 = vld [vmem:[%s626 + $0x25] sm:$0xff]
  %v1015 = vld [vmem:[%s626 + $0x35] sm:$0xff]
  %v1016 = vld [vmem:[%s626 + $0x3d] sm:$0xff]
  %v1017 = vld [vmem:[%s626 + $0x4d] sm:$0xff]
  %v1018 = vld [vmem:[%s626 + $0x55] sm:$0xff]
  %v1019 = vld [vmem:[%s626 + $0x65] sm:$0xff]
  %v1020 = vld [vmem:[%s626 + $0x6d] sm:$0xff]
  %v1021 = vld [vmem:[%s626 + $0x7d] sm:$0xff]
  %v1022 = vld [vmem:[%s626 + $0x85] sm:$0xff]
  %v1023 = vld [vmem:[%s626 + $0x95] sm:$0xff]
  %v1024 = vld [vmem:[%s626 + $0x9d] sm:$0xff]
  %v1025 = vld [vmem:[%s626 + $0xad] sm:$0xff]
  %v1026 = vld [vmem:[%s626 + $0xb5] sm:$0xff]
  %v1027 = vld [vmem:[%s626 + $0xc5] sm:$0xff]
  %v1028 = vld [vmem:[%s626 + $0xcd] sm:$0xff]
  %v1029 = vld [vmem:[%s626 + $0xdd] sm:$0xff]
  %v1030 = vld [vmem:[%s626 + $0xe5] sm:$0xff]
  %v1031 = vld [vmem:[%s626 + $0xf5] sm:$0xff]
  %v1032 = vld [vmem:[%s626 + $0xfd] sm:$0xff]
  %v1033 = vld [vmem:[%s626 + $0x10d] sm:$0xff]
  %v1034 = vld [vmem:[%s626 + $0x115] sm:$0xff]
  %v1035 = vld [vmem:[%s626 + $0x125] sm:$0xff]
  %v1036 = vld [vmem:[%s626 + $0x12d] sm:$0xff]
  %v1037 = vld [vmem:[%s626 + $0x13d] sm:$0xff]
  %v1038 = vld [vmem:[%s626 + $0x145] sm:$0xff]
  %v1039 = vld [vmem:[%s626 + $0x155] sm:$0xff]
  %v1040 = vld [vmem:[%s626 + $0x15d] sm:$0xff]
  %v1041 = vld [vmem:[%s626 + $0x16d] sm:$0xff]
  %v1042 = vld [vmem:[%s626 + $0x175] sm:$0xff]
  %v1043 = vmul.f32 %v1011, 0.012594641
  %v1044 = vmul.f32 %v1012, 0.012594641
  %v1045 = vmul.f32 %v1013, 0.012594641
  %v1046 = vmul.f32 %v1014, 0.012594641
  %v1047 = vmul.f32 %v1015, 0.012594641
  %v1048 = vmul.f32 %v1016, 0.012594641
  %v1049 = vmul.f32 %v1017, 0.012594641
  %v1050 = vmul.f32 %v1018, 0.012594641
  %v1051 = vmul.f32 %v1019, 0.012594641
  %v1052 = vmul.f32 %v1020, 0.012594641
  %v1053 = vmul.f32 %v1021, 0.012594641
  %v1054 = vmul.f32 %v1022, 0.012594641
  %v1055 = vmul.f32 %v1023, 0.012594641
  %v1056 = vmul.f32 %v1024, 0.012594641
  %v1057 = vmul.f32 %v1025, 0.012594641
  %v1058 = vmul.f32 %v1026, 0.012594641
  %v1059 = vmul.f32 %v1027, 0.012594641
  %v1060 = vmul.f32 %v1028, 0.012594641
  %v1061 = vmul.f32 %v1029, 0.012594641
  %v1062 = vmul.f32 %v1030, 0.012594641
  %v1063 = vmul.f32 %v1031, 0.012594641
  %v1064 = vmul.f32 %v1032, 0.012594641
  %v1065 = vmul.f32 %v1033, 0.012594641
  %v1066 = vmul.f32 %v1034, 0.012594641
  %v1067 = vmul.f32 %v1035, 0.012594641
  %v1068 = vmul.f32 %v1036, 0.012594641
  %v1069 = vmul.f32 %v1037, 0.012594641
  %v1070 = vmul.f32 %v1038, 0.012594641
  %v1071 = vmul.f32 %v1039, 0.012594641
  %v1072 = vmul.f32 %v1040, 0.012594641
  %v1073 = vmul.f32 %v1041, 0.012594641
  %v1074 = vmul.f32 %v1042, 0.012594641
  %v1075 = vadd.f32 %v691, %v1043
  %v1076 = vadd.f32 %v692, %v1044
  %v1077 = vadd.f32 %v693, %v1045
  %v1078 = vadd.f32 %v694, %v1046
  %v1079 = vadd.f32 %v695, %v1047
  %v1080 = vadd.f32 %v696, %v1048
  %v1081 = vadd.f32 %v697, %v1049
  %v1082 = vadd.f32 %v698, %v1050
  %v1083 = vadd.f32 %v699, %v1051
  %v1084 = vadd.f32 %v700, %v1052
  %v1085 = vadd.f32 %v701, %v1053
  %v1086 = vadd.f32 %v702, %v1054
  %v1087 = vadd.f32 %v703, %v1055
  %v1088 = vadd.f32 %v704, %v1056
  %v1089 = vadd.f32 %v705, %v1057
  %v1090 = vadd.f32 %v706, %v1058
  %v1091 = vadd.f32 %v707, %v1059
  %v1092 = vadd.f32 %v708, %v1060
  %v1093 = vadd.f32 %v709, %v1061
  %v1094 = vadd.f32 %v710, %v1062
  %v1095 = vadd.f32 %v711, %v1063
  %v1096 = vadd.f32 %v712, %v1064
  %v1097 = vadd.f32 %v713, %v1065
  %v1098 = vadd.f32 %v714, %v1066
  %v1099 = vadd.f32 %v715, %v1067
  %v1100 = vadd.f32 %v716, %v1068
  %v1101 = vadd.f32 %v717, %v1069
  %v1102 = vadd.f32 %v718, %v1070
  %v1103 = vadd.f32 %v719, %v1071
  %v1104 = vadd.f32 %v720, %v1072
  %v1105 = vadd.f32 %v721, %v1073
  %v1106 = vadd.f32 %v722, %v1074
  %v1107 = vld [vmem:[%s626 + $0x6] sm:$0xff]
  %v1108 = vld [vmem:[%s626 + $0xe] sm:$0xff]
  %v1109 = vld [vmem:[%s626 + $0x1e] sm:$0xff]
  %v1110 = vld [vmem:[%s626 + $0x26] sm:$0xff]
  %v1111 = vld [vmem:[%s626 + $0x36] sm:$0xff]
  %v1112 = vld [vmem:[%s626 + $0x3e] sm:$0xff]
  %v1113 = vld [vmem:[%s626 + $0x4e] sm:$0xff]
  %v1114 = vld [vmem:[%s626 + $0x56] sm:$0xff]
  %v1115 = vld [vmem:[%s626 + $0x66] sm:$0xff]
  %v1116 = vld [vmem:[%s626 + $0x6e] sm:$0xff]
  %v1117 = vld [vmem:[%s626 + $0x7e] sm:$0xff]
  %v1118 = vld [vmem:[%s626 + $0x86] sm:$0xff]
  %v1119 = vld [vmem:[%s626 + $0x96] sm:$0xff]
  %v1120 = vld [vmem:[%s626 + $0x9e] sm:$0xff]
  %v1121 = vld [vmem:[%s626 + $0xae] sm:$0xff]
  %v1122 = vld [vmem:[%s626 + $0xb6] sm:$0xff]
  %v1123 = vld [vmem:[%s626 + $0xc6] sm:$0xff]
  %v1124 = vld [vmem:[%s626 + $0xce] sm:$0xff]
  %v1125 = vld [vmem:[%s626 + $0xde] sm:$0xff]
  %v1126 = vld [vmem:[%s626 + $0xe6] sm:$0xff]
  %v1127 = vld [vmem:[%s626 + $0xf6] sm:$0xff]
  %v1128 = vld [vmem:[%s626 + $0xfe] sm:$0xff]
  %v1129 = vld [vmem:[%s626 + $0x10e] sm:$0xff]
  %v1130 = vld [vmem:[%s626 + $0x116] sm:$0xff]
  %v1131 = vld [vmem:[%s626 + $0x126] sm:$0xff]
  %v1132 = vld [vmem:[%s626 + $0x12e] sm:$0xff]
  %v1133 = vld [vmem:[%s626 + $0x13e] sm:$0xff]
  %v1134 = vld [vmem:[%s626 + $0x146] sm:$0xff]
  %v1135 = vld [vmem:[%s626 + $0x156] sm:$0xff]
  %v1136 = vld [vmem:[%s626 + $0x15e] sm:$0xff]
  %v1137 = vld [vmem:[%s626 + $0x16e] sm:$0xff]
  %v1138 = vld [vmem:[%s626 + $0x176] sm:$0xff]
  %v1139 = vmul.f32 %v1107, 0.011749691
  %v1140 = vmul.f32 %v1108, 0.011749691
  %v1141 = vmul.f32 %v1109, 0.011749691
  %v1142 = vmul.f32 %v1110, 0.011749691
  %v1143 = vmul.f32 %v1111, 0.011749691
  %v1144 = vmul.f32 %v1112, 0.011749691
  %v1145 = vmul.f32 %v1113, 0.011749691
  %v1146 = vmul.f32 %v1114, 0.011749691
  %v1147 = vmul.f32 %v1115, 0.011749691
  %v1148 = vmul.f32 %v1116, 0.011749691
  %v1149 = vmul.f32 %v1117, 0.011749691
  %v1150 = vmul.f32 %v1118, 0.011749691
  %v1151 = vmul.f32 %v1119, 0.011749691
  %v1152 = vmul.f32 %v1120, 0.011749691
  %v1153 = vmul.f32 %v1121, 0.011749691
  %v1154 = vmul.f32 %v1122, 0.011749691
  %v1155 = vmul.f32 %v1123, 0.011749691
  %v1156 = vmul.f32 %v1124, 0.011749691
  %v1157 = vmul.f32 %v1125, 0.011749691
  %v1158 = vmul.f32 %v1126, 0.011749691
  %v1159 = vmul.f32 %v1127, 0.011749691
  %v1160 = vmul.f32 %v1128, 0.011749691
  %v1161 = vmul.f32 %v1129, 0.011749691
  %v1162 = vmul.f32 %v1130, 0.011749691
  %v1163 = vmul.f32 %v1131, 0.011749691
  %v1164 = vmul.f32 %v1132, 0.011749691
  %v1165 = vmul.f32 %v1133, 0.011749691
  %v1166 = vmul.f32 %v1134, 0.011749691
  %v1167 = vmul.f32 %v1135, 0.011749691
  %v1168 = vmul.f32 %v1136, 0.011749691
  %v1169 = vmul.f32 %v1137, 0.011749691
  %v1170 = vmul.f32 %v1138, 0.011749691
  %v1171 = vadd.f32 %v787, %v1139
  %v1172 = vadd.f32 %v788, %v1140
  %v1173 = vadd.f32 %v789, %v1141
  %v1174 = vadd.f32 %v790, %v1142
  %v1175 = vadd.f32 %v791, %v1143
  %v1176 = vadd.f32 %v792, %v1144
  %v1177 = vadd.f32 %v793, %v1145
  %v1178 = vadd.f32 %v794, %v1146
  %v1179 = vadd.f32 %v795, %v1147
  %v1180 = vadd.f32 %v796, %v1148
  %v1181 = vadd.f32 %v797, %v1149
  %v1182 = vadd.f32 %v798, %v1150
  %v1183 = vadd.f32 %v799, %v1151
  %v1184 = vadd.f32 %v800, %v1152
  %v1185 = vadd.f32 %v801, %v1153
  %v1186 = vadd.f32 %v802, %v1154
  %v1187 = vadd.f32 %v803, %v1155
  %v1188 = vadd.f32 %v804, %v1156
  %v1189 = vadd.f32 %v805, %v1157
  %v1190 = vadd.f32 %v806, %v1158
  %v1191 = vadd.f32 %v807, %v1159
  %v1192 = vadd.f32 %v808, %v1160
  %v1193 = vadd.f32 %v809, %v1161
  %v1194 = vadd.f32 %v810, %v1162
  %v1195 = vadd.f32 %v811, %v1163
  %v1196 = vadd.f32 %v812, %v1164
  %v1197 = vadd.f32 %v813, %v1165
  %v1198 = vadd.f32 %v814, %v1166
  %v1199 = vadd.f32 %v815, %v1167
  %v1200 = vadd.f32 %v816, %v1168
  %v1201 = vadd.f32 %v817, %v1169
  %v1202 = vadd.f32 %v818, %v1170
  %v1203 = vld [vmem:[%s626 + $0x7] sm:$0xff]
  %v1204 = vld [vmem:[%s626 + $0xf] sm:$0xff]
  %v1205 = vld [vmem:[%s626 + $0x1f] sm:$0xff]
  %v1206 = vld [vmem:[%s626 + $0x27] sm:$0xff]
  %v1207 = vld [vmem:[%s626 + $0x37] sm:$0xff]
  %v1208 = vld [vmem:[%s626 + $0x3f] sm:$0xff]
  %v1209 = vld [vmem:[%s626 + $0x4f] sm:$0xff]
  %v1210 = vld [vmem:[%s626 + $0x57] sm:$0xff]
  %v1211 = vld [vmem:[%s626 + $0x67] sm:$0xff]
  %v1212 = vld [vmem:[%s626 + $0x6f] sm:$0xff]
  %v1213 = vld [vmem:[%s626 + $0x7f] sm:$0xff]
  %v1214 = vld [vmem:[%s626 + $0x87] sm:$0xff]
  %v1215 = vld [vmem:[%s626 + $0x97] sm:$0xff]
  %v1216 = vld [vmem:[%s626 + $0x9f] sm:$0xff]
  %v1217 = vld [vmem:[%s626 + $0xaf] sm:$0xff]
  %v1218 = vld [vmem:[%s626 + $0xb7] sm:$0xff]
  %v1219 = vld [vmem:[%s626 + $0xc7] sm:$0xff]
  %v1220 = vld [vmem:[%s626 + $0xcf] sm:$0xff]
  %v1221 = vld [vmem:[%s626 + $0xdf] sm:$0xff]
  %v1222 = vld [vmem:[%s626 + $0xe7] sm:$0xff]
  %v1223 = vld [vmem:[%s626 + $0xf7] sm:$0xff]
  %v1224 = vld [vmem:[%s626 + $0xff] sm:$0xff]
  %v1225 = vld [vmem:[%s626 + $0x10f] sm:$0xff]
  %v1226 = vld [vmem:[%s626 + $0x117] sm:$0xff]
  %v1227 = vld [vmem:[%s626 + $0x127] sm:$0xff]
  %v1228 = vld [vmem:[%s626 + $0x12f] sm:$0xff]
  %v1229 = vld [vmem:[%s626 + $0x13f] sm:$0xff]
  %v1230 = vld [vmem:[%s626 + $0x147] sm:$0xff]
  %v1231 = vld [vmem:[%s626 + $0x157] sm:$0xff]
  %v1232 = vld [vmem:[%s626 + $0x15f] sm:$0xff]
  %v1233 = vld [vmem:[%s626 + $0x16f] sm:$0xff]
  %v1234 = vld [vmem:[%s626 + $0x177] sm:$0xff]
  %v1235 = vmul.f32 %v1203, 0.020765051
  %v1236 = vmul.f32 %v1204, 0.020765051
  %v1237 = vmul.f32 %v1205, 0.020765051
  %v1238 = vmul.f32 %v1206, 0.020765051
  %v1239 = vmul.f32 %v1207, 0.020765051
  %v1240 = vmul.f32 %v1208, 0.020765051
  %v1241 = vmul.f32 %v1209, 0.020765051
  %v1242 = vmul.f32 %v1210, 0.020765051
  %v1243 = vmul.f32 %v1211, 0.020765051
  %v1244 = vmul.f32 %v1212, 0.020765051
  %v1245 = vmul.f32 %v1213, 0.020765051
  %v1246 = vmul.f32 %v1214, 0.020765051
  %v1247 = vmul.f32 %v1215, 0.020765051
  %v1248 = vmul.f32 %v1216, 0.020765051
  %v1249 = vmul.f32 %v1217, 0.020765051
  %v1250 = vmul.f32 %v1218, 0.020765051
  %v1251 = vmul.f32 %v1219, 0.020765051
  %v1252 = vmul.f32 %v1220, 0.020765051
  %v1253 = vmul.f32 %v1221, 0.020765051
  %v1254 = vmul.f32 %v1222, 0.020765051
  %v1255 = vmul.f32 %v1223, 0.020765051
  %v1256 = vmul.f32 %v1224, 0.020765051
  %v1257 = vmul.f32 %v1225, 0.020765051
  %v1258 = vmul.f32 %v1226, 0.020765051
  %v1259 = vmul.f32 %v1227, 0.020765051
  %v1260 = vmul.f32 %v1228, 0.020765051
  %v1261 = vmul.f32 %v1229, 0.020765051
  %v1262 = vmul.f32 %v1230, 0.020765051
  %v1263 = vmul.f32 %v1231, 0.020765051
  %v1264 = vmul.f32 %v1232, 0.020765051
  %v1265 = vmul.f32 %v1233, 0.020765051
  %v1266 = vmul.f32 %v1234, 0.020765051
  %v1267 = vadd.f32 %v883, %v1235
  %v1268 = vadd.f32 %v884, %v1236
  %v1269 = vadd.f32 %v885, %v1237
  %v1270 = vadd.f32 %v886, %v1238
  %v1271 = vadd.f32 %v887, %v1239
  %v1272 = vadd.f32 %v888, %v1240
  %v1273 = vadd.f32 %v889, %v1241
  %v1274 = vadd.f32 %v890, %v1242
  %v1275 = vadd.f32 %v891, %v1243
  %v1276 = vadd.f32 %v892, %v1244
  %v1277 = vadd.f32 %v893, %v1245
  %v1278 = vadd.f32 %v894, %v1246
  %v1279 = vadd.f32 %v895, %v1247
  %v1280 = vadd.f32 %v896, %v1248
  %v1281 = vadd.f32 %v897, %v1249
  %v1282 = vadd.f32 %v898, %v1250
  %v1283 = vadd.f32 %v899, %v1251
  %v1284 = vadd.f32 %v900, %v1252
  %v1285 = vadd.f32 %v901, %v1253
  %v1286 = vadd.f32 %v902, %v1254
  %v1287 = vadd.f32 %v903, %v1255
  %v1288 = vadd.f32 %v904, %v1256
  %v1289 = vadd.f32 %v905, %v1257
  %v1290 = vadd.f32 %v906, %v1258
  %v1291 = vadd.f32 %v907, %v1259
  %v1292 = vadd.f32 %v908, %v1260
  %v1293 = vadd.f32 %v909, %v1261
  %v1294 = vadd.f32 %v910, %v1262
  %v1295 = vadd.f32 %v911, %v1263
  %v1296 = vadd.f32 %v912, %v1264
  %v1297 = vadd.f32 %v913, %v1265
  %v1298 = vadd.f32 %v914, %v1266
  %s1299 = scalar_lea.vmem [#allocation2], 48
  %v1300 = vld [vmem:[%s1299] sm:$0xff]
  %v1301 = vld [vmem:[%s1299 + $0x8] sm:$0xff]
  %v1302 = vld [vmem:[%s1299 + $0x18] sm:$0xff]
  %v1303 = vld [vmem:[%s1299 + $0x20] sm:$0xff]
  %v1304 = vld [vmem:[%s1299 + $0x30] sm:$0xff]
  %v1305 = vld [vmem:[%s1299 + $0x38] sm:$0xff]
  %v1306 = vld [vmem:[%s1299 + $0x48] sm:$0xff]
  %v1307 = vld [vmem:[%s1299 + $0x50] sm:$0xff]
  %v1308 = vld [vmem:[%s1299 + $0x60] sm:$0xff]
  %v1309 = vld [vmem:[%s1299 + $0x68] sm:$0xff]
  %v1310 = vld [vmem:[%s1299 + $0x78] sm:$0xff]
  %v1311 = vld [vmem:[%s1299 + $0x80] sm:$0xff]
  %v1312 = vld [vmem:[%s1299 + $0x90] sm:$0xff]
  %v1313 = vld [vmem:[%s1299 + $0x98] sm:$0xff]
  %v1314 = vld [vmem:[%s1299 + $0xa8] sm:$0xff]
  %v1315 = vld [vmem:[%s1299 + $0xb0] sm:$0xff]
  %v1316 = vld [vmem:[%s1299 + $0xc0] sm:$0xff]
  %v1317 = vld [vmem:[%s1299 + $0xc8] sm:$0xff]
  %v1318 = vld [vmem:[%s1299 + $0xd8] sm:$0xff]
  %v1319 = vld [vmem:[%s1299 + $0xe0] sm:$0xff]
  %v1320 = vld [vmem:[%s1299 + $0xf0] sm:$0xff]
  %v1321 = vld [vmem:[%s1299 + $0xf8] sm:$0xff]
  %v1322 = vld [vmem:[%s1299 + $0x108] sm:$0xff]
  %v1323 = vld [vmem:[%s1299 + $0x110] sm:$0xff]
  %v1324 = vld [vmem:[%s1299 + $0x120] sm:$0xff]
  %v1325 = vld [vmem:[%s1299 + $0x128] sm:$0xff]
  %v1326 = vld [vmem:[%s1299 + $0x138] sm:$0xff]
  %v1327 = vld [vmem:[%s1299 + $0x140] sm:$0xff]
  %v1328 = vld [vmem:[%s1299 + $0x150] sm:$0xff]
  %v1329 = vld [vmem:[%s1299 + $0x158] sm:$0xff]
  %v1330 = vld [vmem:[%s1299 + $0x168] sm:$0xff]
  %v1331 = vld [vmem:[%s1299 + $0x170] sm:$0xff]
  %v1332 = vmul.f32 %v1300, 0.0008751191
  %v1333 = vmul.f32 %v1301, 0.0008751191
  %v1334 = vmul.f32 %v1302, 0.0008751191
  %v1335 = vmul.f32 %v1303, 0.0008751191
  %v1336 = vmul.f32 %v1304, 0.0008751191
  %v1337 = vmul.f32 %v1305, 0.0008751191
  %v1338 = vmul.f32 %v1306, 0.0008751191
  %v1339 = vmul.f32 %v1307, 0.0008751191
  %v1340 = vmul.f32 %v1308, 0.0008751191
  %v1341 = vmul.f32 %v1309, 0.0008751191
  %v1342 = vmul.f32 %v1310, 0.0008751191
  %v1343 = vmul.f32 %v1311, 0.0008751191
  %v1344 = vmul.f32 %v1312, 0.0008751191
  %v1345 = vmul.f32 %v1313, 0.0008751191
  %v1346 = vmul.f32 %v1314, 0.0008751191
  %v1347 = vmul.f32 %v1315, 0.0008751191
  %v1348 = vmul.f32 %v1316, 0.0008751191
  %v1349 = vmul.f32 %v1317, 0.0008751191
  %v1350 = vmul.f32 %v1318, 0.0008751191
  %v1351 = vmul.f32 %v1319, 0.0008751191
  %v1352 = vmul.f32 %v1320, 0.0008751191
  %v1353 = vmul.f32 %v1321, 0.0008751191
  %v1354 = vmul.f32 %v1322, 0.0008751191
  %v1355 = vmul.f32 %v1323, 0.0008751191
  %v1356 = vmul.f32 %v1324, 0.0008751191
  %v1357 = vmul.f32 %v1325, 0.0008751191
  %v1358 = vmul.f32 %v1326, 0.0008751191
  %v1359 = vmul.f32 %v1327, 0.0008751191
  %v1360 = vmul.f32 %v1328, 0.0008751191
  %v1361 = vmul.f32 %v1329, 0.0008751191
  %v1362 = vmul.f32 %v1330, 0.0008751191
  %v1363 = vmul.f32 %v1331, 0.0008751191
  %v1364 = vadd.f32 %v979, %v1332
  %v1365 = vadd.f32 %v980, %v1333
  %v1366 = vadd.f32 %v981, %v1334
  %v1367 = vadd.f32 %v982, %v1335
  %v1368 = vadd.f32 %v983, %v1336
  %v1369 = vadd.f32 %v984, %v1337
  %v1370 = vadd.f32 %v985, %v1338
  %v1371 = vadd.f32 %v986, %v1339
  %v1372 = vadd.f32 %v987, %v1340
  %v1373 = vadd.f32 %v988, %v1341
  %v1374 = vadd.f32 %v989, %v1342
  %v1375 = vadd.f32 %v990, %v1343
  %v1376 = vadd.f32 %v991, %v1344
  %v1377 = vadd.f32 %v992, %v1345
  %v1378 = vadd.f32 %v993, %v1346
  %v1379 = vadd.f32 %v994, %v1347
  %v1380 = vadd.f32 %v995, %v1348
  %v1381 = vadd.f32 %v996, %v1349
  %v1382 = vadd.f32 %v997, %v1350
  %v1383 = vadd.f32 %v998, %v1351
  %v1384 = vadd.f32 %v999, %v1352
  %v1385 = vadd.f32 %v1000, %v1353
  %v1386 = vadd.f32 %v1001, %v1354
  %v1387 = vadd.f32 %v1002, %v1355
  %v1388 = vadd.f32 %v1003, %v1356
  %v1389 = vadd.f32 %v1004, %v1357
  %v1390 = vadd.f32 %v1005, %v1358
  %v1391 = vadd.f32 %v1006, %v1359
  %v1392 = vadd.f32 %v1007, %v1360
  %v1393 = vadd.f32 %v1008, %v1361
  %v1394 = vadd.f32 %v1009, %v1362
  %v1395 = vadd.f32 %v1010, %v1363
  %v1396 = vld [vmem:[%s1299 + $0x1] sm:$0xff]
  %v1397 = vld [vmem:[%s1299 + $0x9] sm:$0xff]
  %v1398 = vld [vmem:[%s1299 + $0x19] sm:$0xff]
  %v1399 = vld [vmem:[%s1299 + $0x21] sm:$0xff]
  %v1400 = vld [vmem:[%s1299 + $0x31] sm:$0xff]
  %v1401 = vld [vmem:[%s1299 + $0x39] sm:$0xff]
  %v1402 = vld [vmem:[%s1299 + $0x49] sm:$0xff]
  %v1403 = vld [vmem:[%s1299 + $0x51] sm:$0xff]
  %v1404 = vld [vmem:[%s1299 + $0x61] sm:$0xff]
  %v1405 = vld [vmem:[%s1299 + $0x69] sm:$0xff]
  %v1406 = vld [vmem:[%s1299 + $0x79] sm:$0xff]
  %v1407 = vld [vmem:[%s1299 + $0x81] sm:$0xff]
  %v1408 = vld [vmem:[%s1299 + $0x91] sm:$0xff]
  %v1409 = vld [vmem:[%s1299 + $0x99] sm:$0xff]
  %v1410 = vld [vmem:[%s1299 + $0xa9] sm:$0xff]
  %v1411 = vld [vmem:[%s1299 + $0xb1] sm:$0xff]
  %v1412 = vld [vmem:[%s1299 + $0xc1] sm:$0xff]
  %v1413 = vld [vmem:[%s1299 + $0xc9] sm:$0xff]
  %v1414 = vld [vmem:[%s1299 + $0xd9] sm:$0xff]
  %v1415 = vld [vmem:[%s1299 + $0xe1] sm:$0xff]
  %v1416 = vld [vmem:[%s1299 + $0xf1] sm:$0xff]
  %v1417 = vld [vmem:[%s1299 + $0xf9] sm:$0xff]
  %v1418 = vld [vmem:[%s1299 + $0x109] sm:$0xff]
  %v1419 = vld [vmem:[%s1299 + $0x111] sm:$0xff]
  %v1420 = vld [vmem:[%s1299 + $0x121] sm:$0xff]
  %v1421 = vld [vmem:[%s1299 + $0x129] sm:$0xff]
  %v1422 = vld [vmem:[%s1299 + $0x139] sm:$0xff]
  %v1423 = vld [vmem:[%s1299 + $0x141] sm:$0xff]
  %v1424 = vld [vmem:[%s1299 + $0x151] sm:$0xff]
  %v1425 = vld [vmem:[%s1299 + $0x159] sm:$0xff]
  %v1426 = vld [vmem:[%s1299 + $0x169] sm:$0xff]
  %v1427 = vld [vmem:[%s1299 + $0x171] sm:$0xff]
  %v1428 = vmul.f32 %v1396, 0.0041460674
  %v1429 = vmul.f32 %v1397, 0.0041460674
  %v1430 = vmul.f32 %v1398, 0.0041460674
  %v1431 = vmul.f32 %v1399, 0.0041460674
  %v1432 = vmul.f32 %v1400, 0.0041460674
  %v1433 = vmul.f32 %v1401, 0.0041460674
  %v1434 = vmul.f32 %v1402, 0.0041460674
  %v1435 = vmul.f32 %v1403, 0.0041460674
  %v1436 = vmul.f32 %v1404, 0.0041460674
  %v1437 = vmul.f32 %v1405, 0.0041460674
  %v1438 = vmul.f32 %v1406, 0.0041460674
  %v1439 = vmul.f32 %v1407, 0.0041460674
  %v1440 = vmul.f32 %v1408, 0.0041460674
  %v1441 = vmul.f32 %v1409, 0.0041460674
  %v1442 = vmul.f32 %v1410, 0.0041460674
  %v1443 = vmul.f32 %v1411, 0.0041460674
  %v1444 = vmul.f32 %v1412, 0.0041460674
  %v1445 = vmul.f32 %v1413, 0.0041460674
  %v1446 = vmul.f32 %v1414, 0.0041460674
  %v1447 = vmul.f32 %v1415, 0.0041460674
  %v1448 = vmul.f32 %v1416, 0.0041460674
  %v1449 = vmul.f32 %v1417, 0.0041460674
  %v1450 = vmul.f32 %v1418, 0.0041460674
  %v1451 = vmul.f32 %v1419, 0.0041460674
  %v1452 = vmul.f32 %v1420, 0.0041460674
  %v1453 = vmul.f32 %v1421, 0.0041460674
  %v1454 = vmul.f32 %v1422, 0.0041460674
  %v1455 = vmul.f32 %v1423, 0.0041460674
  %v1456 = vmul.f32 %v1424, 0.0041460674
  %v1457 = vmul.f32 %v1425, 0.0041460674
  %v1458 = vmul.f32 %v1426, 0.0041460674
  %v1459 = vmul.f32 %v1427, 0.0041460674
  %v1460 = vadd.f32 %v1075, %v1428
  %v1461 = vadd.f32 %v1076, %v1429
  %v1462 = vadd.f32 %v1077, %v1430
  %v1463 = vadd.f32 %v1078, %v1431
  %v1464 = vadd.f32 %v1079, %v1432
  %v1465 = vadd.f32 %v1080, %v1433
  %v1466 = vadd.f32 %v1081, %v1434
  %v1467 = vadd.f32 %v1082, %v1435
  %v1468 = vadd.f32 %v1083, %v1436
  %v1469 = vadd.f32 %v1084, %v1437
  %v1470 = vadd.f32 %v1085, %v1438
  %v1471 = vadd.f32 %v1086, %v1439
  %v1472 = vadd.f32 %v1087, %v1440
  %v1473 = vadd.f32 %v1088, %v1441
  %v1474 = vadd.f32 %v1089, %v1442
  %v1475 = vadd.f32 %v1090, %v1443
  %v1476 = vadd.f32 %v1091, %v1444
  %v1477 = vadd.f32 %v1092, %v1445
  %v1478 = vadd.f32 %v1093, %v1446
  %v1479 = vadd.f32 %v1094, %v1447
  %v1480 = vadd.f32 %v1095, %v1448
  %v1481 = vadd.f32 %v1096, %v1449
  %v1482 = vadd.f32 %v1097, %v1450
  %v1483 = vadd.f32 %v1098, %v1451
  %v1484 = vadd.f32 %v1099, %v1452
  %v1485 = vadd.f32 %v1100, %v1453
  %v1486 = vadd.f32 %v1101, %v1454
  %v1487 = vadd.f32 %v1102, %v1455
  %v1488 = vadd.f32 %v1103, %v1456
  %v1489 = vadd.f32 %v1104, %v1457
  %v1490 = vadd.f32 %v1105, %v1458
  %v1491 = vadd.f32 %v1106, %v1459
  %v1492 = vld [vmem:[%s1299 + $0x2] sm:$0xff]
  %v1493 = vld [vmem:[%s1299 + $0xa] sm:$0xff]
  %v1494 = vld [vmem:[%s1299 + $0x1a] sm:$0xff]
  %v1495 = vld [vmem:[%s1299 + $0x22] sm:$0xff]
  %v1496 = vld [vmem:[%s1299 + $0x32] sm:$0xff]
  %v1497 = vld [vmem:[%s1299 + $0x3a] sm:$0xff]
  %v1498 = vld [vmem:[%s1299 + $0x4a] sm:$0xff]
  %v1499 = vld [vmem:[%s1299 + $0x52] sm:$0xff]
  %v1500 = vld [vmem:[%s1299 + $0x62] sm:$0xff]
  %v1501 = vld [vmem:[%s1299 + $0x6a] sm:$0xff]
  %v1502 = vld [vmem:[%s1299 + $0x7a] sm:$0xff]
  %v1503 = vld [vmem:[%s1299 + $0x82] sm:$0xff]
  %v1504 = vld [vmem:[%s1299 + $0x92] sm:$0xff]
  %v1505 = vld [vmem:[%s1299 + $0x9a] sm:$0xff]
  %v1506 = vld [vmem:[%s1299 + $0xaa] sm:$0xff]
  %v1507 = vld [vmem:[%s1299 + $0xb2] sm:$0xff]
  %v1508 = vld [vmem:[%s1299 + $0xc2] sm:$0xff]
  %v1509 = vld [vmem:[%s1299 + $0xca] sm:$0xff]
  %v1510 = vld [vmem:[%s1299 + $0xda] sm:$0xff]
  %v1511 = vld [vmem:[%s1299 + $0xe2] sm:$0xff]
  %v1512 = vld [vmem:[%s1299 + $0xf2] sm:$0xff]
  %v1513 = vld [vmem:[%s1299 + $0xfa] sm:$0xff]
  %v1514 = vld [vmem:[%s1299 + $0x10a] sm:$0xff]
  %v1515 = vld [vmem:[%s1299 + $0x112] sm:$0xff]
  %v1516 = vld [vmem:[%s1299 + $0x122] sm:$0xff]
  %v1517 = vld [vmem:[%s1299 + $0x12a] sm:$0xff]
  %v1518 = vld [vmem:[%s1299 + $0x13a] sm:$0xff]
  %v1519 = vld [vmem:[%s1299 + $0x142] sm:$0xff]
  %v1520 = vld [vmem:[%s1299 + $0x152] sm:$0xff]
  %v1521 = vld [vmem:[%s1299 + $0x15a] sm:$0xff]
  %v1522 = vld [vmem:[%s1299 + $0x16a] sm:$0xff]
  %v1523 = vld [vmem:[%s1299 + $0x172] sm:$0xff]
  %v1524 = vmul.f32 %v1492, 0.0043224697
  %v1525 = vmul.f32 %v1493, 0.0043224697
  %v1526 = vmul.f32 %v1494, 0.0043224697
  %v1527 = vmul.f32 %v1495, 0.0043224697
  %v1528 = vmul.f32 %v1496, 0.0043224697
  %v1529 = vmul.f32 %v1497, 0.0043224697
  %v1530 = vmul.f32 %v1498, 0.0043224697
  %v1531 = vmul.f32 %v1499, 0.0043224697
  %v1532 = vmul.f32 %v1500, 0.0043224697
  %v1533 = vmul.f32 %v1501, 0.0043224697
  %v1534 = vmul.f32 %v1502, 0.0043224697
  %v1535 = vmul.f32 %v1503, 0.0043224697
  %v1536 = vmul.f32 %v1504, 0.0043224697
  %v1537 = vmul.f32 %v1505, 0.0043224697
  %v1538 = vmul.f32 %v1506, 0.0043224697
  %v1539 = vmul.f32 %v1507, 0.0043224697
  %v1540 = vmul.f32 %v1508, 0.0043224697
  %v1541 = vmul.f32 %v1509, 0.0043224697
  %v1542 = vmul.f32 %v1510, 0.0043224697
  %v1543 = vmul.f32 %v1511, 0.0043224697
  %v1544 = vmul.f32 %v1512, 0.0043224697
  %v1545 = vmul.f32 %v1513, 0.0043224697
  %v1546 = vmul.f32 %v1514, 0.0043224697
  %v1547 = vmul.f32 %v1515, 0.0043224697
  %v1548 = vmul.f32 %v1516, 0.0043224697
  %v1549 = vmul.f32 %v1517, 0.0043224697
  %v1550 = vmul.f32 %v1518, 0.0043224697
  %v1551 = vmul.f32 %v1519, 0.0043224697
  %v1552 = vmul.f32 %v1520, 0.0043224697
  %v1553 = vmul.f32 %v1521, 0.0043224697
  %v1554 = vmul.f32 %v1522, 0.0043224697
  %v1555 = vmul.f32 %v1523, 0.0043224697
  %v1556 = vadd.f32 %v1171, %v1524
  %v1557 = vadd.f32 %v1172, %v1525
  %v1558 = vadd.f32 %v1173, %v1526
  %v1559 = vadd.f32 %v1174, %v1527
  %v1560 = vadd.f32 %v1175, %v1528
  %v1561 = vadd.f32 %v1176, %v1529
  %v1562 = vadd.f32 %v1177, %v1530
  %v1563 = vadd.f32 %v1178, %v1531
  %v1564 = vadd.f32 %v1179, %v1532
  %v1565 = vadd.f32 %v1180, %v1533
  %v1566 = vadd.f32 %v1181, %v1534
  %v1567 = vadd.f32 %v1182, %v1535
  %v1568 = vadd.f32 %v1183, %v1536
  %v1569 = vadd.f32 %v1184, %v1537
  %v1570 = vadd.f32 %v1185, %v1538
  %v1571 = vadd.f32 %v1186, %v1539
  %v1572 = vadd.f32 %v1187, %v1540
  %v1573 = vadd.f32 %v1188, %v1541
  %v1574 = vadd.f32 %v1189, %v1542
  %v1575 = vadd.f32 %v1190, %v1543
  %v1576 = vadd.f32 %v1191, %v1544
  %v1577 = vadd.f32 %v1192, %v1545
  %v1578 = vadd.f32 %v1193, %v1546
  %v1579 = vadd.f32 %v1194, %v1547
  %v1580 = vadd.f32 %v1195, %v1548
  %v1581 = vadd.f32 %v1196, %v1549
  %v1582 = vadd.f32 %v1197, %v1550
  %v1583 = vadd.f32 %v1198, %v1551
  %v1584 = vadd.f32 %v1199, %v1552
  %v1585 = vadd.f32 %v1200, %v1553
  %v1586 = vadd.f32 %v1201, %v1554
  %v1587 = vadd.f32 %v1202, %v1555
  %v1588 = vld [vmem:[%s1299 + $0x3] sm:$0xff]
  %v1589 = vld [vmem:[%s1299 + $0xb] sm:$0xff]
  %v1590 = vld [vmem:[%s1299 + $0x1b] sm:$0xff]
  %v1591 = vld [vmem:[%s1299 + $0x23] sm:$0xff]
  %v1592 = vld [vmem:[%s1299 + $0x33] sm:$0xff]
  %v1593 = vld [vmem:[%s1299 + $0x3b] sm:$0xff]
  %v1594 = vld [vmem:[%s1299 + $0x4b] sm:$0xff]
  %v1595 = vld [vmem:[%s1299 + $0x53] sm:$0xff]
  %v1596 = vld [vmem:[%s1299 + $0x63] sm:$0xff]
  %v1597 = vld [vmem:[%s1299 + $0x6b] sm:$0xff]
  %v1598 = vld [vmem:[%s1299 + $0x7b] sm:$0xff]
  %v1599 = vld [vmem:[%s1299 + $0x83] sm:$0xff]
  %v1600 = vld [vmem:[%s1299 + $0x93] sm:$0xff]
  %v1601 = vld [vmem:[%s1299 + $0x9b] sm:$0xff]
  %v1602 = vld [vmem:[%s1299 + $0xab] sm:$0xff]
  %v1603 = vld [vmem:[%s1299 + $0xb3] sm:$0xff]
  %v1604 = vld [vmem:[%s1299 + $0xc3] sm:$0xff]
  %v1605 = vld [vmem:[%s1299 + $0xcb] sm:$0xff]
  %v1606 = vld [vmem:[%s1299 + $0xdb] sm:$0xff]
  %v1607 = vld [vmem:[%s1299 + $0xe3] sm:$0xff]
  %v1608 = vld [vmem:[%s1299 + $0xf3] sm:$0xff]
  %v1609 = vld [vmem:[%s1299 + $0xfb] sm:$0xff]
  %v1610 = vld [vmem:[%s1299 + $0x10b] sm:$0xff]
  %v1611 = vld [vmem:[%s1299 + $0x113] sm:$0xff]
  %v1612 = vld [vmem:[%s1299 + $0x123] sm:$0xff]
  %v1613 = vld [vmem:[%s1299 + $0x12b] sm:$0xff]
  %v1614 = vld [vmem:[%s1299 + $0x13b] sm:$0xff]
  %v1615 = vld [vmem:[%s1299 + $0x143] sm:$0xff]
  %v1616 = vld [vmem:[%s1299 + $0x153] sm:$0xff]
  %v1617 = vld [vmem:[%s1299 + $0x15b] sm:$0xff]
  %v1618 = vld [vmem:[%s1299 + $0x16b] sm:$0xff]
  %v1619 = vld [vmem:[%s1299 + $0x173] sm:$0xff]
  %v1620 = vmul.f32 %v1588, 0.013314144
  %v1621 = vmul.f32 %v1589, 0.013314144
  %v1622 = vmul.f32 %v1590, 0.013314144
  %v1623 = vmul.f32 %v1591, 0.013314144
  %v1624 = vmul.f32 %v1592, 0.013314144
  %v1625 = vmul.f32 %v1593, 0.013314144
  %v1626 = vmul.f32 %v1594, 0.013314144
  %v1627 = vmul.f32 %v1595, 0.013314144
  %v1628 = vmul.f32 %v1596, 0.013314144
  %v1629 = vmul.f32 %v1597, 0.013314144
  %v1630 = vmul.f32 %v1598, 0.013314144
  %v1631 = vmul.f32 %v1599, 0.013314144
  %v1632 = vmul.f32 %v1600, 0.013314144
  %v1633 = vmul.f32 %v1601, 0.013314144
  %v1634 = vmul.f32 %v1602, 0.013314144
  %v1635 = vmul.f32 %v1603, 0.013314144
  %v1636 = vmul.f32 %v1604, 0.013314144
  %v1637 = vmul.f32 %v1605, 0.013314144
  %v1638 = vmul.f32 %v1606, 0.013314144
  %v1639 = vmul.f32 %v1607, 0.013314144
  %v1640 = vmul.f32 %v1608, 0.013314144
  %v1641 = vmul.f32 %v1609, 0.013314144
  %v1642 = vmul.f32 %v1610, 0.013314144
  %v1643 = vmul.f32 %v1611, 0.013314144
  %v1644 = vmul.f32 %v1612, 0.013314144
  %v1645 = vmul.f32 %v1613, 0.013314144
  %v1646 = vmul.f32 %v1614, 0.013314144
  %v1647 = vmul.f32 %v1615, 0.013314144
  %v1648 = vmul.f32 %v1616, 0.013314144
  %v1649 = vmul.f32 %v1617, 0.013314144
  %v1650 = vmul.f32 %v1618, 0.013314144
  %v1651 = vmul.f32 %v1619, 0.013314144
  %v1652 = vadd.f32 %v1267, %v1620
  %v1653 = vadd.f32 %v1268, %v1621
  %v1654 = vadd.f32 %v1269, %v1622
  %v1655 = vadd.f32 %v1270, %v1623
  %v1656 = vadd.f32 %v1271, %v1624
  %v1657 = vadd.f32 %v1272, %v1625
  %v1658 = vadd.f32 %v1273, %v1626
  %v1659 = vadd.f32 %v1274, %v1627
  %v1660 = vadd.f32 %v1275, %v1628
  %v1661 = vadd.f32 %v1276, %v1629
  %v1662 = vadd.f32 %v1277, %v1630
  %v1663 = vadd.f32 %v1278, %v1631
  %v1664 = vadd.f32 %v1279, %v1632
  %v1665 = vadd.f32 %v1280, %v1633
  %v1666 = vadd.f32 %v1281, %v1634
  %v1667 = vadd.f32 %v1282, %v1635
  %v1668 = vadd.f32 %v1283, %v1636
  %v1669 = vadd.f32 %v1284, %v1637
  %v1670 = vadd.f32 %v1285, %v1638
  %v1671 = vadd.f32 %v1286, %v1639
  %v1672 = vadd.f32 %v1287, %v1640
  %v1673 = vadd.f32 %v1288, %v1641
  %v1674 = vadd.f32 %v1289, %v1642
  %v1675 = vadd.f32 %v1290, %v1643
  %v1676 = vadd.f32 %v1291, %v1644
  %v1677 = vadd.f32 %v1292, %v1645
  %v1678 = vadd.f32 %v1293, %v1646
  %v1679 = vadd.f32 %v1294, %v1647
  %v1680 = vadd.f32 %v1295, %v1648
  %v1681 = vadd.f32 %v1296, %v1649
  %v1682 = vadd.f32 %v1297, %v1650
  %v1683 = vadd.f32 %v1298, %v1651
  %v1684 = vld [vmem:[%s1299 + $0x4] sm:$0xff]
  %v1685 = vld [vmem:[%s1299 + $0xc] sm:$0xff]
  %v1686 = vld [vmem:[%s1299 + $0x1c] sm:$0xff]
  %v1687 = vld [vmem:[%s1299 + $0x24] sm:$0xff]
  %v1688 = vld [vmem:[%s1299 + $0x34] sm:$0xff]
  %v1689 = vld [vmem:[%s1299 + $0x3c] sm:$0xff]
  %v1690 = vld [vmem:[%s1299 + $0x4c] sm:$0xff]
  %v1691 = vld [vmem:[%s1299 + $0x54] sm:$0xff]
  %v1692 = vld [vmem:[%s1299 + $0x64] sm:$0xff]
  %v1693 = vld [vmem:[%s1299 + $0x6c] sm:$0xff]
  %v1694 = vld [vmem:[%s1299 + $0x7c] sm:$0xff]
  %v1695 = vld [vmem:[%s1299 + $0x84] sm:$0xff]
  %v1696 = vld [vmem:[%s1299 + $0x94] sm:$0xff]
  %v1697 = vld [vmem:[%s1299 + $0x9c] sm:$0xff]
  %v1698 = vld [vmem:[%s1299 + $0xac] sm:$0xff]
  %v1699 = vld [vmem:[%s1299 + $0xb4] sm:$0xff]
  %v1700 = vld [vmem:[%s1299 + $0xc4] sm:$0xff]
  %v1701 = vld [vmem:[%s1299 + $0xcc] sm:$0xff]
  %v1702 = vld [vmem:[%s1299 + $0xdc] sm:$0xff]
  %v1703 = vld [vmem:[%s1299 + $0xe4] sm:$0xff]
  %v1704 = vld [vmem:[%s1299 + $0xf4] sm:$0xff]
  %v1705 = vld [vmem:[%s1299 + $0xfc] sm:$0xff]
  %v1706 = vld [vmem:[%s1299 + $0x10c] sm:$0xff]
  %v1707 = vld [vmem:[%s1299 + $0x114] sm:$0xff]
  %v1708 = vld [vmem:[%s1299 + $0x124] sm:$0xff]
  %v1709 = vld [vmem:[%s1299 + $0x12c] sm:$0xff]
  %v1710 = vld [vmem:[%s1299 + $0x13c] sm:$0xff]
  %v1711 = vld [vmem:[%s1299 + $0x144] sm:$0xff]
  %v1712 = vld [vmem:[%s1299 + $0x154] sm:$0xff]
  %v1713 = vld [vmem:[%s1299 + $0x15c] sm:$0xff]
  %v1714 = vld [vmem:[%s1299 + $0x16c] sm:$0xff]
  %v1715 = vld [vmem:[%s1299 + $0x174] sm:$0xff]
  %v1716 = vmul.f32 %v1684, 0.013130504
  %v1717 = vmul.f32 %v1685, 0.013130504
  %v1718 = vmul.f32 %v1686, 0.013130504
  %v1719 = vmul.f32 %v1687, 0.013130504
  %v1720 = vmul.f32 %v1688, 0.013130504
  %v1721 = vmul.f32 %v1689, 0.013130504
  %v1722 = vmul.f32 %v1690, 0.013130504
  %v1723 = vmul.f32 %v1691, 0.013130504
  %v1724 = vmul.f32 %v1692, 0.013130504
  %v1725 = vmul.f32 %v1693, 0.013130504
  %v1726 = vmul.f32 %v1694, 0.013130504
  %v1727 = vmul.f32 %v1695, 0.013130504
  %v1728 = vmul.f32 %v1696, 0.013130504
  %v1729 = vmul.f32 %v1697, 0.013130504
  %v1730 = vmul.f32 %v1698, 0.013130504
  %v1731 = vmul.f32 %v1699, 0.013130504
  %v1732 = vmul.f32 %v1700, 0.013130504
  %v1733 = vmul.f32 %v1701, 0.013130504
  %v1734 = vmul.f32 %v1702, 0.013130504
  %v1735 = vmul.f32 %v1703, 0.013130504
  %v1736 = vmul.f32 %v1704, 0.013130504
  %v1737 = vmul.f32 %v1705, 0.013130504
  %v1738 = vmul.f32 %v1706, 0.013130504
  %v1739 = vmul.f32 %v1707, 0.013130504
  %v1740 = vmul.f32 %v1708, 0.013130504
  %v1741 = vmul.f32 %v1709, 0.013130504
  %v1742 = vmul.f32 %v1710, 0.013130504
  %v1743 = vmul.f32 %v1711, 0.013130504
  %v1744 = vmul.f32 %v1712, 0.013130504
  %v1745 = vmul.f32 %v1713, 0.013130504
  %v1746 = vmul.f32 %v1714, 0.013130504
  %v1747 = vmul.f32 %v1715, 0.013130504
  %v1748 = vadd.f32 %v1364, %v1716
  %v1749 = vadd.f32 %v1365, %v1717
  %v1750 = vadd.f32 %v1366, %v1718
  %v1751 = vadd.f32 %v1367, %v1719
  %v1752 = vadd.f32 %v1368, %v1720
  %v1753 = vadd.f32 %v1369, %v1721
  %v1754 = vadd.f32 %v1370, %v1722
  %v1755 = vadd.f32 %v1371, %v1723
  %v1756 = vadd.f32 %v1372, %v1724
  %v1757 = vadd.f32 %v1373, %v1725
  %v1758 = vadd.f32 %v1374, %v1726
  %v1759 = vadd.f32 %v1375, %v1727
  %v1760 = vadd.f32 %v1376, %v1728
  %v1761 = vadd.f32 %v1377, %v1729
  %v1762 = vadd.f32 %v1378, %v1730
  %v1763 = vadd.f32 %v1379, %v1731
  %v1764 = vadd.f32 %v1380, %v1732
  %v1765 = vadd.f32 %v1381, %v1733
  %v1766 = vadd.f32 %v1382, %v1734
  %v1767 = vadd.f32 %v1383, %v1735
  %v1768 = vadd.f32 %v1384, %v1736
  %v1769 = vadd.f32 %v1385, %v1737
  %v1770 = vadd.f32 %v1386, %v1738
  %v1771 = vadd.f32 %v1387, %v1739
  %v1772 = vadd.f32 %v1388, %v1740
  %v1773 = vadd.f32 %v1389, %v1741
  %v1774 = vadd.f32 %v1390, %v1742
  %v1775 = vadd.f32 %v1391, %v1743
  %v1776 = vadd.f32 %v1392, %v1744
  %v1777 = vadd.f32 %v1393, %v1745
  %v1778 = vadd.f32 %v1394, %v1746
  %v1779 = vadd.f32 %v1395, %v1747
  %v1780 = vld [vmem:[%s1299 + $0x5] sm:$0xff]
  %v1781 = vld [vmem:[%s1299 + $0xd] sm:$0xff]
  %v1782 = vld [vmem:[%s1299 + $0x1d] sm:$0xff]
  %v1783 = vld [vmem:[%s1299 + $0x25] sm:$0xff]
  %v1784 = vld [vmem:[%s1299 + $0x35] sm:$0xff]
  %v1785 = vld [vmem:[%s1299 + $0x3d] sm:$0xff]
  %v1786 = vld [vmem:[%s1299 + $0x4d] sm:$0xff]
  %v1787 = vld [vmem:[%s1299 + $0x55] sm:$0xff]
  %v1788 = vld [vmem:[%s1299 + $0x65] sm:$0xff]
  %v1789 = vld [vmem:[%s1299 + $0x6d] sm:$0xff]
  %v1790 = vld [vmem:[%s1299 + $0x7d] sm:$0xff]
  %v1791 = vld [vmem:[%s1299 + $0x85] sm:$0xff]
  %v1792 = vld [vmem:[%s1299 + $0x95] sm:$0xff]
  %v1793 = vld [vmem:[%s1299 + $0x9d] sm:$0xff]
  %v1794 = vld [vmem:[%s1299 + $0xad] sm:$0xff]
  %v1795 = vld [vmem:[%s1299 + $0xb5] sm:$0xff]
  %v1796 = vld [vmem:[%s1299 + $0xc5] sm:$0xff]
  %v1797 = vld [vmem:[%s1299 + $0xcd] sm:$0xff]
  %v1798 = vld [vmem:[%s1299 + $0xdd] sm:$0xff]
  %v1799 = vld [vmem:[%s1299 + $0xe5] sm:$0xff]
  %v1800 = vld [vmem:[%s1299 + $0xf5] sm:$0xff]
  %v1801 = vld [vmem:[%s1299 + $0xfd] sm:$0xff]
  %v1802 = vld [vmem:[%s1299 + $0x10d] sm:$0xff]
  %v1803 = vld [vmem:[%s1299 + $0x115] sm:$0xff]
  %v1804 = vld [vmem:[%s1299 + $0x125] sm:$0xff]
  %v1805 = vld [vmem:[%s1299 + $0x12d] sm:$0xff]
  %v1806 = vld [vmem:[%s1299 + $0x13d] sm:$0xff]
  %v1807 = vld [vmem:[%s1299 + $0x145] sm:$0xff]
  %v1808 = vld [vmem:[%s1299 + $0x155] sm:$0xff]
  %v1809 = vld [vmem:[%s1299 + $0x15d] sm:$0xff]
  %v1810 = vld [vmem:[%s1299 + $0x16d] sm:$0xff]
  %v1811 = vld [vmem:[%s1299 + $0x175] sm:$0xff]
  %v1812 = vmul.f32 %v1780, 0.02453101
  %v1813 = vmul.f32 %v1781, 0.02453101
  %v1814 = vmul.f32 %v1782, 0.02453101
  %v1815 = vmul.f32 %v1783, 0.02453101
  %v1816 = vmul.f32 %v1784, 0.02453101
  %v1817 = vmul.f32 %v1785, 0.02453101
  %v1818 = vmul.f32 %v1786, 0.02453101
  %v1819 = vmul.f32 %v1787, 0.02453101
  %v1820 = vmul.f32 %v1788, 0.02453101
  %v1821 = vmul.f32 %v1789, 0.02453101
  %v1822 = vmul.f32 %v1790, 0.02453101
  %v1823 = vmul.f32 %v1791, 0.02453101
  %v1824 = vmul.f32 %v1792, 0.02453101
  %v1825 = vmul.f32 %v1793, 0.02453101
  %v1826 = vmul.f32 %v1794, 0.02453101
  %v1827 = vmul.f32 %v1795, 0.02453101
  %v1828 = vmul.f32 %v1796, 0.02453101
  %v1829 = vmul.f32 %v1797, 0.02453101
  %v1830 = vmul.f32 %v1798, 0.02453101
  %v1831 = vmul.f32 %v1799, 0.02453101
  %v1832 = vmul.f32 %v1800, 0.02453101
  %v1833 = vmul.f32 %v1801, 0.02453101
  %v1834 = vmul.f32 %v1802, 0.02453101
  %v1835 = vmul.f32 %v1803, 0.02453101
  %v1836 = vmul.f32 %v1804, 0.02453101
  %v1837 = vmul.f32 %v1805, 0.02453101
  %v1838 = vmul.f32 %v1806, 0.02453101
  %v1839 = vmul.f32 %v1807, 0.02453101
  %v1840 = vmul.f32 %v1808, 0.02453101
  %v1841 = vmul.f32 %v1809, 0.02453101
  %v1842 = vmul.f32 %v1810, 0.02453101
  %v1843 = vmul.f32 %v1811, 0.02453101
  %v1844 = vadd.f32 %v1460, %v1812
  %v1845 = vadd.f32 %v1461, %v1813
  %v1846 = vadd.f32 %v1462, %v1814
  %v1847 = vadd.f32 %v1463, %v1815
  %v1848 = vadd.f32 %v1464, %v1816
  %v1849 = vadd.f32 %v1465, %v1817
  %v1850 = vadd.f32 %v1466, %v1818
  %v1851 = vadd.f32 %v1467, %v1819
  %v1852 = vadd.f32 %v1468, %v1820
  %v1853 = vadd.f32 %v1469, %v1821
  %v1854 = vadd.f32 %v1470, %v1822
  %v1855 = vadd.f32 %v1471, %v1823
  %v1856 = vadd.f32 %v1472, %v1824
  %v1857 = vadd.f32 %v1473, %v1825
  %v1858 = vadd.f32 %v1474, %v1826
  %v1859 = vadd.f32 %v1475, %v1827
  %v1860 = vadd.f32 %v1476, %v1828
  %v1861 = vadd.f32 %v1477, %v1829
  %v1862 = vadd.f32 %v1478, %v1830
  %v1863 = vadd.f32 %v1479, %v1831
  %v1864 = vadd.f32 %v1480, %v1832
  %v1865 = vadd.f32 %v1481, %v1833
  %v1866 = vadd.f32 %v1482, %v1834
  %v1867 = vadd.f32 %v1483, %v1835
  %v1868 = vadd.f32 %v1484, %v1836
  %v1869 = vadd.f32 %v1485, %v1837
  %v1870 = vadd.f32 %v1486, %v1838
  %v1871 = vadd.f32 %v1487, %v1839
  %v1872 = vadd.f32 %v1488, %v1840
  %v1873 = vadd.f32 %v1489, %v1841
  %v1874 = vadd.f32 %v1490, %v1842
  %v1875 = vadd.f32 %v1491, %v1843
  %v1876 = vld [vmem:[%s1299 + $0x6] sm:$0xff]
  %v1877 = vld [vmem:[%s1299 + $0xe] sm:$0xff]
  %v1878 = vld [vmem:[%s1299 + $0x1e] sm:$0xff]
  %v1879 = vld [vmem:[%s1299 + $0x26] sm:$0xff]
  %v1880 = vld [vmem:[%s1299 + $0x36] sm:$0xff]
  %v1881 = vld [vmem:[%s1299 + $0x3e] sm:$0xff]
  %v1882 = vld [vmem:[%s1299 + $0x4e] sm:$0xff]
  %v1883 = vld [vmem:[%s1299 + $0x56] sm:$0xff]
  %v1884 = vld [vmem:[%s1299 + $0x66] sm:$0xff]
  %v1885 = vld [vmem:[%s1299 + $0x6e] sm:$0xff]
  %v1886 = vld [vmem:[%s1299 + $0x7e] sm:$0xff]
  %v1887 = vld [vmem:[%s1299 + $0x86] sm:$0xff]
  %v1888 = vld [vmem:[%s1299 + $0x96] sm:$0xff]
  %v1889 = vld [vmem:[%s1299 + $0x9e] sm:$0xff]
  %v1890 = vld [vmem:[%s1299 + $0xae] sm:$0xff]
  %v1891 = vld [vmem:[%s1299 + $0xb6] sm:$0xff]
  %v1892 = vld [vmem:[%s1299 + $0xc6] sm:$0xff]
  %v1893 = vld [vmem:[%s1299 + $0xce] sm:$0xff]
  %v1894 = vld [vmem:[%s1299 + $0xde] sm:$0xff]
  %v1895 = vld [vmem:[%s1299 + $0xe6] sm:$0xff]
  %v1896 = vld [vmem:[%s1299 + $0xf6] sm:$0xff]
  %v1897 = vld [vmem:[%s1299 + $0xfe] sm:$0xff]
  %v1898 = vld [vmem:[%s1299 + $0x10e] sm:$0xff]
  %v1899 = vld [vmem:[%s1299 + $0x116] sm:$0xff]
  %v1900 = vld [vmem:[%s1299 + $0x126] sm:$0xff]
  %v1901 = vld [vmem:[%s1299 + $0x12e] sm:$0xff]
  %v1902 = vld [vmem:[%s1299 + $0x13e] sm:$0xff]
  %v1903 = vld [vmem:[%s1299 + $0x146] sm:$0xff]
  %v1904 = vld [vmem:[%s1299 + $0x156] sm:$0xff]
  %v1905 = vld [vmem:[%s1299 + $0x15e] sm:$0xff]
  %v1906 = vld [vmem:[%s1299 + $0x16e] sm:$0xff]
  %v1907 = vld [vmem:[%s1299 + $0x176] sm:$0xff]
  %v1908 = vmul.f32 %v1876, 0.022885272
  %v1909 = vmul.f32 %v1877, 0.022885272
  %v1910 = vmul.f32 %v1878, 0.022885272
  %v1911 = vmul.f32 %v1879, 0.022885272
  %v1912 = vmul.f32 %v1880, 0.022885272
  %v1913 = vmul.f32 %v1881, 0.022885272
  %v1914 = vmul.f32 %v1882, 0.022885272
  %v1915 = vmul.f32 %v1883, 0.022885272
  %v1916 = vmul.f32 %v1884, 0.022885272
  %v1917 = vmul.f32 %v1885, 0.022885272
  %v1918 = vmul.f32 %v1886, 0.022885272
  %v1919 = vmul.f32 %v1887, 0.022885272
  %v1920 = vmul.f32 %v1888, 0.022885272
  %v1921 = vmul.f32 %v1889, 0.022885272
  %v1922 = vmul.f32 %v1890, 0.022885272
  %v1923 = vmul.f32 %v1891, 0.022885272
  %v1924 = vmul.f32 %v1892, 0.022885272
  %v1925 = vmul.f32 %v1893, 0.022885272
  %v1926 = vmul.f32 %v1894, 0.022885272
  %v1927 = vmul.f32 %v1895, 0.022885272
  %v1928 = vmul.f32 %v1896, 0.022885272
  %v1929 = vmul.f32 %v1897, 0.022885272
  %v1930 = vmul.f32 %v1898, 0.022885272
  %v1931 = vmul.f32 %v1899, 0.022885272
  %v1932 = vmul.f32 %v1900, 0.022885272
  %v1933 = vmul.f32 %v1901, 0.022885272
  %v1934 = vmul.f32 %v1902, 0.022885272
  %v1935 = vmul.f32 %v1903, 0.022885272
  %v1936 = vmul.f32 %v1904, 0.022885272
  %v1937 = vmul.f32 %v1905, 0.022885272
  %v1938 = vmul.f32 %v1906, 0.022885272
  %v1939 = vmul.f32 %v1907, 0.022885272
  %v1940 = vadd.f32 %v1556, %v1908
  %v1941 = vadd.f32 %v1557, %v1909
  %v1942 = vadd.f32 %v1558, %v1910
  %v1943 = vadd.f32 %v1559, %v1911
  %v1944 = vadd.f32 %v1560, %v1912
  %v1945 = vadd.f32 %v1561, %v1913
  %v1946 = vadd.f32 %v1562, %v1914
  %v1947 = vadd.f32 %v1563, %v1915
  %v1948 = vadd.f32 %v1564, %v1916
  %v1949 = vadd.f32 %v1565, %v1917
  %v1950 = vadd.f32 %v1566, %v1918
  %v1951 = vadd.f32 %v1567, %v1919
  %v1952 = vadd.f32 %v1568, %v1920
  %v1953 = vadd.f32 %v1569, %v1921
  %v1954 = vadd.f32 %v1570, %v1922
  %v1955 = vadd.f32 %v1571, %v1923
  %v1956 = vadd.f32 %v1572, %v1924
  %v1957 = vadd.f32 %v1573, %v1925
  %v1958 = vadd.f32 %v1574, %v1926
  %v1959 = vadd.f32 %v1575, %v1927
  %v1960 = vadd.f32 %v1576, %v1928
  %v1961 = vadd.f32 %v1577, %v1929
  %v1962 = vadd.f32 %v1578, %v1930
  %v1963 = vadd.f32 %v1579, %v1931
  %v1964 = vadd.f32 %v1580, %v1932
  %v1965 = vadd.f32 %v1581, %v1933
  %v1966 = vadd.f32 %v1582, %v1934
  %v1967 = vadd.f32 %v1583, %v1935
  %v1968 = vadd.f32 %v1584, %v1936
  %v1969 = vadd.f32 %v1585, %v1937
  %v1970 = vadd.f32 %v1586, %v1938
  %v1971 = vadd.f32 %v1587, %v1939
  %v1972 = vld [vmem:[%s1299 + $0x7] sm:$0xff]
  %v1973 = vld [vmem:[%s1299 + $0xf] sm:$0xff]
  %v1974 = vld [vmem:[%s1299 + $0x1f] sm:$0xff]
  %v1975 = vld [vmem:[%s1299 + $0x27] sm:$0xff]
  %v1976 = vld [vmem:[%s1299 + $0x37] sm:$0xff]
  %v1977 = vld [vmem:[%s1299 + $0x3f] sm:$0xff]
  %v1978 = vld [vmem:[%s1299 + $0x4f] sm:$0xff]
  %v1979 = vld [vmem:[%s1299 + $0x57] sm:$0xff]
  %v1980 = vld [vmem:[%s1299 + $0x67] sm:$0xff]
  %v1981 = vld [vmem:[%s1299 + $0x6f] sm:$0xff]
  %v1982 = vld [vmem:[%s1299 + $0x7f] sm:$0xff]
  %v1983 = vld [vmem:[%s1299 + $0x87] sm:$0xff]
  %v1984 = vld [vmem:[%s1299 + $0x97] sm:$0xff]
  %v1985 = vld [vmem:[%s1299 + $0x9f] sm:$0xff]
  %v1986 = vld [vmem:[%s1299 + $0xaf] sm:$0xff]
  %v1987 = vld [vmem:[%s1299 + $0xb7] sm:$0xff]
  %v1988 = vld [vmem:[%s1299 + $0xc7] sm:$0xff]
  %v1989 = vld [vmem:[%s1299 + $0xcf] sm:$0xff]
  %v1990 = vld [vmem:[%s1299 + $0xdf] sm:$0xff]
  %v1991 = vld [vmem:[%s1299 + $0xe7] sm:$0xff]
  %v1992 = vld [vmem:[%s1299 + $0xf7] sm:$0xff]
  %v1993 = vld [vmem:[%s1299 + $0xff] sm:$0xff]
  %v1994 = vld [vmem:[%s1299 + $0x10f] sm:$0xff]
  %v1995 = vld [vmem:[%s1299 + $0x117] sm:$0xff]
  %v1996 = vld [vmem:[%s1299 + $0x127] sm:$0xff]
  %v1997 = vld [vmem:[%s1299 + $0x12f] sm:$0xff]
  %v1998 = vld [vmem:[%s1299 + $0x13f] sm:$0xff]
  %v1999 = vld [vmem:[%s1299 + $0x147] sm:$0xff]
  %v2000 = vld [vmem:[%s1299 + $0x157] sm:$0xff]
  %v2001 = vld [vmem:[%s1299 + $0x15f] sm:$0xff]
  %v2002 = vld [vmem:[%s1299 + $0x16f] sm:$0xff]
  %v2003 = vld [vmem:[%s1299 + $0x177] sm:$0xff]
  %v2004 = vmul.f32 %v1972, 0.025932413
  %v2005 = vmul.f32 %v1973, 0.025932413
  %v2006 = vmul.f32 %v1974, 0.025932413
  %v2007 = vmul.f32 %v1975, 0.025932413
  %v2008 = vmul.f32 %v1976, 0.025932413
  %v2009 = vmul.f32 %v1977, 0.025932413
  %v2010 = vmul.f32 %v1978, 0.025932413
  %v2011 = vmul.f32 %v1979, 0.025932413
  %v2012 = vmul.f32 %v1980, 0.025932413
  %v2013 = vmul.f32 %v1981, 0.025932413
  %v2014 = vmul.f32 %v1982, 0.025932413
  %v2015 = vmul.f32 %v1983, 0.025932413
  %v2016 = vmul.f32 %v1984, 0.025932413
  %v2017 = vmul.f32 %v1985, 0.025932413
  %v2018 = vmul.f32 %v1986, 0.025932413
  %v2019 = vmul.f32 %v1987, 0.025932413
  %v2020 = vmul.f32 %v1988, 0.025932413
  %v2021 = vmul.f32 %v1989, 0.025932413
  %v2022 = vmul.f32 %v1990, 0.025932413
  %v2023 = vmul.f32 %v1991, 0.025932413
  %v2024 = vmul.f32 %v1992, 0.025932413
  %v2025 = vmul.f32 %v1993, 0.025932413
  %v2026 = vmul.f32 %v1994, 0.025932413
  %v2027 = vmul.f32 %v1995, 0.025932413
  %v2028 = vmul.f32 %v1996, 0.025932413
  %v2029 = vmul.f32 %v1997, 0.025932413
  %v2030 = vmul.f32 %v1998, 0.025932413
  %v2031 = vmul.f32 %v1999, 0.025932413
  %v2032 = vmul.f32 %v2000, 0.025932413
  %v2033 = vmul.f32 %v2001, 0.025932413
  %v2034 = vmul.f32 %v2002, 0.025932413
  %v2035 = vmul.f32 %v2003, 0.025932413
  %v2036 = vadd.f32 %v1652, %v2004
  %v2037 = vadd.f32 %v1653, %v2005
  %v2038 = vadd.f32 %v1654, %v2006
  %v2039 = vadd.f32 %v1655, %v2007
  %v2040 = vadd.f32 %v1656, %v2008
  %v2041 = vadd.f32 %v1657, %v2009
  %v2042 = vadd.f32 %v1658, %v2010
  %v2043 = vadd.f32 %v1659, %v2011
  %v2044 = vadd.f32 %v1660, %v2012
  %v2045 = vadd.f32 %v1661, %v2013
  %v2046 = vadd.f32 %v1662, %v2014
  %v2047 = vadd.f32 %v1663, %v2015
  %v2048 = vadd.f32 %v1664, %v2016
  %v2049 = vadd.f32 %v1665, %v2017
  %v2050 = vadd.f32 %v1666, %v2018
  %v2051 = vadd.f32 %v1667, %v2019
  %v2052 = vadd.f32 %v1668, %v2020
  %v2053 = vadd.f32 %v1669, %v2021
  %v2054 = vadd.f32 %v1670, %v2022
  %v2055 = vadd.f32 %v1671, %v2023
  %v2056 = vadd.f32 %v1672, %v2024
  %v2057 = vadd.f32 %v1673, %v2025
  %v2058 = vadd.f32 %v1674, %v2026
  %v2059 = vadd.f32 %v1675, %v2027
  %v2060 = vadd.f32 %v1676, %v2028
  %v2061 = vadd.f32 %v1677, %v2029
  %v2062 = vadd.f32 %v1678, %v2030
  %v2063 = vadd.f32 %v1679, %v2031
  %v2064 = vadd.f32 %v1680, %v2032
  %v2065 = vadd.f32 %v1681, %v2033
  %v2066 = vadd.f32 %v1682, %v2034
  %v2067 = vadd.f32 %v1683, %v2035
  %v2068 = vld [vmem:[%s1299 + $0x10] sm:$0xff]
  %v2069 = vld [vmem:[%s1299 + $0x28] sm:$0xff]
  %v2070 = vld [vmem:[%s1299 + $0x40] sm:$0xff]
  %v2071 = vld [vmem:[%s1299 + $0x58] sm:$0xff]
  %v2072 = vld [vmem:[%s1299 + $0x70] sm:$0xff]
  %v2073 = vld [vmem:[%s1299 + $0x88] sm:$0xff]
  %v2074 = vld [vmem:[%s1299 + $0xa0] sm:$0xff]
  %v2075 = vld [vmem:[%s1299 + $0xb8] sm:$0xff]
  %v2076 = vld [vmem:[%s1299 + $0xd0] sm:$0xff]
  %v2077 = vld [vmem:[%s1299 + $0xe8] sm:$0xff]
  %v2078 = vld [vmem:[%s1299 + $0x100] sm:$0xff]
  %v2079 = vld [vmem:[%s1299 + $0x118] sm:$0xff]
  %v2080 = vld [vmem:[%s1299 + $0x130] sm:$0xff]
  %v2081 = vld [vmem:[%s1299 + $0x148] sm:$0xff]
  %v2082 = vld [vmem:[%s1299 + $0x160] sm:$0xff]
  %v2083 = vld [vmem:[%s1299 + $0x178] sm:$0xff]
  %v2084 = vmul.f32 %v1301, 0.025932413
  %v2085 = vmul.f32 %v2068, 0.025932413
  %v2086 = vmul.f32 %v1303, 0.025932413
  %v2087 = vmul.f32 %v2069, 0.025932413
  %v2088 = vmul.f32 %v1305, 0.025932413
  %v2089 = vmul.f32 %v2070, 0.025932413
  %v2090 = vmul.f32 %v1307, 0.025932413
  %v2091 = vmul.f32 %v2071, 0.025932413
  %v2092 = vmul.f32 %v1309, 0.025932413
  %v2093 = vmul.f32 %v2072, 0.025932413
  %v2094 = vmul.f32 %v1311, 0.025932413
  %v2095 = vmul.f32 %v2073, 0.025932413
  %v2096 = vmul.f32 %v1313, 0.025932413
  %v2097 = vmul.f32 %v2074, 0.025932413
  %v2098 = vmul.f32 %v1315, 0.025932413
  %v2099 = vmul.f32 %v2075, 0.025932413
  %v2100 = vmul.f32 %v1317, 0.025932413
  %v2101 = vmul.f32 %v2076, 0.025932413
  %v2102 = vmul.f32 %v1319, 0.025932413
  %v2103 = vmul.f32 %v2077, 0.025932413
  %v2104 = vmul.f32 %v1321, 0.025932413
  %v2105 = vmul.f32 %v2078, 0.025932413
  %v2106 = vmul.f32 %v1323, 0.025932413
  %v2107 = vmul.f32 %v2079, 0.025932413
  %v2108 = vmul.f32 %v1325, 0.025932413
  %v2109 = vmul.f32 %v2080, 0.025932413
  %v2110 = vmul.f32 %v1327, 0.025932413
  %v2111 = vmul.f32 %v2081, 0.025932413
  %v2112 = vmul.f32 %v1329, 0.025932413
  %v2113 = vmul.f32 %v2082, 0.025932413
  %v2114 = vmul.f32 %v1331, 0.025932413
  %v2115 = vmul.f32 %v2083, 0.025932413
  %v2116 = vadd.f32 %v1748, %v2084
  %v2117 = vadd.f32 %v1749, %v2085
  %v2118 = vadd.f32 %v1750, %v2086
  %v2119 = vadd.f32 %v1751, %v2087
  %v2120 = vadd.f32 %v1752, %v2088
  %v2121 = vadd.f32 %v1753, %v2089
  %v2122 = vadd.f32 %v1754, %v2090
  %v2123 = vadd.f32 %v1755, %v2091
  %v2124 = vadd.f32 %v1756, %v2092
  %v2125 = vadd.f32 %v1757, %v2093
  %v2126 = vadd.f32 %v1758, %v2094
  %v2127 = vadd.f32 %v1759, %v2095
  %v2128 = vadd.f32 %v1760, %v2096
  %v2129 = vadd.f32 %v1761, %v2097
  %v2130 = vadd.f32 %v1762, %v2098
  %v2131 = vadd.f32 %v1763, %v2099
  %v2132 = vadd.f32 %v1764, %v2100
  %v2133 = vadd.f32 %v1765, %v2101
  %v2134 = vadd.f32 %v1766, %v2102
  %v2135 = vadd.f32 %v1767, %v2103
  %v2136 = vadd.f32 %v1768, %v2104
  %v2137 = vadd.f32 %v1769, %v2105
  %v2138 = vadd.f32 %v1770, %v2106
  %v2139 = vadd.f32 %v1771, %v2107
  %v2140 = vadd.f32 %v1772, %v2108
  %v2141 = vadd.f32 %v1773, %v2109
  %v2142 = vadd.f32 %v1774, %v2110
  %v2143 = vadd.f32 %v1775, %v2111
  %v2144 = vadd.f32 %v1776, %v2112
  %v2145 = vadd.f32 %v1777, %v2113
  %v2146 = vadd.f32 %v1778, %v2114
  %v2147 = vadd.f32 %v1779, %v2115
  %s2148 = scalar_lea.vmem [#allocation2], 72
  %v2149 = vld [vmem:[%s2148] sm:$0xff]
  %v2150 = vld [vmem:[%s2148 + $0x8] sm:$0xff]
  %v2151 = vld [vmem:[%s2148 + $0x18] sm:$0xff]
  %v2152 = vld [vmem:[%s2148 + $0x20] sm:$0xff]
  %v2153 = vld [vmem:[%s2148 + $0x30] sm:$0xff]
  %v2154 = vld [vmem:[%s2148 + $0x38] sm:$0xff]
  %v2155 = vld [vmem:[%s2148 + $0x48] sm:$0xff]
  %v2156 = vld [vmem:[%s2148 + $0x50] sm:$0xff]
  %v2157 = vld [vmem:[%s2148 + $0x60] sm:$0xff]
  %v2158 = vld [vmem:[%s2148 + $0x68] sm:$0xff]
  %v2159 = vld [vmem:[%s2148 + $0x78] sm:$0xff]
  %v2160 = vld [vmem:[%s2148 + $0x80] sm:$0xff]
  %v2161 = vld [vmem:[%s2148 + $0x90] sm:$0xff]
  %v2162 = vld [vmem:[%s2148 + $0x98] sm:$0xff]
  %v2163 = vld [vmem:[%s2148 + $0xa8] sm:$0xff]
  %v2164 = vld [vmem:[%s2148 + $0xb0] sm:$0xff]
  %v2165 = vld [vmem:[%s2148 + $0xc0] sm:$0xff]
  %v2166 = vld [vmem:[%s2148 + $0xc8] sm:$0xff]
  %v2167 = vld [vmem:[%s2148 + $0xd8] sm:$0xff]
  %v2168 = vld [vmem:[%s2148 + $0xe0] sm:$0xff]
  %v2169 = vld [vmem:[%s2148 + $0xf0] sm:$0xff]
  %v2170 = vld [vmem:[%s2148 + $0xf8] sm:$0xff]
  %v2171 = vld [vmem:[%s2148 + $0x108] sm:$0xff]
  %v2172 = vld [vmem:[%s2148 + $0x110] sm:$0xff]
  %v2173 = vld [vmem:[%s2148 + $0x120] sm:$0xff]
  %v2174 = vld [vmem:[%s2148 + $0x128] sm:$0xff]
  %v2175 = vld [vmem:[%s2148 + $0x138] sm:$0xff]
  %v2176 = vld [vmem:[%s2148 + $0x140] sm:$0xff]
  %v2177 = vld [vmem:[%s2148 + $0x150] sm:$0xff]
  %v2178 = vld [vmem:[%s2148 + $0x158] sm:$0xff]
  %v2179 = vld [vmem:[%s2148 + $0x168] sm:$0xff]
  %v2180 = vld [vmem:[%s2148 + $0x170] sm:$0xff]
  %v2181 = vmul.f32 %v2149, 0.0038679158
  %v2182 = vmul.f32 %v2150, 0.0038679158
  %v2183 = vmul.f32 %v2151, 0.0038679158
  %v2184 = vmul.f32 %v2152, 0.0038679158
  %v2185 = vmul.f32 %v2153, 0.0038679158
  %v2186 = vmul.f32 %v2154, 0.0038679158
  %v2187 = vmul.f32 %v2155, 0.0038679158
  %v2188 = vmul.f32 %v2156, 0.0038679158
  %v2189 = vmul.f32 %v2157, 0.0038679158
  %v2190 = vmul.f32 %v2158, 0.0038679158
  %v2191 = vmul.f32 %v2159, 0.0038679158
  %v2192 = vmul.f32 %v2160, 0.0038679158
  %v2193 = vmul.f32 %v2161, 0.0038679158
  %v2194 = vmul.f32 %v2162, 0.0038679158
  %v2195 = vmul.f32 %v2163, 0.0038679158
  %v2196 = vmul.f32 %v2164, 0.0038679158
  %v2197 = vmul.f32 %v2165, 0.0038679158
  %v2198 = vmul.f32 %v2166, 0.0038679158
  %v2199 = vmul.f32 %v2167, 0.0038679158
  %v2200 = vmul.f32 %v2168, 0.0038679158
  %v2201 = vmul.f32 %v2169, 0.0038679158
  %v2202 = vmul.f32 %v2170, 0.0038679158
  %v2203 = vmul.f32 %v2171, 0.0038679158
  %v2204 = vmul.f32 %v2172, 0.0038679158
  %v2205 = vmul.f32 %v2173, 0.0038679158
  %v2206 = vmul.f32 %v2174, 0.0038679158
  %v2207 = vmul.f32 %v2175, 0.0038679158
  %v2208 = vmul.f32 %v2176, 0.0038679158
  %v2209 = vmul.f32 %v2177, 0.0038679158
  %v2210 = vmul.f32 %v2178, 0.0038679158
  %v2211 = vmul.f32 %v2179, 0.0038679158
  %v2212 = vmul.f32 %v2180, 0.0038679158
  %v2213 = vadd.f32 %v1844, %v2181
  %v2214 = vadd.f32 %v1845, %v2182
  %v2215 = vadd.f32 %v1846, %v2183
  %v2216 = vadd.f32 %v1847, %v2184
  %v2217 = vadd.f32 %v1848, %v2185
  %v2218 = vadd.f32 %v1849, %v2186
  %v2219 = vadd.f32 %v1850, %v2187
  %v2220 = vadd.f32 %v1851, %v2188
  %v2221 = vadd.f32 %v1852, %v2189
  %v2222 = vadd.f32 %v1853, %v2190
  %v2223 = vadd.f32 %v1854, %v2191
  %v2224 = vadd.f32 %v1855, %v2192
  %v2225 = vadd.f32 %v1856, %v2193
  %v2226 = vadd.f32 %v1857, %v2194
  %v2227 = vadd.f32 %v1858, %v2195
  %v2228 = vadd.f32 %v1859, %v2196
  %v2229 = vadd.f32 %v1860, %v2197
  %v2230 = vadd.f32 %v1861, %v2198
  %v2231 = vadd.f32 %v1862, %v2199
  %v2232 = vadd.f32 %v1863, %v2200
  %v2233 = vadd.f32 %v1864, %v2201
  %v2234 = vadd.f32 %v1865, %v2202
  %v2235 = vadd.f32 %v1866, %v2203
  %v2236 = vadd.f32 %v1867, %v2204
  %v2237 = vadd.f32 %v1868, %v2205
  %v2238 = vadd.f32 %v1869, %v2206
  %v2239 = vadd.f32 %v1870, %v2207
  %v2240 = vadd.f32 %v1871, %v2208
  %v2241 = vadd.f32 %v1872, %v2209
  %v2242 = vadd.f32 %v1873, %v2210
  %v2243 = vadd.f32 %v1874, %v2211
  %v2244 = vadd.f32 %v1875, %v2212
  %v2245 = vld [vmem:[%s2148 + $0x1] sm:$0xff]
  %v2246 = vld [vmem:[%s2148 + $0x9] sm:$0xff]
  %v2247 = vld [vmem:[%s2148 + $0x19] sm:$0xff]
  %v2248 = vld [vmem:[%s2148 + $0x21] sm:$0xff]
  %v2249 = vld [vmem:[%s2148 + $0x31] sm:$0xff]
  %v2250 = vld [vmem:[%s2148 + $0x39] sm:$0xff]
  %v2251 = vld [vmem:[%s2148 + $0x49] sm:$0xff]
  %v2252 = vld [vmem:[%s2148 + $0x51] sm:$0xff]
  %v2253 = vld [vmem:[%s2148 + $0x61] sm:$0xff]
  %v2254 = vld [vmem:[%s2148 + $0x69] sm:$0xff]
  %v2255 = vld [vmem:[%s2148 + $0x79] sm:$0xff]
  %v2256 = vld [vmem:[%s2148 + $0x81] sm:$0xff]
  %v2257 = vld [vmem:[%s2148 + $0x91] sm:$0xff]
  %v2258 = vld [vmem:[%s2148 + $0x99] sm:$0xff]
  %v2259 = vld [vmem:[%s2148 + $0xa9] sm:$0xff]
  %v2260 = vld [vmem:[%s2148 + $0xb1] sm:$0xff]
  %v2261 = vld [vmem:[%s2148 + $0xc1] sm:$0xff]
  %v2262 = vld [vmem:[%s2148 + $0xc9] sm:$0xff]
  %v2263 = vld [vmem:[%s2148 + $0xd9] sm:$0xff]
  %v2264 = vld [vmem:[%s2148 + $0xe1] sm:$0xff]
  %v2265 = vld [vmem:[%s2148 + $0xf1] sm:$0xff]
  %v2266 = vld [vmem:[%s2148 + $0xf9] sm:$0xff]
  %v2267 = vld [vmem:[%s2148 + $0x109] sm:$0xff]
  %v2268 = vld [vmem:[%s2148 + $0x111] sm:$0xff]
  %v2269 = vld [vmem:[%s2148 + $0x121] sm:$0xff]
  %v2270 = vld [vmem:[%s2148 + $0x129] sm:$0xff]
  %v2271 = vld [vmem:[%s2148 + $0x139] sm:$0xff]
  %v2272 = vld [vmem:[%s2148 + $0x141] sm:$0xff]
  %v2273 = vld [vmem:[%s2148 + $0x151] sm:$0xff]
  %v2274 = vld [vmem:[%s2148 + $0x159] sm:$0xff]
  %v2275 = vld [vmem:[%s2148 + $0x169] sm:$0xff]
  %v2276 = vld [vmem:[%s2148 + $0x171] sm:$0xff]
  %v2277 = vmul.f32 %v2245, 0.012594641
  %v2278 = vmul.f32 %v2246, 0.012594641
  %v2279 = vmul.f32 %v2247, 0.012594641
  %v2280 = vmul.f32 %v2248, 0.012594641
  %v2281 = vmul.f32 %v2249, 0.012594641
  %v2282 = vmul.f32 %v2250, 0.012594641
  %v2283 = vmul.f32 %v2251, 0.012594641
  %v2284 = vmul.f32 %v2252, 0.012594641
  %v2285 = vmul.f32 %v2253, 0.012594641
  %v2286 = vmul.f32 %v2254, 0.012594641
  %v2287 = vmul.f32 %v2255, 0.012594641
  %v2288 = vmul.f32 %v2256, 0.012594641
  %v2289 = vmul.f32 %v2257, 0.012594641
  %v2290 = vmul.f32 %v2258, 0.012594641
  %v2291 = vmul.f32 %v2259, 0.012594641
  %v2292 = vmul.f32 %v2260, 0.012594641
  %v2293 = vmul.f32 %v2261, 0.012594641
  %v2294 = vmul.f32 %v2262, 0.012594641
  %v2295 = vmul.f32 %v2263, 0.012594641
  %v2296 = vmul.f32 %v2264, 0.012594641
  %v2297 = vmul.f32 %v2265, 0.012594641
  %v2298 = vmul.f32 %v2266, 0.012594641
  %v2299 = vmul.f32 %v2267, 0.012594641
  %v2300 = vmul.f32 %v2268, 0.012594641
  %v2301 = vmul.f32 %v2269, 0.012594641
  %v2302 = vmul.f32 %v2270, 0.012594641
  %v2303 = vmul.f32 %v2271, 0.012594641
  %v2304 = vmul.f32 %v2272, 0.012594641
  %v2305 = vmul.f32 %v2273, 0.012594641
  %v2306 = vmul.f32 %v2274, 0.012594641
  %v2307 = vmul.f32 %v2275, 0.012594641
  %v2308 = vmul.f32 %v2276, 0.012594641
  %v2309 = vadd.f32 %v1940, %v2277
  %v2310 = vadd.f32 %v1941, %v2278
  %v2311 = vadd.f32 %v1942, %v2279
  %v2312 = vadd.f32 %v1943, %v2280
  %v2313 = vadd.f32 %v1944, %v2281
  %v2314 = vadd.f32 %v1945, %v2282
  %v2315 = vadd.f32 %v1946, %v2283
  %v2316 = vadd.f32 %v1947, %v2284
  %v2317 = vadd.f32 %v1948, %v2285
  %v2318 = vadd.f32 %v1949, %v2286
  %v2319 = vadd.f32 %v1950, %v2287
  %v2320 = vadd.f32 %v1951, %v2288
  %v2321 = vadd.f32 %v1952, %v2289
  %v2322 = vadd.f32 %v1953, %v2290
  %v2323 = vadd.f32 %v1954, %v2291
  %v2324 = vadd.f32 %v1955, %v2292
  %v2325 = vadd.f32 %v1956, %v2293
  %v2326 = vadd.f32 %v1957, %v2294
  %v2327 = vadd.f32 %v1958, %v2295
  %v2328 = vadd.f32 %v1959, %v2296
  %v2329 = vadd.f32 %v1960, %v2297
  %v2330 = vadd.f32 %v1961, %v2298
  %v2331 = vadd.f32 %v1962, %v2299
  %v2332 = vadd.f32 %v1963, %v2300
  %v2333 = vadd.f32 %v1964, %v2301
  %v2334 = vadd.f32 %v1965, %v2302
  %v2335 = vadd.f32 %v1966, %v2303
  %v2336 = vadd.f32 %v1967, %v2304
  %v2337 = vadd.f32 %v1968, %v2305
  %v2338 = vadd.f32 %v1969, %v2306
  %v2339 = vadd.f32 %v1970, %v2307
  %v2340 = vadd.f32 %v1971, %v2308
  %v2341 = vld [vmem:[%s2148 + $0x2] sm:$0xff]
  %v2342 = vld [vmem:[%s2148 + $0xa] sm:$0xff]
  %v2343 = vld [vmem:[%s2148 + $0x1a] sm:$0xff]
  %v2344 = vld [vmem:[%s2148 + $0x22] sm:$0xff]
  %v2345 = vld [vmem:[%s2148 + $0x32] sm:$0xff]
  %v2346 = vld [vmem:[%s2148 + $0x3a] sm:$0xff]
  %v2347 = vld [vmem:[%s2148 + $0x4a] sm:$0xff]
  %v2348 = vld [vmem:[%s2148 + $0x52] sm:$0xff]
  %v2349 = vld [vmem:[%s2148 + $0x62] sm:$0xff]
  %v2350 = vld [vmem:[%s2148 + $0x6a] sm:$0xff]
  %v2351 = vld [vmem:[%s2148 + $0x7a] sm:$0xff]
  %v2352 = vld [vmem:[%s2148 + $0x82] sm:$0xff]
  %v2353 = vld [vmem:[%s2148 + $0x92] sm:$0xff]
  %v2354 = vld [vmem:[%s2148 + $0x9a] sm:$0xff]
  %v2355 = vld [vmem:[%s2148 + $0xaa] sm:$0xff]
  %v2356 = vld [vmem:[%s2148 + $0xb2] sm:$0xff]
  %v2357 = vld [vmem:[%s2148 + $0xc2] sm:$0xff]
  %v2358 = vld [vmem:[%s2148 + $0xca] sm:$0xff]
  %v2359 = vld [vmem:[%s2148 + $0xda] sm:$0xff]
  %v2360 = vld [vmem:[%s2148 + $0xe2] sm:$0xff]
  %v2361 = vld [vmem:[%s2148 + $0xf2] sm:$0xff]
  %v2362 = vld [vmem:[%s2148 + $0xfa] sm:$0xff]
  %v2363 = vld [vmem:[%s2148 + $0x10a] sm:$0xff]
  %v2364 = vld [vmem:[%s2148 + $0x112] sm:$0xff]
  %v2365 = vld [vmem:[%s2148 + $0x122] sm:$0xff]
  %v2366 = vld [vmem:[%s2148 + $0x12a] sm:$0xff]
  %v2367 = vld [vmem:[%s2148 + $0x13a] sm:$0xff]
  %v2368 = vld [vmem:[%s2148 + $0x142] sm:$0xff]
  %v2369 = vld [vmem:[%s2148 + $0x152] sm:$0xff]
  %v2370 = vld [vmem:[%s2148 + $0x15a] sm:$0xff]
  %v2371 = vld [vmem:[%s2148 + $0x16a] sm:$0xff]
  %v2372 = vld [vmem:[%s2148 + $0x172] sm:$0xff]
  %v2373 = vmul.f32 %v2341, 0.013130504
  %v2374 = vmul.f32 %v2342, 0.013130504
  %v2375 = vmul.f32 %v2343, 0.013130504
  %v2376 = vmul.f32 %v2344, 0.013130504
  %v2377 = vmul.f32 %v2345, 0.013130504
  %v2378 = vmul.f32 %v2346, 0.013130504
  %v2379 = vmul.f32 %v2347, 0.013130504
  %v2380 = vmul.f32 %v2348, 0.013130504
  %v2381 = vmul.f32 %v2349, 0.013130504
  %v2382 = vmul.f32 %v2350, 0.013130504
  %v2383 = vmul.f32 %v2351, 0.013130504
  %v2384 = vmul.f32 %v2352, 0.013130504
  %v2385 = vmul.f32 %v2353, 0.013130504
  %v2386 = vmul.f32 %v2354, 0.013130504
  %v2387 = vmul.f32 %v2355, 0.013130504
  %v2388 = vmul.f32 %v2356, 0.013130504
  %v2389 = vmul.f32 %v2357, 0.013130504
  %v2390 = vmul.f32 %v2358, 0.013130504
  %v2391 = vmul.f32 %v2359, 0.013130504
  %v2392 = vmul.f32 %v2360, 0.013130504
  %v2393 = vmul.f32 %v2361, 0.013130504
  %v2394 = vmul.f32 %v2362, 0.013130504
  %v2395 = vmul.f32 %v2363, 0.013130504
  %v2396 = vmul.f32 %v2364, 0.013130504
  %v2397 = vmul.f32 %v2365, 0.013130504
  %v2398 = vmul.f32 %v2366, 0.013130504
  %v2399 = vmul.f32 %v2367, 0.013130504
  %v2400 = vmul.f32 %v2368, 0.013130504
  %v2401 = vmul.f32 %v2369, 0.013130504
  %v2402 = vmul.f32 %v2370, 0.013130504
  %v2403 = vmul.f32 %v2371, 0.013130504
  %v2404 = vmul.f32 %v2372, 0.013130504
  %v2405 = vadd.f32 %v2036, %v2373
  %v2406 = vadd.f32 %v2037, %v2374
  %v2407 = vadd.f32 %v2038, %v2375
  %v2408 = vadd.f32 %v2039, %v2376
  %v2409 = vadd.f32 %v2040, %v2377
  %v2410 = vadd.f32 %v2041, %v2378
  %v2411 = vadd.f32 %v2042, %v2379
  %v2412 = vadd.f32 %v2043, %v2380
  %v2413 = vadd.f32 %v2044, %v2381
  %v2414 = vadd.f32 %v2045, %v2382
  %v2415 = vadd.f32 %v2046, %v2383
  %v2416 = vadd.f32 %v2047, %v2384
  %v2417 = vadd.f32 %v2048, %v2385
  %v2418 = vadd.f32 %v2049, %v2386
  %v2419 = vadd.f32 %v2050, %v2387
  %v2420 = vadd.f32 %v2051, %v2388
  %v2421 = vadd.f32 %v2052, %v2389
  %v2422 = vadd.f32 %v2053, %v2390
  %v2423 = vadd.f32 %v2054, %v2391
  %v2424 = vadd.f32 %v2055, %v2392
  %v2425 = vadd.f32 %v2056, %v2393
  %v2426 = vadd.f32 %v2057, %v2394
  %v2427 = vadd.f32 %v2058, %v2395
  %v2428 = vadd.f32 %v2059, %v2396
  %v2429 = vadd.f32 %v2060, %v2397
  %v2430 = vadd.f32 %v2061, %v2398
  %v2431 = vadd.f32 %v2062, %v2399
  %v2432 = vadd.f32 %v2063, %v2400
  %v2433 = vadd.f32 %v2064, %v2401
  %v2434 = vadd.f32 %v2065, %v2402
  %v2435 = vadd.f32 %v2066, %v2403
  %v2436 = vadd.f32 %v2067, %v2404
  %v2437 = vld [vmem:[%s2148 + $0x3] sm:$0xff]
  %v2438 = vld [vmem:[%s2148 + $0xb] sm:$0xff]
  %v2439 = vld [vmem:[%s2148 + $0x1b] sm:$0xff]
  %v2440 = vld [vmem:[%s2148 + $0x23] sm:$0xff]
  %v2441 = vld [vmem:[%s2148 + $0x33] sm:$0xff]
  %v2442 = vld [vmem:[%s2148 + $0x3b] sm:$0xff]
  %v2443 = vld [vmem:[%s2148 + $0x4b] sm:$0xff]
  %v2444 = vld [vmem:[%s2148 + $0x53] sm:$0xff]
  %v2445 = vld [vmem:[%s2148 + $0x63] sm:$0xff]
  %v2446 = vld [vmem:[%s2148 + $0x6b] sm:$0xff]
  %v2447 = vld [vmem:[%s2148 + $0x7b] sm:$0xff]
  %v2448 = vld [vmem:[%s2148 + $0x83] sm:$0xff]
  %v2449 = vld [vmem:[%s2148 + $0x93] sm:$0xff]
  %v2450 = vld [vmem:[%s2148 + $0x9b] sm:$0xff]
  %v2451 = vld [vmem:[%s2148 + $0xab] sm:$0xff]
  %v2452 = vld [vmem:[%s2148 + $0xb3] sm:$0xff]
  %v2453 = vld [vmem:[%s2148 + $0xc3] sm:$0xff]
  %v2454 = vld [vmem:[%s2148 + $0xcb] sm:$0xff]
  %v2455 = vld [vmem:[%s2148 + $0xdb] sm:$0xff]
  %v2456 = vld [vmem:[%s2148 + $0xe3] sm:$0xff]
  %v2457 = vld [vmem:[%s2148 + $0xf3] sm:$0xff]
  %v2458 = vld [vmem:[%s2148 + $0xfb] sm:$0xff]
  %v2459 = vld [vmem:[%s2148 + $0x10b] sm:$0xff]
  %v2460 = vld [vmem:[%s2148 + $0x113] sm:$0xff]
  %v2461 = vld [vmem:[%s2148 + $0x123] sm:$0xff]
  %v2462 = vld [vmem:[%s2148 + $0x12b] sm:$0xff]
  %v2463 = vld [vmem:[%s2148 + $0x13b] sm:$0xff]
  %v2464 = vld [vmem:[%s2148 + $0x143] sm:$0xff]
  %v2465 = vld [vmem:[%s2148 + $0x153] sm:$0xff]
  %v2466 = vld [vmem:[%s2148 + $0x15b] sm:$0xff]
  %v2467 = vld [vmem:[%s2148 + $0x16b] sm:$0xff]
  %v2468 = vld [vmem:[%s2148 + $0x173] sm:$0xff]
  %v2469 = vmul.f32 %v2437, 0.025932413
  %v2470 = vmul.f32 %v2438, 0.025932413
  %v2471 = vmul.f32 %v2439, 0.025932413
  %v2472 = vmul.f32 %v2440, 0.025932413
  %v2473 = vmul.f32 %v2441, 0.025932413
  %v2474 = vmul.f32 %v2442, 0.025932413
  %v2475 = vmul.f32 %v2443, 0.025932413
  %v2476 = vmul.f32 %v2444, 0.025932413
  %v2477 = vmul.f32 %v2445, 0.025932413
  %v2478 = vmul.f32 %v2446, 0.025932413
  %v2479 = vmul.f32 %v2447, 0.025932413
  %v2480 = vmul.f32 %v2448, 0.025932413
  %v2481 = vmul.f32 %v2449, 0.025932413
  %v2482 = vmul.f32 %v2450, 0.025932413
  %v2483 = vmul.f32 %v2451, 0.025932413
  %v2484 = vmul.f32 %v2452, 0.025932413
  %v2485 = vmul.f32 %v2453, 0.025932413
  %v2486 = vmul.f32 %v2454, 0.025932413
  %v2487 = vmul.f32 %v2455, 0.025932413
  %v2488 = vmul.f32 %v2456, 0.025932413
  %v2489 = vmul.f32 %v2457, 0.025932413
  %v2490 = vmul.f32 %v2458, 0.025932413
  %v2491 = vmul.f32 %v2459, 0.025932413
  %v2492 = vmul.f32 %v2460, 0.025932413
  %v2493 = vmul.f32 %v2461, 0.025932413
  %v2494 = vmul.f32 %v2462, 0.025932413
  %v2495 = vmul.f32 %v2463, 0.025932413
  %v2496 = vmul.f32 %v2464, 0.025932413
  %v2497 = vmul.f32 %v2465, 0.025932413
  %v2498 = vmul.f32 %v2466, 0.025932413
  %v2499 = vmul.f32 %v2467, 0.025932413
  %v2500 = vmul.f32 %v2468, 0.025932413
  %v2501 = vadd.f32 %v2116, %v2469
  %v2502 = vadd.f32 %v2117, %v2470
  %v2503 = vadd.f32 %v2118, %v2471
  %v2504 = vadd.f32 %v2119, %v2472
  %v2505 = vadd.f32 %v2120, %v2473
  %v2506 = vadd.f32 %v2121, %v2474
  %v2507 = vadd.f32 %v2122, %v2475
  %v2508 = vadd.f32 %v2123, %v2476
  %v2509 = vadd.f32 %v2124, %v2477
  %v2510 = vadd.f32 %v2125, %v2478
  %v2511 = vadd.f32 %v2126, %v2479
  %v2512 = vadd.f32 %v2127, %v2480
  %v2513 = vadd.f32 %v2128, %v2481
  %v2514 = vadd.f32 %v2129, %v2482
  %v2515 = vadd.f32 %v2130, %v2483
  %v2516 = vadd.f32 %v2131, %v2484
  %v2517 = vadd.f32 %v2132, %v2485
  %v2518 = vadd.f32 %v2133, %v2486
  %v2519 = vadd.f32 %v2134, %v2487
  %v2520 = vadd.f32 %v2135, %v2488
  %v2521 = vadd.f32 %v2136, %v2489
  %v2522 = vadd.f32 %v2137, %v2490
  %v2523 = vadd.f32 %v2138, %v2491
  %v2524 = vadd.f32 %v2139, %v2492
  %v2525 = vadd.f32 %v2140, %v2493
  %v2526 = vadd.f32 %v2141, %v2494
  %v2527 = vadd.f32 %v2142, %v2495
  %v2528 = vadd.f32 %v2143, %v2496
  %v2529 = vadd.f32 %v2144, %v2497
  %v2530 = vadd.f32 %v2145, %v2498
  %v2531 = vadd.f32 %v2146, %v2499
  %v2532 = vadd.f32 %v2147, %v2500
  %v2533 = vld [vmem:[%s2148 + $0x4] sm:$0xff]
  %v2534 = vld [vmem:[%s2148 + $0xc] sm:$0xff]
  %v2535 = vld [vmem:[%s2148 + $0x1c] sm:$0xff]
  %v2536 = vld [vmem:[%s2148 + $0x24] sm:$0xff]
  %v2537 = vld [vmem:[%s2148 + $0x34] sm:$0xff]
  %v2538 = vld [vmem:[%s2148 + $0x3c] sm:$0xff]
  %v2539 = vld [vmem:[%s2148 + $0x4c] sm:$0xff]
  %v2540 = vld [vmem:[%s2148 + $0x54] sm:$0xff]
  %v2541 = vld [vmem:[%s2148 + $0x64] sm:$0xff]
  %v2542 = vld [vmem:[%s2148 + $0x6c] sm:$0xff]
  %v2543 = vld [vmem:[%s2148 + $0x7c] sm:$0xff]
  %v2544 = vld [vmem:[%s2148 + $0x84] sm:$0xff]
  %v2545 = vld [vmem:[%s2148 + $0x94] sm:$0xff]
  %v2546 = vld [vmem:[%s2148 + $0x9c] sm:$0xff]
  %v2547 = vld [vmem:[%s2148 + $0xac] sm:$0xff]
  %v2548 = vld [vmem:[%s2148 + $0xb4] sm:$0xff]
  %v2549 = vld [vmem:[%s2148 + $0xc4] sm:$0xff]
  %v2550 = vld [vmem:[%s2148 + $0xcc] sm:$0xff]
  %v2551 = vld [vmem:[%s2148 + $0xdc] sm:$0xff]
  %v2552 = vld [vmem:[%s2148 + $0xe4] sm:$0xff]
  %v2553 = vld [vmem:[%s2148 + $0xf4] sm:$0xff]
  %v2554 = vld [vmem:[%s2148 + $0xfc] sm:$0xff]
  %v2555 = vld [vmem:[%s2148 + $0x10c] sm:$0xff]
  %v2556 = vld [vmem:[%s2148 + $0x114] sm:$0xff]
  %v2557 = vld [vmem:[%s2148 + $0x124] sm:$0xff]
  %v2558 = vld [vmem:[%s2148 + $0x12c] sm:$0xff]
  %v2559 = vld [vmem:[%s2148 + $0x13c] sm:$0xff]
  %v2560 = vld [vmem:[%s2148 + $0x144] sm:$0xff]
  %v2561 = vld [vmem:[%s2148 + $0x154] sm:$0xff]
  %v2562 = vld [vmem:[%s2148 + $0x15c] sm:$0xff]
  %v2563 = vld [vmem:[%s2148 + $0x16c] sm:$0xff]
  %v2564 = vld [vmem:[%s2148 + $0x174] sm:$0xff]
  %v2565 = vmul.f32 %v2533, 0.025574729
  %v2566 = vmul.f32 %v2534, 0.025574729
  %v2567 = vmul.f32 %v2535, 0.025574729
  %v2568 = vmul.f32 %v2536, 0.025574729
  %v2569 = vmul.f32 %v2537, 0.025574729
  %v2570 = vmul.f32 %v2538, 0.025574729
  %v2571 = vmul.f32 %v2539, 0.025574729
  %v2572 = vmul.f32 %v2540, 0.025574729
  %v2573 = vmul.f32 %v2541, 0.025574729
  %v2574 = vmul.f32 %v2542, 0.025574729
  %v2575 = vmul.f32 %v2543, 0.025574729
  %v2576 = vmul.f32 %v2544, 0.025574729
  %v2577 = vmul.f32 %v2545, 0.025574729
  %v2578 = vmul.f32 %v2546, 0.025574729
  %v2579 = vmul.f32 %v2547, 0.025574729
  %v2580 = vmul.f32 %v2548, 0.025574729
  %v2581 = vmul.f32 %v2549, 0.025574729
  %v2582 = vmul.f32 %v2550, 0.025574729
  %v2583 = vmul.f32 %v2551, 0.025574729
  %v2584 = vmul.f32 %v2552, 0.025574729
  %v2585 = vmul.f32 %v2553, 0.025574729
  %v2586 = vmul.f32 %v2554, 0.025574729
  %v2587 = vmul.f32 %v2555, 0.025574729
  %v2588 = vmul.f32 %v2556, 0.025574729
  %v2589 = vmul.f32 %v2557, 0.025574729
  %v2590 = vmul.f32 %v2558, 0.025574729
  %v2591 = vmul.f32 %v2559, 0.025574729
  %v2592 = vmul.f32 %v2560, 0.025574729
  %v2593 = vmul.f32 %v2561, 0.025574729
  %v2594 = vmul.f32 %v2562, 0.025574729
  %v2595 = vmul.f32 %v2563, 0.025574729
  %v2596 = vmul.f32 %v2564, 0.025574729
  %v2597 = vadd.f32 %v2213, %v2565
  %v2598 = vadd.f32 %v2214, %v2566
  %v2599 = vadd.f32 %v2215, %v2567
  %v2600 = vadd.f32 %v2216, %v2568
  %v2601 = vadd.f32 %v2217, %v2569
  %v2602 = vadd.f32 %v2218, %v2570
  %v2603 = vadd.f32 %v2219, %v2571
  %v2604 = vadd.f32 %v2220, %v2572
  %v2605 = vadd.f32 %v2221, %v2573
  %v2606 = vadd.f32 %v2222, %v2574
  %v2607 = vadd.f32 %v2223, %v2575
  %v2608 = vadd.f32 %v2224, %v2576
  %v2609 = vadd.f32 %v2225, %v2577
  %v2610 = vadd.f32 %v2226, %v2578
  %v2611 = vadd.f32 %v2227, %v2579
  %v2612 = vadd.f32 %v2228, %v2580
  %v2613 = vadd.f32 %v2229, %v2581
  %v2614 = vadd.f32 %v2230, %v2582
  %v2615 = vadd.f32 %v2231, %v2583
  %v2616 = vadd.f32 %v2232, %v2584
  %v2617 = vadd.f32 %v2233, %v2585
  %v2618 = vadd.f32 %v2234, %v2586
  %v2619 = vadd.f32 %v2235, %v2587
  %v2620 = vadd.f32 %v2236, %v2588
  %v2621 = vadd.f32 %v2237, %v2589
  %v2622 = vadd.f32 %v2238, %v2590
  %v2623 = vadd.f32 %v2239, %v2591
  %v2624 = vadd.f32 %v2240, %v2592
  %v2625 = vadd.f32 %v2241, %v2593
  %v2626 = vadd.f32 %v2242, %v2594
  %v2627 = vadd.f32 %v2243, %v2595
  %v2628 = vadd.f32 %v2244, %v2596
  %v2629 = vld [vmem:[%s2148 + $0x5] sm:$0xff]
  %v2630 = vld [vmem:[%s2148 + $0xd] sm:$0xff]
  %v2631 = vld [vmem:[%s2148 + $0x1d] sm:$0xff]
  %v2632 = vld [vmem:[%s2148 + $0x25] sm:$0xff]
  %v2633 = vld [vmem:[%s2148 + $0x35] sm:$0xff]
  %v2634 = vld [vmem:[%s2148 + $0x3d] sm:$0xff]
  %v2635 = vld [vmem:[%s2148 + $0x4d] sm:$0xff]
  %v2636 = vld [vmem:[%s2148 + $0x55] sm:$0xff]
  %v2637 = vld [vmem:[%s2148 + $0x65] sm:$0xff]
  %v2638 = vld [vmem:[%s2148 + $0x6d] sm:$0xff]
  %v2639 = vld [vmem:[%s2148 + $0x7d] sm:$0xff]
  %v2640 = vld [vmem:[%s2148 + $0x85] sm:$0xff]
  %v2641 = vld [vmem:[%s2148 + $0x95] sm:$0xff]
  %v2642 = vld [vmem:[%s2148 + $0x9d] sm:$0xff]
  %v2643 = vld [vmem:[%s2148 + $0xad] sm:$0xff]
  %v2644 = vld [vmem:[%s2148 + $0xb5] sm:$0xff]
  %v2645 = vld [vmem:[%s2148 + $0xc5] sm:$0xff]
  %v2646 = vld [vmem:[%s2148 + $0xcd] sm:$0xff]
  %v2647 = vld [vmem:[%s2148 + $0xdd] sm:$0xff]
  %v2648 = vld [vmem:[%s2148 + $0xe5] sm:$0xff]
  %v2649 = vld [vmem:[%s2148 + $0xf5] sm:$0xff]
  %v2650 = vld [vmem:[%s2148 + $0xfd] sm:$0xff]
  %v2651 = vld [vmem:[%s2148 + $0x10d] sm:$0xff]
  %v2652 = vld [vmem:[%s2148 + $0x115] sm:$0xff]
  %v2653 = vld [vmem:[%s2148 + $0x125] sm:$0xff]
  %v2654 = vld [vmem:[%s2148 + $0x12d] sm:$0xff]
  %v2655 = vld [vmem:[%s2148 + $0x13d] sm:$0xff]
  %v2656 = vld [vmem:[%s2148 + $0x145] sm:$0xff]
  %v2657 = vld [vmem:[%s2148 + $0x155] sm:$0xff]
  %v2658 = vld [vmem:[%s2148 + $0x15d] sm:$0xff]
  %v2659 = vld [vmem:[%s2148 + $0x16d] sm:$0xff]
  %v2660 = vld [vmem:[%s2148 + $0x175] sm:$0xff]
  %v2661 = vmul.f32 %v2629, 0.03193897
  %v2662 = vmul.f32 %v2630, 0.03193897
  %v2663 = vmul.f32 %v2631, 0.03193897
  %v2664 = vmul.f32 %v2632, 0.03193897
  %v2665 = vmul.f32 %v2633, 0.03193897
  %v2666 = vmul.f32 %v2634, 0.03193897
  %v2667 = vmul.f32 %v2635, 0.03193897
  %v2668 = vmul.f32 %v2636, 0.03193897
  %v2669 = vmul.f32 %v2637, 0.03193897
  %v2670 = vmul.f32 %v2638, 0.03193897
  %v2671 = vmul.f32 %v2639, 0.03193897
  %v2672 = vmul.f32 %v2640, 0.03193897
  %v2673 = vmul.f32 %v2641, 0.03193897
  %v2674 = vmul.f32 %v2642, 0.03193897
  %v2675 = vmul.f32 %v2643, 0.03193897
  %v2676 = vmul.f32 %v2644, 0.03193897
  %v2677 = vmul.f32 %v2645, 0.03193897
  %v2678 = vmul.f32 %v2646, 0.03193897
  %v2679 = vmul.f32 %v2647, 0.03193897
  %v2680 = vmul.f32 %v2648, 0.03193897
  %v2681 = vmul.f32 %v2649, 0.03193897
  %v2682 = vmul.f32 %v2650, 0.03193897
  %v2683 = vmul.f32 %v2651, 0.03193897
  %v2684 = vmul.f32 %v2652, 0.03193897
  %v2685 = vmul.f32 %v2653, 0.03193897
  %v2686 = vmul.f32 %v2654, 0.03193897
  %v2687 = vmul.f32 %v2655, 0.03193897
  %v2688 = vmul.f32 %v2656, 0.03193897
  %v2689 = vmul.f32 %v2657, 0.03193897
  %v2690 = vmul.f32 %v2658, 0.03193897
  %v2691 = vmul.f32 %v2659, 0.03193897
  %v2692 = vmul.f32 %v2660, 0.03193897
  %v2693 = vadd.f32 %v2309, %v2661
  %v2694 = vadd.f32 %v2310, %v2662
  %v2695 = vadd.f32 %v2311, %v2663
  %v2696 = vadd.f32 %v2312, %v2664
  %v2697 = vadd.f32 %v2313, %v2665
  %v2698 = vadd.f32 %v2314, %v2666
  %v2699 = vadd.f32 %v2315, %v2667
  %v2700 = vadd.f32 %v2316, %v2668
  %v2701 = vadd.f32 %v2317, %v2669
  %v2702 = vadd.f32 %v2318, %v2670
  %v2703 = vadd.f32 %v2319, %v2671
  %v2704 = vadd.f32 %v2320, %v2672
  %v2705 = vadd.f32 %v2321, %v2673
  %v2706 = vadd.f32 %v2322, %v2674
  %v2707 = vadd.f32 %v2323, %v2675
  %v2708 = vadd.f32 %v2324, %v2676
  %v2709 = vadd.f32 %v2325, %v2677
  %v2710 = vadd.f32 %v2326, %v2678
  %v2711 = vadd.f32 %v2327, %v2679
  %v2712 = vadd.f32 %v2328, %v2680
  %v2713 = vadd.f32 %v2329, %v2681
  %v2714 = vadd.f32 %v2330, %v2682
  %v2715 = vadd.f32 %v2331, %v2683
  %v2716 = vadd.f32 %v2332, %v2684
  %v2717 = vadd.f32 %v2333, %v2685
  %v2718 = vadd.f32 %v2334, %v2686
  %v2719 = vadd.f32 %v2335, %v2687
  %v2720 = vadd.f32 %v2336, %v2688
  %v2721 = vadd.f32 %v2337, %v2689
  %v2722 = vadd.f32 %v2338, %v2690
  %v2723 = vadd.f32 %v2339, %v2691
  %v2724 = vadd.f32 %v2340, %v2692
  %v2725 = vld [vmem:[%s2148 + $0x6] sm:$0xff]
  %v2726 = vld [vmem:[%s2148 + $0xe] sm:$0xff]
  %v2727 = vld [vmem:[%s2148 + $0x1e] sm:$0xff]
  %v2728 = vld [vmem:[%s2148 + $0x26] sm:$0xff]
  %v2729 = vld [vmem:[%s2148 + $0x36] sm:$0xff]
  %v2730 = vld [vmem:[%s2148 + $0x3e] sm:$0xff]
  %v2731 = vld [vmem:[%s2148 + $0x4e] sm:$0xff]
  %v2732 = vld [vmem:[%s2148 + $0x56] sm:$0xff]
  %v2733 = vld [vmem:[%s2148 + $0x66] sm:$0xff]
  %v2734 = vld [vmem:[%s2148 + $0x6e] sm:$0xff]
  %v2735 = vld [vmem:[%s2148 + $0x7e] sm:$0xff]
  %v2736 = vld [vmem:[%s2148 + $0x86] sm:$0xff]
  %v2737 = vld [vmem:[%s2148 + $0x96] sm:$0xff]
  %v2738 = vld [vmem:[%s2148 + $0x9e] sm:$0xff]
  %v2739 = vld [vmem:[%s2148 + $0xae] sm:$0xff]
  %v2740 = vld [vmem:[%s2148 + $0xb6] sm:$0xff]
  %v2741 = vld [vmem:[%s2148 + $0xc6] sm:$0xff]
  %v2742 = vld [vmem:[%s2148 + $0xce] sm:$0xff]
  %v2743 = vld [vmem:[%s2148 + $0xde] sm:$0xff]
  %v2744 = vld [vmem:[%s2148 + $0xe6] sm:$0xff]
  %v2745 = vld [vmem:[%s2148 + $0xf6] sm:$0xff]
  %v2746 = vld [vmem:[%s2148 + $0xfe] sm:$0xff]
  %v2747 = vld [vmem:[%s2148 + $0x10e] sm:$0xff]
  %v2748 = vld [vmem:[%s2148 + $0x116] sm:$0xff]
  %v2749 = vld [vmem:[%s2148 + $0x126] sm:$0xff]
  %v2750 = vld [vmem:[%s2148 + $0x12e] sm:$0xff]
  %v2751 = vld [vmem:[%s2148 + $0x13e] sm:$0xff]
  %v2752 = vld [vmem:[%s2148 + $0x146] sm:$0xff]
  %v2753 = vld [vmem:[%s2148 + $0x156] sm:$0xff]
  %v2754 = vld [vmem:[%s2148 + $0x15e] sm:$0xff]
  %v2755 = vld [vmem:[%s2148 + $0x16e] sm:$0xff]
  %v2756 = vld [vmem:[%s2148 + $0x176] sm:$0xff]
  %v2757 = vmul.f32 %v2725, 0.030635525
  %v2758 = vmul.f32 %v2726, 0.030635525
  %v2759 = vmul.f32 %v2727, 0.030635525
  %v2760 = vmul.f32 %v2728, 0.030635525
  %v2761 = vmul.f32 %v2729, 0.030635525
  %v2762 = vmul.f32 %v2730, 0.030635525
  %v2763 = vmul.f32 %v2731, 0.030635525
  %v2764 = vmul.f32 %v2732, 0.030635525
  %v2765 = vmul.f32 %v2733, 0.030635525
  %v2766 = vmul.f32 %v2734, 0.030635525
  %v2767 = vmul.f32 %v2735, 0.030635525
  %v2768 = vmul.f32 %v2736, 0.030635525
  %v2769 = vmul.f32 %v2737, 0.030635525
  %v2770 = vmul.f32 %v2738, 0.030635525
  %v2771 = vmul.f32 %v2739, 0.030635525
  %v2772 = vmul.f32 %v2740, 0.030635525
  %v2773 = vmul.f32 %v2741, 0.030635525
  %v2774 = vmul.f32 %v2742, 0.030635525
  %v2775 = vmul.f32 %v2743, 0.030635525
  %v2776 = vmul.f32 %v2744, 0.030635525
  %v2777 = vmul.f32 %v2745, 0.030635525
  %v2778 = vmul.f32 %v2746, 0.030635525
  %v2779 = vmul.f32 %v2747, 0.030635525
  %v2780 = vmul.f32 %v2748, 0.030635525
  %v2781 = vmul.f32 %v2749, 0.030635525
  %v2782 = vmul.f32 %v2750, 0.030635525
  %v2783 = vmul.f32 %v2751, 0.030635525
  %v2784 = vmul.f32 %v2752, 0.030635525
  %v2785 = vmul.f32 %v2753, 0.030635525
  %v2786 = vmul.f32 %v2754, 0.030635525
  %v2787 = vmul.f32 %v2755, 0.030635525
  %v2788 = vmul.f32 %v2756, 0.030635525
  %v2789 = vadd.f32 %v2405, %v2757
  %v2790 = vadd.f32 %v2406, %v2758
  %v2791 = vadd.f32 %v2407, %v2759
  %v2792 = vadd.f32 %v2408, %v2760
  %v2793 = vadd.f32 %v2409, %v2761
  %v2794 = vadd.f32 %v2410, %v2762
  %v2795 = vadd.f32 %v2411, %v2763
  %v2796 = vadd.f32 %v2412, %v2764
  %v2797 = vadd.f32 %v2413, %v2765
  %v2798 = vadd.f32 %v2414, %v2766
  %v2799 = vadd.f32 %v2415, %v2767
  %v2800 = vadd.f32 %v2416, %v2768
  %v2801 = vadd.f32 %v2417, %v2769
  %v2802 = vadd.f32 %v2418, %v2770
  %v2803 = vadd.f32 %v2419, %v2771
  %v2804 = vadd.f32 %v2420, %v2772
  %v2805 = vadd.f32 %v2421, %v2773
  %v2806 = vadd.f32 %v2422, %v2774
  %v2807 = vadd.f32 %v2423, %v2775
  %v2808 = vadd.f32 %v2424, %v2776
  %v2809 = vadd.f32 %v2425, %v2777
  %v2810 = vadd.f32 %v2426, %v2778
  %v2811 = vadd.f32 %v2427, %v2779
  %v2812 = vadd.f32 %v2428, %v2780
  %v2813 = vadd.f32 %v2429, %v2781
  %v2814 = vadd.f32 %v2430, %v2782
  %v2815 = vadd.f32 %v2431, %v2783
  %v2816 = vadd.f32 %v2432, %v2784
  %v2817 = vadd.f32 %v2433, %v2785
  %v2818 = vadd.f32 %v2434, %v2786
  %v2819 = vadd.f32 %v2435, %v2787
  %v2820 = vadd.f32 %v2436, %v2788
  %v2821 = vld [vmem:[%s2148 + $0x7] sm:$0xff]
  %v2822 = vld [vmem:[%s2148 + $0xf] sm:$0xff]
  %v2823 = vld [vmem:[%s2148 + $0x1f] sm:$0xff]
  %v2824 = vld [vmem:[%s2148 + $0x27] sm:$0xff]
  %v2825 = vld [vmem:[%s2148 + $0x37] sm:$0xff]
  %v2826 = vld [vmem:[%s2148 + $0x3f] sm:$0xff]
  %v2827 = vld [vmem:[%s2148 + $0x4f] sm:$0xff]
  %v2828 = vld [vmem:[%s2148 + $0x57] sm:$0xff]
  %v2829 = vld [vmem:[%s2148 + $0x67] sm:$0xff]
  %v2830 = vld [vmem:[%s2148 + $0x6f] sm:$0xff]
  %v2831 = vld [vmem:[%s2148 + $0x7f] sm:$0xff]
  %v2832 = vld [vmem:[%s2148 + $0x87] sm:$0xff]
  %v2833 = vld [vmem:[%s2148 + $0x97] sm:$0xff]
  %v2834 = vld [vmem:[%s2148 + $0x9f] sm:$0xff]
  %v2835 = vld [vmem:[%s2148 + $0xaf] sm:$0xff]
  %v2836 = vld [vmem:[%s2148 + $0xb7] sm:$0xff]
  %v2837 = vld [vmem:[%s2148 + $0xc7] sm:$0xff]
  %v2838 = vld [vmem:[%s2148 + $0xcf] sm:$0xff]
  %v2839 = vld [vmem:[%s2148 + $0xdf] sm:$0xff]
  %v2840 = vld [vmem:[%s2148 + $0xe7] sm:$0xff]
  %v2841 = vld [vmem:[%s2148 + $0xf7] sm:$0xff]
  %v2842 = vld [vmem:[%s2148 + $0xff] sm:$0xff]
  %v2843 = vld [vmem:[%s2148 + $0x10f] sm:$0xff]
  %v2844 = vld [vmem:[%s2148 + $0x117] sm:$0xff]
  %v2845 = vld [vmem:[%s2148 + $0x127] sm:$0xff]
  %v2846 = vld [vmem:[%s2148 + $0x12f] sm:$0xff]
  %v2847 = vld [vmem:[%s2148 + $0x13f] sm:$0xff]
  %v2848 = vld [vmem:[%s2148 + $0x147] sm:$0xff]
  %v2849 = vld [vmem:[%s2148 + $0x157] sm:$0xff]
  %v2850 = vld [vmem:[%s2148 + $0x15f] sm:$0xff]
  %v2851 = vld [vmem:[%s2148 + $0x16f] sm:$0xff]
  %v2852 = vld [vmem:[%s2148 + $0x177] sm:$0xff]
  %v2853 = vmul.f32 %v2821, 0.022885272
  %v2854 = vmul.f32 %v2822, 0.022885272
  %v2855 = vmul.f32 %v2823, 0.022885272
  %v2856 = vmul.f32 %v2824, 0.022885272
  %v2857 = vmul.f32 %v2825, 0.022885272
  %v2858 = vmul.f32 %v2826, 0.022885272
  %v2859 = vmul.f32 %v2827, 0.022885272
  %v2860 = vmul.f32 %v2828, 0.022885272
  %v2861 = vmul.f32 %v2829, 0.022885272
  %v2862 = vmul.f32 %v2830, 0.022885272
  %v2863 = vmul.f32 %v2831, 0.022885272
  %v2864 = vmul.f32 %v2832, 0.022885272
  %v2865 = vmul.f32 %v2833, 0.022885272
  %v2866 = vmul.f32 %v2834, 0.022885272
  %v2867 = vmul.f32 %v2835, 0.022885272
  %v2868 = vmul.f32 %v2836, 0.022885272
  %v2869 = vmul.f32 %v2837, 0.022885272
  %v2870 = vmul.f32 %v2838, 0.022885272
  %v2871 = vmul.f32 %v2839, 0.022885272
  %v2872 = vmul.f32 %v2840, 0.022885272
  %v2873 = vmul.f32 %v2841, 0.022885272
  %v2874 = vmul.f32 %v2842, 0.022885272
  %v2875 = vmul.f32 %v2843, 0.022885272
  %v2876 = vmul.f32 %v2844, 0.022885272
  %v2877 = vmul.f32 %v2845, 0.022885272
  %v2878 = vmul.f32 %v2846, 0.022885272
  %v2879 = vmul.f32 %v2847, 0.022885272
  %v2880 = vmul.f32 %v2848, 0.022885272
  %v2881 = vmul.f32 %v2849, 0.022885272
  %v2882 = vmul.f32 %v2850, 0.022885272
  %v2883 = vmul.f32 %v2851, 0.022885272
  %v2884 = vmul.f32 %v2852, 0.022885272
  %v2885 = vadd.f32 %v2501, %v2853
  %v2886 = vadd.f32 %v2502, %v2854
  %v2887 = vadd.f32 %v2503, %v2855
  %v2888 = vadd.f32 %v2504, %v2856
  %v2889 = vadd.f32 %v2505, %v2857
  %v2890 = vadd.f32 %v2506, %v2858
  %v2891 = vadd.f32 %v2507, %v2859
  %v2892 = vadd.f32 %v2508, %v2860
  %v2893 = vadd.f32 %v2509, %v2861
  %v2894 = vadd.f32 %v2510, %v2862
  %v2895 = vadd.f32 %v2511, %v2863
  %v2896 = vadd.f32 %v2512, %v2864
  %v2897 = vadd.f32 %v2513, %v2865
  %v2898 = vadd.f32 %v2514, %v2866
  %v2899 = vadd.f32 %v2515, %v2867
  %v2900 = vadd.f32 %v2516, %v2868
  %v2901 = vadd.f32 %v2517, %v2869
  %v2902 = vadd.f32 %v2518, %v2870
  %v2903 = vadd.f32 %v2519, %v2871
  %v2904 = vadd.f32 %v2520, %v2872
  %v2905 = vadd.f32 %v2521, %v2873
  %v2906 = vadd.f32 %v2522, %v2874
  %v2907 = vadd.f32 %v2523, %v2875
  %v2908 = vadd.f32 %v2524, %v2876
  %v2909 = vadd.f32 %v2525, %v2877
  %v2910 = vadd.f32 %v2526, %v2878
  %v2911 = vadd.f32 %v2527, %v2879
  %v2912 = vadd.f32 %v2528, %v2880
  %v2913 = vadd.f32 %v2529, %v2881
  %v2914 = vadd.f32 %v2530, %v2882
  %v2915 = vadd.f32 %v2531, %v2883
  %v2916 = vadd.f32 %v2532, %v2884
  %v2917 = vld [vmem:[%s2148 + $0x10] sm:$0xff]
  %v2918 = vld [vmem:[%s2148 + $0x28] sm:$0xff]
  %v2919 = vld [vmem:[%s2148 + $0x40] sm:$0xff]
  %v2920 = vld [vmem:[%s2148 + $0x58] sm:$0xff]
  %v2921 = vld [vmem:[%s2148 + $0x70] sm:$0xff]
  %v2922 = vld [vmem:[%s2148 + $0x88] sm:$0xff]
  %v2923 = vld [vmem:[%s2148 + $0xa0] sm:$0xff]
  %v2924 = vld [vmem:[%s2148 + $0xb8] sm:$0xff]
  %v2925 = vld [vmem:[%s2148 + $0xd0] sm:$0xff]
  %v2926 = vld [vmem:[%s2148 + $0xe8] sm:$0xff]
  %v2927 = vld [vmem:[%s2148 + $0x100] sm:$0xff]
  %v2928 = vld [vmem:[%s2148 + $0x118] sm:$0xff]
  %v2929 = vld [vmem:[%s2148 + $0x130] sm:$0xff]
  %v2930 = vld [vmem:[%s2148 + $0x148] sm:$0xff]
  %v2931 = vld [vmem:[%s2148 + $0x160] sm:$0xff]
  %v2932 = vld [vmem:[%s2148 + $0x178] sm:$0xff]
  %v2933 = vmul.f32 %v2150, 0.020765051
  %v2934 = vmul.f32 %v2917, 0.020765051
  %v2935 = vmul.f32 %v2152, 0.020765051
  %v2936 = vmul.f32 %v2918, 0.020765051
  %v2937 = vmul.f32 %v2154, 0.020765051
  %v2938 = vmul.f32 %v2919, 0.020765051
  %v2939 = vmul.f32 %v2156, 0.020765051
  %v2940 = vmul.f32 %v2920, 0.020765051
  %v2941 = vmul.f32 %v2158, 0.020765051
  %v2942 = vmul.f32 %v2921, 0.020765051
  %v2943 = vmul.f32 %v2160, 0.020765051
  %v2944 = vmul.f32 %v2922, 0.020765051
  %v2945 = vmul.f32 %v2162, 0.020765051
  %v2946 = vmul.f32 %v2923, 0.020765051
  %v2947 = vmul.f32 %v2164, 0.020765051
  %v2948 = vmul.f32 %v2924, 0.020765051
  %v2949 = vmul.f32 %v2166, 0.020765051
  %v2950 = vmul.f32 %v2925, 0.020765051
  %v2951 = vmul.f32 %v2168, 0.020765051
  %v2952 = vmul.f32 %v2926, 0.020765051
  %v2953 = vmul.f32 %v2170, 0.020765051
  %v2954 = vmul.f32 %v2927, 0.020765051
  %v2955 = vmul.f32 %v2172, 0.020765051
  %v2956 = vmul.f32 %v2928, 0.020765051
  %v2957 = vmul.f32 %v2174, 0.020765051
  %v2958 = vmul.f32 %v2929, 0.020765051
  %v2959 = vmul.f32 %v2176, 0.020765051
  %v2960 = vmul.f32 %v2930, 0.020765051
  %v2961 = vmul.f32 %v2178, 0.020765051
  %v2962 = vmul.f32 %v2931, 0.020765051
  %v2963 = vmul.f32 %v2180, 0.020765051
  %v2964 = vmul.f32 %v2932, 0.020765051
  %v2965 = vadd.f32 %v2597, %v2933
  %v2966 = vadd.f32 %v2598, %v2934
  %v2967 = vadd.f32 %v2599, %v2935
  %v2968 = vadd.f32 %v2600, %v2936
  %v2969 = vadd.f32 %v2601, %v2937
  %v2970 = vadd.f32 %v2602, %v2938
  %v2971 = vadd.f32 %v2603, %v2939
  %v2972 = vadd.f32 %v2604, %v2940
  %v2973 = vadd.f32 %v2605, %v2941
  %v2974 = vadd.f32 %v2606, %v2942
  %v2975 = vadd.f32 %v2607, %v2943
  %v2976 = vadd.f32 %v2608, %v2944
  %v2977 = vadd.f32 %v2609, %v2945
  %v2978 = vadd.f32 %v2610, %v2946
  %v2979 = vadd.f32 %v2611, %v2947
  %v2980 = vadd.f32 %v2612, %v2948
  %v2981 = vadd.f32 %v2613, %v2949
  %v2982 = vadd.f32 %v2614, %v2950
  %v2983 = vadd.f32 %v2615, %v2951
  %v2984 = vadd.f32 %v2616, %v2952
  %v2985 = vadd.f32 %v2617, %v2953
  %v2986 = vadd.f32 %v2618, %v2954
  %v2987 = vadd.f32 %v2619, %v2955
  %v2988 = vadd.f32 %v2620, %v2956
  %v2989 = vadd.f32 %v2621, %v2957
  %v2990 = vadd.f32 %v2622, %v2958
  %v2991 = vadd.f32 %v2623, %v2959
  %v2992 = vadd.f32 %v2624, %v2960
  %v2993 = vadd.f32 %v2625, %v2961
  %v2994 = vadd.f32 %v2626, %v2962
  %v2995 = vadd.f32 %v2627, %v2963
  %v2996 = vadd.f32 %v2628, %v2964
  %v2997 = vld [vmem:[%s113] sm:$0xff]
  %v2998 = vld [vmem:[%s113 + $0x8] sm:$0xff]
  %v2999 = vld [vmem:[%s113 + $0x18] sm:$0xff]
  %v3000 = vld [vmem:[%s113 + $0x20] sm:$0xff]
  %v3001 = vld [vmem:[%s113 + $0x30] sm:$0xff]
  %v3002 = vld [vmem:[%s113 + $0x38] sm:$0xff]
  %v3003 = vld [vmem:[%s113 + $0x48] sm:$0xff]
  %v3004 = vld [vmem:[%s113 + $0x50] sm:$0xff]
  %v3005 = vld [vmem:[%s113 + $0x60] sm:$0xff]
  %v3006 = vld [vmem:[%s113 + $0x68] sm:$0xff]
  %v3007 = vld [vmem:[%s113 + $0x78] sm:$0xff]
  %v3008 = vld [vmem:[%s113 + $0x80] sm:$0xff]
  %v3009 = vld [vmem:[%s113 + $0x90] sm:$0xff]
  %v3010 = vld [vmem:[%s113 + $0x98] sm:$0xff]
  %v3011 = vld [vmem:[%s113 + $0xa8] sm:$0xff]
  %v3012 = vld [vmem:[%s113 + $0xb0] sm:$0xff]
  %v3013 = vld [vmem:[%s113 + $0xc0] sm:$0xff]
  %v3014 = vld [vmem:[%s113 + $0xc8] sm:$0xff]
  %v3015 = vld [vmem:[%s113 + $0xd8] sm:$0xff]
  %v3016 = vld [vmem:[%s113 + $0xe0] sm:$0xff]
  %v3017 = vld [vmem:[%s113 + $0xf0] sm:$0xff]
  %v3018 = vld [vmem:[%s113 + $0xf8] sm:$0xff]
  %v3019 = vld [vmem:[%s113 + $0x108] sm:$0xff]
  %v3020 = vld [vmem:[%s113 + $0x110] sm:$0xff]
  %v3021 = vld [vmem:[%s113 + $0x120] sm:$0xff]
  %v3022 = vld [vmem:[%s113 + $0x128] sm:$0xff]
  %v3023 = vld [vmem:[%s113 + $0x138] sm:$0xff]
  %v3024 = vld [vmem:[%s113 + $0x140] sm:$0xff]
  %v3025 = vld [vmem:[%s113 + $0x150] sm:$0xff]
  %v3026 = vld [vmem:[%s113 + $0x158] sm:$0xff]
  %v3027 = vld [vmem:[%s113 + $0x168] sm:$0xff]
  %v3028 = vld [vmem:[%s113 + $0x170] sm:$0xff]
  %v3029 = vmul.f32 %v2997, 0.011749691
  %v3030 = vmul.f32 %v2998, 0.011749691
  %v3031 = vmul.f32 %v2999, 0.011749691
  %v3032 = vmul.f32 %v3000, 0.011749691
  %v3033 = vmul.f32 %v3001, 0.011749691
  %v3034 = vmul.f32 %v3002, 0.011749691
  %v3035 = vmul.f32 %v3003, 0.011749691
  %v3036 = vmul.f32 %v3004, 0.011749691
  %v3037 = vmul.f32 %v3005, 0.011749691
  %v3038 = vmul.f32 %v3006, 0.011749691
  %v3039 = vmul.f32 %v3007, 0.011749691
  %v3040 = vmul.f32 %v3008, 0.011749691
  %v3041 = vmul.f32 %v3009, 0.011749691
  %v3042 = vmul.f32 %v3010, 0.011749691
  %v3043 = vmul.f32 %v3011, 0.011749691
  %v3044 = vmul.f32 %v3012, 0.011749691
  %v3045 = vmul.f32 %v3013, 0.011749691
  %v3046 = vmul.f32 %v3014, 0.011749691
  %v3047 = vmul.f32 %v3015, 0.011749691
  %v3048 = vmul.f32 %v3016, 0.011749691
  %v3049 = vmul.f32 %v3017, 0.011749691
  %v3050 = vmul.f32 %v3018, 0.011749691
  %v3051 = vmul.f32 %v3019, 0.011749691
  %v3052 = vmul.f32 %v3020, 0.011749691
  %v3053 = vmul.f32 %v3021, 0.011749691
  %v3054 = vmul.f32 %v3022, 0.011749691
  %v3055 = vmul.f32 %v3023, 0.011749691
  %v3056 = vmul.f32 %v3024, 0.011749691
  %v3057 = vmul.f32 %v3025, 0.011749691
  %v3058 = vmul.f32 %v3026, 0.011749691
  %v3059 = vmul.f32 %v3027, 0.011749691
  %v3060 = vmul.f32 %v3028, 0.011749691
  %v3061 = vadd.f32 %v2693, %v3029
  %v3062 = vadd.f32 %v2694, %v3030
  %v3063 = vadd.f32 %v2695, %v3031
  %v3064 = vadd.f32 %v2696, %v3032
  %v3065 = vadd.f32 %v2697, %v3033
  %v3066 = vadd.f32 %v2698, %v3034
  %v3067 = vadd.f32 %v2699, %v3035
  %v3068 = vadd.f32 %v2700, %v3036
  %v3069 = vadd.f32 %v2701, %v3037
  %v3070 = vadd.f32 %v2702, %v3038
  %v3071 = vadd.f32 %v2703, %v3039
  %v3072 = vadd.f32 %v2704, %v3040
  %v3073 = vadd.f32 %v2705, %v3041
  %v3074 = vadd.f32 %v2706, %v3042
  %v3075 = vadd.f32 %v2707, %v3043
  %v3076 = vadd.f32 %v2708, %v3044
  %v3077 = vadd.f32 %v2709, %v3045
  %v3078 = vadd.f32 %v2710, %v3046
  %v3079 = vadd.f32 %v2711, %v3047
  %v3080 = vadd.f32 %v2712, %v3048
  %v3081 = vadd.f32 %v2713, %v3049
  %v3082 = vadd.f32 %v2714, %v3050
  %v3083 = vadd.f32 %v2715, %v3051
  %v3084 = vadd.f32 %v2716, %v3052
  %v3085 = vadd.f32 %v2717, %v3053
  %v3086 = vadd.f32 %v2718, %v3054
  %v3087 = vadd.f32 %v2719, %v3055
  %v3088 = vadd.f32 %v2720, %v3056
  %v3089 = vadd.f32 %v2721, %v3057
  %v3090 = vadd.f32 %v2722, %v3058
  %v3091 = vadd.f32 %v2723, %v3059
  %v3092 = vadd.f32 %v2724, %v3060
  %v3093 = vld [vmem:[%s113 + $0x1] sm:$0xff]
  %v3094 = vld [vmem:[%s113 + $0x9] sm:$0xff]
  %v3095 = vld [vmem:[%s113 + $0x19] sm:$0xff]
  %v3096 = vld [vmem:[%s113 + $0x21] sm:$0xff]
  %v3097 = vld [vmem:[%s113 + $0x31] sm:$0xff]
  %v3098 = vld [vmem:[%s113 + $0x39] sm:$0xff]
  %v3099 = vld [vmem:[%s113 + $0x49] sm:$0xff]
  %v3100 = vld [vmem:[%s113 + $0x51] sm:$0xff]
  %v3101 = vld [vmem:[%s113 + $0x61] sm:$0xff]
  %v3102 = vld [vmem:[%s113 + $0x69] sm:$0xff]
  %v3103 = vld [vmem:[%s113 + $0x79] sm:$0xff]
  %v3104 = vld [vmem:[%s113 + $0x81] sm:$0xff]
  %v3105 = vld [vmem:[%s113 + $0x91] sm:$0xff]
  %v3106 = vld [vmem:[%s113 + $0x99] sm:$0xff]
  %v3107 = vld [vmem:[%s113 + $0xa9] sm:$0xff]
  %v3108 = vld [vmem:[%s113 + $0xb1] sm:$0xff]
  %v3109 = vld [vmem:[%s113 + $0xc1] sm:$0xff]
  %v3110 = vld [vmem:[%s113 + $0xc9] sm:$0xff]
  %v3111 = vld [vmem:[%s113 + $0xd9] sm:$0xff]
  %v3112 = vld [vmem:[%s113 + $0xe1] sm:$0xff]
  %v3113 = vld [vmem:[%s113 + $0xf1] sm:$0xff]
  %v3114 = vld [vmem:[%s113 + $0xf9] sm:$0xff]
  %v3115 = vld [vmem:[%s113 + $0x109] sm:$0xff]
  %v3116 = vld [vmem:[%s113 + $0x111] sm:$0xff]
  %v3117 = vld [vmem:[%s113 + $0x121] sm:$0xff]
  %v3118 = vld [vmem:[%s113 + $0x129] sm:$0xff]
  %v3119 = vld [vmem:[%s113 + $0x139] sm:$0xff]
  %v3120 = vld [vmem:[%s113 + $0x141] sm:$0xff]
  %v3121 = vld [vmem:[%s113 + $0x151] sm:$0xff]
  %v3122 = vld [vmem:[%s113 + $0x159] sm:$0xff]
  %v3123 = vld [vmem:[%s113 + $0x169] sm:$0xff]
  %v3124 = vld [vmem:[%s113 + $0x171] sm:$0xff]
  %v3125 = vmul.f32 %v3093, 0.022885272
  %v3126 = vmul.f32 %v3094, 0.022885272
  %v3127 = vmul.f32 %v3095, 0.022885272
  %v3128 = vmul.f32 %v3096, 0.022885272
  %v3129 = vmul.f32 %v3097, 0.022885272
  %v3130 = vmul.f32 %v3098, 0.022885272
  %v3131 = vmul.f32 %v3099, 0.022885272
  %v3132 = vmul.f32 %v3100, 0.022885272
  %v3133 = vmul.f32 %v3101, 0.022885272
  %v3134 = vmul.f32 %v3102, 0.022885272
  %v3135 = vmul.f32 %v3103, 0.022885272
  %v3136 = vmul.f32 %v3104, 0.022885272
  %v3137 = vmul.f32 %v3105, 0.022885272
  %v3138 = vmul.f32 %v3106, 0.022885272
  %v3139 = vmul.f32 %v3107, 0.022885272
  %v3140 = vmul.f32 %v3108, 0.022885272
  %v3141 = vmul.f32 %v3109, 0.022885272
  %v3142 = vmul.f32 %v3110, 0.022885272
  %v3143 = vmul.f32 %v3111, 0.022885272
  %v3144 = vmul.f32 %v3112, 0.022885272
  %v3145 = vmul.f32 %v3113, 0.022885272
  %v3146 = vmul.f32 %v3114, 0.022885272
  %v3147 = vmul.f32 %v3115, 0.022885272
  %v3148 = vmul.f32 %v3116, 0.022885272
  %v3149 = vmul.f32 %v3117, 0.022885272
  %v3150 = vmul.f32 %v3118, 0.022885272
  %v3151 = vmul.f32 %v3119, 0.022885272
  %v3152 = vmul.f32 %v3120, 0.022885272
  %v3153 = vmul.f32 %v3121, 0.022885272
  %v3154 = vmul.f32 %v3122, 0.022885272
  %v3155 = vmul.f32 %v3123, 0.022885272
  %v3156 = vmul.f32 %v3124, 0.022885272
  %v3157 = vadd.f32 %v2789, %v3125
  %v3158 = vadd.f32 %v2790, %v3126
  %v3159 = vadd.f32 %v2791, %v3127
  %v3160 = vadd.f32 %v2792, %v3128
  %v3161 = vadd.f32 %v2793, %v3129
  %v3162 = vadd.f32 %v2794, %v3130
  %v3163 = vadd.f32 %v2795, %v3131
  %v3164 = vadd.f32 %v2796, %v3132
  %v3165 = vadd.f32 %v2797, %v3133
  %v3166 = vadd.f32 %v2798, %v3134
  %v3167 = vadd.f32 %v2799, %v3135
  %v3168 = vadd.f32 %v2800, %v3136
  %v3169 = vadd.f32 %v2801, %v3137
  %v3170 = vadd.f32 %v2802, %v3138
  %v3171 = vadd.f32 %v2803, %v3139
  %v3172 = vadd.f32 %v2804, %v3140
  %v3173 = vadd.f32 %v2805, %v3141
  %v3174 = vadd.f32 %v2806, %v3142
  %v3175 = vadd.f32 %v2807, %v3143
  %v3176 = vadd.f32 %v2808, %v3144
  %v3177 = vadd.f32 %v2809, %v3145
  %v3178 = vadd.f32 %v2810, %v3146
  %v3179 = vadd.f32 %v2811, %v3147
  %v3180 = vadd.f32 %v2812, %v3148
  %v3181 = vadd.f32 %v2813, %v3149
  %v3182 = vadd.f32 %v2814, %v3150
  %v3183 = vadd.f32 %v2815, %v3151
  %v3184 = vadd.f32 %v2816, %v3152
  %v3185 = vadd.f32 %v2817, %v3153
  %v3186 = vadd.f32 %v2818, %v3154
  %v3187 = vadd.f32 %v2819, %v3155
  %v3188 = vadd.f32 %v2820, %v3156
  %v3189 = vld [vmem:[%s113 + $0x2] sm:$0xff]
  %v3190 = vld [vmem:[%s113 + $0xa] sm:$0xff]
  %v3191 = vld [vmem:[%s113 + $0x1a] sm:$0xff]
  %v3192 = vld [vmem:[%s113 + $0x22] sm:$0xff]
  %v3193 = vld [vmem:[%s113 + $0x32] sm:$0xff]
  %v3194 = vld [vmem:[%s113 + $0x3a] sm:$0xff]
  %v3195 = vld [vmem:[%s113 + $0x4a] sm:$0xff]
  %v3196 = vld [vmem:[%s113 + $0x52] sm:$0xff]
  %v3197 = vld [vmem:[%s113 + $0x62] sm:$0xff]
  %v3198 = vld [vmem:[%s113 + $0x6a] sm:$0xff]
  %v3199 = vld [vmem:[%s113 + $0x7a] sm:$0xff]
  %v3200 = vld [vmem:[%s113 + $0x82] sm:$0xff]
  %v3201 = vld [vmem:[%s113 + $0x92] sm:$0xff]
  %v3202 = vld [vmem:[%s113 + $0x9a] sm:$0xff]
  %v3203 = vld [vmem:[%s113 + $0xaa] sm:$0xff]
  %v3204 = vld [vmem:[%s113 + $0xb2] sm:$0xff]
  %v3205 = vld [vmem:[%s113 + $0xc2] sm:$0xff]
  %v3206 = vld [vmem:[%s113 + $0xca] sm:$0xff]
  %v3207 = vld [vmem:[%s113 + $0xda] sm:$0xff]
  %v3208 = vld [vmem:[%s113 + $0xe2] sm:$0xff]
  %v3209 = vld [vmem:[%s113 + $0xf2] sm:$0xff]
  %v3210 = vld [vmem:[%s113 + $0xfa] sm:$0xff]
  %v3211 = vld [vmem:[%s113 + $0x10a] sm:$0xff]
  %v3212 = vld [vmem:[%s113 + $0x112] sm:$0xff]
  %v3213 = vld [vmem:[%s113 + $0x122] sm:$0xff]
  %v3214 = vld [vmem:[%s113 + $0x12a] sm:$0xff]
  %v3215 = vld [vmem:[%s113 + $0x13a] sm:$0xff]
  %v3216 = vld [vmem:[%s113 + $0x142] sm:$0xff]
  %v3217 = vld [vmem:[%s113 + $0x152] sm:$0xff]
  %v3218 = vld [vmem:[%s113 + $0x15a] sm:$0xff]
  %v3219 = vld [vmem:[%s113 + $0x16a] sm:$0xff]
  %v3220 = vld [vmem:[%s113 + $0x172] sm:$0xff]
  %v3221 = vmul.f32 %v3189, 0.02453101
  %v3222 = vmul.f32 %v3190, 0.02453101
  %v3223 = vmul.f32 %v3191, 0.02453101
  %v3224 = vmul.f32 %v3192, 0.02453101
  %v3225 = vmul.f32 %v3193, 0.02453101
  %v3226 = vmul.f32 %v3194, 0.02453101
  %v3227 = vmul.f32 %v3195, 0.02453101
  %v3228 = vmul.f32 %v3196, 0.02453101
  %v3229 = vmul.f32 %v3197, 0.02453101
  %v3230 = vmul.f32 %v3198, 0.02453101
  %v3231 = vmul.f32 %v3199, 0.02453101
  %v3232 = vmul.f32 %v3200, 0.02453101
  %v3233 = vmul.f32 %v3201, 0.02453101
  %v3234 = vmul.f32 %v3202, 0.02453101
  %v3235 = vmul.f32 %v3203, 0.02453101
  %v3236 = vmul.f32 %v3204, 0.02453101
  %v3237 = vmul.f32 %v3205, 0.02453101
  %v3238 = vmul.f32 %v3206, 0.02453101
  %v3239 = vmul.f32 %v3207, 0.02453101
  %v3240 = vmul.f32 %v3208, 0.02453101
  %v3241 = vmul.f32 %v3209, 0.02453101
  %v3242 = vmul.f32 %v3210, 0.02453101
  %v3243 = vmul.f32 %v3211, 0.02453101
  %v3244 = vmul.f32 %v3212, 0.02453101
  %v3245 = vmul.f32 %v3213, 0.02453101
  %v3246 = vmul.f32 %v3214, 0.02453101
  %v3247 = vmul.f32 %v3215, 0.02453101
  %v3248 = vmul.f32 %v3216, 0.02453101
  %v3249 = vmul.f32 %v3217, 0.02453101
  %v3250 = vmul.f32 %v3218, 0.02453101
  %v3251 = vmul.f32 %v3219, 0.02453101
  %v3252 = vmul.f32 %v3220, 0.02453101
  %v3253 = vadd.f32 %v2885, %v3221
  %v3254 = vadd.f32 %v2886, %v3222
  %v3255 = vadd.f32 %v2887, %v3223
  %v3256 = vadd.f32 %v2888, %v3224
  %v3257 = vadd.f32 %v2889, %v3225
  %v3258 = vadd.f32 %v2890, %v3226
  %v3259 = vadd.f32 %v2891, %v3227
  %v3260 = vadd.f32 %v2892, %v3228
  %v3261 = vadd.f32 %v2893, %v3229
  %v3262 = vadd.f32 %v2894, %v3230
  %v3263 = vadd.f32 %v2895, %v3231
  %v3264 = vadd.f32 %v2896, %v3232
  %v3265 = vadd.f32 %v2897, %v3233
  %v3266 = vadd.f32 %v2898, %v3234
  %v3267 = vadd.f32 %v2899, %v3235
  %v3268 = vadd.f32 %v2900, %v3236
  %v3269 = vadd.f32 %v2901, %v3237
  %v3270 = vadd.f32 %v2902, %v3238
  %v3271 = vadd.f32 %v2903, %v3239
  %v3272 = vadd.f32 %v2904, %v3240
  %v3273 = vadd.f32 %v2905, %v3241
  %v3274 = vadd.f32 %v2906, %v3242
  %v3275 = vadd.f32 %v2907, %v3243
  %v3276 = vadd.f32 %v2908, %v3244
  %v3277 = vadd.f32 %v2909, %v3245
  %v3278 = vadd.f32 %v2910, %v3246
  %v3279 = vadd.f32 %v2911, %v3247
  %v3280 = vadd.f32 %v2912, %v3248
  %v3281 = vadd.f32 %v2913, %v3249
  %v3282 = vadd.f32 %v2914, %v3250
  %v3283 = vadd.f32 %v2915, %v3251
  %v3284 = vadd.f32 %v2916, %v3252
  %v3285 = vld [vmem:[%s113 + $0x3] sm:$0xff]
  %v3286 = vld [vmem:[%s113 + $0xb] sm:$0xff]
  %v3287 = vld [vmem:[%s113 + $0x1b] sm:$0xff]
  %v3288 = vld [vmem:[%s113 + $0x23] sm:$0xff]
  %v3289 = vld [vmem:[%s113 + $0x33] sm:$0xff]
  %v3290 = vld [vmem:[%s113 + $0x3b] sm:$0xff]
  %v3291 = vld [vmem:[%s113 + $0x4b] sm:$0xff]
  %v3292 = vld [vmem:[%s113 + $0x53] sm:$0xff]
  %v3293 = vld [vmem:[%s113 + $0x63] sm:$0xff]
  %v3294 = vld [vmem:[%s113 + $0x6b] sm:$0xff]
  %v3295 = vld [vmem:[%s113 + $0x7b] sm:$0xff]
  %v3296 = vld [vmem:[%s113 + $0x83] sm:$0xff]
  %v3297 = vld [vmem:[%s113 + $0x93] sm:$0xff]
  %v3298 = vld [vmem:[%s113 + $0x9b] sm:$0xff]
  %v3299 = vld [vmem:[%s113 + $0xab] sm:$0xff]
  %v3300 = vld [vmem:[%s113 + $0xb3] sm:$0xff]
  %v3301 = vld [vmem:[%s113 + $0xc3] sm:$0xff]
  %v3302 = vld [vmem:[%s113 + $0xcb] sm:$0xff]
  %v3303 = vld [vmem:[%s113 + $0xdb] sm:$0xff]
  %v3304 = vld [vmem:[%s113 + $0xe3] sm:$0xff]
  %v3305 = vld [vmem:[%s113 + $0xf3] sm:$0xff]
  %v3306 = vld [vmem:[%s113 + $0xfb] sm:$0xff]
  %v3307 = vld [vmem:[%s113 + $0x10b] sm:$0xff]
  %v3308 = vld [vmem:[%s113 + $0x113] sm:$0xff]
  %v3309 = vld [vmem:[%s113 + $0x123] sm:$0xff]
  %v3310 = vld [vmem:[%s113 + $0x12b] sm:$0xff]
  %v3311 = vld [vmem:[%s113 + $0x13b] sm:$0xff]
  %v3312 = vld [vmem:[%s113 + $0x143] sm:$0xff]
  %v3313 = vld [vmem:[%s113 + $0x153] sm:$0xff]
  %v3314 = vld [vmem:[%s113 + $0x15b] sm:$0xff]
  %v3315 = vld [vmem:[%s113 + $0x16b] sm:$0xff]
  %v3316 = vld [vmem:[%s113 + $0x173] sm:$0xff]
  %v3317 = vmul.f32 %v3285, 0.03193897
  %v3318 = vmul.f32 %v3286, 0.03193897
  %v3319 = vmul.f32 %v3287, 0.03193897
  %v3320 = vmul.f32 %v3288, 0.03193897
  %v3321 = vmul.f32 %v3289, 0.03193897
  %v3322 = vmul.f32 %v3290, 0.03193897
  %v3323 = vmul.f32 %v3291, 0.03193897
  %v3324 = vmul.f32 %v3292, 0.03193897
  %v3325 = vmul.f32 %v3293, 0.03193897
  %v3326 = vmul.f32 %v3294, 0.03193897
  %v3327 = vmul.f32 %v3295, 0.03193897
  %v3328 = vmul.f32 %v3296, 0.03193897
  %v3329 = vmul.f32 %v3297, 0.03193897
  %v3330 = vmul.f32 %v3298, 0.03193897
  %v3331 = vmul.f32 %v3299, 0.03193897
  %v3332 = vmul.f32 %v3300, 0.03193897
  %v3333 = vmul.f32 %v3301, 0.03193897
  %v3334 = vmul.f32 %v3302, 0.03193897
  %v3335 = vmul.f32 %v3303, 0.03193897
  %v3336 = vmul.f32 %v3304, 0.03193897
  %v3337 = vmul.f32 %v3305, 0.03193897
  %v3338 = vmul.f32 %v3306, 0.03193897
  %v3339 = vmul.f32 %v3307, 0.03193897
  %v3340 = vmul.f32 %v3308, 0.03193897
  %v3341 = vmul.f32 %v3309, 0.03193897
  %v3342 = vmul.f32 %v3310, 0.03193897
  %v3343 = vmul.f32 %v3311, 0.03193897
  %v3344 = vmul.f32 %v3312, 0.03193897
  %v3345 = vmul.f32 %v3313, 0.03193897
  %v3346 = vmul.f32 %v3314, 0.03193897
  %v3347 = vmul.f32 %v3315, 0.03193897
  %v3348 = vmul.f32 %v3316, 0.03193897
  %v3349 = vadd.f32 %v2965, %v3317
  %v3350 = vadd.f32 %v2966, %v3318
  %v3351 = vadd.f32 %v2967, %v3319
  %v3352 = vadd.f32 %v2968, %v3320
  %v3353 = vadd.f32 %v2969, %v3321
  %v3354 = vadd.f32 %v2970, %v3322
  %v3355 = vadd.f32 %v2971, %v3323
  %v3356 = vadd.f32 %v2972, %v3324
  %v3357 = vadd.f32 %v2973, %v3325
  %v3358 = vadd.f32 %v2974, %v3326
  %v3359 = vadd.f32 %v2975, %v3327
  %v3360 = vadd.f32 %v2976, %v3328
  %v3361 = vadd.f32 %v2977, %v3329
  %v3362 = vadd.f32 %v2978, %v3330
  %v3363 = vadd.f32 %v2979, %v3331
  %v3364 = vadd.f32 %v2980, %v3332
  %v3365 = vadd.f32 %v2981, %v3333
  %v3366 = vadd.f32 %v2982, %v3334
  %v3367 = vadd.f32 %v2983, %v3335
  %v3368 = vadd.f32 %v2984, %v3336
  %v3369 = vadd.f32 %v2985, %v3337
  %v3370 = vadd.f32 %v2986, %v3338
  %v3371 = vadd.f32 %v2987, %v3339
  %v3372 = vadd.f32 %v2988, %v3340
  %v3373 = vadd.f32 %v2989, %v3341
  %v3374 = vadd.f32 %v2990, %v3342
  %v3375 = vadd.f32 %v2991, %v3343
  %v3376 = vadd.f32 %v2992, %v3344
  %v3377 = vadd.f32 %v2993, %v3345
  %v3378 = vadd.f32 %v2994, %v3346
  %v3379 = vadd.f32 %v2995, %v3347
  %v3380 = vadd.f32 %v2996, %v3348
  %v3381 = vld [vmem:[%s113 + $0x4] sm:$0xff]
  %v3382 = vld [vmem:[%s113 + $0xc] sm:$0xff]
  %v3383 = vld [vmem:[%s113 + $0x1c] sm:$0xff]
  %v3384 = vld [vmem:[%s113 + $0x24] sm:$0xff]
  %v3385 = vld [vmem:[%s113 + $0x34] sm:$0xff]
  %v3386 = vld [vmem:[%s113 + $0x3c] sm:$0xff]
  %v3387 = vld [vmem:[%s113 + $0x4c] sm:$0xff]
  %v3388 = vld [vmem:[%s113 + $0x54] sm:$0xff]
  %v3389 = vld [vmem:[%s113 + $0x64] sm:$0xff]
  %v3390 = vld [vmem:[%s113 + $0x6c] sm:$0xff]
  %v3391 = vld [vmem:[%s113 + $0x7c] sm:$0xff]
  %v3392 = vld [vmem:[%s113 + $0x84] sm:$0xff]
  %v3393 = vld [vmem:[%s113 + $0x94] sm:$0xff]
  %v3394 = vld [vmem:[%s113 + $0x9c] sm:$0xff]
  %v3395 = vld [vmem:[%s113 + $0xac] sm:$0xff]
  %v3396 = vld [vmem:[%s113 + $0xb4] sm:$0xff]
  %v3397 = vld [vmem:[%s113 + $0xc4] sm:$0xff]
  %v3398 = vld [vmem:[%s113 + $0xcc] sm:$0xff]
  %v3399 = vld [vmem:[%s113 + $0xdc] sm:$0xff]
  %v3400 = vld [vmem:[%s113 + $0xe4] sm:$0xff]
  %v3401 = vld [vmem:[%s113 + $0xf4] sm:$0xff]
  %v3402 = vld [vmem:[%s113 + $0xfc] sm:$0xff]
  %v3403 = vld [vmem:[%s113 + $0x10c] sm:$0xff]
  %v3404 = vld [vmem:[%s113 + $0x114] sm:$0xff]
  %v3405 = vld [vmem:[%s113 + $0x124] sm:$0xff]
  %v3406 = vld [vmem:[%s113 + $0x12c] sm:$0xff]
  %v3407 = vld [vmem:[%s113 + $0x13c] sm:$0xff]
  %v3408 = vld [vmem:[%s113 + $0x144] sm:$0xff]
  %v3409 = vld [vmem:[%s113 + $0x154] sm:$0xff]
  %v3410 = vld [vmem:[%s113 + $0x15c] sm:$0xff]
  %v3411 = vld [vmem:[%s113 + $0x16c] sm:$0xff]
  %v3412 = vld [vmem:[%s113 + $0x174] sm:$0xff]
  %v3413 = vmul.f32 %v3381, 0.032385662
  %v3414 = vmul.f32 %v3382, 0.032385662
  %v3415 = vmul.f32 %v3383, 0.032385662
  %v3416 = vmul.f32 %v3384, 0.032385662
  %v3417 = vmul.f32 %v3385, 0.032385662
  %v3418 = vmul.f32 %v3386, 0.032385662
  %v3419 = vmul.f32 %v3387, 0.032385662
  %v3420 = vmul.f32 %v3388, 0.032385662
  %v3421 = vmul.f32 %v3389, 0.032385662
  %v3422 = vmul.f32 %v3390, 0.032385662
  %v3423 = vmul.f32 %v3391, 0.032385662
  %v3424 = vmul.f32 %v3392, 0.032385662
  %v3425 = vmul.f32 %v3393, 0.032385662
  %v3426 = vmul.f32 %v3394, 0.032385662
  %v3427 = vmul.f32 %v3395, 0.032385662
  %v3428 = vmul.f32 %v3396, 0.032385662
  %v3429 = vmul.f32 %v3397, 0.032385662
  %v3430 = vmul.f32 %v3398, 0.032385662
  %v3431 = vmul.f32 %v3399, 0.032385662
  %v3432 = vmul.f32 %v3400, 0.032385662
  %v3433 = vmul.f32 %v3401, 0.032385662
  %v3434 = vmul.f32 %v3402, 0.032385662
  %v3435 = vmul.f32 %v3403, 0.032385662
  %v3436 = vmul.f32 %v3404, 0.032385662
  %v3437 = vmul.f32 %v3405, 0.032385662
  %v3438 = vmul.f32 %v3406, 0.032385662
  %v3439 = vmul.f32 %v3407, 0.032385662
  %v3440 = vmul.f32 %v3408, 0.032385662
  %v3441 = vmul.f32 %v3409, 0.032385662
  %v3442 = vmul.f32 %v3410, 0.032385662
  %v3443 = vmul.f32 %v3411, 0.032385662
  %v3444 = vmul.f32 %v3412, 0.032385662
  %v3445 = vadd.f32 %v3061, %v3413
  %v3446 = vadd.f32 %v3062, %v3414
  %v3447 = vadd.f32 %v3063, %v3415
  %v3448 = vadd.f32 %v3064, %v3416
  %v3449 = vadd.f32 %v3065, %v3417
  %v3450 = vadd.f32 %v3066, %v3418
  %v3451 = vadd.f32 %v3067, %v3419
  %v3452 = vadd.f32 %v3068, %v3420
  %v3453 = vadd.f32 %v3069, %v3421
  %v3454 = vadd.f32 %v3070, %v3422
  %v3455 = vadd.f32 %v3071, %v3423
  %v3456 = vadd.f32 %v3072, %v3424
  %v3457 = vadd.f32 %v3073, %v3425
  %v3458 = vadd.f32 %v3074, %v3426
  %v3459 = vadd.f32 %v3075, %v3427
  %v3460 = vadd.f32 %v3076, %v3428
  %v3461 = vadd.f32 %v3077, %v3429
  %v3462 = vadd.f32 %v3078, %v3430
  %v3463 = vadd.f32 %v3079, %v3431
  %v3464 = vadd.f32 %v3080, %v3432
  %v3465 = vadd.f32 %v3081, %v3433
  %v3466 = vadd.f32 %v3082, %v3434
  %v3467 = vadd.f32 %v3083, %v3435
  %v3468 = vadd.f32 %v3084, %v3436
  %v3469 = vadd.f32 %v3085, %v3437
  %v3470 = vadd.f32 %v3086, %v3438
  %v3471 = vadd.f32 %v3087, %v3439
  %v3472 = vadd.f32 %v3088, %v3440
  %v3473 = vadd.f32 %v3089, %v3441
  %v3474 = vadd.f32 %v3090, %v3442
  %v3475 = vadd.f32 %v3091, %v3443
  %v3476 = vadd.f32 %v3092, %v3444
  %v3477 = vld [vmem:[%s113 + $0x5] sm:$0xff]
  %v3478 = vld [vmem:[%s113 + $0xd] sm:$0xff]
  %v3479 = vld [vmem:[%s113 + $0x1d] sm:$0xff]
  %v3480 = vld [vmem:[%s113 + $0x25] sm:$0xff]
  %v3481 = vld [vmem:[%s113 + $0x35] sm:$0xff]
  %v3482 = vld [vmem:[%s113 + $0x3d] sm:$0xff]
  %v3483 = vld [vmem:[%s113 + $0x4d] sm:$0xff]
  %v3484 = vld [vmem:[%s113 + $0x55] sm:$0xff]
  %v3485 = vld [vmem:[%s113 + $0x65] sm:$0xff]
  %v3486 = vld [vmem:[%s113 + $0x6d] sm:$0xff]
  %v3487 = vld [vmem:[%s113 + $0x7d] sm:$0xff]
  %v3488 = vld [vmem:[%s113 + $0x85] sm:$0xff]
  %v3489 = vld [vmem:[%s113 + $0x95] sm:$0xff]
  %v3490 = vld [vmem:[%s113 + $0x9d] sm:$0xff]
  %v3491 = vld [vmem:[%s113 + $0xad] sm:$0xff]
  %v3492 = vld [vmem:[%s113 + $0xb5] sm:$0xff]
  %v3493 = vld [vmem:[%s113 + $0xc5] sm:$0xff]
  %v3494 = vld [vmem:[%s113 + $0xcd] sm:$0xff]
  %v3495 = vld [vmem:[%s113 + $0xdd] sm:$0xff]
  %v3496 = vld [vmem:[%s113 + $0xe5] sm:$0xff]
  %v3497 = vld [vmem:[%s113 + $0xf5] sm:$0xff]
  %v3498 = vld [vmem:[%s113 + $0xfd] sm:$0xff]
  %v3499 = vld [vmem:[%s113 + $0x10d] sm:$0xff]
  %v3500 = vld [vmem:[%s113 + $0x115] sm:$0xff]
  %v3501 = vld [vmem:[%s113 + $0x125] sm:$0xff]
  %v3502 = vld [vmem:[%s113 + $0x12d] sm:$0xff]
  %v3503 = vld [vmem:[%s113 + $0x13d] sm:$0xff]
  %v3504 = vld [vmem:[%s113 + $0x145] sm:$0xff]
  %v3505 = vld [vmem:[%s113 + $0x155] sm:$0xff]
  %v3506 = vld [vmem:[%s113 + $0x15d] sm:$0xff]
  %v3507 = vld [vmem:[%s113 + $0x16d] sm:$0xff]
  %v3508 = vld [vmem:[%s113 + $0x175] sm:$0xff]
  %v3509 = vmul.f32 %v3477, 0.025574729
  %v3510 = vmul.f32 %v3478, 0.025574729
  %v3511 = vmul.f32 %v3479, 0.025574729
  %v3512 = vmul.f32 %v3480, 0.025574729
  %v3513 = vmul.f32 %v3481, 0.025574729
  %v3514 = vmul.f32 %v3482, 0.025574729
  %v3515 = vmul.f32 %v3483, 0.025574729
  %v3516 = vmul.f32 %v3484, 0.025574729
  %v3517 = vmul.f32 %v3485, 0.025574729
  %v3518 = vmul.f32 %v3486, 0.025574729
  %v3519 = vmul.f32 %v3487, 0.025574729
  %v3520 = vmul.f32 %v3488, 0.025574729
  %v3521 = vmul.f32 %v3489, 0.025574729
  %v3522 = vmul.f32 %v3490, 0.025574729
  %v3523 = vmul.f32 %v3491, 0.025574729
  %v3524 = vmul.f32 %v3492, 0.025574729
  %v3525 = vmul.f32 %v3493, 0.025574729
  %v3526 = vmul.f32 %v3494, 0.025574729
  %v3527 = vmul.f32 %v3495, 0.025574729
  %v3528 = vmul.f32 %v3496, 0.025574729
  %v3529 = vmul.f32 %v3497, 0.025574729
  %v3530 = vmul.f32 %v3498, 0.025574729
  %v3531 = vmul.f32 %v3499, 0.025574729
  %v3532 = vmul.f32 %v3500, 0.025574729
  %v3533 = vmul.f32 %v3501, 0.025574729
  %v3534 = vmul.f32 %v3502, 0.025574729
  %v3535 = vmul.f32 %v3503, 0.025574729
  %v3536 = vmul.f32 %v3504, 0.025574729
  %v3537 = vmul.f32 %v3505, 0.025574729
  %v3538 = vmul.f32 %v3506, 0.025574729
  %v3539 = vmul.f32 %v3507, 0.025574729
  %v3540 = vmul.f32 %v3508, 0.025574729
  %v3541 = vadd.f32 %v3157, %v3509
  %v3542 = vadd.f32 %v3158, %v3510
  %v3543 = vadd.f32 %v3159, %v3511
  %v3544 = vadd.f32 %v3160, %v3512
  %v3545 = vadd.f32 %v3161, %v3513
  %v3546 = vadd.f32 %v3162, %v3514
  %v3547 = vadd.f32 %v3163, %v3515
  %v3548 = vadd.f32 %v3164, %v3516
  %v3549 = vadd.f32 %v3165, %v3517
  %v3550 = vadd.f32 %v3166, %v3518
  %v3551 = vadd.f32 %v3167, %v3519
  %v3552 = vadd.f32 %v3168, %v3520
  %v3553 = vadd.f32 %v3169, %v3521
  %v3554 = vadd.f32 %v3170, %v3522
  %v3555 = vadd.f32 %v3171, %v3523
  %v3556 = vadd.f32 %v3172, %v3524
  %v3557 = vadd.f32 %v3173, %v3525
  %v3558 = vadd.f32 %v3174, %v3526
  %v3559 = vadd.f32 %v3175, %v3527
  %v3560 = vadd.f32 %v3176, %v3528
  %v3561 = vadd.f32 %v3177, %v3529
  %v3562 = vadd.f32 %v3178, %v3530
  %v3563 = vadd.f32 %v3179, %v3531
  %v3564 = vadd.f32 %v3180, %v3532
  %v3565 = vadd.f32 %v3181, %v3533
  %v3566 = vadd.f32 %v3182, %v3534
  %v3567 = vadd.f32 %v3183, %v3535
  %v3568 = vadd.f32 %v3184, %v3536
  %v3569 = vadd.f32 %v3185, %v3537
  %v3570 = vadd.f32 %v3186, %v3538
  %v3571 = vadd.f32 %v3187, %v3539
  %v3572 = vadd.f32 %v3188, %v3540
  %v3573 = vld [vmem:[%s113 + $0x6] sm:$0xff]
  %v3574 = vld [vmem:[%s113 + $0xe] sm:$0xff]
  %v3575 = vld [vmem:[%s113 + $0x1e] sm:$0xff]
  %v3576 = vld [vmem:[%s113 + $0x26] sm:$0xff]
  %v3577 = vld [vmem:[%s113 + $0x36] sm:$0xff]
  %v3578 = vld [vmem:[%s113 + $0x3e] sm:$0xff]
  %v3579 = vld [vmem:[%s113 + $0x4e] sm:$0xff]
  %v3580 = vld [vmem:[%s113 + $0x56] sm:$0xff]
  %v3581 = vld [vmem:[%s113 + $0x66] sm:$0xff]
  %v3582 = vld [vmem:[%s113 + $0x6e] sm:$0xff]
  %v3583 = vld [vmem:[%s113 + $0x7e] sm:$0xff]
  %v3584 = vld [vmem:[%s113 + $0x86] sm:$0xff]
  %v3585 = vld [vmem:[%s113 + $0x96] sm:$0xff]
  %v3586 = vld [vmem:[%s113 + $0x9e] sm:$0xff]
  %v3587 = vld [vmem:[%s113 + $0xae] sm:$0xff]
  %v3588 = vld [vmem:[%s113 + $0xb6] sm:$0xff]
  %v3589 = vld [vmem:[%s113 + $0xc6] sm:$0xff]
  %v3590 = vld [vmem:[%s113 + $0xce] sm:$0xff]
  %v3591 = vld [vmem:[%s113 + $0xde] sm:$0xff]
  %v3592 = vld [vmem:[%s113 + $0xe6] sm:$0xff]
  %v3593 = vld [vmem:[%s113 + $0xf6] sm:$0xff]
  %v3594 = vld [vmem:[%s113 + $0xfe] sm:$0xff]
  %v3595 = vld [vmem:[%s113 + $0x10e] sm:$0xff]
  %v3596 = vld [vmem:[%s113 + $0x116] sm:$0xff]
  %v3597 = vld [vmem:[%s113 + $0x126] sm:$0xff]
  %v3598 = vld [vmem:[%s113 + $0x12e] sm:$0xff]
  %v3599 = vld [vmem:[%s113 + $0x13e] sm:$0xff]
  %v3600 = vld [vmem:[%s113 + $0x146] sm:$0xff]
  %v3601 = vld [vmem:[%s113 + $0x156] sm:$0xff]
  %v3602 = vld [vmem:[%s113 + $0x15e] sm:$0xff]
  %v3603 = vld [vmem:[%s113 + $0x16e] sm:$0xff]
  %v3604 = vld [vmem:[%s113 + $0x176] sm:$0xff]
  %v3605 = vmul.f32 %v3573, 0.02453101
  %v3606 = vmul.f32 %v3574, 0.02453101
  %v3607 = vmul.f32 %v3575, 0.02453101
  %v3608 = vmul.f32 %v3576, 0.02453101
  %v3609 = vmul.f32 %v3577, 0.02453101
  %v3610 = vmul.f32 %v3578, 0.02453101
  %v3611 = vmul.f32 %v3579, 0.02453101
  %v3612 = vmul.f32 %v3580, 0.02453101
  %v3613 = vmul.f32 %v3581, 0.02453101
  %v3614 = vmul.f32 %v3582, 0.02453101
  %v3615 = vmul.f32 %v3583, 0.02453101
  %v3616 = vmul.f32 %v3584, 0.02453101
  %v3617 = vmul.f32 %v3585, 0.02453101
  %v3618 = vmul.f32 %v3586, 0.02453101
  %v3619 = vmul.f32 %v3587, 0.02453101
  %v3620 = vmul.f32 %v3588, 0.02453101
  %v3621 = vmul.f32 %v3589, 0.02453101
  %v3622 = vmul.f32 %v3590, 0.02453101
  %v3623 = vmul.f32 %v3591, 0.02453101
  %v3624 = vmul.f32 %v3592, 0.02453101
  %v3625 = vmul.f32 %v3593, 0.02453101
  %v3626 = vmul.f32 %v3594, 0.02453101
  %v3627 = vmul.f32 %v3595, 0.02453101
  %v3628 = vmul.f32 %v3596, 0.02453101
  %v3629 = vmul.f32 %v3597, 0.02453101
  %v3630 = vmul.f32 %v3598, 0.02453101
  %v3631 = vmul.f32 %v3599, 0.02453101
  %v3632 = vmul.f32 %v3600, 0.02453101
  %v3633 = vmul.f32 %v3601, 0.02453101
  %v3634 = vmul.f32 %v3602, 0.02453101
  %v3635 = vmul.f32 %v3603, 0.02453101
  %v3636 = vmul.f32 %v3604, 0.02453101
  %v3637 = vadd.f32 %v3253, %v3605
  %v3638 = vadd.f32 %v3254, %v3606
  %v3639 = vadd.f32 %v3255, %v3607
  %v3640 = vadd.f32 %v3256, %v3608
  %v3641 = vadd.f32 %v3257, %v3609
  %v3642 = vadd.f32 %v3258, %v3610
  %v3643 = vadd.f32 %v3259, %v3611
  %v3644 = vadd.f32 %v3260, %v3612
  %v3645 = vadd.f32 %v3261, %v3613
  %v3646 = vadd.f32 %v3262, %v3614
  %v3647 = vadd.f32 %v3263, %v3615
  %v3648 = vadd.f32 %v3264, %v3616
  %v3649 = vadd.f32 %v3265, %v3617
  %v3650 = vadd.f32 %v3266, %v3618
  %v3651 = vadd.f32 %v3267, %v3619
  %v3652 = vadd.f32 %v3268, %v3620
  %v3653 = vadd.f32 %v3269, %v3621
  %v3654 = vadd.f32 %v3270, %v3622
  %v3655 = vadd.f32 %v3271, %v3623
  %v3656 = vadd.f32 %v3272, %v3624
  %v3657 = vadd.f32 %v3273, %v3625
  %v3658 = vadd.f32 %v3274, %v3626
  %v3659 = vadd.f32 %v3275, %v3627
  %v3660 = vadd.f32 %v3276, %v3628
  %v3661 = vadd.f32 %v3277, %v3629
  %v3662 = vadd.f32 %v3278, %v3630
  %v3663 = vadd.f32 %v3279, %v3631
  %v3664 = vadd.f32 %v3280, %v3632
  %v3665 = vadd.f32 %v3281, %v3633
  %v3666 = vadd.f32 %v3282, %v3634
  %v3667 = vadd.f32 %v3283, %v3635
  %v3668 = vadd.f32 %v3284, %v3636
  %v3669 = vld [vmem:[%s113 + $0x7] sm:$0xff]
  %v3670 = vld [vmem:[%s113 + $0xf] sm:$0xff]
  %v3671 = vld [vmem:[%s113 + $0x1f] sm:$0xff]
  %v3672 = vld [vmem:[%s113 + $0x27] sm:$0xff]
  %v3673 = vld [vmem:[%s113 + $0x37] sm:$0xff]
  %v3674 = vld [vmem:[%s113 + $0x3f] sm:$0xff]
  %v3675 = vld [vmem:[%s113 + $0x4f] sm:$0xff]
  %v3676 = vld [vmem:[%s113 + $0x57] sm:$0xff]
  %v3677 = vld [vmem:[%s113 + $0x67] sm:$0xff]
  %v3678 = vld [vmem:[%s113 + $0x6f] sm:$0xff]
  %v3679 = vld [vmem:[%s113 + $0x7f] sm:$0xff]
  %v3680 = vld [vmem:[%s113 + $0x87] sm:$0xff]
  %v3681 = vld [vmem:[%s113 + $0x97] sm:$0xff]
  %v3682 = vld [vmem:[%s113 + $0x9f] sm:$0xff]
  %v3683 = vld [vmem:[%s113 + $0xaf] sm:$0xff]
  %v3684 = vld [vmem:[%s113 + $0xb7] sm:$0xff]
  %v3685 = vld [vmem:[%s113 + $0xc7] sm:$0xff]
  %v3686 = vld [vmem:[%s113 + $0xcf] sm:$0xff]
  %v3687 = vld [vmem:[%s113 + $0xdf] sm:$0xff]
  %v3688 = vld [vmem:[%s113 + $0xe7] sm:$0xff]
  %v3689 = vld [vmem:[%s113 + $0xf7] sm:$0xff]
  %v3690 = vld [vmem:[%s113 + $0xff] sm:$0xff]
  %v3691 = vld [vmem:[%s113 + $0x10f] sm:$0xff]
  %v3692 = vld [vmem:[%s113 + $0x117] sm:$0xff]
  %v3693 = vld [vmem:[%s113 + $0x127] sm:$0xff]
  %v3694 = vld [vmem:[%s113 + $0x12f] sm:$0xff]
  %v3695 = vld [vmem:[%s113 + $0x13f] sm:$0xff]
  %v3696 = vld [vmem:[%s113 + $0x147] sm:$0xff]
  %v3697 = vld [vmem:[%s113 + $0x157] sm:$0xff]
  %v3698 = vld [vmem:[%s113 + $0x15f] sm:$0xff]
  %v3699 = vld [vmem:[%s113 + $0x16f] sm:$0xff]
  %v3700 = vld [vmem:[%s113 + $0x177] sm:$0xff]
  %v3701 = vmul.f32 %v3669, 0.011749691
  %v3702 = vmul.f32 %v3670, 0.011749691
  %v3703 = vmul.f32 %v3671, 0.011749691
  %v3704 = vmul.f32 %v3672, 0.011749691
  %v3705 = vmul.f32 %v3673, 0.011749691
  %v3706 = vmul.f32 %v3674, 0.011749691
  %v3707 = vmul.f32 %v3675, 0.011749691
  %v3708 = vmul.f32 %v3676, 0.011749691
  %v3709 = vmul.f32 %v3677, 0.011749691
  %v3710 = vmul.f32 %v3678, 0.011749691
  %v3711 = vmul.f32 %v3679, 0.011749691
  %v3712 = vmul.f32 %v3680, 0.011749691
  %v3713 = vmul.f32 %v3681, 0.011749691
  %v3714 = vmul.f32 %v3682, 0.011749691
  %v3715 = vmul.f32 %v3683, 0.011749691
  %v3716 = vmul.f32 %v3684, 0.011749691
  %v3717 = vmul.f32 %v3685, 0.011749691
  %v3718 = vmul.f32 %v3686, 0.011749691
  %v3719 = vmul.f32 %v3687, 0.011749691
  %v3720 = vmul.f32 %v3688, 0.011749691
  %v3721 = vmul.f32 %v3689, 0.011749691
  %v3722 = vmul.f32 %v3690, 0.011749691
  %v3723 = vmul.f32 %v3691, 0.011749691
  %v3724 = vmul.f32 %v3692, 0.011749691
  %v3725 = vmul.f32 %v3693, 0.011749691
  %v3726 = vmul.f32 %v3694, 0.011749691
  %v3727 = vmul.f32 %v3695, 0.011749691
  %v3728 = vmul.f32 %v3696, 0.011749691
  %v3729 = vmul.f32 %v3697, 0.011749691
  %v3730 = vmul.f32 %v3698, 0.011749691
  %v3731 = vmul.f32 %v3699, 0.011749691
  %v3732 = vmul.f32 %v3700, 0.011749691
  %v3733 = vadd.f32 %v3349, %v3701
  %v3734 = vadd.f32 %v3350, %v3702
  %v3735 = vadd.f32 %v3351, %v3703
  %v3736 = vadd.f32 %v3352, %v3704
  %v3737 = vadd.f32 %v3353, %v3705
  %v3738 = vadd.f32 %v3354, %v3706
  %v3739 = vadd.f32 %v3355, %v3707
  %v3740 = vadd.f32 %v3356, %v3708
  %v3741 = vadd.f32 %v3357, %v3709
  %v3742 = vadd.f32 %v3358, %v3710
  %v3743 = vadd.f32 %v3359, %v3711
  %v3744 = vadd.f32 %v3360, %v3712
  %v3745 = vadd.f32 %v3361, %v3713
  %v3746 = vadd.f32 %v3362, %v3714
  %v3747 = vadd.f32 %v3363, %v3715
  %v3748 = vadd.f32 %v3364, %v3716
  %v3749 = vadd.f32 %v3365, %v3717
  %v3750 = vadd.f32 %v3366, %v3718
  %v3751 = vadd.f32 %v3367, %v3719
  %v3752 = vadd.f32 %v3368, %v3720
  %v3753 = vadd.f32 %v3369, %v3721
  %v3754 = vadd.f32 %v3370, %v3722
  %v3755 = vadd.f32 %v3371, %v3723
  %v3756 = vadd.f32 %v3372, %v3724
  %v3757 = vadd.f32 %v3373, %v3725
  %v3758 = vadd.f32 %v3374, %v3726
  %v3759 = vadd.f32 %v3375, %v3727
  %v3760 = vadd.f32 %v3376, %v3728
  %v3761 = vadd.f32 %v3377, %v3729
  %v3762 = vadd.f32 %v3378, %v3730
  %v3763 = vadd.f32 %v3379, %v3731
  %v3764 = vadd.f32 %v3380, %v3732
  %v3765 = vld [vmem:[%s113 + $0x10] sm:$0xff]
  %v3766 = vld [vmem:[%s113 + $0x28] sm:$0xff]
  %v3767 = vld [vmem:[%s113 + $0x40] sm:$0xff]
  %v3768 = vld [vmem:[%s113 + $0x58] sm:$0xff]
  %v3769 = vld [vmem:[%s113 + $0x70] sm:$0xff]
  %v3770 = vld [vmem:[%s113 + $0x88] sm:$0xff]
  %v3771 = vld [vmem:[%s113 + $0xa0] sm:$0xff]
  %v3772 = vld [vmem:[%s113 + $0xb8] sm:$0xff]
  %v3773 = vld [vmem:[%s113 + $0xd0] sm:$0xff]
  %v3774 = vld [vmem:[%s113 + $0xe8] sm:$0xff]
  %v3775 = vld [vmem:[%s113 + $0x100] sm:$0xff]
  %v3776 = vld [vmem:[%s113 + $0x118] sm:$0xff]
  %v3777 = vld [vmem:[%s113 + $0x130] sm:$0xff]
  %v3778 = vld [vmem:[%s113 + $0x148] sm:$0xff]
  %v3779 = vld [vmem:[%s113 + $0x160] sm:$0xff]
  %v3780 = vld [vmem:[%s113 + $0x178] sm:$0xff]
  %v3781 = vmul.f32 %v3765, 0.011749691
  %v3782 = vmul.f32 %v3766, 0.011749691
  %v3783 = vmul.f32 %v3767, 0.011749691
  %v3784 = vmul.f32 %v3768, 0.011749691
  %v3785 = vmul.f32 %v3769, 0.011749691
  %v3786 = vmul.f32 %v3770, 0.011749691
  %v3787 = vmul.f32 %v3771, 0.011749691
  %v3788 = vmul.f32 %v3772, 0.011749691
  %v3789 = vmul.f32 %v3773, 0.011749691
  %v3790 = vmul.f32 %v3774, 0.011749691
  %v3791 = vmul.f32 %v3775, 0.011749691
  %v3792 = vmul.f32 %v3776, 0.011749691
  %v3793 = vmul.f32 %v3777, 0.011749691
  %v3794 = vmul.f32 %v3778, 0.011749691
  %v3795 = vmul.f32 %v3779, 0.011749691
  %v3796 = vmul.f32 %v3780, 0.011749691
  %v3797 = vadd.f32 %v3445, %v3030
  %v3798 = vadd.f32 %v3446, %v3781
  %v3799 = vadd.f32 %v3447, %v3032
  %v3800 = vadd.f32 %v3448, %v3782
  %v3801 = vadd.f32 %v3449, %v3034
  %v3802 = vadd.f32 %v3450, %v3783
  %v3803 = vadd.f32 %v3451, %v3036
  %v3804 = vadd.f32 %v3452, %v3784
  %v3805 = vadd.f32 %v3453, %v3038
  %v3806 = vadd.f32 %v3454, %v3785
  %v3807 = vadd.f32 %v3455, %v3040
  %v3808 = vadd.f32 %v3456, %v3786
  %v3809 = vadd.f32 %v3457, %v3042
  %v3810 = vadd.f32 %v3458, %v3787
  %v3811 = vadd.f32 %v3459, %v3044
  %v3812 = vadd.f32 %v3460, %v3788
  %v3813 = vadd.f32 %v3461, %v3046
  %v3814 = vadd.f32 %v3462, %v3789
  %v3815 = vadd.f32 %v3463, %v3048
  %v3816 = vadd.f32 %v3464, %v3790
  %v3817 = vadd.f32 %v3465, %v3050
  %v3818 = vadd.f32 %v3466, %v3791
  %v3819 = vadd.f32 %v3467, %v3052
  %v3820 = vadd.f32 %v3468, %v3792
  %v3821 = vadd.f32 %v3469, %v3054
  %v3822 = vadd.f32 %v3470, %v3793
  %v3823 = vadd.f32 %v3471, %v3056
  %v3824 = vadd.f32 %v3472, %v3794
  %v3825 = vadd.f32 %v3473, %v3058
  %v3826 = vadd.f32 %v3474, %v3795
  %v3827 = vadd.f32 %v3475, %v3060
  %v3828 = vadd.f32 %v3476, %v3796
  %s3829 = scalar_lea.vmem [#allocation2], 120
  %v3830 = vld [vmem:[%s3829] sm:$0xff]
  %v3831 = vld [vmem:[%s3829 + $0x8] sm:$0xff]
  %v3832 = vld [vmem:[%s3829 + $0x18] sm:$0xff]
  %v3833 = vld [vmem:[%s3829 + $0x20] sm:$0xff]
  %v3834 = vld [vmem:[%s3829 + $0x30] sm:$0xff]
  %v3835 = vld [vmem:[%s3829 + $0x38] sm:$0xff]
  %v3836 = vld [vmem:[%s3829 + $0x48] sm:$0xff]
  %v3837 = vld [vmem:[%s3829 + $0x50] sm:$0xff]
  %v3838 = vld [vmem:[%s3829 + $0x60] sm:$0xff]
  %v3839 = vld [vmem:[%s3829 + $0x68] sm:$0xff]
  %v3840 = vld [vmem:[%s3829 + $0x78] sm:$0xff]
  %v3841 = vld [vmem:[%s3829 + $0x80] sm:$0xff]
  %v3842 = vld [vmem:[%s3829 + $0x90] sm:$0xff]
  %v3843 = vld [vmem:[%s3829 + $0x98] sm:$0xff]
  %v3844 = vld [vmem:[%s3829 + $0xa8] sm:$0xff]
  %v3845 = vld [vmem:[%s3829 + $0xb0] sm:$0xff]
  %v3846 = vld [vmem:[%s3829 + $0xc0] sm:$0xff]
  %v3847 = vld [vmem:[%s3829 + $0xc8] sm:$0xff]
  %v3848 = vld [vmem:[%s3829 + $0xd8] sm:$0xff]
  %v3849 = vld [vmem:[%s3829 + $0xe0] sm:$0xff]
  %v3850 = vld [vmem:[%s3829 + $0xf0] sm:$0xff]
  %v3851 = vld [vmem:[%s3829 + $0xf8] sm:$0xff]
  %v3852 = vld [vmem:[%s3829 + $0x108] sm:$0xff]
  %v3853 = vld [vmem:[%s3829 + $0x110] sm:$0xff]
  %v3854 = vld [vmem:[%s3829 + $0x120] sm:$0xff]
  %v3855 = vld [vmem:[%s3829 + $0x128] sm:$0xff]
  %v3856 = vld [vmem:[%s3829 + $0x138] sm:$0xff]
  %v3857 = vld [vmem:[%s3829 + $0x140] sm:$0xff]
  %v3858 = vld [vmem:[%s3829 + $0x150] sm:$0xff]
  %v3859 = vld [vmem:[%s3829 + $0x158] sm:$0xff]
  %v3860 = vld [vmem:[%s3829 + $0x168] sm:$0xff]
  %v3861 = vld [vmem:[%s3829 + $0x170] sm:$0xff]
  %v3862 = vmul.f32 %v3830, 0.020765051
  %v3863 = vmul.f32 %v3831, 0.020765051
  %v3864 = vmul.f32 %v3832, 0.020765051
  %v3865 = vmul.f32 %v3833, 0.020765051
  %v3866 = vmul.f32 %v3834, 0.020765051
  %v3867 = vmul.f32 %v3835, 0.020765051
  %v3868 = vmul.f32 %v3836, 0.020765051
  %v3869 = vmul.f32 %v3837, 0.020765051
  %v3870 = vmul.f32 %v3838, 0.020765051
  %v3871 = vmul.f32 %v3839, 0.020765051
  %v3872 = vmul.f32 %v3840, 0.020765051
  %v3873 = vmul.f32 %v3841, 0.020765051
  %v3874 = vmul.f32 %v3842, 0.020765051
  %v3875 = vmul.f32 %v3843, 0.020765051
  %v3876 = vmul.f32 %v3844, 0.020765051
  %v3877 = vmul.f32 %v3845, 0.020765051
  %v3878 = vmul.f32 %v3846, 0.020765051
  %v3879 = vmul.f32 %v3847, 0.020765051
  %v3880 = vmul.f32 %v3848, 0.020765051
  %v3881 = vmul.f32 %v3849, 0.020765051
  %v3882 = vmul.f32 %v3850, 0.020765051
  %v3883 = vmul.f32 %v3851, 0.020765051
  %v3884 = vmul.f32 %v3852, 0.020765051
  %v3885 = vmul.f32 %v3853, 0.020765051
  %v3886 = vmul.f32 %v3854, 0.020765051
  %v3887 = vmul.f32 %v3855, 0.020765051
  %v3888 = vmul.f32 %v3856, 0.020765051
  %v3889 = vmul.f32 %v3857, 0.020765051
  %v3890 = vmul.f32 %v3858, 0.020765051
  %v3891 = vmul.f32 %v3859, 0.020765051
  %v3892 = vmul.f32 %v3860, 0.020765051
  %v3893 = vmul.f32 %v3861, 0.020765051
  %v3894 = vadd.f32 %v3541, %v3862
  %v3895 = vadd.f32 %v3542, %v3863
  %v3896 = vadd.f32 %v3543, %v3864
  %v3897 = vadd.f32 %v3544, %v3865
  %v3898 = vadd.f32 %v3545, %v3866
  %v3899 = vadd.f32 %v3546, %v3867
  %v3900 = vadd.f32 %v3547, %v3868
  %v3901 = vadd.f32 %v3548, %v3869
  %v3902 = vadd.f32 %v3549, %v3870
  %v3903 = vadd.f32 %v3550, %v3871
  %v3904 = vadd.f32 %v3551, %v3872
  %v3905 = vadd.f32 %v3552, %v3873
  %v3906 = vadd.f32 %v3553, %v3874
  %v3907 = vadd.f32 %v3554, %v3875
  %v3908 = vadd.f32 %v3555, %v3876
  %v3909 = vadd.f32 %v3556, %v3877
  %v3910 = vadd.f32 %v3557, %v3878
  %v3911 = vadd.f32 %v3558, %v3879
  %v3912 = vadd.f32 %v3559, %v3880
  %v3913 = vadd.f32 %v3560, %v3881
  %v3914 = vadd.f32 %v3561, %v3882
  %v3915 = vadd.f32 %v3562, %v3883
  %v3916 = vadd.f32 %v3563, %v3884
  %v3917 = vadd.f32 %v3564, %v3885
  %v3918 = vadd.f32 %v3565, %v3886
  %v3919 = vadd.f32 %v3566, %v3887
  %v3920 = vadd.f32 %v3567, %v3888
  %v3921 = vadd.f32 %v3568, %v3889
  %v3922 = vadd.f32 %v3569, %v3890
  %v3923 = vadd.f32 %v3570, %v3891
  %v3924 = vadd.f32 %v3571, %v3892
  %v3925 = vadd.f32 %v3572, %v3893
  %v3926 = vld [vmem:[%s3829 + $0x1] sm:$0xff]
  %v3927 = vld [vmem:[%s3829 + $0x9] sm:$0xff]
  %v3928 = vld [vmem:[%s3829 + $0x19] sm:$0xff]
  %v3929 = vld [vmem:[%s3829 + $0x21] sm:$0xff]
  %v3930 = vld [vmem:[%s3829 + $0x31] sm:$0xff]
  %v3931 = vld [vmem:[%s3829 + $0x39] sm:$0xff]
  %v3932 = vld [vmem:[%s3829 + $0x49] sm:$0xff]
  %v3933 = vld [vmem:[%s3829 + $0x51] sm:$0xff]
  %v3934 = vld [vmem:[%s3829 + $0x61] sm:$0xff]
  %v3935 = vld [vmem:[%s3829 + $0x69] sm:$0xff]
  %v3936 = vld [vmem:[%s3829 + $0x79] sm:$0xff]
  %v3937 = vld [vmem:[%s3829 + $0x81] sm:$0xff]
  %v3938 = vld [vmem:[%s3829 + $0x91] sm:$0xff]
  %v3939 = vld [vmem:[%s3829 + $0x99] sm:$0xff]
  %v3940 = vld [vmem:[%s3829 + $0xa9] sm:$0xff]
  %v3941 = vld [vmem:[%s3829 + $0xb1] sm:$0xff]
  %v3942 = vld [vmem:[%s3829 + $0xc1] sm:$0xff]
  %v3943 = vld [vmem:[%s3829 + $0xc9] sm:$0xff]
  %v3944 = vld [vmem:[%s3829 + $0xd9] sm:$0xff]
  %v3945 = vld [vmem:[%s3829 + $0xe1] sm:$0xff]
  %v3946 = vld [vmem:[%s3829 + $0xf1] sm:$0xff]
  %v3947 = vld [vmem:[%s3829 + $0xf9] sm:$0xff]
  %v3948 = vld [vmem:[%s3829 + $0x109] sm:$0xff]
  %v3949 = vld [vmem:[%s3829 + $0x111] sm:$0xff]
  %v3950 = vld [vmem:[%s3829 + $0x121] sm:$0xff]
  %v3951 = vld [vmem:[%s3829 + $0x129] sm:$0xff]
  %v3952 = vld [vmem:[%s3829 + $0x139] sm:$0xff]
  %v3953 = vld [vmem:[%s3829 + $0x141] sm:$0xff]
  %v3954 = vld [vmem:[%s3829 + $0x151] sm:$0xff]
  %v3955 = vld [vmem:[%s3829 + $0x159] sm:$0xff]
  %v3956 = vld [vmem:[%s3829 + $0x169] sm:$0xff]
  %v3957 = vld [vmem:[%s3829 + $0x171] sm:$0xff]
  %v3958 = vmul.f32 %v3926, 0.022885272
  %v3959 = vmul.f32 %v3927, 0.022885272
  %v3960 = vmul.f32 %v3928, 0.022885272
  %v3961 = vmul.f32 %v3929, 0.022885272
  %v3962 = vmul.f32 %v3930, 0.022885272
  %v3963 = vmul.f32 %v3931, 0.022885272
  %v3964 = vmul.f32 %v3932, 0.022885272
  %v3965 = vmul.f32 %v3933, 0.022885272
  %v3966 = vmul.f32 %v3934, 0.022885272
  %v3967 = vmul.f32 %v3935, 0.022885272
  %v3968 = vmul.f32 %v3936, 0.022885272
  %v3969 = vmul.f32 %v3937, 0.022885272
  %v3970 = vmul.f32 %v3938, 0.022885272
  %v3971 = vmul.f32 %v3939, 0.022885272
  %v3972 = vmul.f32 %v3940, 0.022885272
  %v3973 = vmul.f32 %v3941, 0.022885272
  %v3974 = vmul.f32 %v3942, 0.022885272
  %v3975 = vmul.f32 %v3943, 0.022885272
  %v3976 = vmul.f32 %v3944, 0.022885272
  %v3977 = vmul.f32 %v3945, 0.022885272
  %v3978 = vmul.f32 %v3946, 0.022885272
  %v3979 = vmul.f32 %v3947, 0.022885272
  %v3980 = vmul.f32 %v3948, 0.022885272
  %v3981 = vmul.f32 %v3949, 0.022885272
  %v3982 = vmul.f32 %v3950, 0.022885272
  %v3983 = vmul.f32 %v3951, 0.022885272
  %v3984 = vmul.f32 %v3952, 0.022885272
  %v3985 = vmul.f32 %v3953, 0.022885272
  %v3986 = vmul.f32 %v3954, 0.022885272
  %v3987 = vmul.f32 %v3955, 0.022885272
  %v3988 = vmul.f32 %v3956, 0.022885272
  %v3989 = vmul.f32 %v3957, 0.022885272
  %v3990 = vadd.f32 %v3637, %v3958
  %v3991 = vadd.f32 %v3638, %v3959
  %v3992 = vadd.f32 %v3639, %v3960
  %v3993 = vadd.f32 %v3640, %v3961
  %v3994 = vadd.f32 %v3641, %v3962
  %v3995 = vadd.f32 %v3642, %v3963
  %v3996 = vadd.f32 %v3643, %v3964
  %v3997 = vadd.f32 %v3644, %v3965
  %v3998 = vadd.f32 %v3645, %v3966
  %v3999 = vadd.f32 %v3646, %v3967
  %v4000 = vadd.f32 %v3647, %v3968
  %v4001 = vadd.f32 %v3648, %v3969
  %v4002 = vadd.f32 %v3649, %v3970
  %v4003 = vadd.f32 %v3650, %v3971
  %v4004 = vadd.f32 %v3651, %v3972
  %v4005 = vadd.f32 %v3652, %v3973
  %v4006 = vadd.f32 %v3653, %v3974
  %v4007 = vadd.f32 %v3654, %v3975
  %v4008 = vadd.f32 %v3655, %v3976
  %v4009 = vadd.f32 %v3656, %v3977
  %v4010 = vadd.f32 %v3657, %v3978
  %v4011 = vadd.f32 %v3658, %v3979
  %v4012 = vadd.f32 %v3659, %v3980
  %v4013 = vadd.f32 %v3660, %v3981
  %v4014 = vadd.f32 %v3661, %v3982
  %v4015 = vadd.f32 %v3662, %v3983
  %v4016 = vadd.f32 %v3663, %v3984
  %v4017 = vadd.f32 %v3664, %v3985
  %v4018 = vadd.f32 %v3665, %v3986
  %v4019 = vadd.f32 %v3666, %v3987
  %v4020 = vadd.f32 %v3667, %v3988
  %v4021 = vadd.f32 %v3668, %v3989
  %v4022 = vld [vmem:[%s3829 + $0x2] sm:$0xff]
  %v4023 = vld [vmem:[%s3829 + $0xa] sm:$0xff]
  %v4024 = vld [vmem:[%s3829 + $0x1a] sm:$0xff]
  %v4025 = vld [vmem:[%s3829 + $0x22] sm:$0xff]
  %v4026 = vld [vmem:[%s3829 + $0x32] sm:$0xff]
  %v4027 = vld [vmem:[%s3829 + $0x3a] sm:$0xff]
  %v4028 = vld [vmem:[%s3829 + $0x4a] sm:$0xff]
  %v4029 = vld [vmem:[%s3829 + $0x52] sm:$0xff]
  %v4030 = vld [vmem:[%s3829 + $0x62] sm:$0xff]
  %v4031 = vld [vmem:[%s3829 + $0x6a] sm:$0xff]
  %v4032 = vld [vmem:[%s3829 + $0x7a] sm:$0xff]
  %v4033 = vld [vmem:[%s3829 + $0x82] sm:$0xff]
  %v4034 = vld [vmem:[%s3829 + $0x92] sm:$0xff]
  %v4035 = vld [vmem:[%s3829 + $0x9a] sm:$0xff]
  %v4036 = vld [vmem:[%s3829 + $0xaa] sm:$0xff]
  %v4037 = vld [vmem:[%s3829 + $0xb2] sm:$0xff]
  %v4038 = vld [vmem:[%s3829 + $0xc2] sm:$0xff]
  %v4039 = vld [vmem:[%s3829 + $0xca] sm:$0xff]
  %v4040 = vld [vmem:[%s3829 + $0xda] sm:$0xff]
  %v4041 = vld [vmem:[%s3829 + $0xe2] sm:$0xff]
  %v4042 = vld [vmem:[%s3829 + $0xf2] sm:$0xff]
  %v4043 = vld [vmem:[%s3829 + $0xfa] sm:$0xff]
  %v4044 = vld [vmem:[%s3829 + $0x10a] sm:$0xff]
  %v4045 = vld [vmem:[%s3829 + $0x112] sm:$0xff]
  %v4046 = vld [vmem:[%s3829 + $0x122] sm:$0xff]
  %v4047 = vld [vmem:[%s3829 + $0x12a] sm:$0xff]
  %v4048 = vld [vmem:[%s3829 + $0x13a] sm:$0xff]
  %v4049 = vld [vmem:[%s3829 + $0x142] sm:$0xff]
  %v4050 = vld [vmem:[%s3829 + $0x152] sm:$0xff]
  %v4051 = vld [vmem:[%s3829 + $0x15a] sm:$0xff]
  %v4052 = vld [vmem:[%s3829 + $0x16a] sm:$0xff]
  %v4053 = vld [vmem:[%s3829 + $0x172] sm:$0xff]
  %v4054 = vmul.f32 %v4022, 0.030635525
  %v4055 = vmul.f32 %v4023, 0.030635525
  %v4056 = vmul.f32 %v4024, 0.030635525
  %v4057 = vmul.f32 %v4025, 0.030635525
  %v4058 = vmul.f32 %v4026, 0.030635525
  %v4059 = vmul.f32 %v4027, 0.030635525
  %v4060 = vmul.f32 %v4028, 0.030635525
  %v4061 = vmul.f32 %v4029, 0.030635525
  %v4062 = vmul.f32 %v4030, 0.030635525
  %v4063 = vmul.f32 %v4031, 0.030635525
  %v4064 = vmul.f32 %v4032, 0.030635525
  %v4065 = vmul.f32 %v4033, 0.030635525
  %v4066 = vmul.f32 %v4034, 0.030635525
  %v4067 = vmul.f32 %v4035, 0.030635525
  %v4068 = vmul.f32 %v4036, 0.030635525
  %v4069 = vmul.f32 %v4037, 0.030635525
  %v4070 = vmul.f32 %v4038, 0.030635525
  %v4071 = vmul.f32 %v4039, 0.030635525
  %v4072 = vmul.f32 %v4040, 0.030635525
  %v4073 = vmul.f32 %v4041, 0.030635525
  %v4074 = vmul.f32 %v4042, 0.030635525
  %v4075 = vmul.f32 %v4043, 0.030635525
  %v4076 = vmul.f32 %v4044, 0.030635525
  %v4077 = vmul.f32 %v4045, 0.030635525
  %v4078 = vmul.f32 %v4046, 0.030635525
  %v4079 = vmul.f32 %v4047, 0.030635525
  %v4080 = vmul.f32 %v4048, 0.030635525
  %v4081 = vmul.f32 %v4049, 0.030635525
  %v4082 = vmul.f32 %v4050, 0.030635525
  %v4083 = vmul.f32 %v4051, 0.030635525
  %v4084 = vmul.f32 %v4052, 0.030635525
  %v4085 = vmul.f32 %v4053, 0.030635525
  %v4086 = vadd.f32 %v3733, %v4054
  %v4087 = vadd.f32 %v3734, %v4055
  %v4088 = vadd.f32 %v3735, %v4056
  %v4089 = vadd.f32 %v3736, %v4057
  %v4090 = vadd.f32 %v3737, %v4058
  %v4091 = vadd.f32 %v3738, %v4059
  %v4092 = vadd.f32 %v3739, %v4060
  %v4093 = vadd.f32 %v3740, %v4061
  %v4094 = vadd.f32 %v3741, %v4062
  %v4095 = vadd.f32 %v3742, %v4063
  %v4096 = vadd.f32 %v3743, %v4064
  %v4097 = vadd.f32 %v3744, %v4065
  %v4098 = vadd.f32 %v3745, %v4066
  %v4099 = vadd.f32 %v3746, %v4067
  %v4100 = vadd.f32 %v3747, %v4068
  %v4101 = vadd.f32 %v3748, %v4069
  %v4102 = vadd.f32 %v3749, %v4070
  %v4103 = vadd.f32 %v3750, %v4071
  %v4104 = vadd.f32 %v3751, %v4072
  %v4105 = vadd.f32 %v3752, %v4073
  %v4106 = vadd.f32 %v3753, %v4074
  %v4107 = vadd.f32 %v3754, %v4075
  %v4108 = vadd.f32 %v3755, %v4076
  %v4109 = vadd.f32 %v3756, %v4077
  %v4110 = vadd.f32 %v3757, %v4078
  %v4111 = vadd.f32 %v3758, %v4079
  %v4112 = vadd.f32 %v3759, %v4080
  %v4113 = vadd.f32 %v3760, %v4081
  %v4114 = vadd.f32 %v3761, %v4082
  %v4115 = vadd.f32 %v3762, %v4083
  %v4116 = vadd.f32 %v3763, %v4084
  %v4117 = vadd.f32 %v3764, %v4085
  %v4118 = vld [vmem:[%s3829 + $0x3] sm:$0xff]
  %v4119 = vld [vmem:[%s3829 + $0xb] sm:$0xff]
  %v4120 = vld [vmem:[%s3829 + $0x1b] sm:$0xff]
  %v4121 = vld [vmem:[%s3829 + $0x23] sm:$0xff]
  %v4122 = vld [vmem:[%s3829 + $0x33] sm:$0xff]
  %v4123 = vld [vmem:[%s3829 + $0x3b] sm:$0xff]
  %v4124 = vld [vmem:[%s3829 + $0x4b] sm:$0xff]
  %v4125 = vld [vmem:[%s3829 + $0x53] sm:$0xff]
  %v4126 = vld [vmem:[%s3829 + $0x63] sm:$0xff]
  %v4127 = vld [vmem:[%s3829 + $0x6b] sm:$0xff]
  %v4128 = vld [vmem:[%s3829 + $0x7b] sm:$0xff]
  %v4129 = vld [vmem:[%s3829 + $0x83] sm:$0xff]
  %v4130 = vld [vmem:[%s3829 + $0x93] sm:$0xff]
  %v4131 = vld [vmem:[%s3829 + $0x9b] sm:$0xff]
  %v4132 = vld [vmem:[%s3829 + $0xab] sm:$0xff]
  %v4133 = vld [vmem:[%s3829 + $0xb3] sm:$0xff]
  %v4134 = vld [vmem:[%s3829 + $0xc3] sm:$0xff]
  %v4135 = vld [vmem:[%s3829 + $0xcb] sm:$0xff]
  %v4136 = vld [vmem:[%s3829 + $0xdb] sm:$0xff]
  %v4137 = vld [vmem:[%s3829 + $0xe3] sm:$0xff]
  %v4138 = vld [vmem:[%s3829 + $0xf3] sm:$0xff]
  %v4139 = vld [vmem:[%s3829 + $0xfb] sm:$0xff]
  %v4140 = vld [vmem:[%s3829 + $0x10b] sm:$0xff]
  %v4141 = vld [vmem:[%s3829 + $0x113] sm:$0xff]
  %v4142 = vld [vmem:[%s3829 + $0x123] sm:$0xff]
  %v4143 = vld [vmem:[%s3829 + $0x12b] sm:$0xff]
  %v4144 = vld [vmem:[%s3829 + $0x13b] sm:$0xff]
  %v4145 = vld [vmem:[%s3829 + $0x143] sm:$0xff]
  %v4146 = vld [vmem:[%s3829 + $0x153] sm:$0xff]
  %v4147 = vld [vmem:[%s3829 + $0x15b] sm:$0xff]
  %v4148 = vld [vmem:[%s3829 + $0x16b] sm:$0xff]
  %v4149 = vld [vmem:[%s3829 + $0x173] sm:$0xff]
  %v4150 = vmul.f32 %v4118, 0.03193897
  %v4151 = vmul.f32 %v4119, 0.03193897
  %v4152 = vmul.f32 %v4120, 0.03193897
  %v4153 = vmul.f32 %v4121, 0.03193897
  %v4154 = vmul.f32 %v4122, 0.03193897
  %v4155 = vmul.f32 %v4123, 0.03193897
  %v4156 = vmul.f32 %v4124, 0.03193897
  %v4157 = vmul.f32 %v4125, 0.03193897
  %v4158 = vmul.f32 %v4126, 0.03193897
  %v4159 = vmul.f32 %v4127, 0.03193897
  %v4160 = vmul.f32 %v4128, 0.03193897
  %v4161 = vmul.f32 %v4129, 0.03193897
  %v4162 = vmul.f32 %v4130, 0.03193897
  %v4163 = vmul.f32 %v4131, 0.03193897
  %v4164 = vmul.f32 %v4132, 0.03193897
  %v4165 = vmul.f32 %v4133, 0.03193897
  %v4166 = vmul.f32 %v4134, 0.03193897
  %v4167 = vmul.f32 %v4135, 0.03193897
  %v4168 = vmul.f32 %v4136, 0.03193897
  %v4169 = vmul.f32 %v4137, 0.03193897
  %v4170 = vmul.f32 %v4138, 0.03193897
  %v4171 = vmul.f32 %v4139, 0.03193897
  %v4172 = vmul.f32 %v4140, 0.03193897
  %v4173 = vmul.f32 %v4141, 0.03193897
  %v4174 = vmul.f32 %v4142, 0.03193897
  %v4175 = vmul.f32 %v4143, 0.03193897
  %v4176 = vmul.f32 %v4144, 0.03193897
  %v4177 = vmul.f32 %v4145, 0.03193897
  %v4178 = vmul.f32 %v4146, 0.03193897
  %v4179 = vmul.f32 %v4147, 0.03193897
  %v4180 = vmul.f32 %v4148, 0.03193897
  %v4181 = vmul.f32 %v4149, 0.03193897
  %v4182 = vadd.f32 %v3797, %v4150
  %v4183 = vadd.f32 %v3798, %v4151
  %v4184 = vadd.f32 %v3799, %v4152
  %v4185 = vadd.f32 %v3800, %v4153
  %v4186 = vadd.f32 %v3801, %v4154
  %v4187 = vadd.f32 %v3802, %v4155
  %v4188 = vadd.f32 %v3803, %v4156
  %v4189 = vadd.f32 %v3804, %v4157
  %v4190 = vadd.f32 %v3805, %v4158
  %v4191 = vadd.f32 %v3806, %v4159
  %v4192 = vadd.f32 %v3807, %v4160
  %v4193 = vadd.f32 %v3808, %v4161
  %v4194 = vadd.f32 %v3809, %v4162
  %v4195 = vadd.f32 %v3810, %v4163
  %v4196 = vadd.f32 %v3811, %v4164
  %v4197 = vadd.f32 %v3812, %v4165
  %v4198 = vadd.f32 %v3813, %v4166
  %v4199 = vadd.f32 %v3814, %v4167
  %v4200 = vadd.f32 %v3815, %v4168
  %v4201 = vadd.f32 %v3816, %v4169
  %v4202 = vadd.f32 %v3817, %v4170
  %v4203 = vadd.f32 %v3818, %v4171
  %v4204 = vadd.f32 %v3819, %v4172
  %v4205 = vadd.f32 %v3820, %v4173
  %v4206 = vadd.f32 %v3821, %v4174
  %v4207 = vadd.f32 %v3822, %v4175
  %v4208 = vadd.f32 %v3823, %v4176
  %v4209 = vadd.f32 %v3824, %v4177
  %v4210 = vadd.f32 %v3825, %v4178
  %v4211 = vadd.f32 %v3826, %v4179
  %v4212 = vadd.f32 %v3827, %v4180
  %v4213 = vadd.f32 %v3828, %v4181
  %v4214 = vld [vmem:[%s3829 + $0x4] sm:$0xff]
  %v4215 = vld [vmem:[%s3829 + $0xc] sm:$0xff]
  %v4216 = vld [vmem:[%s3829 + $0x1c] sm:$0xff]
  %v4217 = vld [vmem:[%s3829 + $0x24] sm:$0xff]
  %v4218 = vld [vmem:[%s3829 + $0x34] sm:$0xff]
  %v4219 = vld [vmem:[%s3829 + $0x3c] sm:$0xff]
  %v4220 = vld [vmem:[%s3829 + $0x4c] sm:$0xff]
  %v4221 = vld [vmem:[%s3829 + $0x54] sm:$0xff]
  %v4222 = vld [vmem:[%s3829 + $0x64] sm:$0xff]
  %v4223 = vld [vmem:[%s3829 + $0x6c] sm:$0xff]
  %v4224 = vld [vmem:[%s3829 + $0x7c] sm:$0xff]
  %v4225 = vld [vmem:[%s3829 + $0x84] sm:$0xff]
  %v4226 = vld [vmem:[%s3829 + $0x94] sm:$0xff]
  %v4227 = vld [vmem:[%s3829 + $0x9c] sm:$0xff]
  %v4228 = vld [vmem:[%s3829 + $0xac] sm:$0xff]
  %v4229 = vld [vmem:[%s3829 + $0xb4] sm:$0xff]
  %v4230 = vld [vmem:[%s3829 + $0xc4] sm:$0xff]
  %v4231 = vld [vmem:[%s3829 + $0xcc] sm:$0xff]
  %v4232 = vld [vmem:[%s3829 + $0xdc] sm:$0xff]
  %v4233 = vld [vmem:[%s3829 + $0xe4] sm:$0xff]
  %v4234 = vld [vmem:[%s3829 + $0xf4] sm:$0xff]
  %v4235 = vld [vmem:[%s3829 + $0xfc] sm:$0xff]
  %v4236 = vld [vmem:[%s3829 + $0x10c] sm:$0xff]
  %v4237 = vld [vmem:[%s3829 + $0x114] sm:$0xff]
  %v4238 = vld [vmem:[%s3829 + $0x124] sm:$0xff]
  %v4239 = vld [vmem:[%s3829 + $0x12c] sm:$0xff]
  %v4240 = vld [vmem:[%s3829 + $0x13c] sm:$0xff]
  %v4241 = vld [vmem:[%s3829 + $0x144] sm:$0xff]
  %v4242 = vld [vmem:[%s3829 + $0x154] sm:$0xff]
  %v4243 = vld [vmem:[%s3829 + $0x15c] sm:$0xff]
  %v4244 = vld [vmem:[%s3829 + $0x16c] sm:$0xff]
  %v4245 = vld [vmem:[%s3829 + $0x174] sm:$0xff]
  %v4246 = vmul.f32 %v4214, 0.025932413
  %v4247 = vmul.f32 %v4215, 0.025932413
  %v4248 = vmul.f32 %v4216, 0.025932413
  %v4249 = vmul.f32 %v4217, 0.025932413
  %v4250 = vmul.f32 %v4218, 0.025932413
  %v4251 = vmul.f32 %v4219, 0.025932413
  %v4252 = vmul.f32 %v4220, 0.025932413
  %v4253 = vmul.f32 %v4221, 0.025932413
  %v4254 = vmul.f32 %v4222, 0.025932413
  %v4255 = vmul.f32 %v4223, 0.025932413
  %v4256 = vmul.f32 %v4224, 0.025932413
  %v4257 = vmul.f32 %v4225, 0.025932413
  %v4258 = vmul.f32 %v4226, 0.025932413
  %v4259 = vmul.f32 %v4227, 0.025932413
  %v4260 = vmul.f32 %v4228, 0.025932413
  %v4261 = vmul.f32 %v4229, 0.025932413
  %v4262 = vmul.f32 %v4230, 0.025932413
  %v4263 = vmul.f32 %v4231, 0.025932413
  %v4264 = vmul.f32 %v4232, 0.025932413
  %v4265 = vmul.f32 %v4233, 0.025932413
  %v4266 = vmul.f32 %v4234, 0.025932413
  %v4267 = vmul.f32 %v4235, 0.025932413
  %v4268 = vmul.f32 %v4236, 0.025932413
  %v4269 = vmul.f32 %v4237, 0.025932413
  %v4270 = vmul.f32 %v4238, 0.025932413
  %v4271 = vmul.f32 %v4239, 0.025932413
  %v4272 = vmul.f32 %v4240, 0.025932413
  %v4273 = vmul.f32 %v4241, 0.025932413
  %v4274 = vmul.f32 %v4242, 0.025932413
  %v4275 = vmul.f32 %v4243, 0.025932413
  %v4276 = vmul.f32 %v4244, 0.025932413
  %v4277 = vmul.f32 %v4245, 0.025932413
  %v4278 = vadd.f32 %v3894, %v4246
  %v4279 = vadd.f32 %v3895, %v4247
  %v4280 = vadd.f32 %v3896, %v4248
  %v4281 = vadd.f32 %v3897, %v4249
  %v4282 = vadd.f32 %v3898, %v4250
  %v4283 = vadd.f32 %v3899, %v4251
  %v4284 = vadd.f32 %v3900, %v4252
  %v4285 = vadd.f32 %v3901, %v4253
  %v4286 = vadd.f32 %v3902, %v4254
  %v4287 = vadd.f32 %v3903, %v4255
  %v4288 = vadd.f32 %v3904, %v4256
  %v4289 = vadd.f32 %v3905, %v4257
  %v4290 = vadd.f32 %v3906, %v4258
  %v4291 = vadd.f32 %v3907, %v4259
  %v4292 = vadd.f32 %v3908, %v4260
  %v4293 = vadd.f32 %v3909, %v4261
  %v4294 = vadd.f32 %v3910, %v4262
  %v4295 = vadd.f32 %v3911, %v4263
  %v4296 = vadd.f32 %v3912, %v4264
  %v4297 = vadd.f32 %v3913, %v4265
  %v4298 = vadd.f32 %v3914, %v4266
  %v4299 = vadd.f32 %v3915, %v4267
  %v4300 = vadd.f32 %v3916, %v4268
  %v4301 = vadd.f32 %v3917, %v4269
  %v4302 = vadd.f32 %v3918, %v4270
  %v4303 = vadd.f32 %v3919, %v4271
  %v4304 = vadd.f32 %v3920, %v4272
  %v4305 = vadd.f32 %v3921, %v4273
  %v4306 = vadd.f32 %v3922, %v4274
  %v4307 = vadd.f32 %v3923, %v4275
  %v4308 = vadd.f32 %v3924, %v4276
  %v4309 = vadd.f32 %v3925, %v4277
  %v4310 = vld [vmem:[%s3829 + $0x5] sm:$0xff]
  %v4311 = vld [vmem:[%s3829 + $0xd] sm:$0xff]
  %v4312 = vld [vmem:[%s3829 + $0x1d] sm:$0xff]
  %v4313 = vld [vmem:[%s3829 + $0x25] sm:$0xff]
  %v4314 = vld [vmem:[%s3829 + $0x35] sm:$0xff]
  %v4315 = vld [vmem:[%s3829 + $0x3d] sm:$0xff]
  %v4316 = vld [vmem:[%s3829 + $0x4d] sm:$0xff]
  %v4317 = vld [vmem:[%s3829 + $0x55] sm:$0xff]
  %v4318 = vld [vmem:[%s3829 + $0x65] sm:$0xff]
  %v4319 = vld [vmem:[%s3829 + $0x6d] sm:$0xff]
  %v4320 = vld [vmem:[%s3829 + $0x7d] sm:$0xff]
  %v4321 = vld [vmem:[%s3829 + $0x85] sm:$0xff]
  %v4322 = vld [vmem:[%s3829 + $0x95] sm:$0xff]
  %v4323 = vld [vmem:[%s3829 + $0x9d] sm:$0xff]
  %v4324 = vld [vmem:[%s3829 + $0xad] sm:$0xff]
  %v4325 = vld [vmem:[%s3829 + $0xb5] sm:$0xff]
  %v4326 = vld [vmem:[%s3829 + $0xc5] sm:$0xff]
  %v4327 = vld [vmem:[%s3829 + $0xcd] sm:$0xff]
  %v4328 = vld [vmem:[%s3829 + $0xdd] sm:$0xff]
  %v4329 = vld [vmem:[%s3829 + $0xe5] sm:$0xff]
  %v4330 = vld [vmem:[%s3829 + $0xf5] sm:$0xff]
  %v4331 = vld [vmem:[%s3829 + $0xfd] sm:$0xff]
  %v4332 = vld [vmem:[%s3829 + $0x10d] sm:$0xff]
  %v4333 = vld [vmem:[%s3829 + $0x115] sm:$0xff]
  %v4334 = vld [vmem:[%s3829 + $0x125] sm:$0xff]
  %v4335 = vld [vmem:[%s3829 + $0x12d] sm:$0xff]
  %v4336 = vld [vmem:[%s3829 + $0x13d] sm:$0xff]
  %v4337 = vld [vmem:[%s3829 + $0x145] sm:$0xff]
  %v4338 = vld [vmem:[%s3829 + $0x155] sm:$0xff]
  %v4339 = vld [vmem:[%s3829 + $0x15d] sm:$0xff]
  %v4340 = vld [vmem:[%s3829 + $0x16d] sm:$0xff]
  %v4341 = vld [vmem:[%s3829 + $0x175] sm:$0xff]
  %v4342 = vmul.f32 %v4310, 0.025932413
  %v4343 = vmul.f32 %v4311, 0.025932413
  %v4344 = vmul.f32 %v4312, 0.025932413
  %v4345 = vmul.f32 %v4313, 0.025932413
  %v4346 = vmul.f32 %v4314, 0.025932413
  %v4347 = vmul.f32 %v4315, 0.025932413
  %v4348 = vmul.f32 %v4316, 0.025932413
  %v4349 = vmul.f32 %v4317, 0.025932413
  %v4350 = vmul.f32 %v4318, 0.025932413
  %v4351 = vmul.f32 %v4319, 0.025932413
  %v4352 = vmul.f32 %v4320, 0.025932413
  %v4353 = vmul.f32 %v4321, 0.025932413
  %v4354 = vmul.f32 %v4322, 0.025932413
  %v4355 = vmul.f32 %v4323, 0.025932413
  %v4356 = vmul.f32 %v4324, 0.025932413
  %v4357 = vmul.f32 %v4325, 0.025932413
  %v4358 = vmul.f32 %v4326, 0.025932413
  %v4359 = vmul.f32 %v4327, 0.025932413
  %v4360 = vmul.f32 %v4328, 0.025932413
  %v4361 = vmul.f32 %v4329, 0.025932413
  %v4362 = vmul.f32 %v4330, 0.025932413
  %v4363 = vmul.f32 %v4331, 0.025932413
  %v4364 = vmul.f32 %v4332, 0.025932413
  %v4365 = vmul.f32 %v4333, 0.025932413
  %v4366 = vmul.f32 %v4334, 0.025932413
  %v4367 = vmul.f32 %v4335, 0.025932413
  %v4368 = vmul.f32 %v4336, 0.025932413
  %v4369 = vmul.f32 %v4337, 0.025932413
  %v4370 = vmul.f32 %v4338, 0.025932413
  %v4371 = vmul.f32 %v4339, 0.025932413
  %v4372 = vmul.f32 %v4340, 0.025932413
  %v4373 = vmul.f32 %v4341, 0.025932413
  %v4374 = vadd.f32 %v3990, %v4342
  %v4375 = vadd.f32 %v3991, %v4343
  %v4376 = vadd.f32 %v3992, %v4344
  %v4377 = vadd.f32 %v3993, %v4345
  %v4378 = vadd.f32 %v3994, %v4346
  %v4379 = vadd.f32 %v3995, %v4347
  %v4380 = vadd.f32 %v3996, %v4348
  %v4381 = vadd.f32 %v3997, %v4349
  %v4382 = vadd.f32 %v3998, %v4350
  %v4383 = vadd.f32 %v3999, %v4351
  %v4384 = vadd.f32 %v4000, %v4352
  %v4385 = vadd.f32 %v4001, %v4353
  %v4386 = vadd.f32 %v4002, %v4354
  %v4387 = vadd.f32 %v4003, %v4355
  %v4388 = vadd.f32 %v4004, %v4356
  %v4389 = vadd.f32 %v4005, %v4357
  %v4390 = vadd.f32 %v4006, %v4358
  %v4391 = vadd.f32 %v4007, %v4359
  %v4392 = vadd.f32 %v4008, %v4360
  %v4393 = vadd.f32 %v4009, %v4361
  %v4394 = vadd.f32 %v4010, %v4362
  %v4395 = vadd.f32 %v4011, %v4363
  %v4396 = vadd.f32 %v4012, %v4364
  %v4397 = vadd.f32 %v4013, %v4365
  %v4398 = vadd.f32 %v4014, %v4366
  %v4399 = vadd.f32 %v4015, %v4367
  %v4400 = vadd.f32 %v4016, %v4368
  %v4401 = vadd.f32 %v4017, %v4369
  %v4402 = vadd.f32 %v4018, %v4370
  %v4403 = vadd.f32 %v4019, %v4371
  %v4404 = vadd.f32 %v4020, %v4372
  %v4405 = vadd.f32 %v4021, %v4373
  %v4406 = vld [vmem:[%s3829 + $0x6] sm:$0xff]
  %v4407 = vld [vmem:[%s3829 + $0xe] sm:$0xff]
  %v4408 = vld [vmem:[%s3829 + $0x1e] sm:$0xff]
  %v4409 = vld [vmem:[%s3829 + $0x26] sm:$0xff]
  %v4410 = vld [vmem:[%s3829 + $0x36] sm:$0xff]
  %v4411 = vld [vmem:[%s3829 + $0x3e] sm:$0xff]
  %v4412 = vld [vmem:[%s3829 + $0x4e] sm:$0xff]
  %v4413 = vld [vmem:[%s3829 + $0x56] sm:$0xff]
  %v4414 = vld [vmem:[%s3829 + $0x66] sm:$0xff]
  %v4415 = vld [vmem:[%s3829 + $0x6e] sm:$0xff]
  %v4416 = vld [vmem:[%s3829 + $0x7e] sm:$0xff]
  %v4417 = vld [vmem:[%s3829 + $0x86] sm:$0xff]
  %v4418 = vld [vmem:[%s3829 + $0x96] sm:$0xff]
  %v4419 = vld [vmem:[%s3829 + $0x9e] sm:$0xff]
  %v4420 = vld [vmem:[%s3829 + $0xae] sm:$0xff]
  %v4421 = vld [vmem:[%s3829 + $0xb6] sm:$0xff]
  %v4422 = vld [vmem:[%s3829 + $0xc6] sm:$0xff]
  %v4423 = vld [vmem:[%s3829 + $0xce] sm:$0xff]
  %v4424 = vld [vmem:[%s3829 + $0xde] sm:$0xff]
  %v4425 = vld [vmem:[%s3829 + $0xe6] sm:$0xff]
  %v4426 = vld [vmem:[%s3829 + $0xf6] sm:$0xff]
  %v4427 = vld [vmem:[%s3829 + $0xfe] sm:$0xff]
  %v4428 = vld [vmem:[%s3829 + $0x10e] sm:$0xff]
  %v4429 = vld [vmem:[%s3829 + $0x116] sm:$0xff]
  %v4430 = vld [vmem:[%s3829 + $0x126] sm:$0xff]
  %v4431 = vld [vmem:[%s3829 + $0x12e] sm:$0xff]
  %v4432 = vld [vmem:[%s3829 + $0x13e] sm:$0xff]
  %v4433 = vld [vmem:[%s3829 + $0x146] sm:$0xff]
  %v4434 = vld [vmem:[%s3829 + $0x156] sm:$0xff]
  %v4435 = vld [vmem:[%s3829 + $0x15e] sm:$0xff]
  %v4436 = vld [vmem:[%s3829 + $0x16e] sm:$0xff]
  %v4437 = vld [vmem:[%s3829 + $0x176] sm:$0xff]
  %v4438 = vmul.f32 %v4406, 0.013130504
  %v4439 = vmul.f32 %v4407, 0.013130504
  %v4440 = vmul.f32 %v4408, 0.013130504
  %v4441 = vmul.f32 %v4409, 0.013130504
  %v4442 = vmul.f32 %v4410, 0.013130504
  %v4443 = vmul.f32 %v4411, 0.013130504
  %v4444 = vmul.f32 %v4412, 0.013130504
  %v4445 = vmul.f32 %v4413, 0.013130504
  %v4446 = vmul.f32 %v4414, 0.013130504
  %v4447 = vmul.f32 %v4415, 0.013130504
  %v4448 = vmul.f32 %v4416, 0.013130504
  %v4449 = vmul.f32 %v4417, 0.013130504
  %v4450 = vmul.f32 %v4418, 0.013130504
  %v4451 = vmul.f32 %v4419, 0.013130504
  %v4452 = vmul.f32 %v4420, 0.013130504
  %v4453 = vmul.f32 %v4421, 0.013130504
  %v4454 = vmul.f32 %v4422, 0.013130504
  %v4455 = vmul.f32 %v4423, 0.013130504
  %v4456 = vmul.f32 %v4424, 0.013130504
  %v4457 = vmul.f32 %v4425, 0.013130504
  %v4458 = vmul.f32 %v4426, 0.013130504
  %v4459 = vmul.f32 %v4427, 0.013130504
  %v4460 = vmul.f32 %v4428, 0.013130504
  %v4461 = vmul.f32 %v4429, 0.013130504
  %v4462 = vmul.f32 %v4430, 0.013130504
  %v4463 = vmul.f32 %v4431, 0.013130504
  %v4464 = vmul.f32 %v4432, 0.013130504
  %v4465 = vmul.f32 %v4433, 0.013130504
  %v4466 = vmul.f32 %v4434, 0.013130504
  %v4467 = vmul.f32 %v4435, 0.013130504
  %v4468 = vmul.f32 %v4436, 0.013130504
  %v4469 = vmul.f32 %v4437, 0.013130504
  %v4470 = vadd.f32 %v4086, %v4438
  %v4471 = vadd.f32 %v4087, %v4439
  %v4472 = vadd.f32 %v4088, %v4440
  %v4473 = vadd.f32 %v4089, %v4441
  %v4474 = vadd.f32 %v4090, %v4442
  %v4475 = vadd.f32 %v4091, %v4443
  %v4476 = vadd.f32 %v4092, %v4444
  %v4477 = vadd.f32 %v4093, %v4445
  %v4478 = vadd.f32 %v4094, %v4446
  %v4479 = vadd.f32 %v4095, %v4447
  %v4480 = vadd.f32 %v4096, %v4448
  %v4481 = vadd.f32 %v4097, %v4449
  %v4482 = vadd.f32 %v4098, %v4450
  %v4483 = vadd.f32 %v4099, %v4451
  %v4484 = vadd.f32 %v4100, %v4452
  %v4485 = vadd.f32 %v4101, %v4453
  %v4486 = vadd.f32 %v4102, %v4454
  %v4487 = vadd.f32 %v4103, %v4455
  %v4488 = vadd.f32 %v4104, %v4456
  %v4489 = vadd.f32 %v4105, %v4457
  %v4490 = vadd.f32 %v4106, %v4458
  %v4491 = vadd.f32 %v4107, %v4459
  %v4492 = vadd.f32 %v4108, %v4460
  %v4493 = vadd.f32 %v4109, %v4461
  %v4494 = vadd.f32 %v4110, %v4462
  %v4495 = vadd.f32 %v4111, %v4463
  %v4496 = vadd.f32 %v4112, %v4464
  %v4497 = vadd.f32 %v4113, %v4465
  %v4498 = vadd.f32 %v4114, %v4466
  %v4499 = vadd.f32 %v4115, %v4467
  %v4500 = vadd.f32 %v4116, %v4468
  %v4501 = vadd.f32 %v4117, %v4469
  %v4502 = vld [vmem:[%s3829 + $0x7] sm:$0xff]
  %v4503 = vld [vmem:[%s3829 + $0xf] sm:$0xff]
  %v4504 = vld [vmem:[%s3829 + $0x1f] sm:$0xff]
  %v4505 = vld [vmem:[%s3829 + $0x27] sm:$0xff]
  %v4506 = vld [vmem:[%s3829 + $0x37] sm:$0xff]
  %v4507 = vld [vmem:[%s3829 + $0x3f] sm:$0xff]
  %v4508 = vld [vmem:[%s3829 + $0x4f] sm:$0xff]
  %v4509 = vld [vmem:[%s3829 + $0x57] sm:$0xff]
  %v4510 = vld [vmem:[%s3829 + $0x67] sm:$0xff]
  %v4511 = vld [vmem:[%s3829 + $0x6f] sm:$0xff]
  %v4512 = vld [vmem:[%s3829 + $0x7f] sm:$0xff]
  %v4513 = vld [vmem:[%s3829 + $0x87] sm:$0xff]
  %v4514 = vld [vmem:[%s3829 + $0x97] sm:$0xff]
  %v4515 = vld [vmem:[%s3829 + $0x9f] sm:$0xff]
  %v4516 = vld [vmem:[%s3829 + $0xaf] sm:$0xff]
  %v4517 = vld [vmem:[%s3829 + $0xb7] sm:$0xff]
  %v4518 = vld [vmem:[%s3829 + $0xc7] sm:$0xff]
  %v4519 = vld [vmem:[%s3829 + $0xcf] sm:$0xff]
  %v4520 = vld [vmem:[%s3829 + $0xdf] sm:$0xff]
  %v4521 = vld [vmem:[%s3829 + $0xe7] sm:$0xff]
  %v4522 = vld [vmem:[%s3829 + $0xf7] sm:$0xff]
  %v4523 = vld [vmem:[%s3829 + $0xff] sm:$0xff]
  %v4524 = vld [vmem:[%s3829 + $0x10f] sm:$0xff]
  %v4525 = vld [vmem:[%s3829 + $0x117] sm:$0xff]
  %v4526 = vld [vmem:[%s3829 + $0x127] sm:$0xff]
  %v4527 = vld [vmem:[%s3829 + $0x12f] sm:$0xff]
  %v4528 = vld [vmem:[%s3829 + $0x13f] sm:$0xff]
  %v4529 = vld [vmem:[%s3829 + $0x147] sm:$0xff]
  %v4530 = vld [vmem:[%s3829 + $0x157] sm:$0xff]
  %v4531 = vld [vmem:[%s3829 + $0x15f] sm:$0xff]
  %v4532 = vld [vmem:[%s3829 + $0x16f] sm:$0xff]
  %v4533 = vld [vmem:[%s3829 + $0x177] sm:$0xff]
  %v4534 = vmul.f32 %v4502, 0.012594641
  %v4535 = vmul.f32 %v4503, 0.012594641
  %v4536 = vmul.f32 %v4504, 0.012594641
  %v4537 = vmul.f32 %v4505, 0.012594641
  %v4538 = vmul.f32 %v4506, 0.012594641
  %v4539 = vmul.f32 %v4507, 0.012594641
  %v4540 = vmul.f32 %v4508, 0.012594641
  %v4541 = vmul.f32 %v4509, 0.012594641
  %v4542 = vmul.f32 %v4510, 0.012594641
  %v4543 = vmul.f32 %v4511, 0.012594641
  %v4544 = vmul.f32 %v4512, 0.012594641
  %v4545 = vmul.f32 %v4513, 0.012594641
  %v4546 = vmul.f32 %v4514, 0.012594641
  %v4547 = vmul.f32 %v4515, 0.012594641
  %v4548 = vmul.f32 %v4516, 0.012594641
  %v4549 = vmul.f32 %v4517, 0.012594641
  %v4550 = vmul.f32 %v4518, 0.012594641
  %v4551 = vmul.f32 %v4519, 0.012594641
  %v4552 = vmul.f32 %v4520, 0.012594641
  %v4553 = vmul.f32 %v4521, 0.012594641
  %v4554 = vmul.f32 %v4522, 0.012594641
  %v4555 = vmul.f32 %v4523, 0.012594641
  %v4556 = vmul.f32 %v4524, 0.012594641
  %v4557 = vmul.f32 %v4525, 0.012594641
  %v4558 = vmul.f32 %v4526, 0.012594641
  %v4559 = vmul.f32 %v4527, 0.012594641
  %v4560 = vmul.f32 %v4528, 0.012594641
  %v4561 = vmul.f32 %v4529, 0.012594641
  %v4562 = vmul.f32 %v4530, 0.012594641
  %v4563 = vmul.f32 %v4531, 0.012594641
  %v4564 = vmul.f32 %v4532, 0.012594641
  %v4565 = vmul.f32 %v4533, 0.012594641
  %v4566 = vadd.f32 %v4182, %v4534
  %v4567 = vadd.f32 %v4183, %v4535
  %v4568 = vadd.f32 %v4184, %v4536
  %v4569 = vadd.f32 %v4185, %v4537
  %v4570 = vadd.f32 %v4186, %v4538
  %v4571 = vadd.f32 %v4187, %v4539
  %v4572 = vadd.f32 %v4188, %v4540
  %v4573 = vadd.f32 %v4189, %v4541
  %v4574 = vadd.f32 %v4190, %v4542
  %v4575 = vadd.f32 %v4191, %v4543
  %v4576 = vadd.f32 %v4192, %v4544
  %v4577 = vadd.f32 %v4193, %v4545
  %v4578 = vadd.f32 %v4194, %v4546
  %v4579 = vadd.f32 %v4195, %v4547
  %v4580 = vadd.f32 %v4196, %v4548
  %v4581 = vadd.f32 %v4197, %v4549
  %v4582 = vadd.f32 %v4198, %v4550
  %v4583 = vadd.f32 %v4199, %v4551
  %v4584 = vadd.f32 %v4200, %v4552
  %v4585 = vadd.f32 %v4201, %v4553
  %v4586 = vadd.f32 %v4202, %v4554
  %v4587 = vadd.f32 %v4203, %v4555
  %v4588 = vadd.f32 %v4204, %v4556
  %v4589 = vadd.f32 %v4205, %v4557
  %v4590 = vadd.f32 %v4206, %v4558
  %v4591 = vadd.f32 %v4207, %v4559
  %v4592 = vadd.f32 %v4208, %v4560
  %v4593 = vadd.f32 %v4209, %v4561
  %v4594 = vadd.f32 %v4210, %v4562
  %v4595 = vadd.f32 %v4211, %v4563
  %v4596 = vadd.f32 %v4212, %v4564
  %v4597 = vadd.f32 %v4213, %v4565
  %v4598 = vld [vmem:[%s3829 + $0x10] sm:$0xff]
  %v4599 = vld [vmem:[%s3829 + $0x28] sm:$0xff]
  %v4600 = vld [vmem:[%s3829 + $0x40] sm:$0xff]
  %v4601 = vld [vmem:[%s3829 + $0x58] sm:$0xff]
  %v4602 = vld [vmem:[%s3829 + $0x70] sm:$0xff]
  %v4603 = vld [vmem:[%s3829 + $0x88] sm:$0xff]
  %v4604 = vld [vmem:[%s3829 + $0xa0] sm:$0xff]
  %v4605 = vld [vmem:[%s3829 + $0xb8] sm:$0xff]
  %v4606 = vld [vmem:[%s3829 + $0xd0] sm:$0xff]
  %v4607 = vld [vmem:[%s3829 + $0xe8] sm:$0xff]
  %v4608 = vld [vmem:[%s3829 + $0x100] sm:$0xff]
  %v4609 = vld [vmem:[%s3829 + $0x118] sm:$0xff]
  %v4610 = vld [vmem:[%s3829 + $0x130] sm:$0xff]
  %v4611 = vld [vmem:[%s3829 + $0x148] sm:$0xff]
  %v4612 = vld [vmem:[%s3829 + $0x160] sm:$0xff]
  %v4613 = vld [vmem:[%s3829 + $0x178] sm:$0xff]
  %v4614 = vmul.f32 %v3831, 0.0038679158
  %v4615 = vmul.f32 %v4598, 0.0038679158
  %v4616 = vmul.f32 %v3833, 0.0038679158
  %v4617 = vmul.f32 %v4599, 0.0038679158
  %v4618 = vmul.f32 %v3835, 0.0038679158
  %v4619 = vmul.f32 %v4600, 0.0038679158
  %v4620 = vmul.f32 %v3837, 0.0038679158
  %v4621 = vmul.f32 %v4601, 0.0038679158
  %v4622 = vmul.f32 %v3839, 0.0038679158
  %v4623 = vmul.f32 %v4602, 0.0038679158
  %v4624 = vmul.f32 %v3841, 0.0038679158
  %v4625 = vmul.f32 %v4603, 0.0038679158
  %v4626 = vmul.f32 %v3843, 0.0038679158
  %v4627 = vmul.f32 %v4604, 0.0038679158
  %v4628 = vmul.f32 %v3845, 0.0038679158
  %v4629 = vmul.f32 %v4605, 0.0038679158
  %v4630 = vmul.f32 %v3847, 0.0038679158
  %v4631 = vmul.f32 %v4606, 0.0038679158
  %v4632 = vmul.f32 %v3849, 0.0038679158
  %v4633 = vmul.f32 %v4607, 0.0038679158
  %v4634 = vmul.f32 %v3851, 0.0038679158
  %v4635 = vmul.f32 %v4608, 0.0038679158
  %v4636 = vmul.f32 %v3853, 0.0038679158
  %v4637 = vmul.f32 %v4609, 0.0038679158
  %v4638 = vmul.f32 %v3855, 0.0038679158
  %v4639 = vmul.f32 %v4610, 0.0038679158
  %v4640 = vmul.f32 %v3857, 0.0038679158
  %v4641 = vmul.f32 %v4611, 0.0038679158
  %v4642 = vmul.f32 %v3859, 0.0038679158
  %v4643 = vmul.f32 %v4612, 0.0038679158
  %v4644 = vmul.f32 %v3861, 0.0038679158
  %v4645 = vmul.f32 %v4613, 0.0038679158
  %v4646 = vadd.f32 %v4278, %v4614
  %v4647 = vadd.f32 %v4279, %v4615
  %v4648 = vadd.f32 %v4280, %v4616
  %v4649 = vadd.f32 %v4281, %v4617
  %v4650 = vadd.f32 %v4282, %v4618
  %v4651 = vadd.f32 %v4283, %v4619
  %v4652 = vadd.f32 %v4284, %v4620
  %v4653 = vadd.f32 %v4285, %v4621
  %v4654 = vadd.f32 %v4286, %v4622
  %v4655 = vadd.f32 %v4287, %v4623
  %v4656 = vadd.f32 %v4288, %v4624
  %v4657 = vadd.f32 %v4289, %v4625
  %v4658 = vadd.f32 %v4290, %v4626
  %v4659 = vadd.f32 %v4291, %v4627
  %v4660 = vadd.f32 %v4292, %v4628
  %v4661 = vadd.f32 %v4293, %v4629
  %v4662 = vadd.f32 %v4294, %v4630
  %v4663 = vadd.f32 %v4295, %v4631
  %v4664 = vadd.f32 %v4296, %v4632
  %v4665 = vadd.f32 %v4297, %v4633
  %v4666 = vadd.f32 %v4298, %v4634
  %v4667 = vadd.f32 %v4299, %v4635
  %v4668 = vadd.f32 %v4300, %v4636
  %v4669 = vadd.f32 %v4301, %v4637
  %v4670 = vadd.f32 %v4302, %v4638
  %v4671 = vadd.f32 %v4303, %v4639
  %v4672 = vadd.f32 %v4304, %v4640
  %v4673 = vadd.f32 %v4305, %v4641
  %v4674 = vadd.f32 %v4306, %v4642
  %v4675 = vadd.f32 %v4307, %v4643
  %v4676 = vadd.f32 %v4308, %v4644
  %v4677 = vadd.f32 %v4309, %v4645
  %s4678 = scalar_lea.vmem [#allocation2], 144
  %v4679 = vld [vmem:[%s4678] sm:$0xff]
  %v4680 = vld [vmem:[%s4678 + $0x8] sm:$0xff]
  %v4681 = vld [vmem:[%s4678 + $0x18] sm:$0xff]
  %v4682 = vld [vmem:[%s4678 + $0x20] sm:$0xff]
  %v4683 = vld [vmem:[%s4678 + $0x30] sm:$0xff]
  %v4684 = vld [vmem:[%s4678 + $0x38] sm:$0xff]
  %v4685 = vld [vmem:[%s4678 + $0x48] sm:$0xff]
  %v4686 = vld [vmem:[%s4678 + $0x50] sm:$0xff]
  %v4687 = vld [vmem:[%s4678 + $0x60] sm:$0xff]
  %v4688 = vld [vmem:[%s4678 + $0x68] sm:$0xff]
  %v4689 = vld [vmem:[%s4678 + $0x78] sm:$0xff]
  %v4690 = vld [vmem:[%s4678 + $0x80] sm:$0xff]
  %v4691 = vld [vmem:[%s4678 + $0x90] sm:$0xff]
  %v4692 = vld [vmem:[%s4678 + $0x98] sm:$0xff]
  %v4693 = vld [vmem:[%s4678 + $0xa8] sm:$0xff]
  %v4694 = vld [vmem:[%s4678 + $0xb0] sm:$0xff]
  %v4695 = vld [vmem:[%s4678 + $0xc0] sm:$0xff]
  %v4696 = vld [vmem:[%s4678 + $0xc8] sm:$0xff]
  %v4697 = vld [vmem:[%s4678 + $0xd8] sm:$0xff]
  %v4698 = vld [vmem:[%s4678 + $0xe0] sm:$0xff]
  %v4699 = vld [vmem:[%s4678 + $0xf0] sm:$0xff]
  %v4700 = vld [vmem:[%s4678 + $0xf8] sm:$0xff]
  %v4701 = vld [vmem:[%s4678 + $0x108] sm:$0xff]
  %v4702 = vld [vmem:[%s4678 + $0x110] sm:$0xff]
  %v4703 = vld [vmem:[%s4678 + $0x120] sm:$0xff]
  %v4704 = vld [vmem:[%s4678 + $0x128] sm:$0xff]
  %v4705 = vld [vmem:[%s4678 + $0x138] sm:$0xff]
  %v4706 = vld [vmem:[%s4678 + $0x140] sm:$0xff]
  %v4707 = vld [vmem:[%s4678 + $0x150] sm:$0xff]
  %v4708 = vld [vmem:[%s4678 + $0x158] sm:$0xff]
  %v4709 = vld [vmem:[%s4678 + $0x168] sm:$0xff]
  %v4710 = vld [vmem:[%s4678 + $0x170] sm:$0xff]
  %v4711 = vmul.f32 %v4679, 0.025932413
  %v4712 = vmul.f32 %v4680, 0.025932413
  %v4713 = vmul.f32 %v4681, 0.025932413
  %v4714 = vmul.f32 %v4682, 0.025932413
  %v4715 = vmul.f32 %v4683, 0.025932413
  %v4716 = vmul.f32 %v4684, 0.025932413
  %v4717 = vmul.f32 %v4685, 0.025932413
  %v4718 = vmul.f32 %v4686, 0.025932413
  %v4719 = vmul.f32 %v4687, 0.025932413
  %v4720 = vmul.f32 %v4688, 0.025932413
  %v4721 = vmul.f32 %v4689, 0.025932413
  %v4722 = vmul.f32 %v4690, 0.025932413
  %v4723 = vmul.f32 %v4691, 0.025932413
  %v4724 = vmul.f32 %v4692, 0.025932413
  %v4725 = vmul.f32 %v4693, 0.025932413
  %v4726 = vmul.f32 %v4694, 0.025932413
  %v4727 = vmul.f32 %v4695, 0.025932413
  %v4728 = vmul.f32 %v4696, 0.025932413
  %v4729 = vmul.f32 %v4697, 0.025932413
  %v4730 = vmul.f32 %v4698, 0.025932413
  %v4731 = vmul.f32 %v4699, 0.025932413
  %v4732 = vmul.f32 %v4700, 0.025932413
  %v4733 = vmul.f32 %v4701, 0.025932413
  %v4734 = vmul.f32 %v4702, 0.025932413
  %v4735 = vmul.f32 %v4703, 0.025932413
  %v4736 = vmul.f32 %v4704, 0.025932413
  %v4737 = vmul.f32 %v4705, 0.025932413
  %v4738 = vmul.f32 %v4706, 0.025932413
  %v4739 = vmul.f32 %v4707, 0.025932413
  %v4740 = vmul.f32 %v4708, 0.025932413
  %v4741 = vmul.f32 %v4709, 0.025932413
  %v4742 = vmul.f32 %v4710, 0.025932413
  %v4743 = vadd.f32 %v4374, %v4711
  %v4744 = vadd.f32 %v4375, %v4712
  %v4745 = vadd.f32 %v4376, %v4713
  %v4746 = vadd.f32 %v4377, %v4714
  %v4747 = vadd.f32 %v4378, %v4715
  %v4748 = vadd.f32 %v4379, %v4716
  %v4749 = vadd.f32 %v4380, %v4717
  %v4750 = vadd.f32 %v4381, %v4718
  %v4751 = vadd.f32 %v4382, %v4719
  %v4752 = vadd.f32 %v4383, %v4720
  %v4753 = vadd.f32 %v4384, %v4721
  %v4754 = vadd.f32 %v4385, %v4722
  %v4755 = vadd.f32 %v4386, %v4723
  %v4756 = vadd.f32 %v4387, %v4724
  %v4757 = vadd.f32 %v4388, %v4725
  %v4758 = vadd.f32 %v4389, %v4726
  %v4759 = vadd.f32 %v4390, %v4727
  %v4760 = vadd.f32 %v4391, %v4728
  %v4761 = vadd.f32 %v4392, %v4729
  %v4762 = vadd.f32 %v4393, %v4730
  %v4763 = vadd.f32 %v4394, %v4731
  %v4764 = vadd.f32 %v4395, %v4732
  %v4765 = vadd.f32 %v4396, %v4733
  %v4766 = vadd.f32 %v4397, %v4734
  %v4767 = vadd.f32 %v4398, %v4735
  %v4768 = vadd.f32 %v4399, %v4736
  %v4769 = vadd.f32 %v4400, %v4737
  %v4770 = vadd.f32 %v4401, %v4738
  %v4771 = vadd.f32 %v4402, %v4739
  %v4772 = vadd.f32 %v4403, %v4740
  %v4773 = vadd.f32 %v4404, %v4741
  %v4774 = vadd.f32 %v4405, %v4742
  %v4775 = vld [vmem:[%s4678 + $0x1] sm:$0xff]
  %v4776 = vld [vmem:[%s4678 + $0x9] sm:$0xff]
  %v4777 = vld [vmem:[%s4678 + $0x19] sm:$0xff]
  %v4778 = vld [vmem:[%s4678 + $0x21] sm:$0xff]
  %v4779 = vld [vmem:[%s4678 + $0x31] sm:$0xff]
  %v4780 = vld [vmem:[%s4678 + $0x39] sm:$0xff]
  %v4781 = vld [vmem:[%s4678 + $0x49] sm:$0xff]
  %v4782 = vld [vmem:[%s4678 + $0x51] sm:$0xff]
  %v4783 = vld [vmem:[%s4678 + $0x61] sm:$0xff]
  %v4784 = vld [vmem:[%s4678 + $0x69] sm:$0xff]
  %v4785 = vld [vmem:[%s4678 + $0x79] sm:$0xff]
  %v4786 = vld [vmem:[%s4678 + $0x81] sm:$0xff]
  %v4787 = vld [vmem:[%s4678 + $0x91] sm:$0xff]
  %v4788 = vld [vmem:[%s4678 + $0x99] sm:$0xff]
  %v4789 = vld [vmem:[%s4678 + $0xa9] sm:$0xff]
  %v4790 = vld [vmem:[%s4678 + $0xb1] sm:$0xff]
  %v4791 = vld [vmem:[%s4678 + $0xc1] sm:$0xff]
  %v4792 = vld [vmem:[%s4678 + $0xc9] sm:$0xff]
  %v4793 = vld [vmem:[%s4678 + $0xd9] sm:$0xff]
  %v4794 = vld [vmem:[%s4678 + $0xe1] sm:$0xff]
  %v4795 = vld [vmem:[%s4678 + $0xf1] sm:$0xff]
  %v4796 = vld [vmem:[%s4678 + $0xf9] sm:$0xff]
  %v4797 = vld [vmem:[%s4678 + $0x109] sm:$0xff]
  %v4798 = vld [vmem:[%s4678 + $0x111] sm:$0xff]
  %v4799 = vld [vmem:[%s4678 + $0x121] sm:$0xff]
  %v4800 = vld [vmem:[%s4678 + $0x129] sm:$0xff]
  %v4801 = vld [vmem:[%s4678 + $0x139] sm:$0xff]
  %v4802 = vld [vmem:[%s4678 + $0x141] sm:$0xff]
  %v4803 = vld [vmem:[%s4678 + $0x151] sm:$0xff]
  %v4804 = vld [vmem:[%s4678 + $0x159] sm:$0xff]
  %v4805 = vld [vmem:[%s4678 + $0x169] sm:$0xff]
  %v4806 = vld [vmem:[%s4678 + $0x171] sm:$0xff]
  %v4807 = vmul.f32 %v4775, 0.025932413
  %v4808 = vmul.f32 %v4776, 0.025932413
  %v4809 = vmul.f32 %v4777, 0.025932413
  %v4810 = vmul.f32 %v4778, 0.025932413
  %v4811 = vmul.f32 %v4779, 0.025932413
  %v4812 = vmul.f32 %v4780, 0.025932413
  %v4813 = vmul.f32 %v4781, 0.025932413
  %v4814 = vmul.f32 %v4782, 0.025932413
  %v4815 = vmul.f32 %v4783, 0.025932413
  %v4816 = vmul.f32 %v4784, 0.025932413
  %v4817 = vmul.f32 %v4785, 0.025932413
  %v4818 = vmul.f32 %v4786, 0.025932413
  %v4819 = vmul.f32 %v4787, 0.025932413
  %v4820 = vmul.f32 %v4788, 0.025932413
  %v4821 = vmul.f32 %v4789, 0.025932413
  %v4822 = vmul.f32 %v4790, 0.025932413
  %v4823 = vmul.f32 %v4791, 0.025932413
  %v4824 = vmul.f32 %v4792, 0.025932413
  %v4825 = vmul.f32 %v4793, 0.025932413
  %v4826 = vmul.f32 %v4794, 0.025932413
  %v4827 = vmul.f32 %v4795, 0.025932413
  %v4828 = vmul.f32 %v4796, 0.025932413
  %v4829 = vmul.f32 %v4797, 0.025932413
  %v4830 = vmul.f32 %v4798, 0.025932413
  %v4831 = vmul.f32 %v4799, 0.025932413
  %v4832 = vmul.f32 %v4800, 0.025932413
  %v4833 = vmul.f32 %v4801, 0.025932413
  %v4834 = vmul.f32 %v4802, 0.025932413
  %v4835 = vmul.f32 %v4803, 0.025932413
  %v4836 = vmul.f32 %v4804, 0.025932413
  %v4837 = vmul.f32 %v4805, 0.025932413
  %v4838 = vmul.f32 %v4806, 0.025932413
  %v4839 = vadd.f32 %v4470, %v4807
  %v4840 = vadd.f32 %v4471, %v4808
  %v4841 = vadd.f32 %v4472, %v4809
  %v4842 = vadd.f32 %v4473, %v4810
  %v4843 = vadd.f32 %v4474, %v4811
  %v4844 = vadd.f32 %v4475, %v4812
  %v4845 = vadd.f32 %v4476, %v4813
  %v4846 = vadd.f32 %v4477, %v4814
  %v4847 = vadd.f32 %v4478, %v4815
  %v4848 = vadd.f32 %v4479, %v4816
  %v4849 = vadd.f32 %v4480, %v4817
  %v4850 = vadd.f32 %v4481, %v4818
  %v4851 = vadd.f32 %v4482, %v4819
  %v4852 = vadd.f32 %v4483, %v4820
  %v4853 = vadd.f32 %v4484, %v4821
  %v4854 = vadd.f32 %v4485, %v4822
  %v4855 = vadd.f32 %v4486, %v4823
  %v4856 = vadd.f32 %v4487, %v4824
  %v4857 = vadd.f32 %v4488, %v4825
  %v4858 = vadd.f32 %v4489, %v4826
  %v4859 = vadd.f32 %v4490, %v4827
  %v4860 = vadd.f32 %v4491, %v4828
  %v4861 = vadd.f32 %v4492, %v4829
  %v4862 = vadd.f32 %v4493, %v4830
  %v4863 = vadd.f32 %v4494, %v4831
  %v4864 = vadd.f32 %v4495, %v4832
  %v4865 = vadd.f32 %v4496, %v4833
  %v4866 = vadd.f32 %v4497, %v4834
  %v4867 = vadd.f32 %v4498, %v4835
  %v4868 = vadd.f32 %v4499, %v4836
  %v4869 = vadd.f32 %v4500, %v4837
  %v4870 = vadd.f32 %v4501, %v4838
  %v4871 = vld [vmem:[%s4678 + $0x2] sm:$0xff]
  %v4872 = vld [vmem:[%s4678 + $0xa] sm:$0xff]
  %v4873 = vld [vmem:[%s4678 + $0x1a] sm:$0xff]
  %v4874 = vld [vmem:[%s4678 + $0x22] sm:$0xff]
  %v4875 = vld [vmem:[%s4678 + $0x32] sm:$0xff]
  %v4876 = vld [vmem:[%s4678 + $0x3a] sm:$0xff]
  %v4877 = vld [vmem:[%s4678 + $0x4a] sm:$0xff]
  %v4878 = vld [vmem:[%s4678 + $0x52] sm:$0xff]
  %v4879 = vld [vmem:[%s4678 + $0x62] sm:$0xff]
  %v4880 = vld [vmem:[%s4678 + $0x6a] sm:$0xff]
  %v4881 = vld [vmem:[%s4678 + $0x7a] sm:$0xff]
  %v4882 = vld [vmem:[%s4678 + $0x82] sm:$0xff]
  %v4883 = vld [vmem:[%s4678 + $0x92] sm:$0xff]
  %v4884 = vld [vmem:[%s4678 + $0x9a] sm:$0xff]
  %v4885 = vld [vmem:[%s4678 + $0xaa] sm:$0xff]
  %v4886 = vld [vmem:[%s4678 + $0xb2] sm:$0xff]
  %v4887 = vld [vmem:[%s4678 + $0xc2] sm:$0xff]
  %v4888 = vld [vmem:[%s4678 + $0xca] sm:$0xff]
  %v4889 = vld [vmem:[%s4678 + $0xda] sm:$0xff]
  %v4890 = vld [vmem:[%s4678 + $0xe2] sm:$0xff]
  %v4891 = vld [vmem:[%s4678 + $0xf2] sm:$0xff]
  %v4892 = vld [vmem:[%s4678 + $0xfa] sm:$0xff]
  %v4893 = vld [vmem:[%s4678 + $0x10a] sm:$0xff]
  %v4894 = vld [vmem:[%s4678 + $0x112] sm:$0xff]
  %v4895 = vld [vmem:[%s4678 + $0x122] sm:$0xff]
  %v4896 = vld [vmem:[%s4678 + $0x12a] sm:$0xff]
  %v4897 = vld [vmem:[%s4678 + $0x13a] sm:$0xff]
  %v4898 = vld [vmem:[%s4678 + $0x142] sm:$0xff]
  %v4899 = vld [vmem:[%s4678 + $0x152] sm:$0xff]
  %v4900 = vld [vmem:[%s4678 + $0x15a] sm:$0xff]
  %v4901 = vld [vmem:[%s4678 + $0x16a] sm:$0xff]
  %v4902 = vld [vmem:[%s4678 + $0x172] sm:$0xff]
  %v4903 = vmul.f32 %v4871, 0.022885272
  %v4904 = vmul.f32 %v4872, 0.022885272
  %v4905 = vmul.f32 %v4873, 0.022885272
  %v4906 = vmul.f32 %v4874, 0.022885272
  %v4907 = vmul.f32 %v4875, 0.022885272
  %v4908 = vmul.f32 %v4876, 0.022885272
  %v4909 = vmul.f32 %v4877, 0.022885272
  %v4910 = vmul.f32 %v4878, 0.022885272
  %v4911 = vmul.f32 %v4879, 0.022885272
  %v4912 = vmul.f32 %v4880, 0.022885272
  %v4913 = vmul.f32 %v4881, 0.022885272
  %v4914 = vmul.f32 %v4882, 0.022885272
  %v4915 = vmul.f32 %v4883, 0.022885272
  %v4916 = vmul.f32 %v4884, 0.022885272
  %v4917 = vmul.f32 %v4885, 0.022885272
  %v4918 = vmul.f32 %v4886, 0.022885272
  %v4919 = vmul.f32 %v4887, 0.022885272
  %v4920 = vmul.f32 %v4888, 0.022885272
  %v4921 = vmul.f32 %v4889, 0.022885272
  %v4922 = vmul.f32 %v4890, 0.022885272
  %v4923 = vmul.f32 %v4891, 0.022885272
  %v4924 = vmul.f32 %v4892, 0.022885272
  %v4925 = vmul.f32 %v4893, 0.022885272
  %v4926 = vmul.f32 %v4894, 0.022885272
  %v4927 = vmul.f32 %v4895, 0.022885272
  %v4928 = vmul.f32 %v4896, 0.022885272
  %v4929 = vmul.f32 %v4897, 0.022885272
  %v4930 = vmul.f32 %v4898, 0.022885272
  %v4931 = vmul.f32 %v4899, 0.022885272
  %v4932 = vmul.f32 %v4900, 0.022885272
  %v4933 = vmul.f32 %v4901, 0.022885272
  %v4934 = vmul.f32 %v4902, 0.022885272
  %v4935 = vadd.f32 %v4566, %v4903
  %v4936 = vadd.f32 %v4567, %v4904
  %v4937 = vadd.f32 %v4568, %v4905
  %v4938 = vadd.f32 %v4569, %v4906
  %v4939 = vadd.f32 %v4570, %v4907
  %v4940 = vadd.f32 %v4571, %v4908
  %v4941 = vadd.f32 %v4572, %v4909
  %v4942 = vadd.f32 %v4573, %v4910
  %v4943 = vadd.f32 %v4574, %v4911
  %v4944 = vadd.f32 %v4575, %v4912
  %v4945 = vadd.f32 %v4576, %v4913
  %v4946 = vadd.f32 %v4577, %v4914
  %v4947 = vadd.f32 %v4578, %v4915
  %v4948 = vadd.f32 %v4579, %v4916
  %v4949 = vadd.f32 %v4580, %v4917
  %v4950 = vadd.f32 %v4581, %v4918
  %v4951 = vadd.f32 %v4582, %v4919
  %v4952 = vadd.f32 %v4583, %v4920
  %v4953 = vadd.f32 %v4584, %v4921
  %v4954 = vadd.f32 %v4585, %v4922
  %v4955 = vadd.f32 %v4586, %v4923
  %v4956 = vadd.f32 %v4587, %v4924
  %v4957 = vadd.f32 %v4588, %v4925
  %v4958 = vadd.f32 %v4589, %v4926
  %v4959 = vadd.f32 %v4590, %v4927
  %v4960 = vadd.f32 %v4591, %v4928
  %v4961 = vadd.f32 %v4592, %v4929
  %v4962 = vadd.f32 %v4593, %v4930
  %v4963 = vadd.f32 %v4594, %v4931
  %v4964 = vadd.f32 %v4595, %v4932
  %v4965 = vadd.f32 %v4596, %v4933
  %v4966 = vadd.f32 %v4597, %v4934
  %v4967 = vld [vmem:[%s4678 + $0x3] sm:$0xff]
  %v4968 = vld [vmem:[%s4678 + $0xb] sm:$0xff]
  %v4969 = vld [vmem:[%s4678 + $0x1b] sm:$0xff]
  %v4970 = vld [vmem:[%s4678 + $0x23] sm:$0xff]
  %v4971 = vld [vmem:[%s4678 + $0x33] sm:$0xff]
  %v4972 = vld [vmem:[%s4678 + $0x3b] sm:$0xff]
  %v4973 = vld [vmem:[%s4678 + $0x4b] sm:$0xff]
  %v4974 = vld [vmem:[%s4678 + $0x53] sm:$0xff]
  %v4975 = vld [vmem:[%s4678 + $0x63] sm:$0xff]
  %v4976 = vld [vmem:[%s4678 + $0x6b] sm:$0xff]
  %v4977 = vld [vmem:[%s4678 + $0x7b] sm:$0xff]
  %v4978 = vld [vmem:[%s4678 + $0x83] sm:$0xff]
  %v4979 = vld [vmem:[%s4678 + $0x93] sm:$0xff]
  %v4980 = vld [vmem:[%s4678 + $0x9b] sm:$0xff]
  %v4981 = vld [vmem:[%s4678 + $0xab] sm:$0xff]
  %v4982 = vld [vmem:[%s4678 + $0xb3] sm:$0xff]
  %v4983 = vld [vmem:[%s4678 + $0xc3] sm:$0xff]
  %v4984 = vld [vmem:[%s4678 + $0xcb] sm:$0xff]
  %v4985 = vld [vmem:[%s4678 + $0xdb] sm:$0xff]
  %v4986 = vld [vmem:[%s4678 + $0xe3] sm:$0xff]
  %v4987 = vld [vmem:[%s4678 + $0xf3] sm:$0xff]
  %v4988 = vld [vmem:[%s4678 + $0xfb] sm:$0xff]
  %v4989 = vld [vmem:[%s4678 + $0x10b] sm:$0xff]
  %v4990 = vld [vmem:[%s4678 + $0x113] sm:$0xff]
  %v4991 = vld [vmem:[%s4678 + $0x123] sm:$0xff]
  %v4992 = vld [vmem:[%s4678 + $0x12b] sm:$0xff]
  %v4993 = vld [vmem:[%s4678 + $0x13b] sm:$0xff]
  %v4994 = vld [vmem:[%s4678 + $0x143] sm:$0xff]
  %v4995 = vld [vmem:[%s4678 + $0x153] sm:$0xff]
  %v4996 = vld [vmem:[%s4678 + $0x15b] sm:$0xff]
  %v4997 = vld [vmem:[%s4678 + $0x16b] sm:$0xff]
  %v4998 = vld [vmem:[%s4678 + $0x173] sm:$0xff]
  %v4999 = vmul.f32 %v4967, 0.02453101
  %v5000 = vmul.f32 %v4968, 0.02453101
  %v5001 = vmul.f32 %v4969, 0.02453101
  %v5002 = vmul.f32 %v4970, 0.02453101
  %v5003 = vmul.f32 %v4971, 0.02453101
  %v5004 = vmul.f32 %v4972, 0.02453101
  %v5005 = vmul.f32 %v4973, 0.02453101
  %v5006 = vmul.f32 %v4974, 0.02453101
  %v5007 = vmul.f32 %v4975, 0.02453101
  %v5008 = vmul.f32 %v4976, 0.02453101
  %v5009 = vmul.f32 %v4977, 0.02453101
  %v5010 = vmul.f32 %v4978, 0.02453101
  %v5011 = vmul.f32 %v4979, 0.02453101
  %v5012 = vmul.f32 %v4980, 0.02453101
  %v5013 = vmul.f32 %v4981, 0.02453101
  %v5014 = vmul.f32 %v4982, 0.02453101
  %v5015 = vmul.f32 %v4983, 0.02453101
  %v5016 = vmul.f32 %v4984, 0.02453101
  %v5017 = vmul.f32 %v4985, 0.02453101
  %v5018 = vmul.f32 %v4986, 0.02453101
  %v5019 = vmul.f32 %v4987, 0.02453101
  %v5020 = vmul.f32 %v4988, 0.02453101
  %v5021 = vmul.f32 %v4989, 0.02453101
  %v5022 = vmul.f32 %v4990, 0.02453101
  %v5023 = vmul.f32 %v4991, 0.02453101
  %v5024 = vmul.f32 %v4992, 0.02453101
  %v5025 = vmul.f32 %v4993, 0.02453101
  %v5026 = vmul.f32 %v4994, 0.02453101
  %v5027 = vmul.f32 %v4995, 0.02453101
  %v5028 = vmul.f32 %v4996, 0.02453101
  %v5029 = vmul.f32 %v4997, 0.02453101
  %v5030 = vmul.f32 %v4998, 0.02453101
  %v5031 = vadd.f32 %v4646, %v4999
  %v5032 = vadd.f32 %v4647, %v5000
  %v5033 = vadd.f32 %v4648, %v5001
  %v5034 = vadd.f32 %v4649, %v5002
  %v5035 = vadd.f32 %v4650, %v5003
  %v5036 = vadd.f32 %v4651, %v5004
  %v5037 = vadd.f32 %v4652, %v5005
  %v5038 = vadd.f32 %v4653, %v5006
  %v5039 = vadd.f32 %v4654, %v5007
  %v5040 = vadd.f32 %v4655, %v5008
  %v5041 = vadd.f32 %v4656, %v5009
  %v5042 = vadd.f32 %v4657, %v5010
  %v5043 = vadd.f32 %v4658, %v5011
  %v5044 = vadd.f32 %v4659, %v5012
  %v5045 = vadd.f32 %v4660, %v5013
  %v5046 = vadd.f32 %v4661, %v5014
  %v5047 = vadd.f32 %v4662, %v5015
  %v5048 = vadd.f32 %v4663, %v5016
  %v5049 = vadd.f32 %v4664, %v5017
  %v5050 = vadd.f32 %v4665, %v5018
  %v5051 = vadd.f32 %v4666, %v5019
  %v5052 = vadd.f32 %v4667, %v5020
  %v5053 = vadd.f32 %v4668, %v5021
  %v5054 = vadd.f32 %v4669, %v5022
  %v5055 = vadd.f32 %v4670, %v5023
  %v5056 = vadd.f32 %v4671, %v5024
  %v5057 = vadd.f32 %v4672, %v5025
  %v5058 = vadd.f32 %v4673, %v5026
  %v5059 = vadd.f32 %v4674, %v5027
  %v5060 = vadd.f32 %v4675, %v5028
  %v5061 = vadd.f32 %v4676, %v5029
  %v5062 = vadd.f32 %v4677, %v5030
  %v5063 = vld [vmem:[%s4678 + $0x4] sm:$0xff]
  %v5064 = vld [vmem:[%s4678 + $0xc] sm:$0xff]
  %v5065 = vld [vmem:[%s4678 + $0x1c] sm:$0xff]
  %v5066 = vld [vmem:[%s4678 + $0x24] sm:$0xff]
  %v5067 = vld [vmem:[%s4678 + $0x34] sm:$0xff]
  %v5068 = vld [vmem:[%s4678 + $0x3c] sm:$0xff]
  %v5069 = vld [vmem:[%s4678 + $0x4c] sm:$0xff]
  %v5070 = vld [vmem:[%s4678 + $0x54] sm:$0xff]
  %v5071 = vld [vmem:[%s4678 + $0x64] sm:$0xff]
  %v5072 = vld [vmem:[%s4678 + $0x6c] sm:$0xff]
  %v5073 = vld [vmem:[%s4678 + $0x7c] sm:$0xff]
  %v5074 = vld [vmem:[%s4678 + $0x84] sm:$0xff]
  %v5075 = vld [vmem:[%s4678 + $0x94] sm:$0xff]
  %v5076 = vld [vmem:[%s4678 + $0x9c] sm:$0xff]
  %v5077 = vld [vmem:[%s4678 + $0xac] sm:$0xff]
  %v5078 = vld [vmem:[%s4678 + $0xb4] sm:$0xff]
  %v5079 = vld [vmem:[%s4678 + $0xc4] sm:$0xff]
  %v5080 = vld [vmem:[%s4678 + $0xcc] sm:$0xff]
  %v5081 = vld [vmem:[%s4678 + $0xdc] sm:$0xff]
  %v5082 = vld [vmem:[%s4678 + $0xe4] sm:$0xff]
  %v5083 = vld [vmem:[%s4678 + $0xf4] sm:$0xff]
  %v5084 = vld [vmem:[%s4678 + $0xfc] sm:$0xff]
  %v5085 = vld [vmem:[%s4678 + $0x10c] sm:$0xff]
  %v5086 = vld [vmem:[%s4678 + $0x114] sm:$0xff]
  %v5087 = vld [vmem:[%s4678 + $0x124] sm:$0xff]
  %v5088 = vld [vmem:[%s4678 + $0x12c] sm:$0xff]
  %v5089 = vld [vmem:[%s4678 + $0x13c] sm:$0xff]
  %v5090 = vld [vmem:[%s4678 + $0x144] sm:$0xff]
  %v5091 = vld [vmem:[%s4678 + $0x154] sm:$0xff]
  %v5092 = vld [vmem:[%s4678 + $0x15c] sm:$0xff]
  %v5093 = vld [vmem:[%s4678 + $0x16c] sm:$0xff]
  %v5094 = vld [vmem:[%s4678 + $0x174] sm:$0xff]
  %v5095 = vmul.f32 %v5063, 0.013130504
  %v5096 = vmul.f32 %v5064, 0.013130504
  %v5097 = vmul.f32 %v5065, 0.013130504
  %v5098 = vmul.f32 %v5066, 0.013130504
  %v5099 = vmul.f32 %v5067, 0.013130504
  %v5100 = vmul.f32 %v5068, 0.013130504
  %v5101 = vmul.f32 %v5069, 0.013130504
  %v5102 = vmul.f32 %v5070, 0.013130504
  %v5103 = vmul.f32 %v5071, 0.013130504
  %v5104 = vmul.f32 %v5072, 0.013130504
  %v5105 = vmul.f32 %v5073, 0.013130504
  %v5106 = vmul.f32 %v5074, 0.013130504
  %v5107 = vmul.f32 %v5075, 0.013130504
  %v5108 = vmul.f32 %v5076, 0.013130504
  %v5109 = vmul.f32 %v5077, 0.013130504
  %v5110 = vmul.f32 %v5078, 0.013130504
  %v5111 = vmul.f32 %v5079, 0.013130504
  %v5112 = vmul.f32 %v5080, 0.013130504
  %v5113 = vmul.f32 %v5081, 0.013130504
  %v5114 = vmul.f32 %v5082, 0.013130504
  %v5115 = vmul.f32 %v5083, 0.013130504
  %v5116 = vmul.f32 %v5084, 0.013130504
  %v5117 = vmul.f32 %v5085, 0.013130504
  %v5118 = vmul.f32 %v5086, 0.013130504
  %v5119 = vmul.f32 %v5087, 0.013130504
  %v5120 = vmul.f32 %v5088, 0.013130504
  %v5121 = vmul.f32 %v5089, 0.013130504
  %v5122 = vmul.f32 %v5090, 0.013130504
  %v5123 = vmul.f32 %v5091, 0.013130504
  %v5124 = vmul.f32 %v5092, 0.013130504
  %v5125 = vmul.f32 %v5093, 0.013130504
  %v5126 = vmul.f32 %v5094, 0.013130504
  %v5127 = vadd.f32 %v4743, %v5095
  %v5128 = vadd.f32 %v4744, %v5096
  %v5129 = vadd.f32 %v4745, %v5097
  %v5130 = vadd.f32 %v4746, %v5098
  %v5131 = vadd.f32 %v4747, %v5099
  %v5132 = vadd.f32 %v4748, %v5100
  %v5133 = vadd.f32 %v4749, %v5101
  %v5134 = vadd.f32 %v4750, %v5102
  %v5135 = vadd.f32 %v4751, %v5103
  %v5136 = vadd.f32 %v4752, %v5104
  %v5137 = vadd.f32 %v4753, %v5105
  %v5138 = vadd.f32 %v4754, %v5106
  %v5139 = vadd.f32 %v4755, %v5107
  %v5140 = vadd.f32 %v4756, %v5108
  %v5141 = vadd.f32 %v4757, %v5109
  %v5142 = vadd.f32 %v4758, %v5110
  %v5143 = vadd.f32 %v4759, %v5111
  %v5144 = vadd.f32 %v4760, %v5112
  %v5145 = vadd.f32 %v4761, %v5113
  %v5146 = vadd.f32 %v4762, %v5114
  %v5147 = vadd.f32 %v4763, %v5115
  %v5148 = vadd.f32 %v4764, %v5116
  %v5149 = vadd.f32 %v4765, %v5117
  %v5150 = vadd.f32 %v4766, %v5118
  %v5151 = vadd.f32 %v4767, %v5119
  %v5152 = vadd.f32 %v4768, %v5120
  %v5153 = vadd.f32 %v4769, %v5121
  %v5154 = vadd.f32 %v4770, %v5122
  %v5155 = vadd.f32 %v4771, %v5123
  %v5156 = vadd.f32 %v4772, %v5124
  %v5157 = vadd.f32 %v4773, %v5125
  %v5158 = vadd.f32 %v4774, %v5126
  %v5159 = vld [vmem:[%s4678 + $0x5] sm:$0xff]
  %v5160 = vld [vmem:[%s4678 + $0xd] sm:$0xff]
  %v5161 = vld [vmem:[%s4678 + $0x1d] sm:$0xff]
  %v5162 = vld [vmem:[%s4678 + $0x25] sm:$0xff]
  %v5163 = vld [vmem:[%s4678 + $0x35] sm:$0xff]
  %v5164 = vld [vmem:[%s4678 + $0x3d] sm:$0xff]
  %v5165 = vld [vmem:[%s4678 + $0x4d] sm:$0xff]
  %v5166 = vld [vmem:[%s4678 + $0x55] sm:$0xff]
  %v5167 = vld [vmem:[%s4678 + $0x65] sm:$0xff]
  %v5168 = vld [vmem:[%s4678 + $0x6d] sm:$0xff]
  %v5169 = vld [vmem:[%s4678 + $0x7d] sm:$0xff]
  %v5170 = vld [vmem:[%s4678 + $0x85] sm:$0xff]
  %v5171 = vld [vmem:[%s4678 + $0x95] sm:$0xff]
  %v5172 = vld [vmem:[%s4678 + $0x9d] sm:$0xff]
  %v5173 = vld [vmem:[%s4678 + $0xad] sm:$0xff]
  %v5174 = vld [vmem:[%s4678 + $0xb5] sm:$0xff]
  %v5175 = vld [vmem:[%s4678 + $0xc5] sm:$0xff]
  %v5176 = vld [vmem:[%s4678 + $0xcd] sm:$0xff]
  %v5177 = vld [vmem:[%s4678 + $0xdd] sm:$0xff]
  %v5178 = vld [vmem:[%s4678 + $0xe5] sm:$0xff]
  %v5179 = vld [vmem:[%s4678 + $0xf5] sm:$0xff]
  %v5180 = vld [vmem:[%s4678 + $0xfd] sm:$0xff]
  %v5181 = vld [vmem:[%s4678 + $0x10d] sm:$0xff]
  %v5182 = vld [vmem:[%s4678 + $0x115] sm:$0xff]
  %v5183 = vld [vmem:[%s4678 + $0x125] sm:$0xff]
  %v5184 = vld [vmem:[%s4678 + $0x12d] sm:$0xff]
  %v5185 = vld [vmem:[%s4678 + $0x13d] sm:$0xff]
  %v5186 = vld [vmem:[%s4678 + $0x145] sm:$0xff]
  %v5187 = vld [vmem:[%s4678 + $0x155] sm:$0xff]
  %v5188 = vld [vmem:[%s4678 + $0x15d] sm:$0xff]
  %v5189 = vld [vmem:[%s4678 + $0x16d] sm:$0xff]
  %v5190 = vld [vmem:[%s4678 + $0x175] sm:$0xff]
  %v5191 = vmul.f32 %v5159, 0.013314144
  %v5192 = vmul.f32 %v5160, 0.013314144
  %v5193 = vmul.f32 %v5161, 0.013314144
  %v5194 = vmul.f32 %v5162, 0.013314144
  %v5195 = vmul.f32 %v5163, 0.013314144
  %v5196 = vmul.f32 %v5164, 0.013314144
  %v5197 = vmul.f32 %v5165, 0.013314144
  %v5198 = vmul.f32 %v5166, 0.013314144
  %v5199 = vmul.f32 %v5167, 0.013314144
  %v5200 = vmul.f32 %v5168, 0.013314144
  %v5201 = vmul.f32 %v5169, 0.013314144
  %v5202 = vmul.f32 %v5170, 0.013314144
  %v5203 = vmul.f32 %v5171, 0.013314144
  %v5204 = vmul.f32 %v5172, 0.013314144
  %v5205 = vmul.f32 %v5173, 0.013314144
  %v5206 = vmul.f32 %v5174, 0.013314144
  %v5207 = vmul.f32 %v5175, 0.013314144
  %v5208 = vmul.f32 %v5176, 0.013314144
  %v5209 = vmul.f32 %v5177, 0.013314144
  %v5210 = vmul.f32 %v5178, 0.013314144
  %v5211 = vmul.f32 %v5179, 0.013314144
  %v5212 = vmul.f32 %v5180, 0.013314144
  %v5213 = vmul.f32 %v5181, 0.013314144
  %v5214 = vmul.f32 %v5182, 0.013314144
  %v5215 = vmul.f32 %v5183, 0.013314144
  %v5216 = vmul.f32 %v5184, 0.013314144
  %v5217 = vmul.f32 %v5185, 0.013314144
  %v5218 = vmul.f32 %v5186, 0.013314144
  %v5219 = vmul.f32 %v5187, 0.013314144
  %v5220 = vmul.f32 %v5188, 0.013314144
  %v5221 = vmul.f32 %v5189, 0.013314144
  %v5222 = vmul.f32 %v5190, 0.013314144
  %v5223 = vadd.f32 %v4839, %v5191
  %v5224 = vadd.f32 %v4840, %v5192
  %v5225 = vadd.f32 %v4841, %v5193
  %v5226 = vadd.f32 %v4842, %v5194
  %v5227 = vadd.f32 %v4843, %v5195
  %v5228 = vadd.f32 %v4844, %v5196
  %v5229 = vadd.f32 %v4845, %v5197
  %v5230 = vadd.f32 %v4846, %v5198
  %v5231 = vadd.f32 %v4847, %v5199
  %v5232 = vadd.f32 %v4848, %v5200
  %v5233 = vadd.f32 %v4849, %v5201
  %v5234 = vadd.f32 %v4850, %v5202
  %v5235 = vadd.f32 %v4851, %v5203
  %v5236 = vadd.f32 %v4852, %v5204
  %v5237 = vadd.f32 %v4853, %v5205
  %v5238 = vadd.f32 %v4854, %v5206
  %v5239 = vadd.f32 %v4855, %v5207
  %v5240 = vadd.f32 %v4856, %v5208
  %v5241 = vadd.f32 %v4857, %v5209
  %v5242 = vadd.f32 %v4858, %v5210
  %v5243 = vadd.f32 %v4859, %v5211
  %v5244 = vadd.f32 %v4860, %v5212
  %v5245 = vadd.f32 %v4861, %v5213
  %v5246 = vadd.f32 %v4862, %v5214
  %v5247 = vadd.f32 %v4863, %v5215
  %v5248 = vadd.f32 %v4864, %v5216
  %v5249 = vadd.f32 %v4865, %v5217
  %v5250 = vadd.f32 %v4866, %v5218
  %v5251 = vadd.f32 %v4867, %v5219
  %v5252 = vadd.f32 %v4868, %v5220
  %v5253 = vadd.f32 %v4869, %v5221
  %v5254 = vadd.f32 %v4870, %v5222
  %v5255 = vld [vmem:[%s4678 + $0x6] sm:$0xff]
  %v5256 = vld [vmem:[%s4678 + $0xe] sm:$0xff]
  %v5257 = vld [vmem:[%s4678 + $0x1e] sm:$0xff]
  %v5258 = vld [vmem:[%s4678 + $0x26] sm:$0xff]
  %v5259 = vld [vmem:[%s4678 + $0x36] sm:$0xff]
  %v5260 = vld [vmem:[%s4678 + $0x3e] sm:$0xff]
  %v5261 = vld [vmem:[%s4678 + $0x4e] sm:$0xff]
  %v5262 = vld [vmem:[%s4678 + $0x56] sm:$0xff]
  %v5263 = vld [vmem:[%s4678 + $0x66] sm:$0xff]
  %v5264 = vld [vmem:[%s4678 + $0x6e] sm:$0xff]
  %v5265 = vld [vmem:[%s4678 + $0x7e] sm:$0xff]
  %v5266 = vld [vmem:[%s4678 + $0x86] sm:$0xff]
  %v5267 = vld [vmem:[%s4678 + $0x96] sm:$0xff]
  %v5268 = vld [vmem:[%s4678 + $0x9e] sm:$0xff]
  %v5269 = vld [vmem:[%s4678 + $0xae] sm:$0xff]
  %v5270 = vld [vmem:[%s4678 + $0xb6] sm:$0xff]
  %v5271 = vld [vmem:[%s4678 + $0xc6] sm:$0xff]
  %v5272 = vld [vmem:[%s4678 + $0xce] sm:$0xff]
  %v5273 = vld [vmem:[%s4678 + $0xde] sm:$0xff]
  %v5274 = vld [vmem:[%s4678 + $0xe6] sm:$0xff]
  %v5275 = vld [vmem:[%s4678 + $0xf6] sm:$0xff]
  %v5276 = vld [vmem:[%s4678 + $0xfe] sm:$0xff]
  %v5277 = vld [vmem:[%s4678 + $0x10e] sm:$0xff]
  %v5278 = vld [vmem:[%s4678 + $0x116] sm:$0xff]
  %v5279 = vld [vmem:[%s4678 + $0x126] sm:$0xff]
  %v5280 = vld [vmem:[%s4678 + $0x12e] sm:$0xff]
  %v5281 = vld [vmem:[%s4678 + $0x13e] sm:$0xff]
  %v5282 = vld [vmem:[%s4678 + $0x146] sm:$0xff]
  %v5283 = vld [vmem:[%s4678 + $0x156] sm:$0xff]
  %v5284 = vld [vmem:[%s4678 + $0x15e] sm:$0xff]
  %v5285 = vld [vmem:[%s4678 + $0x16e] sm:$0xff]
  %v5286 = vld [vmem:[%s4678 + $0x176] sm:$0xff]
  %v5287 = vmul.f32 %v5255, 0.0043224697
  %v5288 = vmul.f32 %v5256, 0.0043224697
  %v5289 = vmul.f32 %v5257, 0.0043224697
  %v5290 = vmul.f32 %v5258, 0.0043224697
  %v5291 = vmul.f32 %v5259, 0.0043224697
  %v5292 = vmul.f32 %v5260, 0.0043224697
  %v5293 = vmul.f32 %v5261, 0.0043224697
  %v5294 = vmul.f32 %v5262, 0.0043224697
  %v5295 = vmul.f32 %v5263, 0.0043224697
  %v5296 = vmul.f32 %v5264, 0.0043224697
  %v5297 = vmul.f32 %v5265, 0.0043224697
  %v5298 = vmul.f32 %v5266, 0.0043224697
  %v5299 = vmul.f32 %v5267, 0.0043224697
  %v5300 = vmul.f32 %v5268, 0.0043224697
  %v5301 = vmul.f32 %v5269, 0.0043224697
  %v5302 = vmul.f32 %v5270, 0.0043224697
  %v5303 = vmul.f32 %v5271, 0.0043224697
  %v5304 = vmul.f32 %v5272, 0.0043224697
  %v5305 = vmul.f32 %v5273, 0.0043224697
  %v5306 = vmul.f32 %v5274, 0.0043224697
  %v5307 = vmul.f32 %v5275, 0.0043224697
  %v5308 = vmul.f32 %v5276, 0.0043224697
  %v5309 = vmul.f32 %v5277, 0.0043224697
  %v5310 = vmul.f32 %v5278, 0.0043224697
  %v5311 = vmul.f32 %v5279, 0.0043224697
  %v5312 = vmul.f32 %v5280, 0.0043224697
  %v5313 = vmul.f32 %v5281, 0.0043224697
  %v5314 = vmul.f32 %v5282, 0.0043224697
  %v5315 = vmul.f32 %v5283, 0.0043224697
  %v5316 = vmul.f32 %v5284, 0.0043224697
  %v5317 = vmul.f32 %v5285, 0.0043224697
  %v5318 = vmul.f32 %v5286, 0.0043224697
  %v5319 = vadd.f32 %v4935, %v5287
  %v5320 = vadd.f32 %v4936, %v5288
  %v5321 = vadd.f32 %v4937, %v5289
  %v5322 = vadd.f32 %v4938, %v5290
  %v5323 = vadd.f32 %v4939, %v5291
  %v5324 = vadd.f32 %v4940, %v5292
  %v5325 = vadd.f32 %v4941, %v5293
  %v5326 = vadd.f32 %v4942, %v5294
  %v5327 = vadd.f32 %v4943, %v5295
  %v5328 = vadd.f32 %v4944, %v5296
  %v5329 = vadd.f32 %v4945, %v5297
  %v5330 = vadd.f32 %v4946, %v5298
  %v5331 = vadd.f32 %v4947, %v5299
  %v5332 = vadd.f32 %v4948, %v5300
  %v5333 = vadd.f32 %v4949, %v5301
  %v5334 = vadd.f32 %v4950, %v5302
  %v5335 = vadd.f32 %v4951, %v5303
  %v5336 = vadd.f32 %v4952, %v5304
  %v5337 = vadd.f32 %v4953, %v5305
  %v5338 = vadd.f32 %v4954, %v5306
  %v5339 = vadd.f32 %v4955, %v5307
  %v5340 = vadd.f32 %v4956, %v5308
  %v5341 = vadd.f32 %v4957, %v5309
  %v5342 = vadd.f32 %v4958, %v5310
  %v5343 = vadd.f32 %v4959, %v5311
  %v5344 = vadd.f32 %v4960, %v5312
  %v5345 = vadd.f32 %v4961, %v5313
  %v5346 = vadd.f32 %v4962, %v5314
  %v5347 = vadd.f32 %v4963, %v5315
  %v5348 = vadd.f32 %v4964, %v5316
  %v5349 = vadd.f32 %v4965, %v5317
  %v5350 = vadd.f32 %v4966, %v5318
  %v5351 = vld [vmem:[%s4678 + $0x7] sm:$0xff]
  %v5352 = vld [vmem:[%s4678 + $0xf] sm:$0xff]
  %v5353 = vld [vmem:[%s4678 + $0x1f] sm:$0xff]
  %v5354 = vld [vmem:[%s4678 + $0x27] sm:$0xff]
  %v5355 = vld [vmem:[%s4678 + $0x37] sm:$0xff]
  %v5356 = vld [vmem:[%s4678 + $0x3f] sm:$0xff]
  %v5357 = vld [vmem:[%s4678 + $0x4f] sm:$0xff]
  %v5358 = vld [vmem:[%s4678 + $0x57] sm:$0xff]
  %v5359 = vld [vmem:[%s4678 + $0x67] sm:$0xff]
  %v5360 = vld [vmem:[%s4678 + $0x6f] sm:$0xff]
  %v5361 = vld [vmem:[%s4678 + $0x7f] sm:$0xff]
  %v5362 = vld [vmem:[%s4678 + $0x87] sm:$0xff]
  %v5363 = vld [vmem:[%s4678 + $0x97] sm:$0xff]
  %v5364 = vld [vmem:[%s4678 + $0x9f] sm:$0xff]
  %v5365 = vld [vmem:[%s4678 + $0xaf] sm:$0xff]
  %v5366 = vld [vmem:[%s4678 + $0xb7] sm:$0xff]
  %v5367 = vld [vmem:[%s4678 + $0xc7] sm:$0xff]
  %v5368 = vld [vmem:[%s4678 + $0xcf] sm:$0xff]
  %v5369 = vld [vmem:[%s4678 + $0xdf] sm:$0xff]
  %v5370 = vld [vmem:[%s4678 + $0xe7] sm:$0xff]
  %v5371 = vld [vmem:[%s4678 + $0xf7] sm:$0xff]
  %v5372 = vld [vmem:[%s4678 + $0xff] sm:$0xff]
  %v5373 = vld [vmem:[%s4678 + $0x10f] sm:$0xff]
  %v5374 = vld [vmem:[%s4678 + $0x117] sm:$0xff]
  %v5375 = vld [vmem:[%s4678 + $0x127] sm:$0xff]
  %v5376 = vld [vmem:[%s4678 + $0x12f] sm:$0xff]
  %v5377 = vld [vmem:[%s4678 + $0x13f] sm:$0xff]
  %v5378 = vld [vmem:[%s4678 + $0x147] sm:$0xff]
  %v5379 = vld [vmem:[%s4678 + $0x157] sm:$0xff]
  %v5380 = vld [vmem:[%s4678 + $0x15f] sm:$0xff]
  %v5381 = vld [vmem:[%s4678 + $0x16f] sm:$0xff]
  %v5382 = vld [vmem:[%s4678 + $0x177] sm:$0xff]
  %v5383 = vmul.f32 %v5351, 0.0041460674
  %v5384 = vmul.f32 %v5352, 0.0041460674
  %v5385 = vmul.f32 %v5353, 0.0041460674
  %v5386 = vmul.f32 %v5354, 0.0041460674
  %v5387 = vmul.f32 %v5355, 0.0041460674
  %v5388 = vmul.f32 %v5356, 0.0041460674
  %v5389 = vmul.f32 %v5357, 0.0041460674
  %v5390 = vmul.f32 %v5358, 0.0041460674
  %v5391 = vmul.f32 %v5359, 0.0041460674
  %v5392 = vmul.f32 %v5360, 0.0041460674
  %v5393 = vmul.f32 %v5361, 0.0041460674
  %v5394 = vmul.f32 %v5362, 0.0041460674
  %v5395 = vmul.f32 %v5363, 0.0041460674
  %v5396 = vmul.f32 %v5364, 0.0041460674
  %v5397 = vmul.f32 %v5365, 0.0041460674
  %v5398 = vmul.f32 %v5366, 0.0041460674
  %v5399 = vmul.f32 %v5367, 0.0041460674
  %v5400 = vmul.f32 %v5368, 0.0041460674
  %v5401 = vmul.f32 %v5369, 0.0041460674
  %v5402 = vmul.f32 %v5370, 0.0041460674
  %v5403 = vmul.f32 %v5371, 0.0041460674
  %v5404 = vmul.f32 %v5372, 0.0041460674
  %v5405 = vmul.f32 %v5373, 0.0041460674
  %v5406 = vmul.f32 %v5374, 0.0041460674
  %v5407 = vmul.f32 %v5375, 0.0041460674
  %v5408 = vmul.f32 %v5376, 0.0041460674
  %v5409 = vmul.f32 %v5377, 0.0041460674
  %v5410 = vmul.f32 %v5378, 0.0041460674
  %v5411 = vmul.f32 %v5379, 0.0041460674
  %v5412 = vmul.f32 %v5380, 0.0041460674
  %v5413 = vmul.f32 %v5381, 0.0041460674
  %v5414 = vmul.f32 %v5382, 0.0041460674
  %v5415 = vadd.f32 %v5031, %v5383
  %v5416 = vadd.f32 %v5032, %v5384
  %v5417 = vadd.f32 %v5033, %v5385
  %v5418 = vadd.f32 %v5034, %v5386
  %v5419 = vadd.f32 %v5035, %v5387
  %v5420 = vadd.f32 %v5036, %v5388
  %v5421 = vadd.f32 %v5037, %v5389
  %v5422 = vadd.f32 %v5038, %v5390
  %v5423 = vadd.f32 %v5039, %v5391
  %v5424 = vadd.f32 %v5040, %v5392
  %v5425 = vadd.f32 %v5041, %v5393
  %v5426 = vadd.f32 %v5042, %v5394
  %v5427 = vadd.f32 %v5043, %v5395
  %v5428 = vadd.f32 %v5044, %v5396
  %v5429 = vadd.f32 %v5045, %v5397
  %v5430 = vadd.f32 %v5046, %v5398
  %v5431 = vadd.f32 %v5047, %v5399
  %v5432 = vadd.f32 %v5048, %v5400
  %v5433 = vadd.f32 %v5049, %v5401
  %v5434 = vadd.f32 %v5050, %v5402
  %v5435 = vadd.f32 %v5051, %v5403
  %v5436 = vadd.f32 %v5052, %v5404
  %v5437 = vadd.f32 %v5053, %v5405
  %v5438 = vadd.f32 %v5054, %v5406
  %v5439 = vadd.f32 %v5055, %v5407
  %v5440 = vadd.f32 %v5056, %v5408
  %v5441 = vadd.f32 %v5057, %v5409
  %v5442 = vadd.f32 %v5058, %v5410
  %v5443 = vadd.f32 %v5059, %v5411
  %v5444 = vadd.f32 %v5060, %v5412
  %v5445 = vadd.f32 %v5061, %v5413
  %v5446 = vadd.f32 %v5062, %v5414
  %v5447 = vld [vmem:[%s4678 + $0x10] sm:$0xff]
  %v5448 = vld [vmem:[%s4678 + $0x28] sm:$0xff]
  %v5449 = vld [vmem:[%s4678 + $0x40] sm:$0xff]
  %v5450 = vld [vmem:[%s4678 + $0x58] sm:$0xff]
  %v5451 = vld [vmem:[%s4678 + $0x70] sm:$0xff]
  %v5452 = vld [vmem:[%s4678 + $0x88] sm:$0xff]
  %v5453 = vld [vmem:[%s4678 + $0xa0] sm:$0xff]
  %v5454 = vld [vmem:[%s4678 + $0xb8] sm:$0xff]
  %v5455 = vld [vmem:[%s4678 + $0xd0] sm:$0xff]
  %v5456 = vld [vmem:[%s4678 + $0xe8] sm:$0xff]
  %v5457 = vld [vmem:[%s4678 + $0x100] sm:$0xff]
  %v5458 = vld [vmem:[%s4678 + $0x118] sm:$0xff]
  %v5459 = vld [vmem:[%s4678 + $0x130] sm:$0xff]
  %v5460 = vld [vmem:[%s4678 + $0x148] sm:$0xff]
  %v5461 = vld [vmem:[%s4678 + $0x160] sm:$0xff]
  %v5462 = vld [vmem:[%s4678 + $0x178] sm:$0xff]
  %v5463 = vmul.f32 %v4680, 0.0008751191
  %v5464 = vmul.f32 %v5447, 0.0008751191
  %v5465 = vmul.f32 %v4682, 0.0008751191
  %v5466 = vmul.f32 %v5448, 0.0008751191
  %v5467 = vmul.f32 %v4684, 0.0008751191
  %v5468 = vmul.f32 %v5449, 0.0008751191
  %v5469 = vmul.f32 %v4686, 0.0008751191
  %v5470 = vmul.f32 %v5450, 0.0008751191
  %v5471 = vmul.f32 %v4688, 0.0008751191
  %v5472 = vmul.f32 %v5451, 0.0008751191
  %v5473 = vmul.f32 %v4690, 0.0008751191
  %v5474 = vmul.f32 %v5452, 0.0008751191
  %v5475 = vmul.f32 %v4692, 0.0008751191
  %v5476 = vmul.f32 %v5453, 0.0008751191
  %v5477 = vmul.f32 %v4694, 0.0008751191
  %v5478 = vmul.f32 %v5454, 0.0008751191
  %v5479 = vmul.f32 %v4696, 0.0008751191
  %v5480 = vmul.f32 %v5455, 0.0008751191
  %v5481 = vmul.f32 %v4698, 0.0008751191
  %v5482 = vmul.f32 %v5456, 0.0008751191
  %v5483 = vmul.f32 %v4700, 0.0008751191
  %v5484 = vmul.f32 %v5457, 0.0008751191
  %v5485 = vmul.f32 %v4702, 0.0008751191
  %v5486 = vmul.f32 %v5458, 0.0008751191
  %v5487 = vmul.f32 %v4704, 0.0008751191
  %v5488 = vmul.f32 %v5459, 0.0008751191
  %v5489 = vmul.f32 %v4706, 0.0008751191
  %v5490 = vmul.f32 %v5460, 0.0008751191
  %v5491 = vmul.f32 %v4708, 0.0008751191
  %v5492 = vmul.f32 %v5461, 0.0008751191
  %v5493 = vmul.f32 %v4710, 0.0008751191
  %v5494 = vmul.f32 %v5462, 0.0008751191
  %v5495 = vadd.f32 %v5127, %v5463
  %v5496 = vadd.f32 %v5128, %v5464
  %v5497 = vadd.f32 %v5129, %v5465
  %v5498 = vadd.f32 %v5130, %v5466
  %v5499 = vadd.f32 %v5131, %v5467
  %v5500 = vadd.f32 %v5132, %v5468
  %v5501 = vadd.f32 %v5133, %v5469
  %v5502 = vadd.f32 %v5134, %v5470
  %v5503 = vadd.f32 %v5135, %v5471
  %v5504 = vadd.f32 %v5136, %v5472
  %v5505 = vadd.f32 %v5137, %v5473
  %v5506 = vadd.f32 %v5138, %v5474
  %v5507 = vadd.f32 %v5139, %v5475
  %v5508 = vadd.f32 %v5140, %v5476
  %v5509 = vadd.f32 %v5141, %v5477
  %v5510 = vadd.f32 %v5142, %v5478
  %v5511 = vadd.f32 %v5143, %v5479
  %v5512 = vadd.f32 %v5144, %v5480
  %v5513 = vadd.f32 %v5145, %v5481
  %v5514 = vadd.f32 %v5146, %v5482
  %v5515 = vadd.f32 %v5147, %v5483
  %v5516 = vadd.f32 %v5148, %v5484
  %v5517 = vadd.f32 %v5149, %v5485
  %v5518 = vadd.f32 %v5150, %v5486
  %v5519 = vadd.f32 %v5151, %v5487
  %v5520 = vadd.f32 %v5152, %v5488
  %v5521 = vadd.f32 %v5153, %v5489
  %v5522 = vadd.f32 %v5154, %v5490
  %v5523 = vadd.f32 %v5155, %v5491
  %v5524 = vadd.f32 %v5156, %v5492
  %v5525 = vadd.f32 %v5157, %v5493
  %v5526 = vadd.f32 %v5158, %v5494
  %s5527 = scalar_lea.vmem [#allocation2], 168
  %v5528 = vld [vmem:[%s5527 + $0x1] sm:$0xff]
  %v5529 = vld [vmem:[%s5527 + $0x9] sm:$0xff]
  %v5530 = vld [vmem:[%s5527 + $0x19] sm:$0xff]
  %v5531 = vld [vmem:[%s5527 + $0x21] sm:$0xff]
  %v5532 = vld [vmem:[%s5527 + $0x31] sm:$0xff]
  %v5533 = vld [vmem:[%s5527 + $0x39] sm:$0xff]
  %v5534 = vld [vmem:[%s5527 + $0x49] sm:$0xff]
  %v5535 = vld [vmem:[%s5527 + $0x51] sm:$0xff]
  %v5536 = vld [vmem:[%s5527 + $0x61] sm:$0xff]
  %v5537 = vld [vmem:[%s5527 + $0x69] sm:$0xff]
  %v5538 = vld [vmem:[%s5527 + $0x79] sm:$0xff]
  %v5539 = vld [vmem:[%s5527 + $0x81] sm:$0xff]
  %v5540 = vld [vmem:[%s5527 + $0x91] sm:$0xff]
  %v5541 = vld [vmem:[%s5527 + $0x99] sm:$0xff]
  %v5542 = vld [vmem:[%s5527 + $0xa9] sm:$0xff]
  %v5543 = vld [vmem:[%s5527 + $0xb1] sm:$0xff]
  %v5544 = vld [vmem:[%s5527 + $0xc1] sm:$0xff]
  %v5545 = vld [vmem:[%s5527 + $0xc9] sm:$0xff]
  %v5546 = vld [vmem:[%s5527 + $0xd9] sm:$0xff]
  %v5547 = vld [vmem:[%s5527 + $0xe1] sm:$0xff]
  %v5548 = vld [vmem:[%s5527 + $0xf1] sm:$0xff]
  %v5549 = vld [vmem:[%s5527 + $0xf9] sm:$0xff]
  %v5550 = vld [vmem:[%s5527 + $0x109] sm:$0xff]
  %v5551 = vld [vmem:[%s5527 + $0x111] sm:$0xff]
  %v5552 = vld [vmem:[%s5527 + $0x121] sm:$0xff]
  %v5553 = vld [vmem:[%s5527 + $0x129] sm:$0xff]
  %v5554 = vld [vmem:[%s5527 + $0x139] sm:$0xff]
  %v5555 = vld [vmem:[%s5527 + $0x141] sm:$0xff]
  %v5556 = vld [vmem:[%s5527 + $0x151] sm:$0xff]
  %v5557 = vld [vmem:[%s5527 + $0x159] sm:$0xff]
  %v5558 = vld [vmem:[%s5527 + $0x169] sm:$0xff]
  %v5559 = vld [vmem:[%s5527 + $0x171] sm:$0xff]
  %v5560 = vmul.f32 %v5528, 0.020765051
  %v5561 = vmul.f32 %v5529, 0.020765051
  %v5562 = vmul.f32 %v5530, 0.020765051
  %v5563 = vmul.f32 %v5531, 0.020765051
  %v5564 = vmul.f32 %v5532, 0.020765051
  %v5565 = vmul.f32 %v5533, 0.020765051
  %v5566 = vmul.f32 %v5534, 0.020765051
  %v5567 = vmul.f32 %v5535, 0.020765051
  %v5568 = vmul.f32 %v5536, 0.020765051
  %v5569 = vmul.f32 %v5537, 0.020765051
  %v5570 = vmul.f32 %v5538, 0.020765051
  %v5571 = vmul.f32 %v5539, 0.020765051
  %v5572 = vmul.f32 %v5540, 0.020765051
  %v5573 = vmul.f32 %v5541, 0.020765051
  %v5574 = vmul.f32 %v5542, 0.020765051
  %v5575 = vmul.f32 %v5543, 0.020765051
  %v5576 = vmul.f32 %v5544, 0.020765051
  %v5577 = vmul.f32 %v5545, 0.020765051
  %v5578 = vmul.f32 %v5546, 0.020765051
  %v5579 = vmul.f32 %v5547, 0.020765051
  %v5580 = vmul.f32 %v5548, 0.020765051
  %v5581 = vmul.f32 %v5549, 0.020765051
  %v5582 = vmul.f32 %v5550, 0.020765051
  %v5583 = vmul.f32 %v5551, 0.020765051
  %v5584 = vmul.f32 %v5552, 0.020765051
  %v5585 = vmul.f32 %v5553, 0.020765051
  %v5586 = vmul.f32 %v5554, 0.020765051
  %v5587 = vmul.f32 %v5555, 0.020765051
  %v5588 = vmul.f32 %v5556, 0.020765051
  %v5589 = vmul.f32 %v5557, 0.020765051
  %v5590 = vmul.f32 %v5558, 0.020765051
  %v5591 = vmul.f32 %v5559, 0.020765051
  %v5592 = vadd.f32 %v5223, %v5560
  %v5593 = vadd.f32 %v5224, %v5561
  %v5594 = vadd.f32 %v5225, %v5562
  %v5595 = vadd.f32 %v5226, %v5563
  %v5596 = vadd.f32 %v5227, %v5564
  %v5597 = vadd.f32 %v5228, %v5565
  %v5598 = vadd.f32 %v5229, %v5566
  %v5599 = vadd.f32 %v5230, %v5567
  %v5600 = vadd.f32 %v5231, %v5568
  %v5601 = vadd.f32 %v5232, %v5569
  %v5602 = vadd.f32 %v5233, %v5570
  %v5603 = vadd.f32 %v5234, %v5571
  %v5604 = vadd.f32 %v5235, %v5572
  %v5605 = vadd.f32 %v5236, %v5573
  %v5606 = vadd.f32 %v5237, %v5574
  %v5607 = vadd.f32 %v5238, %v5575
  %v5608 = vadd.f32 %v5239, %v5576
  %v5609 = vadd.f32 %v5240, %v5577
  %v5610 = vadd.f32 %v5241, %v5578
  %v5611 = vadd.f32 %v5242, %v5579
  %v5612 = vadd.f32 %v5243, %v5580
  %v5613 = vadd.f32 %v5244, %v5581
  %v5614 = vadd.f32 %v5245, %v5582
  %v5615 = vadd.f32 %v5246, %v5583
  %v5616 = vadd.f32 %v5247, %v5584
  %v5617 = vadd.f32 %v5248, %v5585
  %v5618 = vadd.f32 %v5249, %v5586
  %v5619 = vadd.f32 %v5250, %v5587
  %v5620 = vadd.f32 %v5251, %v5588
  %v5621 = vadd.f32 %v5252, %v5589
  %v5622 = vadd.f32 %v5253, %v5590
  %v5623 = vadd.f32 %v5254, %v5591
  %v5624 = vld [vmem:[%s5527 + $0x2] sm:$0xff]
  %v5625 = vld [vmem:[%s5527 + $0xa] sm:$0xff]
  %v5626 = vld [vmem:[%s5527 + $0x1a] sm:$0xff]
  %v5627 = vld [vmem:[%s5527 + $0x22] sm:$0xff]
  %v5628 = vld [vmem:[%s5527 + $0x32] sm:$0xff]
  %v5629 = vld [vmem:[%s5527 + $0x3a] sm:$0xff]
  %v5630 = vld [vmem:[%s5527 + $0x4a] sm:$0xff]
  %v5631 = vld [vmem:[%s5527 + $0x52] sm:$0xff]
  %v5632 = vld [vmem:[%s5527 + $0x62] sm:$0xff]
  %v5633 = vld [vmem:[%s5527 + $0x6a] sm:$0xff]
  %v5634 = vld [vmem:[%s5527 + $0x7a] sm:$0xff]
  %v5635 = vld [vmem:[%s5527 + $0x82] sm:$0xff]
  %v5636 = vld [vmem:[%s5527 + $0x92] sm:$0xff]
  %v5637 = vld [vmem:[%s5527 + $0x9a] sm:$0xff]
  %v5638 = vld [vmem:[%s5527 + $0xaa] sm:$0xff]
  %v5639 = vld [vmem:[%s5527 + $0xb2] sm:$0xff]
  %v5640 = vld [vmem:[%s5527 + $0xc2] sm:$0xff]
  %v5641 = vld [vmem:[%s5527 + $0xca] sm:$0xff]
  %v5642 = vld [vmem:[%s5527 + $0xda] sm:$0xff]
  %v5643 = vld [vmem:[%s5527 + $0xe2] sm:$0xff]
  %v5644 = vld [vmem:[%s5527 + $0xf2] sm:$0xff]
  %v5645 = vld [vmem:[%s5527 + $0xfa] sm:$0xff]
  %v5646 = vld [vmem:[%s5527 + $0x10a] sm:$0xff]
  %v5647 = vld [vmem:[%s5527 + $0x112] sm:$0xff]
  %v5648 = vld [vmem:[%s5527 + $0x122] sm:$0xff]
  %v5649 = vld [vmem:[%s5527 + $0x12a] sm:$0xff]
  %v5650 = vld [vmem:[%s5527 + $0x13a] sm:$0xff]
  %v5651 = vld [vmem:[%s5527 + $0x142] sm:$0xff]
  %v5652 = vld [vmem:[%s5527 + $0x152] sm:$0xff]
  %v5653 = vld [vmem:[%s5527 + $0x15a] sm:$0xff]
  %v5654 = vld [vmem:[%s5527 + $0x16a] sm:$0xff]
  %v5655 = vld [vmem:[%s5527 + $0x172] sm:$0xff]
  %v5656 = vmul.f32 %v5624, 0.011749691
  %v5657 = vmul.f32 %v5625, 0.011749691
  %v5658 = vmul.f32 %v5626, 0.011749691
  %v5659 = vmul.f32 %v5627, 0.011749691
  %v5660 = vmul.f32 %v5628, 0.011749691
  %v5661 = vmul.f32 %v5629, 0.011749691
  %v5662 = vmul.f32 %v5630, 0.011749691
  %v5663 = vmul.f32 %v5631, 0.011749691
  %v5664 = vmul.f32 %v5632, 0.011749691
  %v5665 = vmul.f32 %v5633, 0.011749691
  %v5666 = vmul.f32 %v5634, 0.011749691
  %v5667 = vmul.f32 %v5635, 0.011749691
  %v5668 = vmul.f32 %v5636, 0.011749691
  %v5669 = vmul.f32 %v5637, 0.011749691
  %v5670 = vmul.f32 %v5638, 0.011749691
  %v5671 = vmul.f32 %v5639, 0.011749691
  %v5672 = vmul.f32 %v5640, 0.011749691
  %v5673 = vmul.f32 %v5641, 0.011749691
  %v5674 = vmul.f32 %v5642, 0.011749691
  %v5675 = vmul.f32 %v5643, 0.011749691
  %v5676 = vmul.f32 %v5644, 0.011749691
  %v5677 = vmul.f32 %v5645, 0.011749691
  %v5678 = vmul.f32 %v5646, 0.011749691
  %v5679 = vmul.f32 %v5647, 0.011749691
  %v5680 = vmul.f32 %v5648, 0.011749691
  %v5681 = vmul.f32 %v5649, 0.011749691
  %v5682 = vmul.f32 %v5650, 0.011749691
  %v5683 = vmul.f32 %v5651, 0.011749691
  %v5684 = vmul.f32 %v5652, 0.011749691
  %v5685 = vmul.f32 %v5653, 0.011749691
  %v5686 = vmul.f32 %v5654, 0.011749691
  %v5687 = vmul.f32 %v5655, 0.011749691
  %v5688 = vadd.f32 %v5319, %v5656
  %v5689 = vadd.f32 %v5320, %v5657
  %v5690 = vadd.f32 %v5321, %v5658
  %v5691 = vadd.f32 %v5322, %v5659
  %v5692 = vadd.f32 %v5323, %v5660
  %v5693 = vadd.f32 %v5324, %v5661
  %v5694 = vadd.f32 %v5325, %v5662
  %v5695 = vadd.f32 %v5326, %v5663
  %v5696 = vadd.f32 %v5327, %v5664
  %v5697 = vadd.f32 %v5328, %v5665
  %v5698 = vadd.f32 %v5329, %v5666
  %v5699 = vadd.f32 %v5330, %v5667
  %v5700 = vadd.f32 %v5331, %v5668
  %v5701 = vadd.f32 %v5332, %v5669
  %v5702 = vadd.f32 %v5333, %v5670
  %v5703 = vadd.f32 %v5334, %v5671
  %v5704 = vadd.f32 %v5335, %v5672
  %v5705 = vadd.f32 %v5336, %v5673
  %v5706 = vadd.f32 %v5337, %v5674
  %v5707 = vadd.f32 %v5338, %v5675
  %v5708 = vadd.f32 %v5339, %v5676
  %v5709 = vadd.f32 %v5340, %v5677
  %v5710 = vadd.f32 %v5341, %v5678
  %v5711 = vadd.f32 %v5342, %v5679
  %v5712 = vadd.f32 %v5343, %v5680
  %v5713 = vadd.f32 %v5344, %v5681
  %v5714 = vadd.f32 %v5345, %v5682
  %v5715 = vadd.f32 %v5346, %v5683
  %v5716 = vadd.f32 %v5347, %v5684
  %v5717 = vadd.f32 %v5348, %v5685
  %v5718 = vadd.f32 %v5349, %v5686
  %v5719 = vadd.f32 %v5350, %v5687
  %v5720 = vld [vmem:[%s5527 + $0x3] sm:$0xff]
  %v5721 = vld [vmem:[%s5527 + $0xb] sm:$0xff]
  %v5722 = vld [vmem:[%s5527 + $0x1b] sm:$0xff]
  %v5723 = vld [vmem:[%s5527 + $0x23] sm:$0xff]
  %v5724 = vld [vmem:[%s5527 + $0x33] sm:$0xff]
  %v5725 = vld [vmem:[%s5527 + $0x3b] sm:$0xff]
  %v5726 = vld [vmem:[%s5527 + $0x4b] sm:$0xff]
  %v5727 = vld [vmem:[%s5527 + $0x53] sm:$0xff]
  %v5728 = vld [vmem:[%s5527 + $0x63] sm:$0xff]
  %v5729 = vld [vmem:[%s5527 + $0x6b] sm:$0xff]
  %v5730 = vld [vmem:[%s5527 + $0x7b] sm:$0xff]
  %v5731 = vld [vmem:[%s5527 + $0x83] sm:$0xff]
  %v5732 = vld [vmem:[%s5527 + $0x93] sm:$0xff]
  %v5733 = vld [vmem:[%s5527 + $0x9b] sm:$0xff]
  %v5734 = vld [vmem:[%s5527 + $0xab] sm:$0xff]
  %v5735 = vld [vmem:[%s5527 + $0xb3] sm:$0xff]
  %v5736 = vld [vmem:[%s5527 + $0xc3] sm:$0xff]
  %v5737 = vld [vmem:[%s5527 + $0xcb] sm:$0xff]
  %v5738 = vld [vmem:[%s5527 + $0xdb] sm:$0xff]
  %v5739 = vld [vmem:[%s5527 + $0xe3] sm:$0xff]
  %v5740 = vld [vmem:[%s5527 + $0xf3] sm:$0xff]
  %v5741 = vld [vmem:[%s5527 + $0xfb] sm:$0xff]
  %v5742 = vld [vmem:[%s5527 + $0x10b] sm:$0xff]
  %v5743 = vld [vmem:[%s5527 + $0x113] sm:$0xff]
  %v5744 = vld [vmem:[%s5527 + $0x123] sm:$0xff]
  %v5745 = vld [vmem:[%s5527 + $0x12b] sm:$0xff]
  %v5746 = vld [vmem:[%s5527 + $0x13b] sm:$0xff]
  %v5747 = vld [vmem:[%s5527 + $0x143] sm:$0xff]
  %v5748 = vld [vmem:[%s5527 + $0x153] sm:$0xff]
  %v5749 = vld [vmem:[%s5527 + $0x15b] sm:$0xff]
  %v5750 = vld [vmem:[%s5527 + $0x16b] sm:$0xff]
  %v5751 = vld [vmem:[%s5527 + $0x173] sm:$0xff]
  %v5752 = vmul.f32 %v5720, 0.012594641
  %v5753 = vmul.f32 %v5721, 0.012594641
  %v5754 = vmul.f32 %v5722, 0.012594641
  %v5755 = vmul.f32 %v5723, 0.012594641
  %v5756 = vmul.f32 %v5724, 0.012594641
  %v5757 = vmul.f32 %v5725, 0.012594641
  %v5758 = vmul.f32 %v5726, 0.012594641
  %v5759 = vmul.f32 %v5727, 0.012594641
  %v5760 = vmul.f32 %v5728, 0.012594641
  %v5761 = vmul.f32 %v5729, 0.012594641
  %v5762 = vmul.f32 %v5730, 0.012594641
  %v5763 = vmul.f32 %v5731, 0.012594641
  %v5764 = vmul.f32 %v5732, 0.012594641
  %v5765 = vmul.f32 %v5733, 0.012594641
  %v5766 = vmul.f32 %v5734, 0.012594641
  %v5767 = vmul.f32 %v5735, 0.012594641
  %v5768 = vmul.f32 %v5736, 0.012594641
  %v5769 = vmul.f32 %v5737, 0.012594641
  %v5770 = vmul.f32 %v5738, 0.012594641
  %v5771 = vmul.f32 %v5739, 0.012594641
  %v5772 = vmul.f32 %v5740, 0.012594641
  %v5773 = vmul.f32 %v5741, 0.012594641
  %v5774 = vmul.f32 %v5742, 0.012594641
  %v5775 = vmul.f32 %v5743, 0.012594641
  %v5776 = vmul.f32 %v5744, 0.012594641
  %v5777 = vmul.f32 %v5745, 0.012594641
  %v5778 = vmul.f32 %v5746, 0.012594641
  %v5779 = vmul.f32 %v5747, 0.012594641
  %v5780 = vmul.f32 %v5748, 0.012594641
  %v5781 = vmul.f32 %v5749, 0.012594641
  %v5782 = vmul.f32 %v5750, 0.012594641
  %v5783 = vmul.f32 %v5751, 0.012594641
  %v5784 = vadd.f32 %v5415, %v5752
  %v5785 = vadd.f32 %v5416, %v5753
  %v5786 = vadd.f32 %v5417, %v5754
  %v5787 = vadd.f32 %v5418, %v5755
  %v5788 = vadd.f32 %v5419, %v5756
  %v5789 = vadd.f32 %v5420, %v5757
  %v5790 = vadd.f32 %v5421, %v5758
  %v5791 = vadd.f32 %v5422, %v5759
  %v5792 = vadd.f32 %v5423, %v5760
  %v5793 = vadd.f32 %v5424, %v5761
  %v5794 = vadd.f32 %v5425, %v5762
  %v5795 = vadd.f32 %v5426, %v5763
  %v5796 = vadd.f32 %v5427, %v5764
  %v5797 = vadd.f32 %v5428, %v5765
  %v5798 = vadd.f32 %v5429, %v5766
  %v5799 = vadd.f32 %v5430, %v5767
  %v5800 = vadd.f32 %v5431, %v5768
  %v5801 = vadd.f32 %v5432, %v5769
  %v5802 = vadd.f32 %v5433, %v5770
  %v5803 = vadd.f32 %v5434, %v5771
  %v5804 = vadd.f32 %v5435, %v5772
  %v5805 = vadd.f32 %v5436, %v5773
  %v5806 = vadd.f32 %v5437, %v5774
  %v5807 = vadd.f32 %v5438, %v5775
  %v5808 = vadd.f32 %v5439, %v5776
  %v5809 = vadd.f32 %v5440, %v5777
  %v5810 = vadd.f32 %v5441, %v5778
  %v5811 = vadd.f32 %v5442, %v5779
  %v5812 = vadd.f32 %v5443, %v5780
  %v5813 = vadd.f32 %v5444, %v5781
  %v5814 = vadd.f32 %v5445, %v5782
  %v5815 = vadd.f32 %v5446, %v5783
  %v5816 = vld [vmem:[%s5527 + $0x4] sm:$0xff]
  %v5817 = vld [vmem:[%s5527 + $0xc] sm:$0xff]
  %v5818 = vld [vmem:[%s5527 + $0x1c] sm:$0xff]
  %v5819 = vld [vmem:[%s5527 + $0x24] sm:$0xff]
  %v5820 = vld [vmem:[%s5527 + $0x34] sm:$0xff]
  %v5821 = vld [vmem:[%s5527 + $0x3c] sm:$0xff]
  %v5822 = vld [vmem:[%s5527 + $0x4c] sm:$0xff]
  %v5823 = vld [vmem:[%s5527 + $0x54] sm:$0xff]
  %v5824 = vld [vmem:[%s5527 + $0x64] sm:$0xff]
  %v5825 = vld [vmem:[%s5527 + $0x6c] sm:$0xff]
  %v5826 = vld [vmem:[%s5527 + $0x7c] sm:$0xff]
  %v5827 = vld [vmem:[%s5527 + $0x84] sm:$0xff]
  %v5828 = vld [vmem:[%s5527 + $0x94] sm:$0xff]
  %v5829 = vld [vmem:[%s5527 + $0x9c] sm:$0xff]
  %v5830 = vld [vmem:[%s5527 + $0xac] sm:$0xff]
  %v5831 = vld [vmem:[%s5527 + $0xb4] sm:$0xff]
  %v5832 = vld [vmem:[%s5527 + $0xc4] sm:$0xff]
  %v5833 = vld [vmem:[%s5527 + $0xcc] sm:$0xff]
  %v5834 = vld [vmem:[%s5527 + $0xdc] sm:$0xff]
  %v5835 = vld [vmem:[%s5527 + $0xe4] sm:$0xff]
  %v5836 = vld [vmem:[%s5527 + $0xf4] sm:$0xff]
  %v5837 = vld [vmem:[%s5527 + $0xfc] sm:$0xff]
  %v5838 = vld [vmem:[%s5527 + $0x10c] sm:$0xff]
  %v5839 = vld [vmem:[%s5527 + $0x114] sm:$0xff]
  %v5840 = vld [vmem:[%s5527 + $0x124] sm:$0xff]
  %v5841 = vld [vmem:[%s5527 + $0x12c] sm:$0xff]
  %v5842 = vld [vmem:[%s5527 + $0x13c] sm:$0xff]
  %v5843 = vld [vmem:[%s5527 + $0x144] sm:$0xff]
  %v5844 = vld [vmem:[%s5527 + $0x154] sm:$0xff]
  %v5845 = vld [vmem:[%s5527 + $0x15c] sm:$0xff]
  %v5846 = vld [vmem:[%s5527 + $0x16c] sm:$0xff]
  %v5847 = vld [vmem:[%s5527 + $0x174] sm:$0xff]
  %v5848 = vmul.f32 %v5816, 0.0043224697
  %v5849 = vmul.f32 %v5817, 0.0043224697
  %v5850 = vmul.f32 %v5818, 0.0043224697
  %v5851 = vmul.f32 %v5819, 0.0043224697
  %v5852 = vmul.f32 %v5820, 0.0043224697
  %v5853 = vmul.f32 %v5821, 0.0043224697
  %v5854 = vmul.f32 %v5822, 0.0043224697
  %v5855 = vmul.f32 %v5823, 0.0043224697
  %v5856 = vmul.f32 %v5824, 0.0043224697
  %v5857 = vmul.f32 %v5825, 0.0043224697
  %v5858 = vmul.f32 %v5826, 0.0043224697
  %v5859 = vmul.f32 %v5827, 0.0043224697
  %v5860 = vmul.f32 %v5828, 0.0043224697
  %v5861 = vmul.f32 %v5829, 0.0043224697
  %v5862 = vmul.f32 %v5830, 0.0043224697
  %v5863 = vmul.f32 %v5831, 0.0043224697
  %v5864 = vmul.f32 %v5832, 0.0043224697
  %v5865 = vmul.f32 %v5833, 0.0043224697
  %v5866 = vmul.f32 %v5834, 0.0043224697
  %v5867 = vmul.f32 %v5835, 0.0043224697
  %v5868 = vmul.f32 %v5836, 0.0043224697
  %v5869 = vmul.f32 %v5837, 0.0043224697
  %v5870 = vmul.f32 %v5838, 0.0043224697
  %v5871 = vmul.f32 %v5839, 0.0043224697
  %v5872 = vmul.f32 %v5840, 0.0043224697
  %v5873 = vmul.f32 %v5841, 0.0043224697
  %v5874 = vmul.f32 %v5842, 0.0043224697
  %v5875 = vmul.f32 %v5843, 0.0043224697
  %v5876 = vmul.f32 %v5844, 0.0043224697
  %v5877 = vmul.f32 %v5845, 0.0043224697
  %v5878 = vmul.f32 %v5846, 0.0043224697
  %v5879 = vmul.f32 %v5847, 0.0043224697
  %v5880 = vadd.f32 %v5495, %v5848
  %v5881 = vadd.f32 %v5496, %v5849
  %v5882 = vadd.f32 %v5497, %v5850
  %v5883 = vadd.f32 %v5498, %v5851
  %v5884 = vadd.f32 %v5499, %v5852
  %v5885 = vadd.f32 %v5500, %v5853
  %v5886 = vadd.f32 %v5501, %v5854
  %v5887 = vadd.f32 %v5502, %v5855
  %v5888 = vadd.f32 %v5503, %v5856
  %v5889 = vadd.f32 %v5504, %v5857
  %v5890 = vadd.f32 %v5505, %v5858
  %v5891 = vadd.f32 %v5506, %v5859
  %v5892 = vadd.f32 %v5507, %v5860
  %v5893 = vadd.f32 %v5508, %v5861
  %v5894 = vadd.f32 %v5509, %v5862
  %v5895 = vadd.f32 %v5510, %v5863
  %v5896 = vadd.f32 %v5511, %v5864
  %v5897 = vadd.f32 %v5512, %v5865
  %v5898 = vadd.f32 %v5513, %v5866
  %v5899 = vadd.f32 %v5514, %v5867
  %v5900 = vadd.f32 %v5515, %v5868
  %v5901 = vadd.f32 %v5516, %v5869
  %v5902 = vadd.f32 %v5517, %v5870
  %v5903 = vadd.f32 %v5518, %v5871
  %v5904 = vadd.f32 %v5519, %v5872
  %v5905 = vadd.f32 %v5520, %v5873
  %v5906 = vadd.f32 %v5521, %v5874
  %v5907 = vadd.f32 %v5522, %v5875
  %v5908 = vadd.f32 %v5523, %v5876
  %v5909 = vadd.f32 %v5524, %v5877
  %v5910 = vadd.f32 %v5525, %v5878
  %v5911 = vadd.f32 %v5526, %v5879
  %v5912 = vld [vmem:[%s5527 + $0x5] sm:$0xff]
  %v5913 = vld [vmem:[%s5527 + $0xd] sm:$0xff]
  %v5914 = vld [vmem:[%s5527 + $0x1d] sm:$0xff]
  %v5915 = vld [vmem:[%s5527 + $0x25] sm:$0xff]
  %v5916 = vld [vmem:[%s5527 + $0x35] sm:$0xff]
  %v5917 = vld [vmem:[%s5527 + $0x3d] sm:$0xff]
  %v5918 = vld [vmem:[%s5527 + $0x4d] sm:$0xff]
  %v5919 = vld [vmem:[%s5527 + $0x55] sm:$0xff]
  %v5920 = vld [vmem:[%s5527 + $0x65] sm:$0xff]
  %v5921 = vld [vmem:[%s5527 + $0x6d] sm:$0xff]
  %v5922 = vld [vmem:[%s5527 + $0x7d] sm:$0xff]
  %v5923 = vld [vmem:[%s5527 + $0x85] sm:$0xff]
  %v5924 = vld [vmem:[%s5527 + $0x95] sm:$0xff]
  %v5925 = vld [vmem:[%s5527 + $0x9d] sm:$0xff]
  %v5926 = vld [vmem:[%s5527 + $0xad] sm:$0xff]
  %v5927 = vld [vmem:[%s5527 + $0xb5] sm:$0xff]
  %v5928 = vld [vmem:[%s5527 + $0xc5] sm:$0xff]
  %v5929 = vld [vmem:[%s5527 + $0xcd] sm:$0xff]
  %v5930 = vld [vmem:[%s5527 + $0xdd] sm:$0xff]
  %v5931 = vld [vmem:[%s5527 + $0xe5] sm:$0xff]
  %v5932 = vld [vmem:[%s5527 + $0xf5] sm:$0xff]
  %v5933 = vld [vmem:[%s5527 + $0xfd] sm:$0xff]
  %v5934 = vld [vmem:[%s5527 + $0x10d] sm:$0xff]
  %v5935 = vld [vmem:[%s5527 + $0x115] sm:$0xff]
  %v5936 = vld [vmem:[%s5527 + $0x125] sm:$0xff]
  %v5937 = vld [vmem:[%s5527 + $0x12d] sm:$0xff]
  %v5938 = vld [vmem:[%s5527 + $0x13d] sm:$0xff]
  %v5939 = vld [vmem:[%s5527 + $0x145] sm:$0xff]
  %v5940 = vld [vmem:[%s5527 + $0x155] sm:$0xff]
  %v5941 = vld [vmem:[%s5527 + $0x15d] sm:$0xff]
  %v5942 = vld [vmem:[%s5527 + $0x16d] sm:$0xff]
  %v5943 = vld [vmem:[%s5527 + $0x175] sm:$0xff]
  %v5944 = vmul.f32 %v5912, 0.0043224697
  %v5945 = vmul.f32 %v5913, 0.0043224697
  %v5946 = vmul.f32 %v5914, 0.0043224697
  %v5947 = vmul.f32 %v5915, 0.0043224697
  %v5948 = vmul.f32 %v5916, 0.0043224697
  %v5949 = vmul.f32 %v5917, 0.0043224697
  %v5950 = vmul.f32 %v5918, 0.0043224697
  %v5951 = vmul.f32 %v5919, 0.0043224697
  %v5952 = vmul.f32 %v5920, 0.0043224697
  %v5953 = vmul.f32 %v5921, 0.0043224697
  %v5954 = vmul.f32 %v5922, 0.0043224697
  %v5955 = vmul.f32 %v5923, 0.0043224697
  %v5956 = vmul.f32 %v5924, 0.0043224697
  %v5957 = vmul.f32 %v5925, 0.0043224697
  %v5958 = vmul.f32 %v5926, 0.0043224697
  %v5959 = vmul.f32 %v5927, 0.0043224697
  %v5960 = vmul.f32 %v5928, 0.0043224697
  %v5961 = vmul.f32 %v5929, 0.0043224697
  %v5962 = vmul.f32 %v5930, 0.0043224697
  %v5963 = vmul.f32 %v5931, 0.0043224697
  %v5964 = vmul.f32 %v5932, 0.0043224697
  %v5965 = vmul.f32 %v5933, 0.0043224697
  %v5966 = vmul.f32 %v5934, 0.0043224697
  %v5967 = vmul.f32 %v5935, 0.0043224697
  %v5968 = vmul.f32 %v5936, 0.0043224697
  %v5969 = vmul.f32 %v5937, 0.0043224697
  %v5970 = vmul.f32 %v5938, 0.0043224697
  %v5971 = vmul.f32 %v5939, 0.0043224697
  %v5972 = vmul.f32 %v5940, 0.0043224697
  %v5973 = vmul.f32 %v5941, 0.0043224697
  %v5974 = vmul.f32 %v5942, 0.0043224697
  %v5975 = vmul.f32 %v5943, 0.0043224697
  %v5976 = vadd.f32 %v5592, %v5944
  %v5977 = vadd.f32 %v5593, %v5945
  %v5978 = vadd.f32 %v5594, %v5946
  %v5979 = vadd.f32 %v5595, %v5947
  %v5980 = vadd.f32 %v5596, %v5948
  %v5981 = vadd.f32 %v5597, %v5949
  %v5982 = vadd.f32 %v5598, %v5950
  %v5983 = vadd.f32 %v5599, %v5951
  %v5984 = vadd.f32 %v5600, %v5952
  %v5985 = vadd.f32 %v5601, %v5953
  %v5986 = vadd.f32 %v5602, %v5954
  %v5987 = vadd.f32 %v5603, %v5955
  %v5988 = vadd.f32 %v5604, %v5956
  %v5989 = vadd.f32 %v5605, %v5957
  %v5990 = vadd.f32 %v5606, %v5958
  %v5991 = vadd.f32 %v5607, %v5959
  %v5992 = vadd.f32 %v5608, %v5960
  %v5993 = vadd.f32 %v5609, %v5961
  %v5994 = vadd.f32 %v5610, %v5962
  %v5995 = vadd.f32 %v5611, %v5963
  %v5996 = vadd.f32 %v5612, %v5964
  %v5997 = vadd.f32 %v5613, %v5965
  %v5998 = vadd.f32 %v5614, %v5966
  %v5999 = vadd.f32 %v5615, %v5967
  %v6000 = vadd.f32 %v5616, %v5968
  %v6001 = vadd.f32 %v5617, %v5969
  %v6002 = vadd.f32 %v5618, %v5970
  %v6003 = vadd.f32 %v5619, %v5971
  %v6004 = vadd.f32 %v5620, %v5972
  %v6005 = vadd.f32 %v5621, %v5973
  %v6006 = vadd.f32 %v5622, %v5974
  %v6007 = vadd.f32 %v5623, %v5975
  %v6008 = vld [vmem:[%s5527 + $0x6] sm:$0xff]
  %v6009 = vld [vmem:[%s5527 + $0xe] sm:$0xff]
  %v6010 = vld [vmem:[%s5527 + $0x1e] sm:$0xff]
  %v6011 = vld [vmem:[%s5527 + $0x26] sm:$0xff]
  %v6012 = vld [vmem:[%s5527 + $0x36] sm:$0xff]
  %v6013 = vld [vmem:[%s5527 + $0x3e] sm:$0xff]
  %v6014 = vld [vmem:[%s5527 + $0x4e] sm:$0xff]
  %v6015 = vld [vmem:[%s5527 + $0x56] sm:$0xff]
  %v6016 = vld [vmem:[%s5527 + $0x66] sm:$0xff]
  %v6017 = vld [vmem:[%s5527 + $0x6e] sm:$0xff]
  %v6018 = vld [vmem:[%s5527 + $0x7e] sm:$0xff]
  %v6019 = vld [vmem:[%s5527 + $0x86] sm:$0xff]
  %v6020 = vld [vmem:[%s5527 + $0x96] sm:$0xff]
  %v6021 = vld [vmem:[%s5527 + $0x9e] sm:$0xff]
  %v6022 = vld [vmem:[%s5527 + $0xae] sm:$0xff]
  %v6023 = vld [vmem:[%s5527 + $0xb6] sm:$0xff]
  %v6024 = vld [vmem:[%s5527 + $0xc6] sm:$0xff]
  %v6025 = vld [vmem:[%s5527 + $0xce] sm:$0xff]
  %v6026 = vld [vmem:[%s5527 + $0xde] sm:$0xff]
  %v6027 = vld [vmem:[%s5527 + $0xe6] sm:$0xff]
  %v6028 = vld [vmem:[%s5527 + $0xf6] sm:$0xff]
  %v6029 = vld [vmem:[%s5527 + $0xfe] sm:$0xff]
  %v6030 = vld [vmem:[%s5527 + $0x10e] sm:$0xff]
  %v6031 = vld [vmem:[%s5527 + $0x116] sm:$0xff]
  %v6032 = vld [vmem:[%s5527 + $0x126] sm:$0xff]
  %v6033 = vld [vmem:[%s5527 + $0x12e] sm:$0xff]
  %v6034 = vld [vmem:[%s5527 + $0x13e] sm:$0xff]
  %v6035 = vld [vmem:[%s5527 + $0x146] sm:$0xff]
  %v6036 = vld [vmem:[%s5527 + $0x156] sm:$0xff]
  %v6037 = vld [vmem:[%s5527 + $0x15e] sm:$0xff]
  %v6038 = vld [vmem:[%s5527 + $0x16e] sm:$0xff]
  %v6039 = vld [vmem:[%s5527 + $0x176] sm:$0xff]
  %v6040 = vmul.f32 %v6008, 0.0009251127
  %v6041 = vmul.f32 %v6009, 0.0009251127
  %v6042 = vmul.f32 %v6010, 0.0009251127
  %v6043 = vmul.f32 %v6011, 0.0009251127
  %v6044 = vmul.f32 %v6012, 0.0009251127
  %v6045 = vmul.f32 %v6013, 0.0009251127
  %v6046 = vmul.f32 %v6014, 0.0009251127
  %v6047 = vmul.f32 %v6015, 0.0009251127
  %v6048 = vmul.f32 %v6016, 0.0009251127
  %v6049 = vmul.f32 %v6017, 0.0009251127
  %v6050 = vmul.f32 %v6018, 0.0009251127
  %v6051 = vmul.f32 %v6019, 0.0009251127
  %v6052 = vmul.f32 %v6020, 0.0009251127
  %v6053 = vmul.f32 %v6021, 0.0009251127
  %v6054 = vmul.f32 %v6022, 0.0009251127
  %v6055 = vmul.f32 %v6023, 0.0009251127
  %v6056 = vmul.f32 %v6024, 0.0009251127
  %v6057 = vmul.f32 %v6025, 0.0009251127
  %v6058 = vmul.f32 %v6026, 0.0009251127
  %v6059 = vmul.f32 %v6027, 0.0009251127
  %v6060 = vmul.f32 %v6028, 0.0009251127
  %v6061 = vmul.f32 %v6029, 0.0009251127
  %v6062 = vmul.f32 %v6030, 0.0009251127
  %v6063 = vmul.f32 %v6031, 0.0009251127
  %v6064 = vmul.f32 %v6032, 0.0009251127
  %v6065 = vmul.f32 %v6033, 0.0009251127
  %v6066 = vmul.f32 %v6034, 0.0009251127
  %v6067 = vmul.f32 %v6035, 0.0009251127
  %v6068 = vmul.f32 %v6036, 0.0009251127
  %v6069 = vmul.f32 %v6037, 0.0009251127
  %v6070 = vmul.f32 %v6038, 0.0009251127
  %v6071 = vmul.f32 %v6039, 0.0009251127
  %v6072 = vadd.f32 %v5688, %v6040
  %v6073 = vadd.f32 %v5689, %v6041
  %v6074 = vadd.f32 %v5690, %v6042
  %v6075 = vadd.f32 %v5691, %v6043
  %v6076 = vadd.f32 %v5692, %v6044
  %v6077 = vadd.f32 %v5693, %v6045
  %v6078 = vadd.f32 %v5694, %v6046
  %v6079 = vadd.f32 %v5695, %v6047
  %v6080 = vadd.f32 %v5696, %v6048
  %v6081 = vadd.f32 %v5697, %v6049
  %v6082 = vadd.f32 %v5698, %v6050
  %v6083 = vadd.f32 %v5699, %v6051
  %v6084 = vadd.f32 %v5700, %v6052
  %v6085 = vadd.f32 %v5701, %v6053
  %v6086 = vadd.f32 %v5702, %v6054
  %v6087 = vadd.f32 %v5703, %v6055
  %v6088 = vadd.f32 %v5704, %v6056
  %v6089 = vadd.f32 %v5705, %v6057
  %v6090 = vadd.f32 %v5706, %v6058
  %v6091 = vadd.f32 %v5707, %v6059
  %v6092 = vadd.f32 %v5708, %v6060
  %v6093 = vadd.f32 %v5709, %v6061
  %v6094 = vadd.f32 %v5710, %v6062
  %v6095 = vadd.f32 %v5711, %v6063
  %v6096 = vadd.f32 %v5712, %v6064
  %v6097 = vadd.f32 %v5713, %v6065
  %v6098 = vadd.f32 %v5714, %v6066
  %v6099 = vadd.f32 %v5715, %v6067
  %v6100 = vadd.f32 %v5716, %v6068
  %v6101 = vadd.f32 %v5717, %v6069
  %v6102 = vadd.f32 %v5718, %v6070
  %v6103 = vadd.f32 %v5719, %v6071
  %v6104 = vld [vmem:[%s5527 + $0x7] sm:$0xff]
  %v6105 = vld [vmem:[%s5527 + $0xf] sm:$0xff]
  %v6106 = vld [vmem:[%s5527 + $0x1f] sm:$0xff]
  %v6107 = vld [vmem:[%s5527 + $0x27] sm:$0xff]
  %v6108 = vld [vmem:[%s5527 + $0x37] sm:$0xff]
  %v6109 = vld [vmem:[%s5527 + $0x3f] sm:$0xff]
  %v6110 = vld [vmem:[%s5527 + $0x4f] sm:$0xff]
  %v6111 = vld [vmem:[%s5527 + $0x57] sm:$0xff]
  %v6112 = vld [vmem:[%s5527 + $0x67] sm:$0xff]
  %v6113 = vld [vmem:[%s5527 + $0x6f] sm:$0xff]
  %v6114 = vld [vmem:[%s5527 + $0x7f] sm:$0xff]
  %v6115 = vld [vmem:[%s5527 + $0x87] sm:$0xff]
  %v6116 = vld [vmem:[%s5527 + $0x97] sm:$0xff]
  %v6117 = vld [vmem:[%s5527 + $0x9f] sm:$0xff]
  %v6118 = vld [vmem:[%s5527 + $0xaf] sm:$0xff]
  %v6119 = vld [vmem:[%s5527 + $0xb7] sm:$0xff]
  %v6120 = vld [vmem:[%s5527 + $0xc7] sm:$0xff]
  %v6121 = vld [vmem:[%s5527 + $0xcf] sm:$0xff]
  %v6122 = vld [vmem:[%s5527 + $0xdf] sm:$0xff]
  %v6123 = vld [vmem:[%s5527 + $0xe7] sm:$0xff]
  %v6124 = vld [vmem:[%s5527 + $0xf7] sm:$0xff]
  %v6125 = vld [vmem:[%s5527 + $0xff] sm:$0xff]
  %v6126 = vld [vmem:[%s5527 + $0x10f] sm:$0xff]
  %v6127 = vld [vmem:[%s5527 + $0x117] sm:$0xff]
  %v6128 = vld [vmem:[%s5527 + $0x127] sm:$0xff]
  %v6129 = vld [vmem:[%s5527 + $0x12f] sm:$0xff]
  %v6130 = vld [vmem:[%s5527 + $0x13f] sm:$0xff]
  %v6131 = vld [vmem:[%s5527 + $0x147] sm:$0xff]
  %v6132 = vld [vmem:[%s5527 + $0x157] sm:$0xff]
  %v6133 = vld [vmem:[%s5527 + $0x15f] sm:$0xff]
  %v6134 = vld [vmem:[%s5527 + $0x16f] sm:$0xff]
  %v6135 = vld [vmem:[%s5527 + $0x177] sm:$0xff]
  %v6136 = vmul.f32 %v6104, 0.0009123527
  %v6137 = vmul.f32 %v6105, 0.0009123527
  %v6138 = vmul.f32 %v6106, 0.0009123527
  %v6139 = vmul.f32 %v6107, 0.0009123527
  %v6140 = vmul.f32 %v6108, 0.0009123527
  %v6141 = vmul.f32 %v6109, 0.0009123527
  %v6142 = vmul.f32 %v6110, 0.0009123527
  %v6143 = vmul.f32 %v6111, 0.0009123527
  %v6144 = vmul.f32 %v6112, 0.0009123527
  %v6145 = vmul.f32 %v6113, 0.0009123527
  %v6146 = vmul.f32 %v6114, 0.0009123527
  %v6147 = vmul.f32 %v6115, 0.0009123527
  %v6148 = vmul.f32 %v6116, 0.0009123527
  %v6149 = vmul.f32 %v6117, 0.0009123527
  %v6150 = vmul.f32 %v6118, 0.0009123527
  %v6151 = vmul.f32 %v6119, 0.0009123527
  %v6152 = vmul.f32 %v6120, 0.0009123527
  %v6153 = vmul.f32 %v6121, 0.0009123527
  %v6154 = vmul.f32 %v6122, 0.0009123527
  %v6155 = vmul.f32 %v6123, 0.0009123527
  %v6156 = vmul.f32 %v6124, 0.0009123527
  %v6157 = vmul.f32 %v6125, 0.0009123527
  %v6158 = vmul.f32 %v6126, 0.0009123527
  %v6159 = vmul.f32 %v6127, 0.0009123527
  %v6160 = vmul.f32 %v6128, 0.0009123527
  %v6161 = vmul.f32 %v6129, 0.0009123527
  %v6162 = vmul.f32 %v6130, 0.0009123527
  %v6163 = vmul.f32 %v6131, 0.0009123527
  %v6164 = vmul.f32 %v6132, 0.0009123527
  %v6165 = vmul.f32 %v6133, 0.0009123527
  %v6166 = vmul.f32 %v6134, 0.0009123527
  %v6167 = vmul.f32 %v6135, 0.0009123527
  %v6168 = vadd.f32 %v5784, %v6136
  %v6169 = vadd.f32 %v5785, %v6137
  %v6170 = vadd.f32 %v5786, %v6138
  %v6171 = vadd.f32 %v5787, %v6139
  %v6172 = vadd.f32 %v5788, %v6140
  %v6173 = vadd.f32 %v5789, %v6141
  %v6174 = vadd.f32 %v5790, %v6142
  %v6175 = vadd.f32 %v5791, %v6143
  %v6176 = vadd.f32 %v5792, %v6144
  %v6177 = vadd.f32 %v5793, %v6145
  %v6178 = vadd.f32 %v5794, %v6146
  %v6179 = vadd.f32 %v5795, %v6147
  %v6180 = vadd.f32 %v5796, %v6148
  %v6181 = vadd.f32 %v5797, %v6149
  %v6182 = vadd.f32 %v5798, %v6150
  %v6183 = vadd.f32 %v5799, %v6151
  %v6184 = vadd.f32 %v5800, %v6152
  %v6185 = vadd.f32 %v5801, %v6153
  %v6186 = vadd.f32 %v5802, %v6154
  %v6187 = vadd.f32 %v5803, %v6155
  %v6188 = vadd.f32 %v5804, %v6156
  %v6189 = vadd.f32 %v5805, %v6157
  %v6190 = vadd.f32 %v5806, %v6158
  %v6191 = vadd.f32 %v5807, %v6159
  %v6192 = vadd.f32 %v5808, %v6160
  %v6193 = vadd.f32 %v5809, %v6161
  %v6194 = vadd.f32 %v5810, %v6162
  %v6195 = vadd.f32 %v5811, %v6163
  %v6196 = vadd.f32 %v5812, %v6164
  %v6197 = vadd.f32 %v5813, %v6165
  %v6198 = vadd.f32 %v5814, %v6166
  %v6199 = vadd.f32 %v5815, %v6167
  %s6200 = scalar_lea.vmem [#allocation2], 192
  %v6201 = vld [vmem:[%s6200 + $0x2] sm:$0xff]
  %v6202 = vld [vmem:[%s6200 + $0xa] sm:$0xff]
  %v6203 = vld [vmem:[%s6200 + $0x1a] sm:$0xff]
  %v6204 = vld [vmem:[%s6200 + $0x22] sm:$0xff]
  %v6205 = vld [vmem:[%s6200 + $0x32] sm:$0xff]
  %v6206 = vld [vmem:[%s6200 + $0x3a] sm:$0xff]
  %v6207 = vld [vmem:[%s6200 + $0x4a] sm:$0xff]
  %v6208 = vld [vmem:[%s6200 + $0x52] sm:$0xff]
  %v6209 = vld [vmem:[%s6200 + $0x62] sm:$0xff]
  %v6210 = vld [vmem:[%s6200 + $0x6a] sm:$0xff]
  %v6211 = vld [vmem:[%s6200 + $0x7a] sm:$0xff]
  %v6212 = vld [vmem:[%s6200 + $0x82] sm:$0xff]
  %v6213 = vld [vmem:[%s6200 + $0x92] sm:$0xff]
  %v6214 = vld [vmem:[%s6200 + $0x9a] sm:$0xff]
  %v6215 = vld [vmem:[%s6200 + $0xaa] sm:$0xff]
  %v6216 = vld [vmem:[%s6200 + $0xb2] sm:$0xff]
  %v6217 = vld [vmem:[%s6200 + $0xc2] sm:$0xff]
  %v6218 = vld [vmem:[%s6200 + $0xca] sm:$0xff]
  %v6219 = vld [vmem:[%s6200 + $0xda] sm:$0xff]
  %v6220 = vld [vmem:[%s6200 + $0xe2] sm:$0xff]
  %v6221 = vld [vmem:[%s6200 + $0xf2] sm:$0xff]
  %v6222 = vld [vmem:[%s6200 + $0xfa] sm:$0xff]
  %v6223 = vld [vmem:[%s6200 + $0x10a] sm:$0xff]
  %v6224 = vld [vmem:[%s6200 + $0x112] sm:$0xff]
  %v6225 = vld [vmem:[%s6200 + $0x122] sm:$0xff]
  %v6226 = vld [vmem:[%s6200 + $0x12a] sm:$0xff]
  %v6227 = vld [vmem:[%s6200 + $0x13a] sm:$0xff]
  %v6228 = vld [vmem:[%s6200 + $0x142] sm:$0xff]
  %v6229 = vld [vmem:[%s6200 + $0x152] sm:$0xff]
  %v6230 = vld [vmem:[%s6200 + $0x15a] sm:$0xff]
  %v6231 = vld [vmem:[%s6200 + $0x16a] sm:$0xff]
  %v6232 = vld [vmem:[%s6200 + $0x172] sm:$0xff]
  %v6233 = vmul.f32 %v6201, 0.010661134
  %v6234 = vmul.f32 %v6202, 0.010661134
  %v6235 = vmul.f32 %v6203, 0.010661134
  %v6236 = vmul.f32 %v6204, 0.010661134
  %v6237 = vmul.f32 %v6205, 0.010661134
  %v6238 = vmul.f32 %v6206, 0.010661134
  %v6239 = vmul.f32 %v6207, 0.010661134
  %v6240 = vmul.f32 %v6208, 0.010661134
  %v6241 = vmul.f32 %v6209, 0.010661134
  %v6242 = vmul.f32 %v6210, 0.010661134
  %v6243 = vmul.f32 %v6211, 0.010661134
  %v6244 = vmul.f32 %v6212, 0.010661134
  %v6245 = vmul.f32 %v6213, 0.010661134
  %v6246 = vmul.f32 %v6214, 0.010661134
  %v6247 = vmul.f32 %v6215, 0.010661134
  %v6248 = vmul.f32 %v6216, 0.010661134
  %v6249 = vmul.f32 %v6217, 0.010661134
  %v6250 = vmul.f32 %v6218, 0.010661134
  %v6251 = vmul.f32 %v6219, 0.010661134
  %v6252 = vmul.f32 %v6220, 0.010661134
  %v6253 = vmul.f32 %v6221, 0.010661134
  %v6254 = vmul.f32 %v6222, 0.010661134
  %v6255 = vmul.f32 %v6223, 0.010661134
  %v6256 = vmul.f32 %v6224, 0.010661134
  %v6257 = vmul.f32 %v6225, 0.010661134
  %v6258 = vmul.f32 %v6226, 0.010661134
  %v6259 = vmul.f32 %v6227, 0.010661134
  %v6260 = vmul.f32 %v6228, 0.010661134
  %v6261 = vmul.f32 %v6229, 0.010661134
  %v6262 = vmul.f32 %v6230, 0.010661134
  %v6263 = vmul.f32 %v6231, 0.010661134
  %v6264 = vmul.f32 %v6232, 0.010661134
  %v6265 = vadd.f32 %v5880, %v6233
  %v6266 = vadd.f32 %v5881, %v6234
  %v6267 = vadd.f32 %v5882, %v6235
  %v6268 = vadd.f32 %v5883, %v6236
  %v6269 = vadd.f32 %v5884, %v6237
  %v6270 = vadd.f32 %v5885, %v6238
  %v6271 = vadd.f32 %v5886, %v6239
  %v6272 = vadd.f32 %v5887, %v6240
  %v6273 = vadd.f32 %v5888, %v6241
  %v6274 = vadd.f32 %v5889, %v6242
  %v6275 = vadd.f32 %v5890, %v6243
  %v6276 = vadd.f32 %v5891, %v6244
  %v6277 = vadd.f32 %v5892, %v6245
  %v6278 = vadd.f32 %v5893, %v6246
  %v6279 = vadd.f32 %v5894, %v6247
  %v6280 = vadd.f32 %v5895, %v6248
  %v6281 = vadd.f32 %v5896, %v6249
  %v6282 = vadd.f32 %v5897, %v6250
  %v6283 = vadd.f32 %v5898, %v6251
  %v6284 = vadd.f32 %v5899, %v6252
  %v6285 = vadd.f32 %v5900, %v6253
  %v6286 = vadd.f32 %v5901, %v6254
  %v6287 = vadd.f32 %v5902, %v6255
  %v6288 = vadd.f32 %v5903, %v6256
  %v6289 = vadd.f32 %v5904, %v6257
  %v6290 = vadd.f32 %v5905, %v6258
  %v6291 = vadd.f32 %v5906, %v6259
  %v6292 = vadd.f32 %v5907, %v6260
  %v6293 = vadd.f32 %v5908, %v6261
  %v6294 = vadd.f32 %v5909, %v6262
  %v6295 = vadd.f32 %v5910, %v6263
  %v6296 = vadd.f32 %v5911, %v6264
  %v6297 = vld [vmem:[%s6200 + $0x3] sm:$0xff]
  %v6298 = vld [vmem:[%s6200 + $0xb] sm:$0xff]
  %v6299 = vld [vmem:[%s6200 + $0x1b] sm:$0xff]
  %v6300 = vld [vmem:[%s6200 + $0x23] sm:$0xff]
  %v6301 = vld [vmem:[%s6200 + $0x33] sm:$0xff]
  %v6302 = vld [vmem:[%s6200 + $0x3b] sm:$0xff]
  %v6303 = vld [vmem:[%s6200 + $0x4b] sm:$0xff]
  %v6304 = vld [vmem:[%s6200 + $0x53] sm:$0xff]
  %v6305 = vld [vmem:[%s6200 + $0x63] sm:$0xff]
  %v6306 = vld [vmem:[%s6200 + $0x6b] sm:$0xff]
  %v6307 = vld [vmem:[%s6200 + $0x7b] sm:$0xff]
  %v6308 = vld [vmem:[%s6200 + $0x83] sm:$0xff]
  %v6309 = vld [vmem:[%s6200 + $0x93] sm:$0xff]
  %v6310 = vld [vmem:[%s6200 + $0x9b] sm:$0xff]
  %v6311 = vld [vmem:[%s6200 + $0xab] sm:$0xff]
  %v6312 = vld [vmem:[%s6200 + $0xb3] sm:$0xff]
  %v6313 = vld [vmem:[%s6200 + $0xc3] sm:$0xff]
  %v6314 = vld [vmem:[%s6200 + $0xcb] sm:$0xff]
  %v6315 = vld [vmem:[%s6200 + $0xdb] sm:$0xff]
  %v6316 = vld [vmem:[%s6200 + $0xe3] sm:$0xff]
  %v6317 = vld [vmem:[%s6200 + $0xf3] sm:$0xff]
  %v6318 = vld [vmem:[%s6200 + $0xfb] sm:$0xff]
  %v6319 = vld [vmem:[%s6200 + $0x10b] sm:$0xff]
  %v6320 = vld [vmem:[%s6200 + $0x113] sm:$0xff]
  %v6321 = vld [vmem:[%s6200 + $0x123] sm:$0xff]
  %v6322 = vld [vmem:[%s6200 + $0x12b] sm:$0xff]
  %v6323 = vld [vmem:[%s6200 + $0x13b] sm:$0xff]
  %v6324 = vld [vmem:[%s6200 + $0x143] sm:$0xff]
  %v6325 = vld [vmem:[%s6200 + $0x153] sm:$0xff]
  %v6326 = vld [vmem:[%s6200 + $0x15b] sm:$0xff]
  %v6327 = vld [vmem:[%s6200 + $0x16b] sm:$0xff]
  %v6328 = vld [vmem:[%s6200 + $0x173] sm:$0xff]
  %v6329 = vmul.f32 %v6297, 0.0038679158
  %v6330 = vmul.f32 %v6298, 0.0038679158
  %v6331 = vmul.f32 %v6299, 0.0038679158
  %v6332 = vmul.f32 %v6300, 0.0038679158
  %v6333 = vmul.f32 %v6301, 0.0038679158
  %v6334 = vmul.f32 %v6302, 0.0038679158
  %v6335 = vmul.f32 %v6303, 0.0038679158
  %v6336 = vmul.f32 %v6304, 0.0038679158
  %v6337 = vmul.f32 %v6305, 0.0038679158
  %v6338 = vmul.f32 %v6306, 0.0038679158
  %v6339 = vmul.f32 %v6307, 0.0038679158
  %v6340 = vmul.f32 %v6308, 0.0038679158
  %v6341 = vmul.f32 %v6309, 0.0038679158
  %v6342 = vmul.f32 %v6310, 0.0038679158
  %v6343 = vmul.f32 %v6311, 0.0038679158
  %v6344 = vmul.f32 %v6312, 0.0038679158
  %v6345 = vmul.f32 %v6313, 0.0038679158
  %v6346 = vmul.f32 %v6314, 0.0038679158
  %v6347 = vmul.f32 %v6315, 0.0038679158
  %v6348 = vmul.f32 %v6316, 0.0038679158
  %v6349 = vmul.f32 %v6317, 0.0038679158
  %v6350 = vmul.f32 %v6318, 0.0038679158
  %v6351 = vmul.f32 %v6319, 0.0038679158
  %v6352 = vmul.f32 %v6320, 0.0038679158
  %v6353 = vmul.f32 %v6321, 0.0038679158
  %v6354 = vmul.f32 %v6322, 0.0038679158
  %v6355 = vmul.f32 %v6323, 0.0038679158
  %v6356 = vmul.f32 %v6324, 0.0038679158
  %v6357 = vmul.f32 %v6325, 0.0038679158
  %v6358 = vmul.f32 %v6326, 0.0038679158
  %v6359 = vmul.f32 %v6327, 0.0038679158
  %v6360 = vmul.f32 %v6328, 0.0038679158
  %v6361 = vadd.f32 %v5976, %v6329
  %v6362 = vadd.f32 %v5977, %v6330
  %v6363 = vadd.f32 %v5978, %v6331
  %v6364 = vadd.f32 %v5979, %v6332
  %v6365 = vadd.f32 %v5980, %v6333
  %v6366 = vadd.f32 %v5981, %v6334
  %v6367 = vadd.f32 %v5982, %v6335
  %v6368 = vadd.f32 %v5983, %v6336
  %v6369 = vadd.f32 %v5984, %v6337
  %v6370 = vadd.f32 %v5985, %v6338
  %v6371 = vadd.f32 %v5986, %v6339
  %v6372 = vadd.f32 %v5987, %v6340
  %v6373 = vadd.f32 %v5988, %v6341
  %v6374 = vadd.f32 %v5989, %v6342
  %v6375 = vadd.f32 %v5990, %v6343
  %v6376 = vadd.f32 %v5991, %v6344
  %v6377 = vadd.f32 %v5992, %v6345
  %v6378 = vadd.f32 %v5993, %v6346
  %v6379 = vadd.f32 %v5994, %v6347
  %v6380 = vadd.f32 %v5995, %v6348
  %v6381 = vadd.f32 %v5996, %v6349
  %v6382 = vadd.f32 %v5997, %v6350
  %v6383 = vadd.f32 %v5998, %v6351
  %v6384 = vadd.f32 %v5999, %v6352
  %v6385 = vadd.f32 %v6000, %v6353
  %v6386 = vadd.f32 %v6001, %v6354
  %v6387 = vadd.f32 %v6002, %v6355
  %v6388 = vadd.f32 %v6003, %v6356
  %v6389 = vadd.f32 %v6004, %v6357
  %v6390 = vadd.f32 %v6005, %v6358
  %v6391 = vadd.f32 %v6006, %v6359
  %v6392 = vadd.f32 %v6007, %v6360
  %v6393 = vld [vmem:[%s6200 + $0x4] sm:$0xff]
  %v6394 = vld [vmem:[%s6200 + $0xc] sm:$0xff]
  %v6395 = vld [vmem:[%s6200 + $0x1c] sm:$0xff]
  %v6396 = vld [vmem:[%s6200 + $0x24] sm:$0xff]
  %v6397 = vld [vmem:[%s6200 + $0x34] sm:$0xff]
  %v6398 = vld [vmem:[%s6200 + $0x3c] sm:$0xff]
  %v6399 = vld [vmem:[%s6200 + $0x4c] sm:$0xff]
  %v6400 = vld [vmem:[%s6200 + $0x54] sm:$0xff]
  %v6401 = vld [vmem:[%s6200 + $0x64] sm:$0xff]
  %v6402 = vld [vmem:[%s6200 + $0x6c] sm:$0xff]
  %v6403 = vld [vmem:[%s6200 + $0x7c] sm:$0xff]
  %v6404 = vld [vmem:[%s6200 + $0x84] sm:$0xff]
  %v6405 = vld [vmem:[%s6200 + $0x94] sm:$0xff]
  %v6406 = vld [vmem:[%s6200 + $0x9c] sm:$0xff]
  %v6407 = vld [vmem:[%s6200 + $0xac] sm:$0xff]
  %v6408 = vld [vmem:[%s6200 + $0xb4] sm:$0xff]
  %v6409 = vld [vmem:[%s6200 + $0xc4] sm:$0xff]
  %v6410 = vld [vmem:[%s6200 + $0xcc] sm:$0xff]
  %v6411 = vld [vmem:[%s6200 + $0xdc] sm:$0xff]
  %v6412 = vld [vmem:[%s6200 + $0xe4] sm:$0xff]
  %v6413 = vld [vmem:[%s6200 + $0xf4] sm:$0xff]
  %v6414 = vld [vmem:[%s6200 + $0xfc] sm:$0xff]
  %v6415 = vld [vmem:[%s6200 + $0x10c] sm:$0xff]
  %v6416 = vld [vmem:[%s6200 + $0x114] sm:$0xff]
  %v6417 = vld [vmem:[%s6200 + $0x124] sm:$0xff]
  %v6418 = vld [vmem:[%s6200 + $0x12c] sm:$0xff]
  %v6419 = vld [vmem:[%s6200 + $0x13c] sm:$0xff]
  %v6420 = vld [vmem:[%s6200 + $0x144] sm:$0xff]
  %v6421 = vld [vmem:[%s6200 + $0x154] sm:$0xff]
  %v6422 = vld [vmem:[%s6200 + $0x15c] sm:$0xff]
  %v6423 = vld [vmem:[%s6200 + $0x16c] sm:$0xff]
  %v6424 = vld [vmem:[%s6200 + $0x174] sm:$0xff]
  %v6425 = vmul.f32 %v6393, 0.0041460674
  %v6426 = vmul.f32 %v6394, 0.0041460674
  %v6427 = vmul.f32 %v6395, 0.0041460674
  %v6428 = vmul.f32 %v6396, 0.0041460674
  %v6429 = vmul.f32 %v6397, 0.0041460674
  %v6430 = vmul.f32 %v6398, 0.0041460674
  %v6431 = vmul.f32 %v6399, 0.0041460674
  %v6432 = vmul.f32 %v6400, 0.0041460674
  %v6433 = vmul.f32 %v6401, 0.0041460674
  %v6434 = vmul.f32 %v6402, 0.0041460674
  %v6435 = vmul.f32 %v6403, 0.0041460674
  %v6436 = vmul.f32 %v6404, 0.0041460674
  %v6437 = vmul.f32 %v6405, 0.0041460674
  %v6438 = vmul.f32 %v6406, 0.0041460674
  %v6439 = vmul.f32 %v6407, 0.0041460674
  %v6440 = vmul.f32 %v6408, 0.0041460674
  %v6441 = vmul.f32 %v6409, 0.0041460674
  %v6442 = vmul.f32 %v6410, 0.0041460674
  %v6443 = vmul.f32 %v6411, 0.0041460674
  %v6444 = vmul.f32 %v6412, 0.0041460674
  %v6445 = vmul.f32 %v6413, 0.0041460674
  %v6446 = vmul.f32 %v6414, 0.0041460674
  %v6447 = vmul.f32 %v6415, 0.0041460674
  %v6448 = vmul.f32 %v6416, 0.0041460674
  %v6449 = vmul.f32 %v6417, 0.0041460674
  %v6450 = vmul.f32 %v6418, 0.0041460674
  %v6451 = vmul.f32 %v6419, 0.0041460674
  %v6452 = vmul.f32 %v6420, 0.0041460674
  %v6453 = vmul.f32 %v6421, 0.0041460674
  %v6454 = vmul.f32 %v6422, 0.0041460674
  %v6455 = vmul.f32 %v6423, 0.0041460674
  %v6456 = vmul.f32 %v6424, 0.0041460674
  %v6457 = vadd.f32 %v6072, %v6425
  %v6458 = vadd.f32 %v6073, %v6426
  %v6459 = vadd.f32 %v6074, %v6427
  %v6460 = vadd.f32 %v6075, %v6428
  %v6461 = vadd.f32 %v6076, %v6429
  %v6462 = vadd.f32 %v6077, %v6430
  %v6463 = vadd.f32 %v6078, %v6431
  %v6464 = vadd.f32 %v6079, %v6432
  %v6465 = vadd.f32 %v6080, %v6433
  %v6466 = vadd.f32 %v6081, %v6434
  %v6467 = vadd.f32 %v6082, %v6435
  %v6468 = vadd.f32 %v6083, %v6436
  %v6469 = vadd.f32 %v6084, %v6437
  %v6470 = vadd.f32 %v6085, %v6438
  %v6471 = vadd.f32 %v6086, %v6439
  %v6472 = vadd.f32 %v6087, %v6440
  %v6473 = vadd.f32 %v6088, %v6441
  %v6474 = vadd.f32 %v6089, %v6442
  %v6475 = vadd.f32 %v6090, %v6443
  %v6476 = vadd.f32 %v6091, %v6444
  %v6477 = vadd.f32 %v6092, %v6445
  %v6478 = vadd.f32 %v6093, %v6446
  %v6479 = vadd.f32 %v6094, %v6447
  %v6480 = vadd.f32 %v6095, %v6448
  %v6481 = vadd.f32 %v6096, %v6449
  %v6482 = vadd.f32 %v6097, %v6450
  %v6483 = vadd.f32 %v6098, %v6451
  %v6484 = vadd.f32 %v6099, %v6452
  %v6485 = vadd.f32 %v6100, %v6453
  %v6486 = vadd.f32 %v6101, %v6454
  %v6487 = vadd.f32 %v6102, %v6455
  %v6488 = vadd.f32 %v6103, %v6456
  %v6489 = vld [vmem:[%s6200 + $0x5] sm:$0xff]
  %v6490 = vld [vmem:[%s6200 + $0xd] sm:$0xff]
  %v6491 = vld [vmem:[%s6200 + $0x1d] sm:$0xff]
  %v6492 = vld [vmem:[%s6200 + $0x25] sm:$0xff]
  %v6493 = vld [vmem:[%s6200 + $0x35] sm:$0xff]
  %v6494 = vld [vmem:[%s6200 + $0x3d] sm:$0xff]
  %v6495 = vld [vmem:[%s6200 + $0x4d] sm:$0xff]
  %v6496 = vld [vmem:[%s6200 + $0x55] sm:$0xff]
  %v6497 = vld [vmem:[%s6200 + $0x65] sm:$0xff]
  %v6498 = vld [vmem:[%s6200 + $0x6d] sm:$0xff]
  %v6499 = vld [vmem:[%s6200 + $0x7d] sm:$0xff]
  %v6500 = vld [vmem:[%s6200 + $0x85] sm:$0xff]
  %v6501 = vld [vmem:[%s6200 + $0x95] sm:$0xff]
  %v6502 = vld [vmem:[%s6200 + $0x9d] sm:$0xff]
  %v6503 = vld [vmem:[%s6200 + $0xad] sm:$0xff]
  %v6504 = vld [vmem:[%s6200 + $0xb5] sm:$0xff]
  %v6505 = vld [vmem:[%s6200 + $0xc5] sm:$0xff]
  %v6506 = vld [vmem:[%s6200 + $0xcd] sm:$0xff]
  %v6507 = vld [vmem:[%s6200 + $0xdd] sm:$0xff]
  %v6508 = vld [vmem:[%s6200 + $0xe5] sm:$0xff]
  %v6509 = vld [vmem:[%s6200 + $0xf5] sm:$0xff]
  %v6510 = vld [vmem:[%s6200 + $0xfd] sm:$0xff]
  %v6511 = vld [vmem:[%s6200 + $0x10d] sm:$0xff]
  %v6512 = vld [vmem:[%s6200 + $0x115] sm:$0xff]
  %v6513 = vld [vmem:[%s6200 + $0x125] sm:$0xff]
  %v6514 = vld [vmem:[%s6200 + $0x12d] sm:$0xff]
  %v6515 = vld [vmem:[%s6200 + $0x13d] sm:$0xff]
  %v6516 = vld [vmem:[%s6200 + $0x145] sm:$0xff]
  %v6517 = vld [vmem:[%s6200 + $0x155] sm:$0xff]
  %v6518 = vld [vmem:[%s6200 + $0x15d] sm:$0xff]
  %v6519 = vld [vmem:[%s6200 + $0x16d] sm:$0xff]
  %v6520 = vld [vmem:[%s6200 + $0x175] sm:$0xff]
  %v6521 = vmul.f32 %v6489, 0.0009123527
  %v6522 = vmul.f32 %v6490, 0.0009123527
  %v6523 = vmul.f32 %v6491, 0.0009123527
  %v6524 = vmul.f32 %v6492, 0.0009123527
  %v6525 = vmul.f32 %v6493, 0.0009123527
  %v6526 = vmul.f32 %v6494, 0.0009123527
  %v6527 = vmul.f32 %v6495, 0.0009123527
  %v6528 = vmul.f32 %v6496, 0.0009123527
  %v6529 = vmul.f32 %v6497, 0.0009123527
  %v6530 = vmul.f32 %v6498, 0.0009123527
  %v6531 = vmul.f32 %v6499, 0.0009123527
  %v6532 = vmul.f32 %v6500, 0.0009123527
  %v6533 = vmul.f32 %v6501, 0.0009123527
  %v6534 = vmul.f32 %v6502, 0.0009123527
  %v6535 = vmul.f32 %v6503, 0.0009123527
  %v6536 = vmul.f32 %v6504, 0.0009123527
  %v6537 = vmul.f32 %v6505, 0.0009123527
  %v6538 = vmul.f32 %v6506, 0.0009123527
  %v6539 = vmul.f32 %v6507, 0.0009123527
  %v6540 = vmul.f32 %v6508, 0.0009123527
  %v6541 = vmul.f32 %v6509, 0.0009123527
  %v6542 = vmul.f32 %v6510, 0.0009123527
  %v6543 = vmul.f32 %v6511, 0.0009123527
  %v6544 = vmul.f32 %v6512, 0.0009123527
  %v6545 = vmul.f32 %v6513, 0.0009123527
  %v6546 = vmul.f32 %v6514, 0.0009123527
  %v6547 = vmul.f32 %v6515, 0.0009123527
  %v6548 = vmul.f32 %v6516, 0.0009123527
  %v6549 = vmul.f32 %v6517, 0.0009123527
  %v6550 = vmul.f32 %v6518, 0.0009123527
  %v6551 = vmul.f32 %v6519, 0.0009123527
  %v6552 = vmul.f32 %v6520, 0.0009123527
  %v6553 = vadd.f32 %v6168, %v6521
  %v6554 = vadd.f32 %v6169, %v6522
  %v6555 = vadd.f32 %v6170, %v6523
  %v6556 = vadd.f32 %v6171, %v6524
  %v6557 = vadd.f32 %v6172, %v6525
  %v6558 = vadd.f32 %v6173, %v6526
  %v6559 = vadd.f32 %v6174, %v6527
  %v6560 = vadd.f32 %v6175, %v6528
  %v6561 = vadd.f32 %v6176, %v6529
  %v6562 = vadd.f32 %v6177, %v6530
  %v6563 = vadd.f32 %v6178, %v6531
  %v6564 = vadd.f32 %v6179, %v6532
  %v6565 = vadd.f32 %v6180, %v6533
  %v6566 = vadd.f32 %v6181, %v6534
  %v6567 = vadd.f32 %v6182, %v6535
  %v6568 = vadd.f32 %v6183, %v6536
  %v6569 = vadd.f32 %v6184, %v6537
  %v6570 = vadd.f32 %v6185, %v6538
  %v6571 = vadd.f32 %v6186, %v6539
  %v6572 = vadd.f32 %v6187, %v6540
  %v6573 = vadd.f32 %v6188, %v6541
  %v6574 = vadd.f32 %v6189, %v6542
  %v6575 = vadd.f32 %v6190, %v6543
  %v6576 = vadd.f32 %v6191, %v6544
  %v6577 = vadd.f32 %v6192, %v6545
  %v6578 = vadd.f32 %v6193, %v6546
  %v6579 = vadd.f32 %v6194, %v6547
  %v6580 = vadd.f32 %v6195, %v6548
  %v6581 = vadd.f32 %v6196, %v6549
  %v6582 = vadd.f32 %v6197, %v6550
  %v6583 = vadd.f32 %v6198, %v6551
  %v6584 = vadd.f32 %v6199, %v6552
  %v6585 = vld [vmem:[%s6200 + $0x6] sm:$0xff]
  %v6586 = vld [vmem:[%s6200 + $0xe] sm:$0xff]
  %v6587 = vld [vmem:[%s6200 + $0x1e] sm:$0xff]
  %v6588 = vld [vmem:[%s6200 + $0x26] sm:$0xff]
  %v6589 = vld [vmem:[%s6200 + $0x36] sm:$0xff]
  %v6590 = vld [vmem:[%s6200 + $0x3e] sm:$0xff]
  %v6591 = vld [vmem:[%s6200 + $0x4e] sm:$0xff]
  %v6592 = vld [vmem:[%s6200 + $0x56] sm:$0xff]
  %v6593 = vld [vmem:[%s6200 + $0x66] sm:$0xff]
  %v6594 = vld [vmem:[%s6200 + $0x6e] sm:$0xff]
  %v6595 = vld [vmem:[%s6200 + $0x7e] sm:$0xff]
  %v6596 = vld [vmem:[%s6200 + $0x86] sm:$0xff]
  %v6597 = vld [vmem:[%s6200 + $0x96] sm:$0xff]
  %v6598 = vld [vmem:[%s6200 + $0x9e] sm:$0xff]
  %v6599 = vld [vmem:[%s6200 + $0xae] sm:$0xff]
  %v6600 = vld [vmem:[%s6200 + $0xb6] sm:$0xff]
  %v6601 = vld [vmem:[%s6200 + $0xc6] sm:$0xff]
  %v6602 = vld [vmem:[%s6200 + $0xce] sm:$0xff]
  %v6603 = vld [vmem:[%s6200 + $0xde] sm:$0xff]
  %v6604 = vld [vmem:[%s6200 + $0xe6] sm:$0xff]
  %v6605 = vld [vmem:[%s6200 + $0xf6] sm:$0xff]
  %v6606 = vld [vmem:[%s6200 + $0xfe] sm:$0xff]
  %v6607 = vld [vmem:[%s6200 + $0x10e] sm:$0xff]
  %v6608 = vld [vmem:[%s6200 + $0x116] sm:$0xff]
  %v6609 = vld [vmem:[%s6200 + $0x126] sm:$0xff]
  %v6610 = vld [vmem:[%s6200 + $0x12e] sm:$0xff]
  %v6611 = vld [vmem:[%s6200 + $0x13e] sm:$0xff]
  %v6612 = vld [vmem:[%s6200 + $0x146] sm:$0xff]
  %v6613 = vld [vmem:[%s6200 + $0x156] sm:$0xff]
  %v6614 = vld [vmem:[%s6200 + $0x15e] sm:$0xff]
  %v6615 = vld [vmem:[%s6200 + $0x16e] sm:$0xff]
  %v6616 = vld [vmem:[%s6200 + $0x176] sm:$0xff]
  %v6617 = vmul.f32 %v6585, 0.0009251127
  %v6618 = vmul.f32 %v6586, 0.0009251127
  %v6619 = vmul.f32 %v6587, 0.0009251127
  %v6620 = vmul.f32 %v6588, 0.0009251127
  %v6621 = vmul.f32 %v6589, 0.0009251127
  %v6622 = vmul.f32 %v6590, 0.0009251127
  %v6623 = vmul.f32 %v6591, 0.0009251127
  %v6624 = vmul.f32 %v6592, 0.0009251127
  %v6625 = vmul.f32 %v6593, 0.0009251127
  %v6626 = vmul.f32 %v6594, 0.0009251127
  %v6627 = vmul.f32 %v6595, 0.0009251127
  %v6628 = vmul.f32 %v6596, 0.0009251127
  %v6629 = vmul.f32 %v6597, 0.0009251127
  %v6630 = vmul.f32 %v6598, 0.0009251127
  %v6631 = vmul.f32 %v6599, 0.0009251127
  %v6632 = vmul.f32 %v6600, 0.0009251127
  %v6633 = vmul.f32 %v6601, 0.0009251127
  %v6634 = vmul.f32 %v6602, 0.0009251127
  %v6635 = vmul.f32 %v6603, 0.0009251127
  %v6636 = vmul.f32 %v6604, 0.0009251127
  %v6637 = vmul.f32 %v6605, 0.0009251127
  %v6638 = vmul.f32 %v6606, 0.0009251127
  %v6639 = vmul.f32 %v6607, 0.0009251127
  %v6640 = vmul.f32 %v6608, 0.0009251127
  %v6641 = vmul.f32 %v6609, 0.0009251127
  %v6642 = vmul.f32 %v6610, 0.0009251127
  %v6643 = vmul.f32 %v6611, 0.0009251127
  %v6644 = vmul.f32 %v6612, 0.0009251127
  %v6645 = vmul.f32 %v6613, 0.0009251127
  %v6646 = vmul.f32 %v6614, 0.0009251127
  %v6647 = vmul.f32 %v6615, 0.0009251127
  %v6648 = vmul.f32 %v6616, 0.0009251127
  %v6649 = vadd.f32 %v6265, %v6617
  %v6650 = vadd.f32 %v6266, %v6618
  %v6651 = vadd.f32 %v6267, %v6619
  %v6652 = vadd.f32 %v6268, %v6620
  %v6653 = vadd.f32 %v6269, %v6621
  %v6654 = vadd.f32 %v6270, %v6622
  %v6655 = vadd.f32 %v6271, %v6623
  %v6656 = vadd.f32 %v6272, %v6624
  %v6657 = vadd.f32 %v6273, %v6625
  %v6658 = vadd.f32 %v6274, %v6626
  %v6659 = vadd.f32 %v6275, %v6627
  %v6660 = vadd.f32 %v6276, %v6628
  %v6661 = vadd.f32 %v6277, %v6629
  %v6662 = vadd.f32 %v6278, %v6630
  %v6663 = vadd.f32 %v6279, %v6631
  %v6664 = vadd.f32 %v6280, %v6632
  %v6665 = vadd.f32 %v6281, %v6633
  %v6666 = vadd.f32 %v6282, %v6634
  %v6667 = vadd.f32 %v6283, %v6635
  %v6668 = vadd.f32 %v6284, %v6636
  %v6669 = vadd.f32 %v6285, %v6637
  %v6670 = vadd.f32 %v6286, %v6638
  %v6671 = vadd.f32 %v6287, %v6639
  %v6672 = vadd.f32 %v6288, %v6640
  %v6673 = vadd.f32 %v6289, %v6641
  %v6674 = vadd.f32 %v6290, %v6642
  %v6675 = vadd.f32 %v6291, %v6643
  %v6676 = vadd.f32 %v6292, %v6644
  %v6677 = vadd.f32 %v6293, %v6645
  %v6678 = vadd.f32 %v6294, %v6646
  %v6679 = vadd.f32 %v6295, %v6647
  %v6680 = vadd.f32 %v6296, %v6648
  %v6681 = vadd.f32 %v6649, %v6361
  %v6682 = vadd.f32 %v6650, %v6362
  %v6683 = vadd.f32 %v6651, %v6363
  %v6684 = vadd.f32 %v6652, %v6364
  %v6685 = vadd.f32 %v6653, %v6365
  %v6686 = vadd.f32 %v6654, %v6366
  %v6687 = vadd.f32 %v6655, %v6367
  %v6688 = vadd.f32 %v6656, %v6368
  %v6689 = vadd.f32 %v6657, %v6369
  %v6690 = vadd.f32 %v6658, %v6370
  %v6691 = vadd.f32 %v6659, %v6371
  %v6692 = vadd.f32 %v6660, %v6372
  %v6693 = vadd.f32 %v6661, %v6373
  %v6694 = vadd.f32 %v6662, %v6374
  %v6695 = vadd.f32 %v6663, %v6375
  %v6696 = vadd.f32 %v6664, %v6376
  %v6697 = vadd.f32 %v6665, %v6377
  %v6698 = vadd.f32 %v6666, %v6378
  %v6699 = vadd.f32 %v6667, %v6379
  %v6700 = vadd.f32 %v6668, %v6380
  %v6701 = vadd.f32 %v6669, %v6381
  %v6702 = vadd.f32 %v6670, %v6382
  %v6703 = vadd.f32 %v6671, %v6383
  %v6704 = vadd.f32 %v6672, %v6384
  %v6705 = vadd.f32 %v6673, %v6385
  %v6706 = vadd.f32 %v6674, %v6386
  %v6707 = vadd.f32 %v6675, %v6387
  %v6708 = vadd.f32 %v6676, %v6388
  %v6709 = vadd.f32 %v6677, %v6389
  %v6710 = vadd.f32 %v6678, %v6390
  %v6711 = vadd.f32 %v6679, %v6391
  %v6712 = vadd.f32 %v6680, %v6392
  %v6713 = vadd.f32 %v6457, %v6553
  %v6714 = vadd.f32 %v6458, %v6554
  %v6715 = vadd.f32 %v6459, %v6555
  %v6716 = vadd.f32 %v6460, %v6556
  %v6717 = vadd.f32 %v6461, %v6557
  %v6718 = vadd.f32 %v6462, %v6558
  %v6719 = vadd.f32 %v6463, %v6559
  %v6720 = vadd.f32 %v6464, %v6560
  %v6721 = vadd.f32 %v6465, %v6561
  %v6722 = vadd.f32 %v6466, %v6562
  %v6723 = vadd.f32 %v6467, %v6563
  %v6724 = vadd.f32 %v6468, %v6564
  %v6725 = vadd.f32 %v6469, %v6565
  %v6726 = vadd.f32 %v6470, %v6566
  %v6727 = vadd.f32 %v6471, %v6567
  %v6728 = vadd.f32 %v6472, %v6568
  %v6729 = vadd.f32 %v6473, %v6569
  %v6730 = vadd.f32 %v6474, %v6570
  %v6731 = vadd.f32 %v6475, %v6571
  %v6732 = vadd.f32 %v6476, %v6572
  %v6733 = vadd.f32 %v6477, %v6573
  %v6734 = vadd.f32 %v6478, %v6574
  %v6735 = vadd.f32 %v6479, %v6575
  %v6736 = vadd.f32 %v6480, %v6576
  %v6737 = vadd.f32 %v6481, %v6577
  %v6738 = vadd.f32 %v6482, %v6578
  %v6739 = vadd.f32 %v6483, %v6579
  %v6740 = vadd.f32 %v6484, %v6580
  %v6741 = vadd.f32 %v6485, %v6581
  %v6742 = vadd.f32 %v6486, %v6582
  %v6743 = vadd.f32 %v6487, %v6583
  %v6744 = vadd.f32 %v6488, %v6584
  %v6745 = vadd.f32 %v6681, %v6713
  %v6746 = vadd.f32 %v6682, %v6714
  %v6747 = vadd.f32 %v6683, %v6715
  %v6748 = vadd.f32 %v6684, %v6716
  %v6749 = vadd.f32 %v6685, %v6717
  %v6750 = vadd.f32 %v6686, %v6718
  %v6751 = vadd.f32 %v6687, %v6719
  %v6752 = vadd.f32 %v6688, %v6720
  %v6753 = vadd.f32 %v6689, %v6721
  %v6754 = vadd.f32 %v6690, %v6722
  %v6755 = vadd.f32 %v6691, %v6723
  %v6756 = vadd.f32 %v6692, %v6724
  %v6757 = vadd.f32 %v6693, %v6725
  %v6758 = vadd.f32 %v6694, %v6726
  %v6759 = vadd.f32 %v6695, %v6727
  %v6760 = vadd.f32 %v6696, %v6728
  %v6761 = vadd.f32 %v6697, %v6729
  %v6762 = vadd.f32 %v6698, %v6730
  %v6763 = vadd.f32 %v6699, %v6731
  %v6764 = vadd.f32 %v6700, %v6732
  %v6765 = vadd.f32 %v6701, %v6733
  %v6766 = vadd.f32 %v6702, %v6734
  %v6767 = vadd.f32 %v6703, %v6735
  %v6768 = vadd.f32 %v6704, %v6736
  %v6769 = vadd.f32 %v6705, %v6737
  %v6770 = vadd.f32 %v6706, %v6738
  %v6771 = vadd.f32 %v6707, %v6739
  %v6772 = vadd.f32 %v6708, %v6740
  %v6773 = vadd.f32 %v6709, %v6741
  %v6774 = vadd.f32 %v6710, %v6742
  %v6775 = vadd.f32 %v6711, %v6743
  %v6776 = vadd.f32 %v6712, %v6744
  %6777 = vst.msk [vmem:[%s1] sm:$0xff] %vm8, %v6745
  %6778 = vst.msk [vmem:[%s1 + $0x8] sm:$0xff] %vm8, %v6746
  %6779 = vst.msk [vmem:[%s1 + $0x10] sm:$0xff] %vm8, %v6747
  %6780 = vst.msk [vmem:[%s1 + $0x18] sm:$0xff] %vm8, %v6748
  %6781 = vst.msk [vmem:[%s1 + $0x20] sm:$0xff] %vm8, %v6749
  %6782 = vst.msk [vmem:[%s1 + $0x28] sm:$0xff] %vm8, %v6750
  %6783 = vst.msk [vmem:[%s1 + $0x30] sm:$0xff] %vm8, %v6751
  %6784 = vst.msk [vmem:[%s1 + $0x38] sm:$0xff] %vm8, %v6752
  %6785 = vst.msk [vmem:[%s1 + $0x40] sm:$0xff] %vm8, %v6753
  %6786 = vst.msk [vmem:[%s1 + $0x48] sm:$0xff] %vm8, %v6754
  %6787 = vst.msk [vmem:[%s1 + $0x50] sm:$0xff] %vm8, %v6755
  %6788 = vst.msk [vmem:[%s1 + $0x58] sm:$0xff] %vm8, %v6756
  %6789 = vst.msk [vmem:[%s1 + $0x60] sm:$0xff] %vm8, %v6757
  %6790 = vst.msk [vmem:[%s1 + $0x68] sm:$0xff] %vm8, %v6758
  %6791 = vst.msk [vmem:[%s1 + $0x70] sm:$0xff] %vm8, %v6759
  %6792 = vst.msk [vmem:[%s1 + $0x78] sm:$0xff] %vm8, %v6760
  %6793 = vst.msk [vmem:[%s1 + $0x80] sm:$0xff] %vm8, %v6761
  %6794 = vst.msk [vmem:[%s1 + $0x88] sm:$0xff] %vm8, %v6762
  %6795 = vst.msk [vmem:[%s1 + $0x90] sm:$0xff] %vm8, %v6763
  %6796 = vst.msk [vmem:[%s1 + $0x98] sm:$0xff] %vm8, %v6764
  %6797 = vst.msk [vmem:[%s1 + $0xa0] sm:$0xff] %vm8, %v6765
  %6798 = vst.msk [vmem:[%s1 + $0xa8] sm:$0xff] %vm8, %v6766
  %6799 = vst.msk [vmem:[%s1 + $0xb0] sm:$0xff] %vm8, %v6767
  %6800 = vst.msk [vmem:[%s1 + $0xb8] sm:$0xff] %vm8, %v6768
  %6801 = vst.msk [vmem:[%s1 + $0xc0] sm:$0xff] %vm8, %v6769
  %6802 = vst.msk [vmem:[%s1 + $0xc8] sm:$0xff] %vm8, %v6770
  %6803 = vst.msk [vmem:[%s1 + $0xd0] sm:$0xff] %vm8, %v6771
  %6804 = vst.msk [vmem:[%s1 + $0xd8] sm:$0xff] %vm8, %v6772
  %6805 = vst.msk [vmem:[%s1 + $0xe0] sm:$0xff] %vm8, %v6773
  %6806 = vst.msk [vmem:[%s1 + $0xe8] sm:$0xff] %vm8, %v6774
  %6807 = vst.msk [vmem:[%s1 + $0xf0] sm:$0xff] %vm8, %v6775
  %6808 = vst.msk [vmem:[%s1 + $0xf8] sm:$0xff] %vm8, %v6776
  // Predicated region
  $region6: #{tpu_custom_call.1} parent=0 // pred_check
    _
  $region7: #{tpu_custom_call.1} parent=0 // pred_check_branch
    %6810 = sbr.rel (0) target = $region9
  $region8: #{tpu_custom_call.1} parent=0 // pred_region
    _
  $region9: #{tpu_custom_call.1} parent=0 // pred_fallthru
    _
  // Predicated region
  $region10: #{tpu_custom_call.1} parent=0 // pred_check
    _
  $region11: #{tpu_custom_call.1} parent=0 // pred_check_branch
    %6812 = sbr.rel (0) target = $region13
  $region12: #{tpu_custom_call.1} parent=0 // pred_region
    _
  $region13: #{tpu_custom_call.1} parent=0 // pred_fallthru
    _

</llo_original>
